<compile_context>
chip_gen: v7x
topology: tpu7x:2x2x1
jax: 0.10.0
libtpu: 0.0.40
codegen_flags: <defaults>
</compile_context>

<pallas_src>
import functools

import jax
import jax.numpy as jnp
import numpy as np
from jax import lax
from jax.experimental import pallas as pl
from jax.experimental.pallas import tpu as pltpu

LANE = 128
SUBLANE = 8


def _round_up(x, m):
    return (x + m - 1) // m * m


def basic_block_kernel(x_ref, w1_ref, s1_ref, b1_ref, w2_ref, s2_ref, b2_ref,
                       out_ref, xpad_ref, mid_ref, *, TH):
    # x_ref   : (1, H, W, C)      f32 input block (channels padded to lane width)
    # w1_ref  : (3, 3*C, C)       bf16 conv1 weights, K-merged over (kw, ci)
    # s1/b1   : (1, C)            f32 folded BN1 scale / bias
    # w2_ref  : (3, 3*C, C)       bf16 conv2 weights, K-merged over (kw, ci)
    # s2/b2   : (1, C)            f32 folded BN2 scale / bias
    # out_ref : (1, H, W, C)      f32 output block
    # xpad_ref: (H+2, Wp, C) bf16 VMEM scratch, zero-haloed conv1 input
    # mid_ref : (H+2, Wp, C) bf16 VMEM scratch, zero-haloed relu(bn1(conv1))
    H = out_ref.shape[1]
    W = out_ref.shape[2]
    C = out_ref.shape[3]
    Wp = xpad_ref.shape[1]
    num_tiles = H // TH
    unroll = num_tiles <= 4

    # Hoisted per-channel BN scale / bias (row-broadcast over the lane dim).
    s1 = s1_ref[...]
    b1 = b1_ref[...]
    s2 = s2_ref[...]
    b2 = b2_ref[...]

    # ---- Halo-only zeroing.  The interior is fully overwritten every step,
    # so only the 1-pixel ring needs zeros.  Re-zeroing per step keeps the
    # batch axis free of cross-iteration state ("parallel"-safe) at ~3% of a
    # full-buffer zero.  Columns beyond W+1 are never read, so they are left
    # untouched.
    def zero_halo(ref):
        zrow = jnp.zeros((1, Wp, C), ref.dtype)
        ref[pl.ds(0, 1), :, :] = zrow
        ref[pl.ds(H + 1, 1), :, :] = zrow
        zcol = jnp.zeros((H, 1, C), ref.dtype)
        ref[pl.ds(1, H), pl.ds(0, 1), :] = zcol
        ref[pl.ds(1, H), pl.ds(W + 1, 1), :] = zcol

    zero_halo(xpad_ref)
    zero_halo(mid_ref)

    # ---- Stage the input image once into the bf16 padded scratch (single
    # read of the f32 input block; no full-image value kept live).
    xpad_ref[pl.ds(1, H), pl.ds(1, W), :] = x_ref[0].astype(jnp.bfloat16)

    # 3x3 / pad 1 / stride 1 conv on a TH-row tile: 3 deep-K MXU matmuls
    # (the 3 dw taps are merged along the contraction dim -> K = 3*C).
    # W is a multiple of 8 at these shapes, so the (TH, W, 3C)->(TH*W, 3C)
    # reshape is layout-free.
    def conv_tile(src_ref, w_ref, row0):
        acc = None
        for dh in range(3):
            r = row0 + dh
            t0 = src_ref[pl.ds(r, TH), pl.ds(0, W), :]
            t1 = src_ref[pl.ds(r, TH), pl.ds(1, W), :]
            t2 = src_ref[pl.ds(r, TH), pl.ds(2, W), :]
            win = jnp.concatenate([t0, t1, t2], axis=-1).reshape(TH * W, 3 * C)
            p = jnp.dot(win, w_ref[dh], preferred_element_type=jnp.float32)
            acc = p if acc is None else acc + p
        return acc

    # ---- Pass 1: relu(bn1(conv1(x))) -> bf16 interior of mid_ref.
    def pass1(t, carry):
        row0 = t * TH
        acc = conv_tile(xpad_ref, w1_ref, row0)
        out1 = jnp.maximum(acc * s1 + b1, 0.0)
        mid_ref[pl.ds(row0 + 1, TH), pl.ds(1, W), :] = (
            out1.reshape(TH, W, C).astype(jnp.bfloat16))
        return carry

    lax.fori_loop(0, num_tiles, pass1, 0, unroll=unroll)

    # ---- Pass 2: relu(bn2(conv2(mid)) + x) -> f32 output.  Residual is read
    # per-tile from the f32 input block only at the finalize.
    def pass2(t, carry):
        row0 = t * TH
        acc = conv_tile(mid_ref, w2_ref, row0)
        res = x_ref[pl.ds(0, 1), pl.ds(row0, TH), :, :].reshape(TH * W, C)
        y = jnp.maximum(acc * s2 + b2 + res, 0.0)
        out_ref[pl.ds(0, 1), pl.ds(row0, TH), :, :] = (
            y.reshape(1, TH, W, C).astype(out_ref.dtype))
        return carry

    lax.fori_loop(0, num_tiles, pass2, 0, unroll=unroll)


def basic_block_forward(x_nchw, params, eps=1e-5):
    """x_nchw: (N, C, H, W) float32.  Returns (N, C, H, W)."""
    (w1, g1, be1, m1, v1, w2, g2, be2, m2, v2) = params

    # Fold BN (inference mode) into per-channel scale / bias.
    s1 = g1 / jnp.sqrt(v1 + eps)
    b1 = be1 - m1 * s1
    s2 = g2 / jnp.sqrt(v2 + eps)
    b2 = be2 - m2 * s2

    x = jnp.transpose(x_nchw, (0, 2, 3, 1)).astype(jnp.float32)    # NCHW -> NHWC
    N, H, W, Cin = x.shape
    Cout = w1.shape[0]
    assert Cin == Cout, "BasicBlock with downsample=None requires inplanes==planes"

    # Pad channels to the TPU lane width.  Padded channels carry zeros
    # end-to-end (zero weights, zero scale/bias, zero residual) and are
    # sliced off after the pallas_call.
    C = max(LANE, _round_up(Cout, LANE))
    pc_in, pc_out = C - Cin, C - Cout
    x_p = jnp.pad(x, ((0, 0), (0, 0), (0, 0), (0, pc_in)))

    # Row-tile size: largest divisor of H with TH*W <= 128 rows so the f32
    # accumulator chunk (TH*W x C) stays register-resident.
    TH = 1
    for cand in range(H, 0, -1):
        if H % cand == 0 and cand * W <= 128:
            TH = cand
            break

    # Scratch width rounded to a sublane multiple (explicit padding).
    Wp = _round_up(W + 2, SUBLANE)

    def prep_w(w):
        # OIHW -> HWIO, channel-pad, then merge (kw, ci) into the contraction
        # dim: row (kw*C + ci) of w_m[kh] multiplies xpad[h+kh, w+kw, ci].
        wt = jnp.transpose(w, (2, 3, 1, 0))
        wt = jnp.pad(wt, ((0, 0), (0, 0), (0, pc_in), (0, pc_out)))
        return wt.reshape(3, 3 * C, C).astype(jnp.bfloat16)

    def prep_v(v):
        return jnp.pad(v, (0, pc_out)).reshape(1, C).astype(jnp.float32)

    w1m, w2m = prep_w(w1), prep_w(w2)
    s1v, b1v, s2v, b2v = prep_v(s1), prep_v(b1), prep_v(s2), prep_v(b2)

    # VMEM budget with a generation-aware cap.
    img_f32 = H * W * C * 4
    pad_bf16 = (H + 2) * Wp * C * 2
    w_bf16 = 3 * 3 * C * C * 2
    tile_tmp = TH * W * C * 4 * 4 + TH * W * 3 * C * 2
    need = (2 * img_f32 +          # input block (double-buffered)
            2 * img_f32 +          # output block (double-buffered)
            2 * 2 * w_bf16 +       # both conv weights (bf16, double-buffered)
            2 * pad_bf16 +         # padded bf16 scratches
            2 * tile_tmp)          # per-tile temporaries
    try:
        vmem_cap = int(pltpu.get_tpu_info().vmem_capacity_bytes)
    except Exception:
        vmem_cap = 64 * 1024 * 1024
    vmem_limit = min(int(need * 1.5) + (2 << 20), int(0.85 * vmem_cap))
    vmem_limit = max(vmem_limit, 4 << 20)

    kernel = functools.partial(basic_block_kernel, TH=TH)

    out_nhwc = pl.pallas_call(
        kernel,
        out_shape=jax.ShapeDtypeStruct((N, H, W, C), jnp.float32),
        grid=(N,),
        in_specs=[
            pl.BlockSpec((1, H, W, C), lambda n: (n, 0, 0, 0)),
            pl.BlockSpec((3, 3 * C, C), lambda n: (0, 0, 0)),
            pl.BlockSpec((1, C), lambda n: (0, 0)),
            pl.BlockSpec((1, C), lambda n: (0, 0)),
            pl.BlockSpec((3, 3 * C, C), lambda n: (0, 0, 0)),
            pl.BlockSpec((1, C), lambda n: (0, 0)),
            pl.BlockSpec((1, C), lambda n: (0, 0)),
        ],
        out_specs=pl.BlockSpec((1, H, W, C), lambda n: (n, 0, 0, 0)),
        scratch_shapes=[
            pltpu.VMEM((H + 2, Wp, C), jnp.bfloat16),   # padded conv1 input
            pltpu.VMEM((H + 2, Wp, C), jnp.bfloat16),   # padded conv2 input
        ],
        compiler_params=pltpu.CompilerParams(
            dimension_semantics=("parallel",),
            vmem_limit_bytes=vmem_limit),
    )(x_p, w1m, s1v, b1v, w2m, s2v, b2v)

    out_nhwc = out_nhwc[..., :Cout]                    # drop channel padding
    return jnp.transpose(out_nhwc, (0, 3, 1, 2))       # back to NCHW


def ref_forward(x, params, eps=1e-5):
    """Pure-JAX f32 reference matching the PyTorch module (BN inference mode)."""
    (w1, g1, be1, m1, v1, w2, g2, be2, m2, v2) = params

    def conv(inp, w):
        return jax.lax.conv_general_dilated(
            inp, w, window_strides=(1, 1), padding=((1, 1), (1, 1)),
            dimension_numbers=("NCHW", "OIHW", "NCHW"))

    def bn(o, g, b, m, v):
        inv = g / jnp.sqrt(v + eps)
        return o * inv[None, :, None, None] + (b - m * inv)[None, :, None, None]

    out = jax.nn.relu(bn(conv(x, w1), g1, be1, m1, v1))
    out = bn(conv(out, w2), g2, be2, m2, v2)
    return jax.nn.relu(out + x)


if __name__ == "__main__":
    # Small shapes consistent with the module: inplanes = planes = 4, stride = 1.
    N, C, H, W = 2, 4, 16, 16
    key = jax.random.PRNGKey(0)
    keys = jax.random.split(key, 11)

    x = jax.random.normal(keys[0], (N, C, H, W), jnp.float32)

    # Deterministic parameter init (conv weights OIHW, like nn.Conv2d).
    w1 = 0.1 * jax.random.normal(keys[1], (C, C, 3, 3), jnp.float32)
    w2 = 0.1 * jax.random.normal(keys[2], (C, C, 3, 3), jnp.float32)
    g1 = 1.0 + 0.1 * jax.random.normal(keys[3], (C,), jnp.float32)
    be1 = 0.1 * jax.random.normal(keys[4], (C,), jnp.float32)
    m1 = 0.1 * jax.random.normal(keys[5], (C,), jnp.float32)
    v1 = jax.random.uniform(keys[6], (C,), jnp.float32, 0.5, 1.5)
    g2 = 1.0 + 0.1 * jax.random.normal(keys[7], (C,), jnp.float32)
    be2 = 0.1 * jax.random.normal(keys[8], (C,), jnp.float32)
    m2 = 0.1 * jax.random.normal(keys[9], (C,), jnp.float32)
    v2 = jax.random.uniform(keys[10], (C,), jnp.float32, 0.5, 1.5)

    params = (w1, g1, be1, m1, v1, w2, g2, be2, m2, v2)

    out = jax.block_until_ready(basic_block_forward(x, params))
    ref = jax.block_until_ready(ref_forward(x, params))

    # Tolerance loosened vs the pure-f32 path: MXU inputs / intermediate
    # activations are bf16 (f32 accumulation, f32 residual).
    np.testing.assert_allclose(np.asarray(out), np.asarray(ref),
                               rtol=5e-2, atol=5e-2)

    print("KERNEL_OK")
</pallas_src>

<mosaic_0001>
module attributes {stable_mosaic.version = 11 : i64} {
  func.func @basic_block_kernel(%arg0: i32, %arg1: memref<1x16x16x128xf32, #tpu.memory_space<vmem>>, %arg2: memref<3x384x128xbf16, #tpu.memory_space<vmem>>, %arg3: memref<1x128xf32, #tpu.memory_space<vmem>>, %arg4: memref<1x128xf32, #tpu.memory_space<vmem>>, %arg5: memref<3x384x128xbf16, #tpu.memory_space<vmem>>, %arg6: memref<1x128xf32, #tpu.memory_space<vmem>>, %arg7: memref<1x128xf32, #tpu.memory_space<vmem>>, %arg8: memref<1x16x16x128xf32, #tpu.memory_space<vmem>>, %arg9: memref<18x24x128xbf16, #tpu.memory_space<vmem>>, %arg10: memref<18x24x128xbf16, #tpu.memory_space<vmem>>) attributes {dimension_semantics = [#tpu.dimension_semantics<parallel>], iteration_bounds = array<i64: 2>, scalar_prefetch = 0 : i64, scratch_operands = 2 : i64, tpu.core_type = #tpu.core_type<tc>, window_params = [{transform_indices = @transform_0, window_bounds = array<i64: 1, 16, 16, 128>}, {pipeline_mode = #tpu.pipeline_mode<synchronous>, transform_indices = @transform_1, window_bounds = array<i64: 3, 384, 128>}, {pipeline_mode = #tpu.pipeline_mode<synchronous>, transform_indices = @transform_2, window_bounds = array<i64: 1, 128>}, {pipeline_mode = #tpu.pipeline_mode<synchronous>, transform_indices = @transform_3, window_bounds = array<i64: 1, 128>}, {pipeline_mode = #tpu.pipeline_mode<synchronous>, transform_indices = @transform_4, window_bounds = array<i64: 3, 384, 128>}, {pipeline_mode = #tpu.pipeline_mode<synchronous>, transform_indices = @transform_5, window_bounds = array<i64: 1, 128>}, {pipeline_mode = #tpu.pipeline_mode<synchronous>, transform_indices = @transform_6, window_bounds = array<i64: 1, 128>}, {transform_indices = @transform_7, window_bounds = array<i64: 1, 16, 16, 128>}]} {
    %c0 = arith.constant 0 : index
    %c0_0 = arith.constant 0 : index
    %0 = vector.load %arg3[%c0, %c0_0] : memref<1x128xf32, #tpu.memory_space<vmem>>, vector<1x128xf32>
    %c0_1 = arith.constant 0 : index
    %c0_2 = arith.constant 0 : index
    %1 = vector.load %arg4[%c0_1, %c0_2] : memref<1x128xf32, #tpu.memory_space<vmem>>, vector<1x128xf32>
    %c0_3 = arith.constant 0 : index
    %c0_4 = arith.constant 0 : index
    %2 = vector.load %arg6[%c0_3, %c0_4] : memref<1x128xf32, #tpu.memory_space<vmem>>, vector<1x128xf32>
    %c0_5 = arith.constant 0 : index
    %c0_6 = arith.constant 0 : index
    %3 = vector.load %arg7[%c0_5, %c0_6] : memref<1x128xf32, #tpu.memory_space<vmem>>, vector<1x128xf32>
    %cst = arith.constant 0.000000e+00 : bf16
    %4 = vector.broadcast %cst : bf16 to vector<1x24x128xbf16>
    %c0_7 = arith.constant 0 : index
    %c0_8 = arith.constant 0 : index
    %c0_9 = arith.constant 0 : index
    %5 = vector.load %arg9[%c0_7, %c0_8, %c0_9] : memref<18x24x128xbf16, #tpu.memory_space<vmem>>, vector<1x24x128xbf16>
    tpu.vector_store %arg9[%c0_7, %c0_8, %c0_9], %4 {strides = array<i32>} : memref<18x24x128xbf16, #tpu.memory_space<vmem>>, vector<1x24x128xbf16>,
    %c17 = arith.constant 17 : index
    %c0_10 = arith.constant 0 : index
    %c0_11 = arith.constant 0 : index
    %6 = vector.load %arg9[%c17, %c0_10, %c0_11] : memref<18x24x128xbf16, #tpu.memory_space<vmem>>, vector<1x24x128xbf16>
    tpu.vector_store %arg9[%c17, %c0_10, %c0_11], %4 {strides = array<i32>} : memref<18x24x128xbf16, #tpu.memory_space<vmem>>, vector<1x24x128xbf16>,
    %cst_12 = arith.constant 0.000000e+00 : bf16
    %7 = vector.broadcast %cst_12 : bf16 to vector<16x1x128xbf16>
    %c1 = arith.constant 1 : index
    %c0_13 = arith.constant 0 : index
    %c0_14 = arith.constant 0 : index
    %8 = vector.load %arg9[%c1, %c0_13, %c0_14] : memref<18x24x128xbf16, #tpu.memory_space<vmem>>, vector<16x1x128xbf16>
    tpu.vector_store %arg9[%c1, %c0_13, %c0_14], %7 {strides = array<i32>} : memref<18x24x128xbf16, #tpu.memory_space<vmem>>, vector<16x1x128xbf16>,
    %c1_15 = arith.constant 1 : index
    %c17_16 = arith.constant 17 : index
    %c0_17 = arith.constant 0 : index
    %9 = vector.load %arg9[%c1_15, %c17_16, %c0_17] : memref<18x24x128xbf16, #tpu.memory_space<vmem>>, vector<16x1x128xbf16>
    tpu.vector_store %arg9[%c1_15, %c17_16, %c0_17], %7 {strides = array<i32>} : memref<18x24x128xbf16, #tpu.memory_space<vmem>>, vector<16x1x128xbf16>,
    %cst_18 = arith.constant 0.000000e+00 : bf16
    %10 = vector.broadcast %cst_18 : bf16 to vector<1x24x128xbf16>
    %c0_19 = arith.constant 0 : index
    %c0_20 = arith.constant 0 : index
    %c0_21 = arith.constant 0 : index
    %11 = vector.load %arg10[%c0_19, %c0_20, %c0_21] : memref<18x24x128xbf16, #tpu.memory_space<vmem>>, vector<1x24x128xbf16>
    tpu.vector_store %arg10[%c0_19, %c0_20, %c0_21], %10 {strides = array<i32>} : memref<18x24x128xbf16, #tpu.memory_space<vmem>>, vector<1x24x128xbf16>,
    %c17_22 = arith.constant 17 : index
    %c0_23 = arith.constant 0 : index
    %c0_24 = arith.constant 0 : index
    %12 = vector.load %arg10[%c17_22, %c0_23, %c0_24] : memref<18x24x128xbf16, #tpu.memory_space<vmem>>, vector<1x24x128xbf16>
    tpu.vector_store %arg10[%c17_22, %c0_23, %c0_24], %10 {strides = array<i32>} : memref<18x24x128xbf16, #tpu.memory_space<vmem>>, vector<1x24x128xbf16>,
    %cst_25 = arith.constant 0.000000e+00 : bf16
    %13 = vector.broadcast %cst_25 : bf16 to vector<16x1x128xbf16>
    %c1_26 = arith.constant 1 : index
    %c0_27 = arith.constant 0 : index
    %c0_28 = arith.constant 0 : index
    %14 = vector.load %arg10[%c1_26, %c0_27, %c0_28] : memref<18x24x128xbf16, #tpu.memory_space<vmem>>, vector<16x1x128xbf16>
    tpu.vector_store %arg10[%c1_26, %c0_27, %c0_28], %13 {strides = array<i32>} : memref<18x24x128xbf16, #tpu.memory_space<vmem>>, vector<16x1x128xbf16>,
    %c1_29 = arith.constant 1 : index
    %c17_30 = arith.constant 17 : index
    %c0_31 = arith.constant 0 : index
    %15 = vector.load %arg10[%c1_29, %c17_30, %c0_31] : memref<18x24x128xbf16, #tpu.memory_space<vmem>>, vector<16x1x128xbf16>
    tpu.vector_store %arg10[%c1_29, %c17_30, %c0_31], %13 {strides = array<i32>} : memref<18x24x128xbf16, #tpu.memory_space<vmem>>, vector<16x1x128xbf16>,
    %c0_32 = arith.constant 0 : index
    %c0_33 = arith.constant 0 : index
    %c0_34 = arith.constant 0 : index
    %c0_35 = arith.constant 0 : index
    %16 = vector.load %arg1[%c0_32, %c0_33, %c0_34, %c0_35] : memref<1x16x16x128xf32, #tpu.memory_space<vmem>>, vector<1x16x16x128xf32>
    %17 = vector.shape_cast %16 : vector<1x16x16x128xf32> to vector<16x16x128xf32>
    %18 = arith.truncf %17 : vector<16x16x128xf32> to vector<16x16x128xbf16>
    %c1_36 = arith.constant 1 : index
    %c1_37 = arith.constant 1 : index
    %c0_38 = arith.constant 0 : index
    %19 = vector.load %arg9[%c1_36, %c1_37, %c0_38] : memref<18x24x128xbf16, #tpu.memory_space<vmem>>, vector<16x16x128xbf16>
    tpu.vector_store %arg9[%c1_36, %c1_37, %c0_38], %18 {strides = array<i32>} : memref<18x24x128xbf16, #tpu.memory_space<vmem>>, vector<16x16x128xbf16>,
    %c0_i32 = arith.constant 0 : i32
    %c8_i32 = arith.constant 8 : i32
    %20 = arith.muli %c0_i32, %c8_i32 : i32
    %c0_i32_39 = arith.constant 0 : i32
    %21 = arith.addi %20, %c0_i32_39 : i32
    %22 = arith.index_cast %21 : i32 to index
    %c0_40 = arith.constant 0 : index
    %c0_41 = arith.constant 0 : index
    %23 = vector.load %arg9[%22, %c0_40, %c0_41] : memref<18x24x128xbf16, #tpu.memory_space<vmem>>, vector<8x16x128xbf16>
    %24 = arith.index_cast %21 : i32 to index
    %c1_42 = arith.constant 1 : index
    %c0_43 = arith.constant 0 : index
    %25 = vector.load %arg9[%24, %c1_42, %c0_43] : memref<18x24x128xbf16, #tpu.memory_space<vmem>>, vector<8x16x128xbf16>
    %26 = arith.index_cast %21 : i32 to index
    %c2 = arith.constant 2 : index
    %c0_44 = arith.constant 0 : index
    %27 = vector.load %arg9[%26, %c2, %c0_44] : memref<18x24x128xbf16, #tpu.memory_space<vmem>>, vector<8x16x128xbf16>
    %28 = tpu.concatenate %23, %25, %27 in 2 : vector<8x16x128xbf16>, vector<8x16x128xbf16>, vector<8x16x128xbf16> -> vector<8x16x384xbf16>
    %29 = vector.shape_cast %28 : vector<8x16x384xbf16> to vector<128x384xbf16>
    %c0_45 = arith.constant 0 : index
    %c0_46 = arith.constant 0 : index
    %c0_47 = arith.constant 0 : index
    %30 = vector.load %arg2[%c0_45, %c0_46, %c0_47] : memref<3x384x128xbf16, #tpu.memory_space<vmem>>, vector<1x384x128xbf16>
    %31 = vector.shape_cast %30 : vector<1x384x128xbf16> to vector<384x128xbf16>
    %cst_48 = arith.constant dense<0.000000e+00> : vector<128x128xf32>
    %32 = tpu.matmul %29, %31, %cst_48 {dimension_numbers = #tpu.dot_dimension_numbers<[1], [0], [0], [1], [0, 0, 1, 1], [], []>} : vector<128x384xbf16>, vector<384x128xbf16>, vector<128x128xf32> -> vector<128x128xf32>
    %c1_i32 = arith.constant 1 : i32
    %33 = arith.addi %20, %c1_i32 : i32
    %34 = arith.index_cast %33 : i32 to index
    %c0_49 = arith.constant 0 : index
    %c0_50 = arith.constant 0 : index
    %35 = vector.load %arg9[%34, %c0_49, %c0_50] : memref<18x24x128xbf16, #tpu.memory_space<vmem>>, vector<8x16x128xbf16>
    %36 = arith.index_cast %33 : i32 to index
    %c1_51 = arith.constant 1 : index
    %c0_52 = arith.constant 0 : index
    %37 = vector.load %arg9[%36, %c1_51, %c0_52] : memref<18x24x128xbf16, #tpu.memory_space<vmem>>, vector<8x16x128xbf16>
    %38 = arith.index_cast %33 : i32 to index
    %c2_53 = arith.constant 2 : index
    %c0_54 = arith.constant 0 : index
    %39 = vector.load %arg9[%38, %c2_53, %c0_54] : memref<18x24x128xbf16, #tpu.memory_space<vmem>>, vector<8x16x128xbf16>
    %40 = tpu.concatenate %35, %37, %39 in 2 : vector<8x16x128xbf16>, vector<8x16x128xbf16>, vector<8x16x128xbf16> -> vector<8x16x384xbf16>
    %41 = vector.shape_cast %40 : vector<8x16x384xbf16> to vector<128x384xbf16>
    %c1_55 = arith.constant 1 : index
    %c0_56 = arith.constant 0 : index
    %c0_57 = arith.constant 0 : index
    %42 = vector.load %arg2[%c1_55, %c0_56, %c0_57] : memref<3x384x128xbf16, #tpu.memory_space<vmem>>, vector<1x384x128xbf16>
    %43 = vector.shape_cast %42 : vector<1x384x128xbf16> to vector<384x128xbf16>
    %cst_58 = arith.constant dense<0.000000e+00> : vector<128x128xf32>
    %44 = tpu.matmul %41, %43, %cst_58 {dimension_numbers = #tpu.dot_dimension_numbers<[1], [0], [0], [1], [0, 0, 1, 1], [], []>} : vector<128x384xbf16>, vector<384x128xbf16>, vector<128x128xf32> -> vector<128x128xf32>
    %45 = arith.addf %32, %44 : vector<128x128xf32>
    %c2_i32 = arith.constant 2 : i32
    %46 = arith.addi %20, %c2_i32 : i32
    %47 = arith.index_cast %46 : i32 to index
    %c0_59 = arith.constant 0 : index
    %c0_60 = arith.constant 0 : index
    %48 = vector.load %arg9[%47, %c0_59, %c0_60] : memref<18x24x128xbf16, #tpu.memory_space<vmem>>, vector<8x16x128xbf16>
    %49 = arith.index_cast %46 : i32 to index
    %c1_61 = arith.constant 1 : index
    %c0_62 = arith.constant 0 : index
    %50 = vector.load %arg9[%49, %c1_61, %c0_62] : memref<18x24x128xbf16, #tpu.memory_space<vmem>>, vector<8x16x128xbf16>
    %51 = arith.index_cast %46 : i32 to index
    %c2_63 = arith.constant 2 : index
    %c0_64 = arith.constant 0 : index
    %52 = vector.load %arg9[%51, %c2_63, %c0_64] : memref<18x24x128xbf16, #tpu.memory_space<vmem>>, vector<8x16x128xbf16>
    %53 = tpu.concatenate %48, %50, %52 in 2 : vector<8x16x128xbf16>, vector<8x16x128xbf16>, vector<8x16x128xbf16> -> vector<8x16x384xbf16>
    %54 = vector.shape_cast %53 : vector<8x16x384xbf16> to vector<128x384xbf16>
    %c2_65 = arith.constant 2 : index
    %c0_66 = arith.constant 0 : index
    %c0_67 = arith.constant 0 : index
    %55 = vector.load %arg2[%c2_65, %c0_66, %c0_67] : memref<3x384x128xbf16, #tpu.memory_space<vmem>>, vector<1x384x128xbf16>
    %56 = vector.shape_cast %55 : vector<1x384x128xbf16> to vector<384x128xbf16>
    %cst_68 = arith.constant dense<0.000000e+00> : vector<128x128xf32>
    %57 = tpu.matmul %54, %56, %cst_68 {dimension_numbers = #tpu.dot_dimension_numbers<[1], [0], [0], [1], [0, 0, 1, 1], [], []>} : vector<128x384xbf16>, vector<384x128xbf16>, vector<128x128xf32> -> vector<128x128xf32>
    %58 = arith.addf %45, %57 : vector<128x128xf32>
    %59 = vector.broadcast %0 : vector<1x128xf32> to vector<128x128xf32>
    %60 = arith.mulf %58, %59 : vector<128x128xf32>
    %61 = vector.broadcast %1 : vector<1x128xf32> to vector<128x128xf32>
    %62 = arith.addf %60, %61 : vector<128x128xf32>
    %cst_69 = arith.constant 0.000000e+00 : f32
    %63 = vector.broadcast %cst_69 : f32 to vector<128x128xf32>
    %64 = arith.maximumf %62, %63 : vector<128x128xf32>
    %65 = vector.shape_cast %64 : vector<128x128xf32> to vector<8x16x128xf32>
    %66 = arith.truncf %65 : vector<8x16x128xf32> to vector<8x16x128xbf16>
    %c1_i32_70 = arith.constant 1 : i32
    %67 = arith.addi %20, %c1_i32_70 : i32
    %68 = arith.index_cast %67 : i32 to index
    %c1_71 = arith.constant 1 : index
    %c0_72 = arith.constant 0 : index
    %69 = vector.load %arg10[%68, %c1_71, %c0_72] : memref<18x24x128xbf16, #tpu.memory_space<vmem>>, vector<8x16x128xbf16>
    tpu.vector_store %arg10[%68, %c1_71, %c0_72], %66 {strides = array<i32>} : memref<18x24x128xbf16, #tpu.memory_space<vmem>>, vector<8x16x128xbf16>,
    %c1_i32_73 = arith.constant 1 : i32
    %c8_i32_74 = arith.constant 8 : i32
    %70 = arith.muli %c1_i32_73, %c8_i32_74 : i32
    %c0_i32_75 = arith.constant 0 : i32
    %71 = arith.addi %70, %c0_i32_75 : i32
    %72 = arith.index_cast %71 : i32 to index
    %c0_76 = arith.constant 0 : index
    %c0_77 = arith.constant 0 : index
    %73 = vector.load %arg9[%72, %c0_76, %c0_77] : memref<18x24x128xbf16, #tpu.memory_space<vmem>>, vector<8x16x128xbf16>
    %74 = arith.index_cast %71 : i32 to index
    %c1_78 = arith.constant 1 : index
    %c0_79 = arith.constant 0 : index
    %75 = vector.load %arg9[%74, %c1_78, %c0_79] : memref<18x24x128xbf16, #tpu.memory_space<vmem>>, vector<8x16x128xbf16>
    %76 = arith.index_cast %71 : i32 to index
    %c2_80 = arith.constant 2 : index
    %c0_81 = arith.constant 0 : index
    %77 = vector.load %arg9[%76, %c2_80, %c0_81] : memref<18x24x128xbf16, #tpu.memory_space<vmem>>, vector<8x16x128xbf16>
    %78 = tpu.concatenate %73, %75, %77 in 2 : vector<8x16x128xbf16>, vector<8x16x128xbf16>, vector<8x16x128xbf16> -> vector<8x16x384xbf16>
    %79 = vector.shape_cast %78 : vector<8x16x384xbf16> to vector<128x384xbf16>
    %c0_82 = arith.constant 0 : index
    %c0_83 = arith.constant 0 : index
    %c0_84 = arith.constant 0 : index
    %80 = vector.load %arg2[%c0_82, %c0_83, %c0_84] : memref<3x384x128xbf16, #tpu.memory_space<vmem>>, vector<1x384x128xbf16>
    %81 = vector.shape_cast %80 : vector<1x384x128xbf16> to vector<384x128xbf16>
    %cst_85 = arith.constant dense<0.000000e+00> : vector<128x128xf32>
    %82 = tpu.matmul %79, %81, %cst_85 {dimension_numbers = #tpu.dot_dimension_numbers<[1], [0], [0], [1], [0, 0, 1, 1], [], []>} : vector<128x384xbf16>, vector<384x128xbf16>, vector<128x128xf32> -> vector<128x128xf32>
    %c1_i32_86 = arith.constant 1 : i32
    %83 = arith.addi %70, %c1_i32_86 : i32
    %84 = arith.index_cast %83 : i32 to index
    %c0_87 = arith.constant 0 : index
    %c0_88 = arith.constant 0 : index
    %85 = vector.load %arg9[%84, %c0_87, %c0_88] : memref<18x24x128xbf16, #tpu.memory_space<vmem>>, vector<8x16x128xbf16>
    %86 = arith.index_cast %83 : i32 to index
    %c1_89 = arith.constant 1 : index
    %c0_90 = arith.constant 0 : index
    %87 = vector.load %arg9[%86, %c1_89, %c0_90] : memref<18x24x128xbf16, #tpu.memory_space<vmem>>, vector<8x16x128xbf16>
    %88 = arith.index_cast %83 : i32 to index
    %c2_91 = arith.constant 2 : index
    %c0_92 = arith.constant 0 : index
    %89 = vector.load %arg9[%88, %c2_91, %c0_92] : memref<18x24x128xbf16, #tpu.memory_space<vmem>>, vector<8x16x128xbf16>
    %90 = tpu.concatenate %85, %87, %89 in 2 : vector<8x16x128xbf16>, vector<8x16x128xbf16>, vector<8x16x128xbf16> -> vector<8x16x384xbf16>
    %91 = vector.shape_cast %90 : vector<8x16x384xbf16> to vector<128x384xbf16>
    %c1_93 = arith.constant 1 : index
    %c0_94 = arith.constant 0 : index
    %c0_95 = arith.constant 0 : index
    %92 = vector.load %arg2[%c1_93, %c0_94, %c0_95] : memref<3x384x128xbf16, #tpu.memory_space<vmem>>, vector<1x384x128xbf16>
    %93 = vector.shape_cast %92 : vector<1x384x128xbf16> to vector<384x128xbf16>
    %cst_96 = arith.constant dense<0.000000e+00> : vector<128x128xf32>
    %94 = tpu.matmul %91, %93, %cst_96 {dimension_numbers = #tpu.dot_dimension_numbers<[1], [0], [0], [1], [0, 0, 1, 1], [], []>} : vector<128x384xbf16>, vector<384x128xbf16>, vector<128x128xf32> -> vector<128x128xf32>
    %95 = arith.addf %82, %94 : vector<128x128xf32>
    %c2_i32_97 = arith.constant 2 : i32
    %96 = arith.addi %70, %c2_i32_97 : i32
    %97 = arith.index_cast %96 : i32 to index
    %c0_98 = arith.constant 0 : index
    %c0_99 = arith.constant 0 : index
    %98 = vector.load %arg9[%97, %c0_98, %c0_99] : memref<18x24x128xbf16, #tpu.memory_space<vmem>>, vector<8x16x128xbf16>
    %99 = arith.index_cast %96 : i32 to index
    %c1_100 = arith.constant 1 : index
    %c0_101 = arith.constant 0 : index
    %100 = vector.load %arg9[%99, %c1_100, %c0_101] : memref<18x24x128xbf16, #tpu.memory_space<vmem>>, vector<8x16x128xbf16>
    %101 = arith.index_cast %96 : i32 to index
    %c2_102 = arith.constant 2 : index
    %c0_103 = arith.constant 0 : index
    %102 = vector.load %arg9[%101, %c2_102, %c0_103] : memref<18x24x128xbf16, #tpu.memory_space<vmem>>, vector<8x16x128xbf16>
    %103 = tpu.concatenate %98, %100, %102 in 2 : vector<8x16x128xbf16>, vector<8x16x128xbf16>, vector<8x16x128xbf16> -> vector<8x16x384xbf16>
    %104 = vector.shape_cast %103 : vector<8x16x384xbf16> to vector<128x384xbf16>
    %c2_104 = arith.constant 2 : index
    %c0_105 = arith.constant 0 : index
    %c0_106 = arith.constant 0 : index
    %105 = vector.load %arg2[%c2_104, %c0_105, %c0_106] : memref<3x384x128xbf16, #tpu.memory_space<vmem>>, vector<1x384x128xbf16>
    %106 = vector.shape_cast %105 : vector<1x384x128xbf16> to vector<384x128xbf16>
    %cst_107 = arith.constant dense<0.000000e+00> : vector<128x128xf32>
    %107 = tpu.matmul %104, %106, %cst_107 {dimension_numbers = #tpu.dot_dimension_numbers<[1], [0], [0], [1], [0, 0, 1, 1], [], []>} : vector<128x384xbf16>, vector<384x128xbf16>, vector<128x128xf32> -> vector<128x128xf32>
    %108 = arith.addf %95, %107 : vector<128x128xf32>
    %109 = vector.broadcast %0 : vector<1x128xf32> to vector<128x128xf32>
    %110 = arith.mulf %108, %109 : vector<128x128xf32>
    %111 = vector.broadcast %1 : vector<1x128xf32> to vector<128x128xf32>
    %112 = arith.addf %110, %111 : vector<128x128xf32>
    %cst_108 = arith.constant 0.000000e+00 : f32
    %113 = vector.broadcast %cst_108 : f32 to vector<128x128xf32>
    %114 = arith.maximumf %112, %113 : vector<128x128xf32>
    %115 = vector.shape_cast %114 : vector<128x128xf32> to vector<8x16x128xf32>
    %116 = arith.truncf %115 : vector<8x16x128xf32> to vector<8x16x128xbf16>
    %c1_i32_109 = arith.constant 1 : i32
    %117 = arith.addi %70, %c1_i32_109 : i32
    %118 = arith.index_cast %117 : i32 to index
    %c1_110 = arith.constant 1 : index
    %c0_111 = arith.constant 0 : index
    %119 = vector.load %arg10[%118, %c1_110, %c0_111] : memref<18x24x128xbf16, #tpu.memory_space<vmem>>, vector<8x16x128xbf16>
    tpu.vector_store %arg10[%118, %c1_110, %c0_111], %116 {strides = array<i32>} : memref<18x24x128xbf16, #tpu.memory_space<vmem>>, vector<8x16x128xbf16>,
    %c2_i32_112 = arith.constant 2 : i32
    %c0_i32_113 = arith.constant 0 : i32
    %c8_i32_114 = arith.constant 8 : i32
    %120 = arith.muli %c0_i32_113, %c8_i32_114 : i32
    %c0_i32_115 = arith.constant 0 : i32
    %121 = arith.addi %120, %c0_i32_115 : i32
    %122 = arith.index_cast %121 : i32 to index
    %c0_116 = arith.constant 0 : index
    %c0_117 = arith.constant 0 : index
    %123 = vector.load %arg10[%122, %c0_116, %c0_117] : memref<18x24x128xbf16, #tpu.memory_space<vmem>>, vector<8x16x128xbf16>
    %124 = arith.index_cast %121 : i32 to index
    %c1_118 = arith.constant 1 : index
    %c0_119 = arith.constant 0 : index
    %125 = vector.load %arg10[%124, %c1_118, %c0_119] : memref<18x24x128xbf16, #tpu.memory_space<vmem>>, vector<8x16x128xbf16>
    %126 = arith.index_cast %121 : i32 to index
    %c2_120 = arith.constant 2 : index
    %c0_121 = arith.constant 0 : index
    %127 = vector.load %arg10[%126, %c2_120, %c0_121] : memref<18x24x128xbf16, #tpu.memory_space<vmem>>, vector<8x16x128xbf16>
    %128 = tpu.concatenate %123, %125, %127 in 2 : vector<8x16x128xbf16>, vector<8x16x128xbf16>, vector<8x16x128xbf16> -> vector<8x16x384xbf16>
    %129 = vector.shape_cast %128 : vector<8x16x384xbf16> to vector<128x384xbf16>
    %c0_122 = arith.constant 0 : index
    %c0_123 = arith.constant 0 : index
    %c0_124 = arith.constant 0 : index
    %130 = vector.load %arg5[%c0_122, %c0_123, %c0_124] : memref<3x384x128xbf16, #tpu.memory_space<vmem>>, vector<1x384x128xbf16>
    %131 = vector.shape_cast %130 : vector<1x384x128xbf16> to vector<384x128xbf16>
    %cst_125 = arith.constant dense<0.000000e+00> : vector<128x128xf32>
    %132 = tpu.matmul %129, %131, %cst_125 {dimension_numbers = #tpu.dot_dimension_numbers<[1], [0], [0], [1], [0, 0, 1, 1], [], []>} : vector<128x384xbf16>, vector<384x128xbf16>, vector<128x128xf32> -> vector<128x128xf32>
    %c1_i32_126 = arith.constant 1 : i32
    %133 = arith.addi %120, %c1_i32_126 : i32
    %134 = arith.index_cast %133 : i32 to index
    %c0_127 = arith.constant 0 : index
    %c0_128 = arith.constant 0 : index
    %135 = vector.load %arg10[%134, %c0_127, %c0_128] : memref<18x24x128xbf16, #tpu.memory_space<vmem>>, vector<8x16x128xbf16>
    %136 = arith.index_cast %133 : i32 to index
    %c1_129 = arith.constant 1 : index
    %c0_130 = arith.constant 0 : index
    %137 = vector.load %arg10[%136, %c1_129, %c0_130] : memref<18x24x128xbf16, #tpu.memory_space<vmem>>, vector<8x16x128xbf16>
    %138 = arith.index_cast %133 : i32 to index
    %c2_131 = arith.constant 2 : index
    %c0_132 = arith.constant 0 : index
    %139 = vector.load %arg10[%138, %c2_131, %c0_132] : memref<18x24x128xbf16, #tpu.memory_space<vmem>>, vector<8x16x128xbf16>
    %140 = tpu.concatenate %135, %137, %139 in 2 : vector<8x16x128xbf16>, vector<8x16x128xbf16>, vector<8x16x128xbf16> -> vector<8x16x384xbf16>
    %141 = vector.shape_cast %140 : vector<8x16x384xbf16> to vector<128x384xbf16>
    %c1_133 = arith.constant 1 : index
    %c0_134 = arith.constant 0 : index
    %c0_135 = arith.constant 0 : index
    %142 = vector.load %arg5[%c1_133, %c0_134, %c0_135] : memref<3x384x128xbf16, #tpu.memory_space<vmem>>, vector<1x384x128xbf16>
    %143 = vector.shape_cast %142 : vector<1x384x128xbf16> to vector<384x128xbf16>
    %cst_136 = arith.constant dense<0.000000e+00> : vector<128x128xf32>
    %144 = tpu.matmul %141, %143, %cst_136 {dimension_numbers = #tpu.dot_dimension_numbers<[1], [0], [0], [1], [0, 0, 1, 1], [], []>} : vector<128x384xbf16>, vector<384x128xbf16>, vector<128x128xf32> -> vector<128x128xf32>
    %145 = arith.addf %132, %144 : vector<128x128xf32>
    %c2_i32_137 = arith.constant 2 : i32
    %146 = arith.addi %120, %c2_i32_137 : i32
    %147 = arith.index_cast %146 : i32 to index
    %c0_138 = arith.constant 0 : index
    %c0_139 = arith.constant 0 : index
    %148 = vector.load %arg10[%147, %c0_138, %c0_139] : memref<18x24x128xbf16, #tpu.memory_space<vmem>>, vector<8x16x128xbf16>
    %149 = arith.index_cast %146 : i32 to index
    %c1_140 = arith.constant 1 : index
    %c0_141 = arith.constant 0 : index
    %150 = vector.load %arg10[%149, %c1_140, %c0_141] : memref<18x24x128xbf16, #tpu.memory_space<vmem>>, vector<8x16x128xbf16>
    %151 = arith.index_cast %146 : i32 to index
    %c2_142 = arith.constant 2 : index
    %c0_143 = arith.constant 0 : index
    %152 = vector.load %arg10[%151, %c2_142, %c0_143] : memref<18x24x128xbf16, #tpu.memory_space<vmem>>, vector<8x16x128xbf16>
    %153 = tpu.concatenate %148, %150, %152 in 2 : vector<8x16x128xbf16>, vector<8x16x128xbf16>, vector<8x16x128xbf16> -> vector<8x16x384xbf16>
    %154 = vector.shape_cast %153 : vector<8x16x384xbf16> to vector<128x384xbf16>
    %c2_144 = arith.constant 2 : index
    %c0_145 = arith.constant 0 : index
    %c0_146 = arith.constant 0 : index
    %155 = vector.load %arg5[%c2_144, %c0_145, %c0_146] : memref<3x384x128xbf16, #tpu.memory_space<vmem>>, vector<1x384x128xbf16>
    %156 = vector.shape_cast %155 : vector<1x384x128xbf16> to vector<384x128xbf16>
    %cst_147 = arith.constant dense<0.000000e+00> : vector<128x128xf32>
    %157 = tpu.matmul %154, %156, %cst_147 {dimension_numbers = #tpu.dot_dimension_numbers<[1], [0], [0], [1], [0, 0, 1, 1], [], []>} : vector<128x384xbf16>, vector<384x128xbf16>, vector<128x128xf32> -> vector<128x128xf32>
    %158 = arith.addf %145, %157 : vector<128x128xf32>
    %c0_148 = arith.constant 0 : index
    %159 = arith.index_cast %120 : i32 to index
    %c0_149 = arith.constant 0 : index
    %c0_150 = arith.constant 0 : index
    %160 = vector.load %arg1[%c0_148, %159, %c0_149, %c0_150] : memref<1x16x16x128xf32, #tpu.memory_space<vmem>>, vector<1x8x16x128xf32>
    %161 = vector.shape_cast %160 : vector<1x8x16x128xf32> to vector<128x128xf32>
    %162 = vector.broadcast %2 : vector<1x128xf32> to vector<128x128xf32>
    %163 = arith.mulf %158, %162 : vector<128x128xf32>
    %164 = vector.broadcast %3 : vector<1x128xf32> to vector<128x128xf32>
    %165 = arith.addf %163, %164 : vector<128x128xf32>
    %166 = arith.addf %165, %161 : vector<128x128xf32>
    %cst_151 = arith.constant 0.000000e+00 : f32
    %167 = vector.broadcast %cst_151 : f32 to vector<128x128xf32>
    %168 = arith.maximumf %166, %167 : vector<128x128xf32>
    %169 = vector.shape_cast %168 : vector<128x128xf32> to vector<1x8x16x128xf32>
    %c0_152 = arith.constant 0 : index
    %170 = arith.index_cast %120 : i32 to index
    %c0_153 = arith.constant 0 : index
    %c0_154 = arith.constant 0 : index
    %171 = vector.load %arg8[%c0_152, %170, %c0_153, %c0_154] : memref<1x16x16x128xf32, #tpu.memory_space<vmem>>, vector<1x8x16x128xf32>
    tpu.vector_store %arg8[%c0_152, %170, %c0_153, %c0_154], %169 {strides = array<i32>} : memref<1x16x16x128xf32, #tpu.memory_space<vmem>>, vector<1x8x16x128xf32>,
    %c1_i32_155 = arith.constant 1 : i32
    %c8_i32_156 = arith.constant 8 : i32
    %172 = arith.muli %c1_i32_155, %c8_i32_156 : i32
    %c0_i32_157 = arith.constant 0 : i32
    %173 = arith.addi %172, %c0_i32_157 : i32
    %174 = arith.index_cast %173 : i32 to index
    %c0_158 = arith.constant 0 : index
    %c0_159 = arith.constant 0 : index
    %175 = vector.load %arg10[%174, %c0_158, %c0_159] : memref<18x24x128xbf16, #tpu.memory_space<vmem>>, vector<8x16x128xbf16>
    %176 = arith.index_cast %173 : i32 to index
    %c1_160 = arith.constant 1 : index
    %c0_161 = arith.constant 0 : index
    %177 = vector.load %arg10[%176, %c1_160, %c0_161] : memref<18x24x128xbf16, #tpu.memory_space<vmem>>, vector<8x16x128xbf16>
    %178 = arith.index_cast %173 : i32 to index
    %c2_162 = arith.constant 2 : index
    %c0_163 = arith.constant 0 : index
    %179 = vector.load %arg10[%178, %c2_162, %c0_163] : memref<18x24x128xbf16, #tpu.memory_space<vmem>>, vector<8x16x128xbf16>
    %180 = tpu.concatenate %175, %177, %179 in 2 : vector<8x16x128xbf16>, vector<8x16x128xbf16>, vector<8x16x128xbf16> -> vector<8x16x384xbf16>
    %181 = vector.shape_cast %180 : vector<8x16x384xbf16> to vector<128x384xbf16>
    %c0_164 = arith.constant 0 : index
    %c0_165 = arith.constant 0 : index
    %c0_166 = arith.constant 0 : index
    %182 = vector.load %arg5[%c0_164, %c0_165, %c0_166] : memref<3x384x128xbf16, #tpu.memory_space<vmem>>, vector<1x384x128xbf16>
    %183 = vector.shape_cast %182 : vector<1x384x128xbf16> to vector<384x128xbf16>
    %cst_167 = arith.constant dense<0.000000e+00> : vector<128x128xf32>
    %184 = tpu.matmul %181, %183, %cst_167 {dimension_numbers = #tpu.dot_dimension_numbers<[1], [0], [0], [1], [0, 0, 1, 1], [], []>} : vector<128x384xbf16>, vector<384x128xbf16>, vector<128x128xf32> -> vector<128x128xf32>
    %c1_i32_168 = arith.constant 1 : i32
    %185 = arith.addi %172, %c1_i32_168 : i32
    %186 = arith.index_cast %185 : i32 to index
    %c0_169 = arith.constant 0 : index
    %c0_170 = arith.constant 0 : index
    %187 = vector.load %arg10[%186, %c0_169, %c0_170] : memref<18x24x128xbf16, #tpu.memory_space<vmem>>, vector<8x16x128xbf16>
    %188 = arith.index_cast %185 : i32 to index
    %c1_171 = arith.constant 1 : index
    %c0_172 = arith.constant 0 : index
    %189 = vector.load %arg10[%188, %c1_171, %c0_172] : memref<18x24x128xbf16, #tpu.memory_space<vmem>>, vector<8x16x128xbf16>
    %190 = arith.index_cast %185 : i32 to index
    %c2_173 = arith.constant 2 : index
    %c0_174 = arith.constant 0 : index
    %191 = vector.load %arg10[%190, %c2_173, %c0_174] : memref<18x24x128xbf16, #tpu.memory_space<vmem>>, vector<8x16x128xbf16>
    %192 = tpu.concatenate %187, %189, %191 in 2 : vector<8x16x128xbf16>, vector<8x16x128xbf16>, vector<8x16x128xbf16> -> vector<8x16x384xbf16>
    %193 = vector.shape_cast %192 : vector<8x16x384xbf16> to vector<128x384xbf16>
    %c1_175 = arith.constant 1 : index
    %c0_176 = arith.constant 0 : index
    %c0_177 = arith.constant 0 : index
    %194 = vector.load %arg5[%c1_175, %c0_176, %c0_177] : memref<3x384x128xbf16, #tpu.memory_space<vmem>>, vector<1x384x128xbf16>
    %195 = vector.shape_cast %194 : vector<1x384x128xbf16> to vector<384x128xbf16>
    %cst_178 = arith.constant dense<0.000000e+00> : vector<128x128xf32>
    %196 = tpu.matmul %193, %195, %cst_178 {dimension_numbers = #tpu.dot_dimension_numbers<[1], [0], [0], [1], [0, 0, 1, 1], [], []>} : vector<128x384xbf16>, vector<384x128xbf16>, vector<128x128xf32> -> vector<128x128xf32>
    %197 = arith.addf %184, %196 : vector<128x128xf32>
    %c2_i32_179 = arith.constant 2 : i32
    %198 = arith.addi %172, %c2_i32_179 : i32
    %199 = arith.index_cast %198 : i32 to index
    %c0_180 = arith.constant 0 : index
    %c0_181 = arith.constant 0 : index
    %200 = vector.load %arg10[%199, %c0_180, %c0_181] : memref<18x24x128xbf16, #tpu.memory_space<vmem>>, vector<8x16x128xbf16>
    %201 = arith.index_cast %198 : i32 to index
    %c1_182 = arith.constant 1 : index
    %c0_183 = arith.constant 0 : index
    %202 = vector.load %arg10[%201, %c1_182, %c0_183] : memref<18x24x128xbf16, #tpu.memory_space<vmem>>, vector<8x16x128xbf16>
    %203 = arith.index_cast %198 : i32 to index
    %c2_184 = arith.constant 2 : index
    %c0_185 = arith.constant 0 : index
    %204 = vector.load %arg10[%203, %c2_184, %c0_185] : memref<18x24x128xbf16, #tpu.memory_space<vmem>>, vector<8x16x128xbf16>
    %205 = tpu.concatenate %200, %202, %204 in 2 : vector<8x16x128xbf16>, vector<8x16x128xbf16>, vector<8x16x128xbf16> -> vector<8x16x384xbf16>
    %206 = vector.shape_cast %205 : vector<8x16x384xbf16> to vector<128x384xbf16>
    %c2_186 = arith.constant 2 : index
    %c0_187 = arith.constant 0 : index
    %c0_188 = arith.constant 0 : index
    %207 = vector.load %arg5[%c2_186, %c0_187, %c0_188] : memref<3x384x128xbf16, #tpu.memory_space<vmem>>, vector<1x384x128xbf16>
    %208 = vector.shape_cast %207 : vector<1x384x128xbf16> to vector<384x128xbf16>
    %cst_189 = arith.constant dense<0.000000e+00> : vector<128x128xf32>
    %209 = tpu.matmul %206, %208, %cst_189 {dimension_numbers = #tpu.dot_dimension_numbers<[1], [0], [0], [1], [0, 0, 1, 1], [], []>} : vector<128x384xbf16>, vector<384x128xbf16>, vector<128x128xf32> -> vector<128x128xf32>
    %210 = arith.addf %197, %209 : vector<128x128xf32>
    %c0_190 = arith.constant 0 : index
    %211 = arith.index_cast %172 : i32 to index
    %c0_191 = arith.constant 0 : index
    %c0_192 = arith.constant 0 : index
    %212 = vector.load %arg1[%c0_190, %211, %c0_191, %c0_192] : memref<1x16x16x128xf32, #tpu.memory_space<vmem>>, vector<1x8x16x128xf32>
    %213 = vector.shape_cast %212 : vector<1x8x16x128xf32> to vector<128x128xf32>
    %214 = vector.broadcast %2 : vector<1x128xf32> to vector<128x128xf32>
    %215 = arith.mulf %210, %214 : vector<128x128xf32>
    %216 = vector.broadcast %3 : vector<1x128xf32> to vector<128x128xf32>
    %217 = arith.addf %215, %216 : vector<128x128xf32>
    %218 = arith.addf %217, %213 : vector<128x128xf32>
    %cst_193 = arith.constant 0.000000e+00 : f32
    %219 = vector.broadcast %cst_193 : f32 to vector<128x128xf32>
    %220 = arith.maximumf %218, %219 : vector<128x128xf32>
    %221 = vector.shape_cast %220 : vector<128x128xf32> to vector<1x8x16x128xf32>
    %c0_194 = arith.constant 0 : index
    %222 = arith.index_cast %172 : i32 to index
    %c0_195 = arith.constant 0 : index
    %c0_196 = arith.constant 0 : index
    %223 = vector.load %arg8[%c0_194, %222, %c0_195, %c0_196] : memref<1x16x16x128xf32, #tpu.memory_space<vmem>>, vector<1x8x16x128xf32>
    tpu.vector_store %arg8[%c0_194, %222, %c0_195, %c0_196], %221 {strides = array<i32>} : memref<1x16x16x128xf32, #tpu.memory_space<vmem>>, vector<1x8x16x128xf32>,
    %c2_i32_197 = arith.constant 2 : i32
    return
  }
  func.func @transform_0(%arg0: i32) -> (i32, i32, i32, i32) {
    %c0_i32 = arith.constant 0 : i32
    %c0_i32_0 = arith.constant 0 : i32
    %c0_i32_1 = arith.constant 0 : i32
    %c0_i32_2 = arith.constant 0 : i32
    return %arg0, %c0_i32, %c0_i32_0, %c0_i32_1 : i32, i32, i32, i32
  }
  func.func @transform_1(%arg0: i32) -> (i32, i32, i32) {
    %c0_i32 = arith.constant 0 : i32
    %c0_i32_0 = arith.constant 0 : i32
    %c0_i32_1 = arith.constant 0 : i32
    %c0_i32_2 = arith.constant 0 : i32
    return %c0_i32, %c0_i32_0, %c0_i32_1 : i32, i32, i32
  }
  func.func @transform_2(%arg0: i32) -> (i32, i32) {
    %c0_i32 = arith.constant 0 : i32
    %c0_i32_0 = arith.constant 0 : i32
    %c0_i32_1 = arith.constant 0 : i32
    return %c0_i32, %c0_i32_0 : i32, i32
  }
  func.func @transform_3(%arg0: i32) -> (i32, i32) {
    %c0_i32 = arith.constant 0 : i32
    %c0_i32_0 = arith.constant 0 : i32
    %c0_i32_1 = arith.constant 0 : i32
    return %c0_i32, %c0_i32_0 : i32, i32
  }
  func.func @transform_4(%arg0: i32) -> (i32, i32, i32) {
    %c0_i32 = arith.constant 0 : i32
    %c0_i32_0 = arith.constant 0 : i32
    %c0_i32_1 = arith.constant 0 : i32
    %c0_i32_2 = arith.constant 0 : i32
    return %c0_i32, %c0_i32_0, %c0_i32_1 : i32, i32, i32
  }
  func.func @transform_5(%arg0: i32) -> (i32, i32) {
    %c0_i32 = arith.constant 0 : i32
    %c0_i32_0 = arith.constant 0 : i32
    %c0_i32_1 = arith.constant 0 : i32
    return %c0_i32, %c0_i32_0 : i32, i32
  }
  func.func @transform_6(%arg0: i32) -> (i32, i32) {
    %c0_i32 = arith.constant 0 : i32
    %c0_i32_0 = arith.constant 0 : i32
    %c0_i32_1 = arith.constant 0 : i32
    return %c0_i32, %c0_i32_0 : i32, i32
  }
  func.func @transform_7(%arg0: i32) -> (i32, i32, i32, i32) {
    %c0_i32 = arith.constant 0 : i32
    %c0_i32_0 = arith.constant 0 : i32
    %c0_i32_1 = arith.constant 0 : i32
    %c0_i32_2 = arith.constant 0 : i32
    return %arg0, %c0_i32, %c0_i32_0, %c0_i32_1 : i32, i32, i32, i32
  }
}

</mosaic_0001>

<llo_original>
// kernel: tpu_custom_call.1
$region0: #{tpu_custom_call.1}
  #allocation0 [shape = 'u32[]', space=smem, size = 0x4, offset = 0x4, fixed_abs, tag = 'smem constant byte address 0x4 - core index']
  #allocation1 [shape = 'u32[144,128]{1,0:T(1,128)}', space=vmem, size = 0x12000, scoped, tag = 'internal scratch']
  #allocation2 [shape = 'bf16[18,24,128]{2,1,0:T(8,128)(2,1)}', space=vmem, size = 0x1b000, scoped, tag = 'scratch operand']
  #allocation3 [shape = 'bf16[18,24,128]{2,1,0:T(8,128)(2,1)}', space=vmem, size = 0x1b000, scoped, tag = 'scratch operand']
  %s0 = inlined_call_operand.hbm [shape: f32[2,16,16,128], index: 0, kind: input, shape index: {}]
  %s1 = inlined_call_operand.hbm [shape: bf16[3,384,128], index: 1, kind: input, shape index: {}]
  %s2 = inlined_call_operand.vmem [shape: f32[1,128], index: 2, kind: input, shape index: {}]
  %s3 = inlined_call_operand.vmem [shape: f32[1,128], index: 3, kind: input, shape index: {}]
  %s4 = inlined_call_operand.hbm [shape: bf16[3,384,128], index: 4, kind: input, shape index: {}]
  %s5 = inlined_call_operand.vmem [shape: f32[1,128], index: 5, kind: input, shape index: {}]
  %s6 = inlined_call_operand.vmem [shape: f32[1,128], index: 6, kind: input, shape index: {}]
  %s7 = inlined_call_operand.hbm [shape: f32[2,16,16,128], index: 7, kind: output, shape index: {}]
  %s8 = sld [smem:[#allocation0]]
  $region73: #{tpu_custom_call.1} parent=0
    _
  %s10 = ssub.s32 1, %s8
  %s11 = scalar_select 0, %s10, %s8
  $region1: #{tpu_custom_call.1} parent=0
    #allocation4 [shape = 'u8[262144]{0}', space=vmem, size = 0x40000, scoped, tag = 'input window, operand 0']
    #allocation5 [shape = 's32[2]{0}', space=sflag, size = 0x8, scoped, tag = 'scoped memory for tpu_custom_call.1']
    #allocation6 [shape = 's32[2]{0}', space=sflag, size = 0x8, scoped, tag = 'scoped memory for tpu_custom_call.1']
    #allocation7 [shape = 'u8[294912]{0}', space=vmem, size = 0x48000, scoped, tag = 'input window, operand 1, single buffered']
    #allocation8 [shape = 's32[1]{0}', space=sflag, size = 0x4, scoped, tag = 'scoped memory for tpu_custom_call.1']
    #allocation9 [shape = 'u8[294912]{0}', space=vmem, size = 0x48000, scoped, tag = 'input window, operand 4, single buffered']
    #allocation10 [shape = 'u8[262144]{0}', space=vmem, size = 0x40000, scoped, tag = 'output window, operand 0']
    %12 = vsyncpa [#allocation5], 0
    %s13 = scalar_lea.sflag [#allocation5], 1
    %14 = vsyncpa %s13, 0
    %15 = vsyncpa [#allocation8], 0
    %16 = vsyncpa [#allocation6], 0
    %s17 = scalar_lea.sflag [#allocation6], 1
    %18 = vsyncpa %s17, 0
    loop: start=0, step=1, limit=4
    $region2: #{tpu_custom_call.1} parent=1 // loop_pre_header
      _
    $region3: #{tpu_custom_call.1} parent=1 // loop_header
      %s20 = sphi 0, %s24
      %p21 = scmp.ge.s32.totalorder %s20, 4
      %s30 = sphi 0, %s32
      %s33 = sphi 0, %s30
      %s34 = sphi 0, %s33
      %s50 = sphi 0, %s34
      %s54 = sphi 0, %s54
      %s56 = sphi 0, %s54
      %s57 = sphi 0, %s56
      %s71 = sphi 0, %s57
      %s75 = sphi 0, %s75
      %s77 = sphi 0, %s75
      %s78 = sphi 0, %s77
      %s92 = sphi 0, %s78
      %s96 = sphi 0, %s96
      %s98 = sphi 0, %s96
      %s99 = sphi 0, %s98
      %s113 = sphi 0, %s99
      %s117 = sphi 0, %s117
      %s119 = sphi 0, %s117
      %s120 = sphi 0, %s119
      %s134 = sphi 0, %s120
      %s138 = sphi 0, %s138
      %s140 = sphi 0, %s138
      %s141 = sphi 0, %s140
      %s155 = sphi 0, %s141
      %s159 = sphi 0, %s159
      %s161 = sphi 0, %s159
      %s162 = sphi 0, %s161
      %s176 = sphi 0, %s162
      %s182 = sphi 0, %s184
      %s185 = sphi 0, %s182
      %s186 = sphi 0, %s185
      %s202 = sphi 0, %s186
    $region4: #{tpu_custom_call.1} parent=1 // loop_header_branch
      %23 = sbr.rel (%p21) target = $region8
    $region5: #{tpu_custom_call.1} parent=1 // loop_body
      %s25 = ssub.s32 %s20, 1
      %s26 = ssub.s32 %s20, 2
      %s27 = sadd.s32 %s20, 1
      %s28 = ssub.s32 %s20, %s27
      %p29 = scmp.eq.s32.totalorder %s28, 0
      %s31 = sadd.s32 %s30, 1
      %s32 = scalar_select %p29, %s30, %s31
      %p35 = pneg %p29
      %p36 = scmp.eq.s32.totalorder %s20, 1
      %p37 = por %p35, %p36
      %p38 = scmp.ne.s32.totalorder %s30, %s33
      %p39 = scmp.eq.s32.totalorder %s20, 0
      %p40 = por %p38, %p39
      %p41 = scmp.ne.s32.totalorder %s30, %s33
      %p42 = scmp.eq.s32.totalorder %s25, 1
      %p43 = por %p41, %p42
      %p44 = scmp.ne.s32.totalorder %s33, %s34
      %p45 = scmp.eq.s32.totalorder %s25, 0
      %p46 = por %p44, %p45
      %p47 = scmp.ne.s32.totalorder %s33, %s34
      %p48 = scmp.eq.s32.totalorder %s26, 1
      %p49 = por %p47, %p48
      %p51 = scmp.ne.s32.totalorder %s34, %s50
      %p52 = scmp.eq.s32.totalorder %s26, 0
      %p53 = por %p51, %p52
      %s55 = sadd.s32 %s54, 1
      %p58 = scmp.eq.s32.totalorder %s20, 1
      %p59 = scmp.ne.s32.totalorder %s54, %s56
      %p60 = scmp.eq.s32.totalorder %s20, 0
      %p61 = por %p59, %p60
      %p62 = scmp.ne.s32.totalorder %s54, %s56
      %p63 = scmp.eq.s32.totalorder %s25, 1
      %p64 = por %p62, %p63
      %p65 = scmp.ne.s32.totalorder %s56, %s57
      %p66 = scmp.eq.s32.totalorder %s25, 0
      %p67 = por %p65, %p66
      %p68 = scmp.ne.s32.totalorder %s56, %s57
      %p69 = scmp.eq.s32.totalorder %s26, 1
      %p70 = por %p68, %p69
      %p72 = scmp.ne.s32.totalorder %s57, %s71
      %p73 = scmp.eq.s32.totalorder %s26, 0
      %p74 = por %p72, %p73
      %s76 = sadd.s32 %s75, 1
      %p79 = scmp.eq.s32.totalorder %s20, 1
      %p80 = scmp.ne.s32.totalorder %s75, %s77
      %p81 = scmp.eq.s32.totalorder %s20, 0
      %p82 = por %p80, %p81
      %p83 = scmp.ne.s32.totalorder %s75, %s77
      %p84 = scmp.eq.s32.totalorder %s25, 1
      %p85 = por %p83, %p84
      %p86 = scmp.ne.s32.totalorder %s77, %s78
      %p87 = scmp.eq.s32.totalorder %s25, 0
      %p88 = por %p86, %p87
      %p89 = scmp.ne.s32.totalorder %s77, %s78
      %p90 = scmp.eq.s32.totalorder %s26, 1
      %p91 = por %p89, %p90
      %p93 = scmp.ne.s32.totalorder %s78, %s92
      %p94 = scmp.eq.s32.totalorder %s26, 0
      %p95 = por %p93, %p94
      %s97 = sadd.s32 %s96, 1
      %p100 = scmp.eq.s32.totalorder %s20, 1
      %p101 = scmp.ne.s32.totalorder %s96, %s98
      %p102 = scmp.eq.s32.totalorder %s20, 0
      %p103 = por %p101, %p102
      %p104 = scmp.ne.s32.totalorder %s96, %s98
      %p105 = scmp.eq.s32.totalorder %s25, 1
      %p106 = por %p104, %p105
      %p107 = scmp.ne.s32.totalorder %s98, %s99
      %p108 = scmp.eq.s32.totalorder %s25, 0
      %p109 = por %p107, %p108
      %p110 = scmp.ne.s32.totalorder %s98, %s99
      %p111 = scmp.eq.s32.totalorder %s26, 1
      %p112 = por %p110, %p111
      %p114 = scmp.ne.s32.totalorder %s99, %s113
      %p115 = scmp.eq.s32.totalorder %s26, 0
      %p116 = por %p114, %p115
      %s118 = sadd.s32 %s117, 1
      %p121 = scmp.eq.s32.totalorder %s20, 1
      %p122 = scmp.ne.s32.totalorder %s117, %s119
      %p123 = scmp.eq.s32.totalorder %s20, 0
      %p124 = por %p122, %p123
      %p125 = scmp.ne.s32.totalorder %s117, %s119
      %p126 = scmp.eq.s32.totalorder %s25, 1
      %p127 = por %p125, %p126
      %p128 = scmp.ne.s32.totalorder %s119, %s120
      %p129 = scmp.eq.s32.totalorder %s25, 0
      %p130 = por %p128, %p129
      %p131 = scmp.ne.s32.totalorder %s119, %s120
      %p132 = scmp.eq.s32.totalorder %s26, 1
      %p133 = por %p131, %p132
      %p135 = scmp.ne.s32.totalorder %s120, %s134
      %p136 = scmp.eq.s32.totalorder %s26, 0
      %p137 = por %p135, %p136
      %s139 = sadd.s32 %s138, 1
      %p142 = scmp.eq.s32.totalorder %s20, 1
      %p143 = scmp.ne.s32.totalorder %s138, %s140
      %p144 = scmp.eq.s32.totalorder %s20, 0
      %p145 = por %p143, %p144
      %p146 = scmp.ne.s32.totalorder %s138, %s140
      %p147 = scmp.eq.s32.totalorder %s25, 1
      %p148 = por %p146, %p147
      %p149 = scmp.ne.s32.totalorder %s140, %s141
      %p150 = scmp.eq.s32.totalorder %s25, 0
      %p151 = por %p149, %p150
      %p152 = scmp.ne.s32.totalorder %s140, %s141
      %p153 = scmp.eq.s32.totalorder %s26, 1
      %p154 = por %p152, %p153
      %p156 = scmp.ne.s32.totalorder %s141, %s155
      %p157 = scmp.eq.s32.totalorder %s26, 0
      %p158 = por %p156, %p157
      %s160 = sadd.s32 %s159, 1
      %p163 = scmp.eq.s32.totalorder %s20, 1
      %p164 = scmp.ne.s32.totalorder %s159, %s161
      %p165 = scmp.eq.s32.totalorder %s20, 0
      %p166 = por %p164, %p165
      %p167 = scmp.ne.s32.totalorder %s159, %s161
      %p168 = scmp.eq.s32.totalorder %s25, 1
      %p169 = por %p167, %p168
      %p170 = scmp.ne.s32.totalorder %s161, %s162
      %p171 = scmp.eq.s32.totalorder %s25, 0
      %p172 = por %p170, %p171
      %p173 = scmp.ne.s32.totalorder %s161, %s162
      %p174 = scmp.eq.s32.totalorder %s26, 1
      %p175 = por %p173, %p174
      %p177 = scmp.ne.s32.totalorder %s162, %s176
      %p178 = scmp.eq.s32.totalorder %s26, 0
      %p179 = por %p177, %p178
      %s180 = ssub.s32 %s20, %s27
      %p181 = scmp.eq.s32.totalorder %s180, 0
      %s183 = sadd.s32 %s182, 1
      %s184 = scalar_select %p181, %s182, %s183
      %p187 = pneg %p181
      %p188 = scmp.eq.s32.totalorder %s20, 1
      %p189 = por %p187, %p188
      %p190 = scmp.ne.s32.totalorder %s182, %s185
      %p191 = scmp.eq.s32.totalorder %s20, 0
      %p192 = por %p190, %p191
      %p193 = scmp.ne.s32.totalorder %s182, %s185
      %p194 = scmp.eq.s32.totalorder %s25, 1
      %p195 = por %p193, %p194
      %p196 = scmp.ne.s32.totalorder %s185, %s186
      %p197 = scmp.eq.s32.totalorder %s25, 0
      %p198 = por %p196, %p197
      %p199 = scmp.ne.s32.totalorder %s185, %s186
      %p200 = scmp.eq.s32.totalorder %s26, 1
      %p201 = por %p199, %p200
      %p203 = scmp.ne.s32.totalorder %s186, %s202
      %p204 = scmp.eq.s32.totalorder %s26, 0
      %p205 = por %p203, %p204
      %p206 = scmp.le.s32.totalorder 1, %s20
      %p207 = scmp.lt.s32.totalorder %s20, 3
      %p208 = pnand %p206, %p207
      %p209 = pneg %p208
      // Predicated region
      $region9: #{tpu_custom_call.1} parent=5 // pred_check
        _
      $region10: #{tpu_custom_call.1} parent=5 // pred_check_branch
        %211 = sbr.rel (%p208) target = $region12
      $region11: #{tpu_custom_call.1} parent=5 // pred_region
        %s212 = ssub.s32 %s20, 1
        // Predicated region
        $region13: #{tpu_custom_call.1} parent=11 // pred_check
          %p213 = pneg %p67
        $region14: #{tpu_custom_call.1} parent=11 // pred_check_branch
          %215 = sbr.rel (%p213) target = $region16
        $region15: #{tpu_custom_call.1} parent=11 // pred_region
          %s217 = ssub.s32 9216, 9216
          %218 = vsyncadd [#allocation8], %s217
          %s219 = sshll.u32 [#allocation7], 4
          %s220 = int_to_ptr.vmem [resolvable:$true] %s219
          %225 = dma.hbm_to_vmem [thread:$0]  %s1, 9216, %s220, [#allocation8], 64, 64, 4
        $region16: #{tpu_custom_call.1} parent=11 // pred_fallthru
          _
        // Predicated region
        $region17: #{tpu_custom_call.1} parent=11 // pred_check
          %p226 = pneg %p88
        $region18: #{tpu_custom_call.1} parent=11 // pred_check_branch
          %228 = sbr.rel (%p226) target = $region20
        $region19: #{tpu_custom_call.1} parent=11 // pred_region
          _
        $region20: #{tpu_custom_call.1} parent=11 // pred_fallthru
          _
        // Predicated region
        $region21: #{tpu_custom_call.1} parent=11 // pred_check
          %p229 = pneg %p109
        $region22: #{tpu_custom_call.1} parent=11 // pred_check_branch
          %231 = sbr.rel (%p229) target = $region24
        $region23: #{tpu_custom_call.1} parent=11 // pred_region
          _
        $region24: #{tpu_custom_call.1} parent=11 // pred_fallthru
          _
        // Predicated region
        $region25: #{tpu_custom_call.1} parent=11 // pred_check
          %p232 = pneg %p130
        $region26: #{tpu_custom_call.1} parent=11 // pred_check_branch
          %234 = sbr.rel (%p232) target = $region28
        $region27: #{tpu_custom_call.1} parent=11 // pred_region
          %s236 = ssub.s32 9216, 9216
          %237 = vsyncadd [#allocation8], %s236
          %s238 = sshll.u32 [#allocation9], 4
          %s239 = int_to_ptr.vmem [resolvable:$true] %s238
          %244 = dma.hbm_to_vmem [thread:$0]  %s4, 9216, %s239, [#allocation8], 64, 64, 4
        $region28: #{tpu_custom_call.1} parent=11 // pred_fallthru
          _
        // Predicated region
        $region29: #{tpu_custom_call.1} parent=11 // pred_check
          %p245 = pneg %p151
        $region30: #{tpu_custom_call.1} parent=11 // pred_check_branch
          %247 = sbr.rel (%p245) target = $region32
        $region31: #{tpu_custom_call.1} parent=11 // pred_region
          _
        $region32: #{tpu_custom_call.1} parent=11 // pred_fallthru
          _
        // Predicated region
        $region33: #{tpu_custom_call.1} parent=11 // pred_check
          %p248 = pneg %p172
        $region34: #{tpu_custom_call.1} parent=11 // pred_check_branch
          %250 = sbr.rel (%p248) target = $region36
        $region35: #{tpu_custom_call.1} parent=11 // pred_region
          _
        $region36: #{tpu_custom_call.1} parent=11 // pred_fallthru
          _
      $region12: #{tpu_custom_call.1} parent=5 // pred_fallthru
        _
      %p251 = scmp.lt.s32.totalorder %s20, 2
      // Predicated region
      $region37: #{tpu_custom_call.1} parent=5 // pred_check
        %p252 = pneg %p251
      $region38: #{tpu_custom_call.1} parent=5 // pred_check_branch
        %254 = sbr.rel (%p252) target = $region40
      $region39: #{tpu_custom_call.1} parent=5 // pred_region
        // Predicated region
        $region41: #{tpu_custom_call.1} parent=39 // pred_check
          %p255 = pneg %p40
        $region42: #{tpu_custom_call.1} parent=39 // pred_check_branch
          %257 = sbr.rel (%p255) target = $region44
        $region43: #{tpu_custom_call.1} parent=39 // pred_region
          %s258 = sand.u32 %s30, 1
          %s259 = scalar_lea.sflag [#allocation5], %s258
          %s260 = sand.u32 %s30, 1
          %s261 = smul.addr %s260, 256
          %s262 = scalar_lea.vmem [#allocation4], %s261
          %s264 = ssub.s32 4096, 4096
          %265 = vsyncadd %s259, %s264
          %s266 = smul.addr %s20, 32
          %s267 = smul.addr %s266, 128
          %s268 = scalar_lea.hbm %s0, %s267
          %s269 = sshll.u32 %s262, 4
          %s270 = int_to_ptr.vmem [resolvable:$true] %s269
          %275 = dma.hbm_to_vmem [thread:$0]  %s268, 4096, %s270, %s259, 128, 128, 8
        $region44: #{tpu_custom_call.1} parent=39 // pred_fallthru
          _
      $region40: #{tpu_custom_call.1} parent=5 // pred_fallthru
        _
      %p276 = scmp.le.s32.totalorder 1, %s20
      %p277 = scmp.lt.s32.totalorder %s20, 3
      %p278 = pnand %p276, %p277
      %p279 = pneg %p278
      // Predicated region
      $region45: #{tpu_custom_call.1} parent=5 // pred_check
        _
      $region46: #{tpu_custom_call.1} parent=5 // pred_check_branch
        %281 = sbr.rel (%p278) target = $region48
      $region47: #{tpu_custom_call.1} parent=5 // pred_region
        %s282 = ssub.s32 %s20, 1
        %s283 = sand.u32 %s33, 1
        %s284 = scalar_lea.sflag [#allocation5], %s283
        %s285 = sand.u32 %s33, 1
        %s286 = smul.addr %s285, 256
        %s287 = scalar_lea.vmem [#allocation4], %s286
        // Predicated region
        $region49: #{tpu_custom_call.1} parent=47 // pred_check
          %p288 = pneg %p46
        $region50: #{tpu_custom_call.1} parent=47 // pred_check_branch
          %290 = sbr.rel (%p288) target = $region52
        $region51: #{tpu_custom_call.1} parent=47 // pred_region
          %291 = dma.done %s284, 4096
        $region52: #{tpu_custom_call.1} parent=47 // pred_fallthru
          _
        // Predicated region
        $region53: #{tpu_custom_call.1} parent=47 // pred_check
          %p292 = pneg %p67
        $region54: #{tpu_custom_call.1} parent=47 // pred_check_branch
          %294 = sbr.rel (%p292) target = $region56
        $region55: #{tpu_custom_call.1} parent=47 // pred_region
          %295 = dma.done [#allocation8], 9216
        $region56: #{tpu_custom_call.1} parent=47 // pred_fallthru
          _
        // Predicated region
        $region57: #{tpu_custom_call.1} parent=47 // pred_check
          %p296 = pneg %p130
        $region58: #{tpu_custom_call.1} parent=47 // pred_check_branch
          %298 = sbr.rel (%p296) target = $region60
        $region59: #{tpu_custom_call.1} parent=47 // pred_region
          %299 = dma.done [#allocation8], 9216
        $region60: #{tpu_custom_call.1} parent=47 // pred_fallthru
          _
        %s300 = sand.u32 %s33, 1
        %s301 = scalar_lea.sflag [#allocation5], %s300
        %s302 = sand.u32 %s33, 1
        %s303 = smul.addr %s302, 256
        %s304 = scalar_lea.vmem [#allocation4], %s303
        %p305 = pneg %p46
        %p306 = pneg %p43
        %p307 = pneg %p67
        %p308 = pneg %p64
        %p309 = pneg %p88
        %p310 = pneg %p85
        %p311 = pneg %p109
        %p312 = pneg %p106
        %p313 = pneg %p130
        %p314 = pneg %p127
        %p315 = pneg %p151
        %p316 = pneg %p148
        %p317 = pneg %p172
        %p318 = pneg %p169
        %p319 = pneg %p198
        %p320 = pneg %p195
        %s321 = sand.u32 %s185, 1
        %s322 = scalar_lea.sflag [#allocation6], %s321
        %s323 = sand.u32 %s185, 1
        %s324 = smul.addr %s323, 256
        %s325 = scalar_lea.vmem [#allocation10], %s324
        %v327 = vld [vmem:[%s2] sm:$0x1]
        %v328 = vld [vmem:[%s3] sm:$0x1]
        %v329 = vld [vmem:[%s5] sm:$0x1]
        %v330 = vld [vmem:[%s6] sm:$0x1]
        %331 = vst [vmem:[#allocation2] sm:$0xf] 0
        %332 = vst [vmem:[#allocation2 + $0x4] sm:$0xf] 0
        %333 = vst [vmem:[#allocation2 + $0x8] sm:$0xf] 0
        %s334 = scalar_lea.vmem [#allocation2], 204
        %335 = vst [vmem:[%s334] sm:$0xf] 0
        %336 = vst [vmem:[%s334 + $0x4] sm:$0xf] 0
        %337 = vst [vmem:[%s334 + $0x8] sm:$0xf] 0
        %s338 = scalar_lea.vmem [#allocation2], 12
        %vm339 = vcmask 1040384
        %vm340 = vsmask.f32 256
        %vm341 = vmand %vm339, %vm340
        %v342 = vld [vmem:[%s338] sm:$0x1]
        %v343 = vsel %vm341, 0, %v342
        %344 = vst [vmem:[%s338] sm:$0x1] %v343
        %v345 = vld [vmem:[%s338 + $0xc] sm:$0x1]
        %v346 = vsel %vm341, 0, %v345
        %347 = vst [vmem:[%s338 + $0xc] sm:$0x1] %v346
        %v348 = vld [vmem:[%s338 + $0x18] sm:$0x1]
        %v349 = vsel %vm341, 0, %v348
        %350 = vst [vmem:[%s338 + $0x18] sm:$0x1] %v349
        %v351 = vld [vmem:[%s338 + $0x24] sm:$0x1]
        %v352 = vsel %vm341, 0, %v351
        %353 = vst [vmem:[%s338 + $0x24] sm:$0x1] %v352
        %v354 = vld [vmem:[%s338 + $0x30] sm:$0x1]
        %v355 = vsel %vm341, 0, %v354
        %356 = vst [vmem:[%s338 + $0x30] sm:$0x1] %v355
        %v357 = vld [vmem:[%s338 + $0x3c] sm:$0x1]
        %v358 = vsel %vm341, 0, %v357
        %359 = vst [vmem:[%s338 + $0x3c] sm:$0x1] %v358
        %v360 = vld [vmem:[%s338 + $0x48] sm:$0x1]
        %v361 = vsel %vm341, 0, %v360
        %362 = vst [vmem:[%s338 + $0x48] sm:$0x1] %v361
        %v363 = vld [vmem:[%s338 + $0x54] sm:$0x1]
        %v364 = vsel %vm341, 0, %v363
        %365 = vst [vmem:[%s338 + $0x54] sm:$0x1] %v364
        %v366 = vld [vmem:[%s338 + $0x60] sm:$0x1]
        %v367 = vsel %vm341, 0, %v366
        %368 = vst [vmem:[%s338 + $0x60] sm:$0x1] %v367
        %v369 = vld [vmem:[%s338 + $0x6c] sm:$0x1]
        %v370 = vsel %vm341, 0, %v369
        %371 = vst [vmem:[%s338 + $0x6c] sm:$0x1] %v370
        %v372 = vld [vmem:[%s338 + $0x78] sm:$0x1]
        %v373 = vsel %vm341, 0, %v372
        %374 = vst [vmem:[%s338 + $0x78] sm:$0x1] %v373
        %v375 = vld [vmem:[%s338 + $0x84] sm:$0x1]
        %v376 = vsel %vm341, 0, %v375
        %377 = vst [vmem:[%s338 + $0x84] sm:$0x1] %v376
        %v378 = vld [vmem:[%s338 + $0x90] sm:$0x1]
        %v379 = vsel %vm341, 0, %v378
        %380 = vst [vmem:[%s338 + $0x90] sm:$0x1] %v379
        %v381 = vld [vmem:[%s338 + $0x9c] sm:$0x1]
        %v382 = vsel %vm341, 0, %v381
        %383 = vst [vmem:[%s338 + $0x9c] sm:$0x1] %v382
        %v384 = vld [vmem:[%s338 + $0xa8] sm:$0x1]
        %v385 = vsel %vm341, 0, %v384
        %386 = vst [vmem:[%s338 + $0xa8] sm:$0x1] %v385
        %v387 = vld [vmem:[%s338 + $0xb4] sm:$0x1]
        %v388 = vsel %vm341, 0, %v387
        %389 = vst [vmem:[%s338 + $0xb4] sm:$0x1] %v388
        %vm390 = vsmask.f32 7938
        %vm391 = vmand %vm339, %vm390
        %v392 = vld [vmem:[%s338 + $0x8] sm:$0x1]
        %v393 = vsel %vm391, 0, %v392
        %394 = vst [vmem:[%s338 + $0x8] sm:$0x1] %v393
        %v395 = vld [vmem:[%s338 + $0x14] sm:$0x1]
        %v396 = vsel %vm391, 0, %v395
        %397 = vst [vmem:[%s338 + $0x14] sm:$0x1] %v396
        %v398 = vld [vmem:[%s338 + $0x20] sm:$0x1]
        %v399 = vsel %vm391, 0, %v398
        %400 = vst [vmem:[%s338 + $0x20] sm:$0x1] %v399
        %v401 = vld [vmem:[%s338 + $0x2c] sm:$0x1]
        %v402 = vsel %vm391, 0, %v401
        %403 = vst [vmem:[%s338 + $0x2c] sm:$0x1] %v402
        %v404 = vld [vmem:[%s338 + $0x38] sm:$0x1]
        %v405 = vsel %vm391, 0, %v404
        %406 = vst [vmem:[%s338 + $0x38] sm:$0x1] %v405
        %v407 = vld [vmem:[%s338 + $0x44] sm:$0x1]
        %v408 = vsel %vm391, 0, %v407
        %409 = vst [vmem:[%s338 + $0x44] sm:$0x1] %v408
        %v410 = vld [vmem:[%s338 + $0x50] sm:$0x1]
        %v411 = vsel %vm391, 0, %v410
        %412 = vst [vmem:[%s338 + $0x50] sm:$0x1] %v411
        %v413 = vld [vmem:[%s338 + $0x5c] sm:$0x1]
        %v414 = vsel %vm391, 0, %v413
        %415 = vst [vmem:[%s338 + $0x5c] sm:$0x1] %v414
        %v416 = vld [vmem:[%s338 + $0x68] sm:$0x1]
        %v417 = vsel %vm391, 0, %v416
        %418 = vst [vmem:[%s338 + $0x68] sm:$0x1] %v417
        %v419 = vld [vmem:[%s338 + $0x74] sm:$0x1]
        %v420 = vsel %vm391, 0, %v419
        %421 = vst [vmem:[%s338 + $0x74] sm:$0x1] %v420
        %v422 = vld [vmem:[%s338 + $0x80] sm:$0x1]
        %v423 = vsel %vm391, 0, %v422
        %424 = vst [vmem:[%s338 + $0x80] sm:$0x1] %v423
        %v425 = vld [vmem:[%s338 + $0x8c] sm:$0x1]
        %v426 = vsel %vm391, 0, %v425
        %427 = vst [vmem:[%s338 + $0x8c] sm:$0x1] %v426
        %v428 = vld [vmem:[%s338 + $0x98] sm:$0x1]
        %v429 = vsel %vm391, 0, %v428
        %430 = vst [vmem:[%s338 + $0x98] sm:$0x1] %v429
        %v431 = vld [vmem:[%s338 + $0xa4] sm:$0x1]
        %v432 = vsel %vm391, 0, %v431
        %433 = vst [vmem:[%s338 + $0xa4] sm:$0x1] %v432
        %v434 = vld [vmem:[%s338 + $0xb0] sm:$0x1]
        %v435 = vsel %vm391, 0, %v434
        %436 = vst [vmem:[%s338 + $0xb0] sm:$0x1] %v435
        %v437 = vld [vmem:[%s338 + $0xbc] sm:$0x1]
        %v438 = vsel %vm391, 0, %v437
        %439 = vst [vmem:[%s338 + $0xbc] sm:$0x1] %v438
        %440 = vst [vmem:[#allocation3] sm:$0xf] 0
        %441 = vst [vmem:[#allocation3 + $0x4] sm:$0xf] 0
        %442 = vst [vmem:[#allocation3 + $0x8] sm:$0xf] 0
        %s443 = scalar_lea.vmem [#allocation3], 204
        %444 = vst [vmem:[%s443] sm:$0xf] 0
        %445 = vst [vmem:[%s443 + $0x4] sm:$0xf] 0
        %446 = vst [vmem:[%s443 + $0x8] sm:$0xf] 0
        %s447 = scalar_lea.vmem [#allocation3], 12
        %v448 = vld [vmem:[%s447] sm:$0x1]
        %v449 = vsel %vm341, 0, %v448
        %450 = vst [vmem:[%s447] sm:$0x1] %v449
        %v451 = vld [vmem:[%s447 + $0xc] sm:$0x1]
        %v452 = vsel %vm341, 0, %v451
        %453 = vst [vmem:[%s447 + $0xc] sm:$0x1] %v452
        %v454 = vld [vmem:[%s447 + $0x18] sm:$0x1]
        %v455 = vsel %vm341, 0, %v454
        %456 = vst [vmem:[%s447 + $0x18] sm:$0x1] %v455
        %v457 = vld [vmem:[%s447 + $0x24] sm:$0x1]
        %v458 = vsel %vm341, 0, %v457
        %459 = vst [vmem:[%s447 + $0x24] sm:$0x1] %v458
        %v460 = vld [vmem:[%s447 + $0x30] sm:$0x1]
        %v461 = vsel %vm341, 0, %v460
        %462 = vst [vmem:[%s447 + $0x30] sm:$0x1] %v461
        %v463 = vld [vmem:[%s447 + $0x3c] sm:$0x1]
        %v464 = vsel %vm341, 0, %v463
        %465 = vst [vmem:[%s447 + $0x3c] sm:$0x1] %v464
        %v466 = vld [vmem:[%s447 + $0x48] sm:$0x1]
        %v467 = vsel %vm341, 0, %v466
        %468 = vst [vmem:[%s447 + $0x48] sm:$0x1] %v467
        %v469 = vld [vmem:[%s447 + $0x54] sm:$0x1]
        %v470 = vsel %vm341, 0, %v469
        %471 = vst [vmem:[%s447 + $0x54] sm:$0x1] %v470
        %v472 = vld [vmem:[%s447 + $0x60] sm:$0x1]
        %v473 = vsel %vm341, 0, %v472
        %474 = vst [vmem:[%s447 + $0x60] sm:$0x1] %v473
        %v475 = vld [vmem:[%s447 + $0x6c] sm:$0x1]
        %v476 = vsel %vm341, 0, %v475
        %477 = vst [vmem:[%s447 + $0x6c] sm:$0x1] %v476
        %v478 = vld [vmem:[%s447 + $0x78] sm:$0x1]
        %v479 = vsel %vm341, 0, %v478
        %480 = vst [vmem:[%s447 + $0x78] sm:$0x1] %v479
        %v481 = vld [vmem:[%s447 + $0x84] sm:$0x1]
        %v482 = vsel %vm341, 0, %v481
        %483 = vst [vmem:[%s447 + $0x84] sm:$0x1] %v482
        %v484 = vld [vmem:[%s447 + $0x90] sm:$0x1]
        %v485 = vsel %vm341, 0, %v484
        %486 = vst [vmem:[%s447 + $0x90] sm:$0x1] %v485
        %v487 = vld [vmem:[%s447 + $0x9c] sm:$0x1]
        %v488 = vsel %vm341, 0, %v487
        %489 = vst [vmem:[%s447 + $0x9c] sm:$0x1] %v488
        %v490 = vld [vmem:[%s447 + $0xa8] sm:$0x1]
        %v491 = vsel %vm341, 0, %v490
        %492 = vst [vmem:[%s447 + $0xa8] sm:$0x1] %v491
        %v493 = vld [vmem:[%s447 + $0xb4] sm:$0x1]
        %v494 = vsel %vm341, 0, %v493
        %495 = vst [vmem:[%s447 + $0xb4] sm:$0x1] %v494
        %v496 = vld [vmem:[%s447 + $0x8] sm:$0x1]
        %v497 = vsel %vm391, 0, %v496
        %498 = vst [vmem:[%s447 + $0x8] sm:$0x1] %v497
        %v499 = vld [vmem:[%s447 + $0x14] sm:$0x1]
        %v500 = vsel %vm391, 0, %v499
        %501 = vst [vmem:[%s447 + $0x14] sm:$0x1] %v500
        %v502 = vld [vmem:[%s447 + $0x20] sm:$0x1]
        %v503 = vsel %vm391, 0, %v502
        %504 = vst [vmem:[%s447 + $0x20] sm:$0x1] %v503
        %v505 = vld [vmem:[%s447 + $0x2c] sm:$0x1]
        %v506 = vsel %vm391, 0, %v505
        %507 = vst [vmem:[%s447 + $0x2c] sm:$0x1] %v506
        %v508 = vld [vmem:[%s447 + $0x38] sm:$0x1]
        %v509 = vsel %vm391, 0, %v508
        %510 = vst [vmem:[%s447 + $0x38] sm:$0x1] %v509
        %v511 = vld [vmem:[%s447 + $0x44] sm:$0x1]
        %v512 = vsel %vm391, 0, %v511
        %513 = vst [vmem:[%s447 + $0x44] sm:$0x1] %v512
        %v514 = vld [vmem:[%s447 + $0x50] sm:$0x1]
        %v515 = vsel %vm391, 0, %v514
        %516 = vst [vmem:[%s447 + $0x50] sm:$0x1] %v515
        %v517 = vld [vmem:[%s447 + $0x5c] sm:$0x1]
        %v518 = vsel %vm391, 0, %v517
        %519 = vst [vmem:[%s447 + $0x5c] sm:$0x1] %v518
        %v520 = vld [vmem:[%s447 + $0x68] sm:$0x1]
        %v521 = vsel %vm391, 0, %v520
        %522 = vst [vmem:[%s447 + $0x68] sm:$0x1] %v521
        %v523 = vld [vmem:[%s447 + $0x74] sm:$0x1]
        %v524 = vsel %vm391, 0, %v523
        %525 = vst [vmem:[%s447 + $0x74] sm:$0x1] %v524
        %v526 = vld [vmem:[%s447 + $0x80] sm:$0x1]
        %v527 = vsel %vm391, 0, %v526
        %528 = vst [vmem:[%s447 + $0x80] sm:$0x1] %v527
        %v529 = vld [vmem:[%s447 + $0x8c] sm:$0x1]
        %v530 = vsel %vm391, 0, %v529
        %531 = vst [vmem:[%s447 + $0x8c] sm:$0x1] %v530
        %v532 = vld [vmem:[%s447 + $0x98] sm:$0x1]
        %v533 = vsel %vm391, 0, %v532
        %534 = vst [vmem:[%s447 + $0x98] sm:$0x1] %v533
        %v535 = vld [vmem:[%s447 + $0xa4] sm:$0x1]
        %v536 = vsel %vm391, 0, %v535
        %537 = vst [vmem:[%s447 + $0xa4] sm:$0x1] %v536
        %v538 = vld [vmem:[%s447 + $0xb0] sm:$0x1]
        %v539 = vsel %vm391, 0, %v538
        %540 = vst [vmem:[%s447 + $0xb0] sm:$0x1] %v539
        %v541 = vld [vmem:[%s447 + $0xbc] sm:$0x1]
        %v542 = vsel %vm391, 0, %v541
        %543 = vst [vmem:[%s447 + $0xbc] sm:$0x1] %v542
        %v544 = vld [vmem:[%s287] sm:$0xff]
        %v545 = vld [vmem:[%s287 + $0x8] sm:$0xff]
        %v546 = vld [vmem:[%s287 + $0x10] sm:$0xff]
        %v547 = vld [vmem:[%s287 + $0x18] sm:$0xff]
        %v548 = vld [vmem:[%s287 + $0x20] sm:$0xff]
        %v549 = vld [vmem:[%s287 + $0x28] sm:$0xff]
        %v550 = vld [vmem:[%s287 + $0x30] sm:$0xff]
        %v551 = vld [vmem:[%s287 + $0x38] sm:$0xff]
        %v552 = vld [vmem:[%s287 + $0x40] sm:$0xff]
        %v553 = vld [vmem:[%s287 + $0x48] sm:$0xff]
        %v554 = vld [vmem:[%s287 + $0x50] sm:$0xff]
        %v555 = vld [vmem:[%s287 + $0x58] sm:$0xff]
        %v556 = vld [vmem:[%s287 + $0x60] sm:$0xff]
        %v557 = vld [vmem:[%s287 + $0x68] sm:$0xff]
        %v558 = vld [vmem:[%s287 + $0x70] sm:$0xff]
        %v559 = vld [vmem:[%s287 + $0x78] sm:$0xff]
        %v560 = vld [vmem:[%s287 + $0x80] sm:$0xff]
        %v561 = vld [vmem:[%s287 + $0x88] sm:$0xff]
        %v562 = vld [vmem:[%s287 + $0x90] sm:$0xff]
        %v563 = vld [vmem:[%s287 + $0x98] sm:$0xff]
        %v564 = vld [vmem:[%s287 + $0xa0] sm:$0xff]
        %v565 = vld [vmem:[%s287 + $0xa8] sm:$0xff]
        %v566 = vld [vmem:[%s287 + $0xb0] sm:$0xff]
        %v567 = vld [vmem:[%s287 + $0xb8] sm:$0xff]
        %v568 = vld [vmem:[%s287 + $0xc0] sm:$0xff]
        %v569 = vld [vmem:[%s287 + $0xc8] sm:$0xff]
        %v570 = vld [vmem:[%s287 + $0xd0] sm:$0xff]
        %v571 = vld [vmem:[%s287 + $0xd8] sm:$0xff]
        %v572 = vld [vmem:[%s287 + $0xe0] sm:$0xff]
        %v573 = vld [vmem:[%s287 + $0xe8] sm:$0xff]
        %v574 = vld [vmem:[%s287 + $0xf0] sm:$0xff]
        %v575 = vld [vmem:[%s287 + $0xf8] sm:$0xff]
        %v576 = vpack.c.bf16 %v545, %v544
        %v577 = vpack.c.bf16 %v547, %v546
        %v578 = vpack.c.bf16 %v549, %v548
        %v579 = vpack.c.bf16 %v551, %v550
        %v580 = vpack.c.bf16 %v553, %v552
        %v581 = vpack.c.bf16 %v555, %v554
        %v582 = vpack.c.bf16 %v557, %v556
        %v583 = vpack.c.bf16 %v559, %v558
        %v584 = vpack.c.bf16 %v561, %v560
        %v585 = vpack.c.bf16 %v563, %v562
        %v586 = vpack.c.bf16 %v565, %v564
        %v587 = vpack.c.bf16 %v567, %v566
        %v588 = vpack.c.bf16 %v569, %v568
        %v589 = vpack.c.bf16 %v571, %v570
        %v590 = vpack.c.bf16 %v573, %v572
        %v591 = vpack.c.bf16 %v575, %v574
        %v608 = vunpack.c.l.b16 %v576
        %v609 = vunpack.c.h.b16 %v576
        %v610 = vunpack.c.l.b16 %v577
        %v611 = vunpack.c.h.b16 %v577
        %v612 = vunpack.c.l.b16 %v578
        %v613 = vunpack.c.h.b16 %v578
        %v614 = vunpack.c.l.b16 %v579
        %v615 = vunpack.c.h.b16 %v579
        %v616 = vunpack.c.l.b16 %v580
        %v617 = vunpack.c.h.b16 %v580
        %v618 = vunpack.c.l.b16 %v581
        %v619 = vunpack.c.h.b16 %v581
        %v620 = vunpack.c.l.b16 %v582
        %v621 = vunpack.c.h.b16 %v582
        %v622 = vunpack.c.l.b16 %v583
        %v623 = vunpack.c.h.b16 %v583
        %v624 = vunpack.c.l.b16 %v584
        %v625 = vunpack.c.h.b16 %v584
        %v626 = vunpack.c.l.b16 %v585
        %v627 = vunpack.c.h.b16 %v585
        %v628 = vunpack.c.l.b16 %v586
        %v629 = vunpack.c.h.b16 %v586
        %v630 = vunpack.c.l.b16 %v587
        %v631 = vunpack.c.h.b16 %v587
        %v632 = vunpack.c.l.b16 %v588
        %v633 = vunpack.c.h.b16 %v588
        %v634 = vunpack.c.l.b16 %v589
        %v635 = vunpack.c.h.b16 %v589
        %v636 = vunpack.c.l.b16 %v590
        %v637 = vunpack.c.h.b16 %v590
        %v638 = vunpack.c.l.b16 %v591
        %v639 = vunpack.c.h.b16 %v591
        %v640 = vpack.c.b16 %v608, %v608
        %v641 = vpack.c.b16 %v609, %v609
        %v642 = vpack.c.b16 %v610, %v610
        %v643 = vpack.c.b16 %v611, %v611
        %v644 = vpack.c.b16 %v612, %v612
        %v645 = vpack.c.b16 %v613, %v613
        %v646 = vpack.c.b16 %v614, %v614
        %v647 = vpack.c.b16 %v615, %v615
        %v648 = vpack.c.b16 %v616, %v616
        %v649 = vpack.c.b16 %v617, %v617
        %v650 = vpack.c.b16 %v618, %v618
        %v651 = vpack.c.b16 %v619, %v619
        %v652 = vpack.c.b16 %v620, %v620
        %v653 = vpack.c.b16 %v621, %v621
        %v654 = vpack.c.b16 %v622, %v622
        %v655 = vpack.c.b16 %v623, %v623
        %v656 = vpack.c.b16 %v624, %v624
        %v657 = vpack.c.b16 %v625, %v625
        %v658 = vpack.c.b16 %v626, %v626
        %v659 = vpack.c.b16 %v627, %v627
        %v660 = vpack.c.b16 %v628, %v628
        %v661 = vpack.c.b16 %v629, %v629
        %v662 = vpack.c.b16 %v630, %v630
        %v663 = vpack.c.b16 %v631, %v631
        %v664 = vpack.c.b16 %v632, %v632
        %v665 = vpack.c.b16 %v633, %v633
        %v666 = vpack.c.b16 %v634, %v634
        %v667 = vpack.c.b16 %v635, %v635
        %v668 = vpack.c.b16 %v636, %v636
        %v669 = vpack.c.b16 %v637, %v637
        %v670 = vpack.c.b16 %v638, %v638
        %v671 = vpack.c.b16 %v639, %v639
        %vm672 = vsmask.f32 4368
        %vm673 = vmor %vm340, %vm672
        %v675 = vshrl.u32 %v640, 16
        %v677 = vrot.slane %v675, 7
        %v678 = vshll.u32 %v640, 16
        %v680 = vor.u32 %v677, %v678
        %v681 = vrot.slane %v677, 4
        %v683 = vshrl.u32 %v641, 16
        %v685 = vrot.slane %v683, 7
        %v686 = vshll.u32 %v641, 16
        %v688 = vor.u32 %v685, %v686
        %v689 = vsel %vm673, %v681, %v688
        %v690 = vrot.slane %v685, 4
        %v692 = vshrl.u32 %v642, 16
        %v694 = vrot.slane %v692, 7
        %v695 = vshll.u32 %v642, 16
        %v697 = vor.u32 %v694, %v695
        %v698 = vrot.slane %v694, 4
        %v700 = vshrl.u32 %v643, 16
        %v702 = vrot.slane %v700, 7
        %v703 = vshll.u32 %v643, 16
        %v705 = vor.u32 %v702, %v703
        %v706 = vsel %vm673, %v698, %v705
        %v707 = vrot.slane %v702, 4
        %v709 = vshrl.u32 %v644, 16
        %v711 = vrot.slane %v709, 7
        %v712 = vshll.u32 %v644, 16
        %v714 = vor.u32 %v711, %v712
        %v715 = vrot.slane %v711, 4
        %v717 = vshrl.u32 %v645, 16
        %v719 = vrot.slane %v717, 7
        %v720 = vshll.u32 %v645, 16
        %v722 = vor.u32 %v719, %v720
        %v723 = vsel %vm673, %v715, %v722
        %v724 = vrot.slane %v719, 4
        %v726 = vshrl.u32 %v646, 16
        %v728 = vrot.slane %v726, 7
        %v729 = vshll.u32 %v646, 16
        %v731 = vor.u32 %v728, %v729
        %v732 = vrot.slane %v728, 4
        %v734 = vshrl.u32 %v647, 16
        %v736 = vrot.slane %v734, 7
        %v737 = vshll.u32 %v647, 16
        %v739 = vor.u32 %v736, %v737
        %v740 = vsel %vm673, %v732, %v739
        %v741 = vrot.slane %v736, 4
        %v743 = vshrl.u32 %v648, 16
        %v745 = vrot.slane %v743, 7
        %v746 = vshll.u32 %v648, 16
        %v748 = vor.u32 %v745, %v746
        %v749 = vrot.slane %v745, 4
        %v751 = vshrl.u32 %v649, 16
        %v753 = vrot.slane %v751, 7
        %v754 = vshll.u32 %v649, 16
        %v756 = vor.u32 %v753, %v754
        %v757 = vsel %vm673, %v749, %v756
        %v758 = vrot.slane %v753, 4
        %v760 = vshrl.u32 %v650, 16
        %v762 = vrot.slane %v760, 7
        %v763 = vshll.u32 %v650, 16
        %v765 = vor.u32 %v762, %v763
        %v766 = vrot.slane %v762, 4
        %v768 = vshrl.u32 %v651, 16
        %v770 = vrot.slane %v768, 7
        %v771 = vshll.u32 %v651, 16
        %v773 = vor.u32 %v770, %v771
        %v774 = vsel %vm673, %v766, %v773
        %v775 = vrot.slane %v770, 4
        %v777 = vshrl.u32 %v652, 16
        %v779 = vrot.slane %v777, 7
        %v780 = vshll.u32 %v652, 16
        %v782 = vor.u32 %v779, %v780
        %v783 = vrot.slane %v779, 4
        %v785 = vshrl.u32 %v653, 16
        %v787 = vrot.slane %v785, 7
        %v788 = vshll.u32 %v653, 16
        %v790 = vor.u32 %v787, %v788
        %v791 = vsel %vm673, %v783, %v790
        %v792 = vrot.slane %v787, 4
        %v794 = vshrl.u32 %v654, 16
        %v796 = vrot.slane %v794, 7
        %v797 = vshll.u32 %v654, 16
        %v799 = vor.u32 %v796, %v797
        %v800 = vrot.slane %v796, 4
        %v802 = vshrl.u32 %v655, 16
        %v804 = vrot.slane %v802, 7
        %v805 = vshll.u32 %v655, 16
        %v807 = vor.u32 %v804, %v805
        %v808 = vsel %vm673, %v800, %v807
        %v809 = vrot.slane %v804, 4
        %v811 = vshrl.u32 %v656, 16
        %v813 = vrot.slane %v811, 7
        %v814 = vshll.u32 %v656, 16
        %v816 = vor.u32 %v813, %v814
        %v817 = vrot.slane %v813, 4
        %v819 = vshrl.u32 %v657, 16
        %v821 = vrot.slane %v819, 7
        %v822 = vshll.u32 %v657, 16
        %v824 = vor.u32 %v821, %v822
        %v825 = vsel %vm673, %v817, %v824
        %v826 = vrot.slane %v821, 4
        %v828 = vshrl.u32 %v658, 16
        %v830 = vrot.slane %v828, 7
        %v831 = vshll.u32 %v658, 16
        %v833 = vor.u32 %v830, %v831
        %v834 = vrot.slane %v830, 4
        %v836 = vshrl.u32 %v659, 16
        %v838 = vrot.slane %v836, 7
        %v839 = vshll.u32 %v659, 16
        %v841 = vor.u32 %v838, %v839
        %v842 = vsel %vm673, %v834, %v841
        %v843 = vrot.slane %v838, 4
        %v845 = vshrl.u32 %v660, 16
        %v847 = vrot.slane %v845, 7
        %v848 = vshll.u32 %v660, 16
        %v850 = vor.u32 %v847, %v848
        %v851 = vrot.slane %v847, 4
        %v853 = vshrl.u32 %v661, 16
        %v855 = vrot.slane %v853, 7
        %v856 = vshll.u32 %v661, 16
        %v858 = vor.u32 %v855, %v856
        %v859 = vsel %vm673, %v851, %v858
        %v860 = vrot.slane %v855, 4
        %v862 = vshrl.u32 %v662, 16
        %v864 = vrot.slane %v862, 7
        %v865 = vshll.u32 %v662, 16
        %v867 = vor.u32 %v864, %v865
        %v868 = vrot.slane %v864, 4
        %v870 = vshrl.u32 %v663, 16
        %v872 = vrot.slane %v870, 7
        %v873 = vshll.u32 %v663, 16
        %v875 = vor.u32 %v872, %v873
        %v876 = vsel %vm673, %v868, %v875
        %v877 = vrot.slane %v872, 4
        %v879 = vshrl.u32 %v664, 16
        %v881 = vrot.slane %v879, 7
        %v882 = vshll.u32 %v664, 16
        %v884 = vor.u32 %v881, %v882
        %v885 = vrot.slane %v881, 4
        %v887 = vshrl.u32 %v665, 16
        %v889 = vrot.slane %v887, 7
        %v890 = vshll.u32 %v665, 16
        %v892 = vor.u32 %v889, %v890
        %v893 = vsel %vm673, %v885, %v892
        %v894 = vrot.slane %v889, 4
        %v896 = vshrl.u32 %v666, 16
        %v898 = vrot.slane %v896, 7
        %v899 = vshll.u32 %v666, 16
        %v901 = vor.u32 %v898, %v899
        %v902 = vrot.slane %v898, 4
        %v904 = vshrl.u32 %v667, 16
        %v906 = vrot.slane %v904, 7
        %v907 = vshll.u32 %v667, 16
        %v909 = vor.u32 %v906, %v907
        %v910 = vsel %vm673, %v902, %v909
        %v911 = vrot.slane %v906, 4
        %v913 = vshrl.u32 %v668, 16
        %v915 = vrot.slane %v913, 7
        %v916 = vshll.u32 %v668, 16
        %v918 = vor.u32 %v915, %v916
        %v919 = vrot.slane %v915, 4
        %v921 = vshrl.u32 %v669, 16
        %v923 = vrot.slane %v921, 7
        %v924 = vshll.u32 %v669, 16
        %v926 = vor.u32 %v923, %v924
        %v927 = vsel %vm673, %v919, %v926
        %v928 = vrot.slane %v923, 4
        %v930 = vshrl.u32 %v670, 16
        %v932 = vrot.slane %v930, 7
        %v933 = vshll.u32 %v670, 16
        %v935 = vor.u32 %v932, %v933
        %v936 = vrot.slane %v932, 4
        %v938 = vshrl.u32 %v671, 16
        %v940 = vrot.slane %v938, 7
        %v941 = vshll.u32 %v671, 16
        %v943 = vor.u32 %v940, %v941
        %v944 = vsel %vm673, %v936, %v943
        %v945 = vrot.slane %v940, 4
        %vm994 = vcmask 1043456
        %vm995 = vmand %vm994, %vm390
        %v996 = vld [vmem:[%s338] sm:$0xf]
        %v997 = vsel %vm995, %v680, %v996
        %998 = vst [vmem:[%s338] sm:$0xf] %v997
        %999 = vst [vmem:[%s338 + $0x4] sm:$0xf] %v689
        %v1000 = vld [vmem:[%s338 + $0x8] sm:$0x1]
        %v1001 = vsel %vm341, %v690, %v1000
        %1002 = vst [vmem:[%s338 + $0x8] sm:$0x1] %v1001
        %v1003 = vld [vmem:[%s338 + $0xc] sm:$0xf]
        %v1004 = vsel %vm995, %v697, %v1003
        %1005 = vst [vmem:[%s338 + $0xc] sm:$0xf] %v1004
        %1006 = vst [vmem:[%s338 + $0x10] sm:$0xf] %v706
        %v1007 = vld [vmem:[%s338 + $0x14] sm:$0x1]
        %v1008 = vsel %vm341, %v707, %v1007
        %1009 = vst [vmem:[%s338 + $0x14] sm:$0x1] %v1008
        %v1010 = vld [vmem:[%s338 + $0x18] sm:$0xf]
        %v1011 = vsel %vm995, %v714, %v1010
        %1012 = vst [vmem:[%s338 + $0x18] sm:$0xf] %v1011
        %1013 = vst [vmem:[%s338 + $0x1c] sm:$0xf] %v723
        %v1014 = vld [vmem:[%s338 + $0x20] sm:$0x1]
        %v1015 = vsel %vm341, %v724, %v1014
        %1016 = vst [vmem:[%s338 + $0x20] sm:$0x1] %v1015
        %v1017 = vld [vmem:[%s338 + $0x24] sm:$0xf]
        %v1018 = vsel %vm995, %v731, %v1017
        %1019 = vst [vmem:[%s338 + $0x24] sm:$0xf] %v1018
        %1020 = vst [vmem:[%s338 + $0x28] sm:$0xf] %v740
        %v1021 = vld [vmem:[%s338 + $0x2c] sm:$0x1]
        %v1022 = vsel %vm341, %v741, %v1021
        %1023 = vst [vmem:[%s338 + $0x2c] sm:$0x1] %v1022
        %v1024 = vld [vmem:[%s338 + $0x30] sm:$0xf]
        %v1025 = vsel %vm995, %v748, %v1024
        %1026 = vst [vmem:[%s338 + $0x30] sm:$0xf] %v1025
        %1027 = vst [vmem:[%s338 + $0x34] sm:$0xf] %v757
        %v1028 = vld [vmem:[%s338 + $0x38] sm:$0x1]
        %v1029 = vsel %vm341, %v758, %v1028
        %1030 = vst [vmem:[%s338 + $0x38] sm:$0x1] %v1029
        %v1031 = vld [vmem:[%s338 + $0x3c] sm:$0xf]
        %v1032 = vsel %vm995, %v765, %v1031
        %1033 = vst [vmem:[%s338 + $0x3c] sm:$0xf] %v1032
        %1034 = vst [vmem:[%s338 + $0x40] sm:$0xf] %v774
        %v1035 = vld [vmem:[%s338 + $0x44] sm:$0x1]
        %v1036 = vsel %vm341, %v775, %v1035
        %1037 = vst [vmem:[%s338 + $0x44] sm:$0x1] %v1036
        %v1038 = vld [vmem:[%s338 + $0x48] sm:$0xf]
        %v1039 = vsel %vm995, %v782, %v1038
        %1040 = vst [vmem:[%s338 + $0x48] sm:$0xf] %v1039
        %1041 = vst [vmem:[%s338 + $0x4c] sm:$0xf] %v791
        %v1042 = vld [vmem:[%s338 + $0x50] sm:$0x1]
        %v1043 = vsel %vm341, %v792, %v1042
        %1044 = vst [vmem:[%s338 + $0x50] sm:$0x1] %v1043
        %v1045 = vld [vmem:[%s338 + $0x54] sm:$0xf]
        %v1046 = vsel %vm995, %v799, %v1045
        %1047 = vst [vmem:[%s338 + $0x54] sm:$0xf] %v1046
        %1048 = vst [vmem:[%s338 + $0x58] sm:$0xf] %v808
        %v1049 = vld [vmem:[%s338 + $0x5c] sm:$0x1]
        %v1050 = vsel %vm341, %v809, %v1049
        %1051 = vst [vmem:[%s338 + $0x5c] sm:$0x1] %v1050
        %v1052 = vld [vmem:[%s338 + $0x60] sm:$0xf]
        %v1053 = vsel %vm995, %v816, %v1052
        %1054 = vst [vmem:[%s338 + $0x60] sm:$0xf] %v1053
        %1055 = vst [vmem:[%s338 + $0x64] sm:$0xf] %v825
        %v1056 = vld [vmem:[%s338 + $0x68] sm:$0x1]
        %v1057 = vsel %vm341, %v826, %v1056
        %1058 = vst [vmem:[%s338 + $0x68] sm:$0x1] %v1057
        %v1059 = vld [vmem:[%s338 + $0x6c] sm:$0xf]
        %v1060 = vsel %vm995, %v833, %v1059
        %1061 = vst [vmem:[%s338 + $0x6c] sm:$0xf] %v1060
        %1062 = vst [vmem:[%s338 + $0x70] sm:$0xf] %v842
        %v1063 = vld [vmem:[%s338 + $0x74] sm:$0x1]
        %v1064 = vsel %vm341, %v843, %v1063
        %1065 = vst [vmem:[%s338 + $0x74] sm:$0x1] %v1064
        %v1066 = vld [vmem:[%s338 + $0x78] sm:$0xf]
        %v1067 = vsel %vm995, %v850, %v1066
        %1068 = vst [vmem:[%s338 + $0x78] sm:$0xf] %v1067
        %1069 = vst [vmem:[%s338 + $0x7c] sm:$0xf] %v859
        %v1070 = vld [vmem:[%s338 + $0x80] sm:$0x1]
        %v1071 = vsel %vm341, %v860, %v1070
        %1072 = vst [vmem:[%s338 + $0x80] sm:$0x1] %v1071
        %v1073 = vld [vmem:[%s338 + $0x84] sm:$0xf]
        %v1074 = vsel %vm995, %v867, %v1073
        %1075 = vst [vmem:[%s338 + $0x84] sm:$0xf] %v1074
        %1076 = vst [vmem:[%s338 + $0x88] sm:$0xf] %v876
        %v1077 = vld [vmem:[%s338 + $0x8c] sm:$0x1]
        %v1078 = vsel %vm341, %v877, %v1077
        %1079 = vst [vmem:[%s338 + $0x8c] sm:$0x1] %v1078
        %v1080 = vld [vmem:[%s338 + $0x90] sm:$0xf]
        %v1081 = vsel %vm995, %v884, %v1080
        %1082 = vst [vmem:[%s338 + $0x90] sm:$0xf] %v1081
        %1083 = vst [vmem:[%s338 + $0x94] sm:$0xf] %v893
        %v1084 = vld [vmem:[%s338 + $0x98] sm:$0x1]
        %v1085 = vsel %vm341, %v894, %v1084
        %1086 = vst [vmem:[%s338 + $0x98] sm:$0x1] %v1085
        %v1087 = vld [vmem:[%s338 + $0x9c] sm:$0xf]
        %v1088 = vsel %vm995, %v901, %v1087
        %1089 = vst [vmem:[%s338 + $0x9c] sm:$0xf] %v1088
        %1090 = vst [vmem:[%s338 + $0xa0] sm:$0xf] %v910
        %v1091 = vld [vmem:[%s338 + $0xa4] sm:$0x1]
        %v1092 = vsel %vm341, %v911, %v1091
        %1093 = vst [vmem:[%s338 + $0xa4] sm:$0x1] %v1092
        %v1094 = vld [vmem:[%s338 + $0xa8] sm:$0xf]
        %v1095 = vsel %vm995, %v918, %v1094
        %1096 = vst [vmem:[%s338 + $0xa8] sm:$0xf] %v1095
        %1097 = vst [vmem:[%s338 + $0xac] sm:$0xf] %v927
        %v1098 = vld [vmem:[%s338 + $0xb0] sm:$0x1]
        %v1099 = vsel %vm341, %v928, %v1098
        %1100 = vst [vmem:[%s338 + $0xb0] sm:$0x1] %v1099
        %v1101 = vld [vmem:[%s338 + $0xb4] sm:$0xf]
        %v1102 = vsel %vm995, %v935, %v1101
        %1103 = vst [vmem:[%s338 + $0xb4] sm:$0xf] %v1102
        %1104 = vst [vmem:[%s338 + $0xb8] sm:$0xf] %v944
        %v1105 = vld [vmem:[%s338 + $0xbc] sm:$0x1]
        %v1106 = vsel %vm341, %v945, %v1105
        %1107 = vst [vmem:[%s338 + $0xbc] sm:$0x1] %v1106
        %v1108 = vld [vmem:[#allocation2] sm:$0xf]
        %v1109 = vld [vmem:[#allocation2 + $0x4] sm:$0xf]
        %v1110 = vld [vmem:[#allocation2 + $0xc] sm:$0xf]
        %v1111 = vld [vmem:[#allocation2 + $0x10] sm:$0xf]
        %v1112 = vld [vmem:[#allocation2 + $0x18] sm:$0xf]
        %v1113 = vld [vmem:[#allocation2 + $0x1c] sm:$0xf]
        %v1114 = vld [vmem:[#allocation2 + $0x24] sm:$0xf]
        %v1115 = vld [vmem:[#allocation2 + $0x28] sm:$0xf]
        %v1116 = vld [vmem:[#allocation2 + $0x30] sm:$0xf]
        %v1117 = vld [vmem:[#allocation2 + $0x34] sm:$0xf]
        %v1118 = vld [vmem:[#allocation2 + $0x3c] sm:$0xf]
        %v1119 = vld [vmem:[#allocation2 + $0x40] sm:$0xf]
        %v1120 = vld [vmem:[#allocation2 + $0x48] sm:$0xf]
        %v1121 = vld [vmem:[#allocation2 + $0x4c] sm:$0xf]
        %v1122 = vld [vmem:[#allocation2 + $0x54] sm:$0xf]
        %v1123 = vld [vmem:[#allocation2 + $0x58] sm:$0xf]
        %v1124 = vld [vmem:[#allocation2 + $0x8] sm:$0x1]
        %v1125 = vld [vmem:[#allocation2 + $0x14] sm:$0x1]
        %v1126 = vld [vmem:[#allocation2 + $0x20] sm:$0x1]
        %v1127 = vld [vmem:[#allocation2 + $0x2c] sm:$0x1]
        %v1128 = vld [vmem:[#allocation2 + $0x38] sm:$0x1]
        %v1129 = vld [vmem:[#allocation2 + $0x44] sm:$0x1]
        %v1130 = vld [vmem:[#allocation2 + $0x50] sm:$0x1]
        %v1131 = vld [vmem:[#allocation2 + $0x5c] sm:$0x1]
        %v1132 = vld [vmem:[#allocation2] sm:$0xe]
        %v1133 = vld [vmem:[#allocation2 + $0xc] sm:$0xe]
        %v1134 = vld [vmem:[#allocation2 + $0x18] sm:$0xe]
        %v1135 = vld [vmem:[#allocation2 + $0x24] sm:$0xe]
        %v1136 = vld [vmem:[#allocation2 + $0x30] sm:$0xe]
        %v1137 = vld [vmem:[#allocation2 + $0x3c] sm:$0xe]
        %v1138 = vld [vmem:[#allocation2 + $0x48] sm:$0xe]
        %v1139 = vld [vmem:[#allocation2 + $0x54] sm:$0xe]
        %v1156 = vunpack.c.l.b16 %v1108
        %v1157 = vunpack.c.l.b16 %v1109
        %v1158 = vunpack.c.l.b16 %v1110
        %v1159 = vunpack.c.l.b16 %v1111
        %v1160 = vunpack.c.l.b16 %v1112
        %v1161 = vunpack.c.l.b16 %v1113
        %v1162 = vunpack.c.l.b16 %v1114
        %v1163 = vunpack.c.l.b16 %v1115
        %v1164 = vunpack.c.l.b16 %v1116
        %v1165 = vunpack.c.l.b16 %v1117
        %v1166 = vunpack.c.l.b16 %v1118
        %v1167 = vunpack.c.l.b16 %v1119
        %v1168 = vunpack.c.l.b16 %v1120
        %v1169 = vunpack.c.l.b16 %v1121
        %v1170 = vunpack.c.l.b16 %v1122
        %v1171 = vunpack.c.l.b16 %v1123
        %v1172 = vpack.c.b16 %v1157, %v1156
        %v1173 = vpack.c.b16 %v1159, %v1158
        %v1174 = vpack.c.b16 %v1161, %v1160
        %v1175 = vpack.c.b16 %v1163, %v1162
        %v1176 = vpack.c.b16 %v1165, %v1164
        %v1177 = vpack.c.b16 %v1167, %v1166
        %v1178 = vpack.c.b16 %v1169, %v1168
        %v1179 = vpack.c.b16 %v1171, %v1170
        %v1196 = vunpack.c.l.b16 %v1124
        %v1197 = vunpack.c.l.b16 %v1125
        %v1198 = vunpack.c.l.b16 %v1126
        %v1199 = vunpack.c.l.b16 %v1127
        %v1200 = vunpack.c.l.b16 %v1128
        %v1201 = vunpack.c.l.b16 %v1129
        %v1202 = vunpack.c.l.b16 %v1130
        %v1203 = vunpack.c.l.b16 %v1131
        %v1204 = vpack.c.b16 %v1196, %v1196
        %v1205 = vpack.c.b16 %v1197, %v1197
        %v1206 = vpack.c.b16 %v1198, %v1198
        %v1207 = vpack.c.b16 %v1199, %v1199
        %v1208 = vpack.c.b16 %v1200, %v1200
        %v1209 = vpack.c.b16 %v1201, %v1201
        %v1210 = vpack.c.b16 %v1202, %v1202
        %v1211 = vpack.c.b16 %v1203, %v1203
        %vm1212 = vsmask.f32 7424
        %v1214 = vshrl.u32 %v1172, 16
        %v1216 = vshll.u32 %v1172, 16
        %v1218 = vrot.slane %v1216, 1
        %v1219 = vor.u32 %v1214, %v1218
        %v1221 = vshll.u32 %v1204, 16
        %v1223 = vrot.slane %v1221, 1
        %v1224 = vsel %vm1212, %v1219, %v1223
        %v1226 = vshrl.u32 %v1173, 16
        %v1228 = vshll.u32 %v1173, 16
        %v1230 = vrot.slane %v1228, 1
        %v1231 = vor.u32 %v1226, %v1230
        %v1233 = vshll.u32 %v1205, 16
        %v1235 = vrot.slane %v1233, 1
        %v1236 = vsel %vm1212, %v1231, %v1235
        %v1238 = vshrl.u32 %v1174, 16
        %v1240 = vshll.u32 %v1174, 16
        %v1242 = vrot.slane %v1240, 1
        %v1243 = vor.u32 %v1238, %v1242
        %v1245 = vshll.u32 %v1206, 16
        %v1247 = vrot.slane %v1245, 1
        %v1248 = vsel %vm1212, %v1243, %v1247
        %v1250 = vshrl.u32 %v1175, 16
        %v1252 = vshll.u32 %v1175, 16
        %v1254 = vrot.slane %v1252, 1
        %v1255 = vor.u32 %v1250, %v1254
        %v1257 = vshll.u32 %v1207, 16
        %v1259 = vrot.slane %v1257, 1
        %v1260 = vsel %vm1212, %v1255, %v1259
        %v1262 = vshrl.u32 %v1176, 16
        %v1264 = vshll.u32 %v1176, 16
        %v1266 = vrot.slane %v1264, 1
        %v1267 = vor.u32 %v1262, %v1266
        %v1269 = vshll.u32 %v1208, 16
        %v1271 = vrot.slane %v1269, 1
        %v1272 = vsel %vm1212, %v1267, %v1271
        %v1274 = vshrl.u32 %v1177, 16
        %v1276 = vshll.u32 %v1177, 16
        %v1278 = vrot.slane %v1276, 1
        %v1279 = vor.u32 %v1274, %v1278
        %v1281 = vshll.u32 %v1209, 16
        %v1283 = vrot.slane %v1281, 1
        %v1284 = vsel %vm1212, %v1279, %v1283
        %v1286 = vshrl.u32 %v1178, 16
        %v1288 = vshll.u32 %v1178, 16
        %v1290 = vrot.slane %v1288, 1
        %v1291 = vor.u32 %v1286, %v1290
        %v1293 = vshll.u32 %v1210, 16
        %v1295 = vrot.slane %v1293, 1
        %v1296 = vsel %vm1212, %v1291, %v1295
        %v1298 = vshrl.u32 %v1179, 16
        %v1300 = vshll.u32 %v1179, 16
        %v1302 = vrot.slane %v1300, 1
        %v1303 = vor.u32 %v1298, %v1302
        %v1305 = vshll.u32 %v1211, 16
        %v1307 = vrot.slane %v1305, 1
        %v1308 = vsel %vm1212, %v1303, %v1307
        %v1325 = vunpack.c.l.b16 %v1132
        %v1326 = vunpack.c.l.b16 %v1133
        %v1327 = vunpack.c.l.b16 %v1134
        %v1328 = vunpack.c.l.b16 %v1135
        %v1329 = vunpack.c.l.b16 %v1136
        %v1330 = vunpack.c.l.b16 %v1137
        %v1331 = vunpack.c.l.b16 %v1138
        %v1332 = vunpack.c.l.b16 %v1139
        %v1333 = vpack.c.b16 %v1157, %v1325
        %v1334 = vpack.c.b16 %v1159, %v1326
        %v1335 = vpack.c.b16 %v1161, %v1327
        %v1336 = vpack.c.b16 %v1163, %v1328
        %v1337 = vpack.c.b16 %v1165, %v1329
        %v1338 = vpack.c.b16 %v1167, %v1330
        %v1339 = vpack.c.b16 %v1169, %v1331
        %v1340 = vpack.c.b16 %v1171, %v1332
        %vm1341 = vcmask 1046528
        %v1342 = vrot.slane %v1333, 1
        %v1343 = vrot.slane %v1204, 1
        %v1344 = vsel %vm1341, %v1342, %v1343
        %v1345 = vrot.slane %v1334, 1
        %v1346 = vrot.slane %v1205, 1
        %v1347 = vsel %vm1341, %v1345, %v1346
        %v1348 = vrot.slane %v1335, 1
        %v1349 = vrot.slane %v1206, 1
        %v1350 = vsel %vm1341, %v1348, %v1349
        %v1351 = vrot.slane %v1336, 1
        %v1352 = vrot.slane %v1207, 1
        %v1353 = vsel %vm1341, %v1351, %v1352
        %v1354 = vrot.slane %v1337, 1
        %v1355 = vrot.slane %v1208, 1
        %v1356 = vsel %vm1341, %v1354, %v1355
        %v1357 = vrot.slane %v1338, 1
        %v1358 = vrot.slane %v1209, 1
        %v1359 = vsel %vm1341, %v1357, %v1358
        %v1360 = vrot.slane %v1339, 1
        %v1361 = vrot.slane %v1210, 1
        %v1362 = vsel %vm1341, %v1360, %v1361
        %v1363 = vrot.slane %v1340, 1
        %v1364 = vrot.slane %v1211, 1
        %v1365 = vsel %vm1341, %v1363, %v1364
        %v1374 = vld [vmem:[#allocation7] sm:$0xf]
        %v1375 = vld [vmem:[#allocation7 + $0x4] sm:$0xf]
        %v1376 = vld [vmem:[#allocation7 + $0x8] sm:$0xf]
        %v1377 = vld [vmem:[#allocation7 + $0xc] sm:$0xf]
        %v1378 = vld [vmem:[#allocation7 + $0x10] sm:$0xf]
        %v1379 = vld [vmem:[#allocation7 + $0x14] sm:$0xf]
        %v1380 = vld [vmem:[#allocation7 + $0x18] sm:$0xf]
        %v1381 = vld [vmem:[#allocation7 + $0x1c] sm:$0xf]
        %v1382 = vld [vmem:[#allocation7 + $0x20] sm:$0xf]
        %v1383 = vld [vmem:[#allocation7 + $0x24] sm:$0xf]
        %v1384 = vld [vmem:[#allocation7 + $0x28] sm:$0xf]
        %v1385 = vld [vmem:[#allocation7 + $0x2c] sm:$0xf]
        %v1386 = vld [vmem:[#allocation7 + $0x30] sm:$0xf]
        %v1387 = vld [vmem:[#allocation7 + $0x34] sm:$0xf]
        %v1388 = vld [vmem:[#allocation7 + $0x38] sm:$0xf]
        %v1389 = vld [vmem:[#allocation7 + $0x3c] sm:$0xf]
        %v1390 = vld [vmem:[#allocation7 + $0x40] sm:$0xf]
        %v1391 = vld [vmem:[#allocation7 + $0x44] sm:$0xf]
        %v1392 = vld [vmem:[#allocation7 + $0x48] sm:$0xf]
        %v1393 = vld [vmem:[#allocation7 + $0x4c] sm:$0xf]
        %v1394 = vld [vmem:[#allocation7 + $0x50] sm:$0xf]
        %v1395 = vld [vmem:[#allocation7 + $0x54] sm:$0xf]
        %v1396 = vld [vmem:[#allocation7 + $0x58] sm:$0xf]
        %v1397 = vld [vmem:[#allocation7 + $0x5c] sm:$0xf]
        %v1398 = vld [vmem:[#allocation7 + $0x60] sm:$0xf]
        %v1399 = vld [vmem:[#allocation7 + $0x64] sm:$0xf]
        %v1400 = vld [vmem:[#allocation7 + $0x68] sm:$0xf]
        %v1401 = vld [vmem:[#allocation7 + $0x6c] sm:$0xf]
        %v1402 = vld [vmem:[#allocation7 + $0x70] sm:$0xf]
        %v1403 = vld [vmem:[#allocation7 + $0x74] sm:$0xf]
        %v1404 = vld [vmem:[#allocation7 + $0x78] sm:$0xf]
        %v1405 = vld [vmem:[#allocation7 + $0x7c] sm:$0xf]
        %v1406 = vld [vmem:[#allocation7 + $0x80] sm:$0xf]
        %v1407 = vld [vmem:[#allocation7 + $0x84] sm:$0xf]
        %v1408 = vld [vmem:[#allocation7 + $0x88] sm:$0xf]
        %v1409 = vld [vmem:[#allocation7 + $0x8c] sm:$0xf]
        %v1410 = vld [vmem:[#allocation7 + $0x90] sm:$0xf]
        %v1411 = vld [vmem:[#allocation7 + $0x94] sm:$0xf]
        %v1412 = vld [vmem:[#allocation7 + $0x98] sm:$0xf]
        %v1413 = vld [vmem:[#allocation7 + $0x9c] sm:$0xf]
        %v1414 = vld [vmem:[#allocation7 + $0xa0] sm:$0xf]
        %v1415 = vld [vmem:[#allocation7 + $0xa4] sm:$0xf]
        %v1416 = vld [vmem:[#allocation7 + $0xa8] sm:$0xf]
        %v1417 = vld [vmem:[#allocation7 + $0xac] sm:$0xf]
        %v1418 = vld [vmem:[#allocation7 + $0xb0] sm:$0xf]
        %v1419 = vld [vmem:[#allocation7 + $0xb4] sm:$0xf]
        %v1420 = vld [vmem:[#allocation7 + $0xb8] sm:$0xf]
        %v1421 = vld [vmem:[#allocation7 + $0xbc] sm:$0xf]
        %v1422 = vld [vmem:[%s338] sm:$0xf]
        %v1423 = vld [vmem:[%s338 + $0x4] sm:$0xf]
        %v1424 = vld [vmem:[%s338 + $0xc] sm:$0xf]
        %v1425 = vld [vmem:[%s338 + $0x10] sm:$0xf]
        %v1426 = vld [vmem:[%s338 + $0x18] sm:$0xf]
        %v1427 = vld [vmem:[%s338 + $0x1c] sm:$0xf]
        %v1428 = vld [vmem:[%s338 + $0x24] sm:$0xf]
        %v1429 = vld [vmem:[%s338 + $0x28] sm:$0xf]
        %v1430 = vld [vmem:[%s338 + $0x30] sm:$0xf]
        %v1431 = vld [vmem:[%s338 + $0x34] sm:$0xf]
        %v1432 = vld [vmem:[%s338 + $0x3c] sm:$0xf]
        %v1433 = vld [vmem:[%s338 + $0x40] sm:$0xf]
        %v1434 = vld [vmem:[%s338 + $0x48] sm:$0xf]
        %v1435 = vld [vmem:[%s338 + $0x4c] sm:$0xf]
        %v1436 = vld [vmem:[%s338 + $0x54] sm:$0xf]
        %v1437 = vld [vmem:[%s338 + $0x58] sm:$0xf]
        %v1438 = vld [vmem:[%s338 + $0x8] sm:$0x1]
        %v1439 = vld [vmem:[%s338 + $0x14] sm:$0x1]
        %v1440 = vld [vmem:[%s338 + $0x20] sm:$0x1]
        %v1441 = vld [vmem:[%s338 + $0x2c] sm:$0x1]
        %v1442 = vld [vmem:[%s338 + $0x38] sm:$0x1]
        %v1443 = vld [vmem:[%s338 + $0x44] sm:$0x1]
        %v1444 = vld [vmem:[%s338 + $0x50] sm:$0x1]
        %v1445 = vld [vmem:[%s338 + $0x5c] sm:$0x1]
        %v1446 = vld [vmem:[%s338] sm:$0xe]
        %v1447 = vld [vmem:[%s338 + $0xc] sm:$0xe]
        %v1448 = vld [vmem:[%s338 + $0x18] sm:$0xe]
        %v1449 = vld [vmem:[%s338 + $0x24] sm:$0xe]
        %v1450 = vld [vmem:[%s338 + $0x30] sm:$0xe]
        %v1451 = vld [vmem:[%s338 + $0x3c] sm:$0xe]
        %v1452 = vld [vmem:[%s338 + $0x48] sm:$0xe]
        %v1453 = vld [vmem:[%s338 + $0x54] sm:$0xe]
        %v1470 = vunpack.c.l.b16 %v1422
        %v1471 = vunpack.c.l.b16 %v1423
        %v1472 = vunpack.c.l.b16 %v1424
        %v1473 = vunpack.c.l.b16 %v1425
        %v1474 = vunpack.c.l.b16 %v1426
        %v1475 = vunpack.c.l.b16 %v1427
        %v1476 = vunpack.c.l.b16 %v1428
        %v1477 = vunpack.c.l.b16 %v1429
        %v1478 = vunpack.c.l.b16 %v1430
        %v1479 = vunpack.c.l.b16 %v1431
        %v1480 = vunpack.c.l.b16 %v1432
        %v1481 = vunpack.c.l.b16 %v1433
        %v1482 = vunpack.c.l.b16 %v1434
        %v1483 = vunpack.c.l.b16 %v1435
        %v1484 = vunpack.c.l.b16 %v1436
        %v1485 = vunpack.c.l.b16 %v1437
        %v1486 = vpack.c.b16 %v1471, %v1470
        %v1487 = vpack.c.b16 %v1473, %v1472
        %v1488 = vpack.c.b16 %v1475, %v1474
        %v1489 = vpack.c.b16 %v1477, %v1476
        %v1490 = vpack.c.b16 %v1479, %v1478
        %v1491 = vpack.c.b16 %v1481, %v1480
        %v1492 = vpack.c.b16 %v1483, %v1482
        %v1493 = vpack.c.b16 %v1485, %v1484
        %v1510 = vunpack.c.l.b16 %v1438
        %v1511 = vunpack.c.l.b16 %v1439
        %v1512 = vunpack.c.l.b16 %v1440
        %v1513 = vunpack.c.l.b16 %v1441
        %v1514 = vunpack.c.l.b16 %v1442
        %v1515 = vunpack.c.l.b16 %v1443
        %v1516 = vunpack.c.l.b16 %v1444
        %v1517 = vunpack.c.l.b16 %v1445
        %v1518 = vpack.c.b16 %v1510, %v1510
        %v1519 = vpack.c.b16 %v1511, %v1511
        %v1520 = vpack.c.b16 %v1512, %v1512
        %v1521 = vpack.c.b16 %v1513, %v1513
        %v1522 = vpack.c.b16 %v1514, %v1514
        %v1523 = vpack.c.b16 %v1515, %v1515
        %v1524 = vpack.c.b16 %v1516, %v1516
        %v1525 = vpack.c.b16 %v1517, %v1517
        %v1527 = vshrl.u32 %v1486, 16
        %v1529 = vshll.u32 %v1486, 16
        %v1531 = vrot.slane %v1529, 1
        %v1532 = vor.u32 %v1527, %v1531
        %v1534 = vshll.u32 %v1518, 16
        %v1536 = vrot.slane %v1534, 1
        %v1537 = vsel %vm1212, %v1532, %v1536
        %v1539 = vshrl.u32 %v1487, 16
        %v1541 = vshll.u32 %v1487, 16
        %v1543 = vrot.slane %v1541, 1
        %v1544 = vor.u32 %v1539, %v1543
        %v1546 = vshll.u32 %v1519, 16
        %v1548 = vrot.slane %v1546, 1
        %v1549 = vsel %vm1212, %v1544, %v1548
        %v1551 = vshrl.u32 %v1488, 16
        %v1553 = vshll.u32 %v1488, 16
        %v1555 = vrot.slane %v1553, 1
        %v1556 = vor.u32 %v1551, %v1555
        %v1558 = vshll.u32 %v1520, 16
        %v1560 = vrot.slane %v1558, 1
        %v1561 = vsel %vm1212, %v1556, %v1560
        %v1563 = vshrl.u32 %v1489, 16
        %v1565 = vshll.u32 %v1489, 16
        %v1567 = vrot.slane %v1565, 1
        %v1568 = vor.u32 %v1563, %v1567
        %v1570 = vshll.u32 %v1521, 16
        %v1572 = vrot.slane %v1570, 1
        %v1573 = vsel %vm1212, %v1568, %v1572
        %v1575 = vshrl.u32 %v1490, 16
        %v1577 = vshll.u32 %v1490, 16
        %v1579 = vrot.slane %v1577, 1
        %v1580 = vor.u32 %v1575, %v1579
        %v1582 = vshll.u32 %v1522, 16
        %v1584 = vrot.slane %v1582, 1
        %v1585 = vsel %vm1212, %v1580, %v1584
        %v1587 = vshrl.u32 %v1491, 16
        %v1589 = vshll.u32 %v1491, 16
        %v1591 = vrot.slane %v1589, 1
        %v1592 = vor.u32 %v1587, %v1591
        %v1594 = vshll.u32 %v1523, 16
        %v1596 = vrot.slane %v1594, 1
        %v1597 = vsel %vm1212, %v1592, %v1596
        %v1599 = vshrl.u32 %v1492, 16
        %v1601 = vshll.u32 %v1492, 16
        %v1603 = vrot.slane %v1601, 1
        %v1604 = vor.u32 %v1599, %v1603
        %v1606 = vshll.u32 %v1524, 16
        %v1608 = vrot.slane %v1606, 1
        %v1609 = vsel %vm1212, %v1604, %v1608
        %v1611 = vshrl.u32 %v1493, 16
        %v1613 = vshll.u32 %v1493, 16
        %v1615 = vrot.slane %v1613, 1
        %v1616 = vor.u32 %v1611, %v1615
        %v1618 = vshll.u32 %v1525, 16
        %v1620 = vrot.slane %v1618, 1
        %v1621 = vsel %vm1212, %v1616, %v1620
        %v1638 = vunpack.c.l.b16 %v1446
        %v1639 = vunpack.c.l.b16 %v1447
        %v1640 = vunpack.c.l.b16 %v1448
        %v1641 = vunpack.c.l.b16 %v1449
        %v1642 = vunpack.c.l.b16 %v1450
        %v1643 = vunpack.c.l.b16 %v1451
        %v1644 = vunpack.c.l.b16 %v1452
        %v1645 = vunpack.c.l.b16 %v1453
        %v1646 = vpack.c.b16 %v1471, %v1638
        %v1647 = vpack.c.b16 %v1473, %v1639
        %v1648 = vpack.c.b16 %v1475, %v1640
        %v1649 = vpack.c.b16 %v1477, %v1641
        %v1650 = vpack.c.b16 %v1479, %v1642
        %v1651 = vpack.c.b16 %v1481, %v1643
        %v1652 = vpack.c.b16 %v1483, %v1644
        %v1653 = vpack.c.b16 %v1485, %v1645
        %v1654 = vrot.slane %v1646, 1
        %v1655 = vrot.slane %v1518, 1
        %v1656 = vsel %vm1341, %v1654, %v1655
        %v1657 = vrot.slane %v1647, 1
        %v1658 = vrot.slane %v1519, 1
        %v1659 = vsel %vm1341, %v1657, %v1658
        %v1660 = vrot.slane %v1648, 1
        %v1661 = vrot.slane %v1520, 1
        %v1662 = vsel %vm1341, %v1660, %v1661
        %v1663 = vrot.slane %v1649, 1
        %v1664 = vrot.slane %v1521, 1
        %v1665 = vsel %vm1341, %v1663, %v1664
        %v1666 = vrot.slane %v1650, 1
        %v1667 = vrot.slane %v1522, 1
        %v1668 = vsel %vm1341, %v1666, %v1667
        %v1669 = vrot.slane %v1651, 1
        %v1670 = vrot.slane %v1523, 1
        %v1671 = vsel %vm1341, %v1669, %v1670
        %v1672 = vrot.slane %v1652, 1
        %v1673 = vrot.slane %v1524, 1
        %v1674 = vsel %vm1341, %v1672, %v1673
        %v1675 = vrot.slane %v1653, 1
        %v1676 = vrot.slane %v1525, 1
        %v1677 = vsel %vm1341, %v1675, %v1676
        %s1686 = scalar_lea.vmem [#allocation7], 192
        %v1687 = vld [vmem:[%s1686] sm:$0xf]
        %v1688 = vld [vmem:[%s1686 + $0x4] sm:$0xf]
        %v1689 = vld [vmem:[%s1686 + $0x8] sm:$0xf]
        %v1690 = vld [vmem:[%s1686 + $0xc] sm:$0xf]
        %v1691 = vld [vmem:[%s1686 + $0x10] sm:$0xf]
        %v1692 = vld [vmem:[%s1686 + $0x14] sm:$0xf]
        %v1693 = vld [vmem:[%s1686 + $0x18] sm:$0xf]
        %v1694 = vld [vmem:[%s1686 + $0x1c] sm:$0xf]
        %v1695 = vld [vmem:[%s1686 + $0x20] sm:$0xf]
        %v1696 = vld [vmem:[%s1686 + $0x24] sm:$0xf]
        %v1697 = vld [vmem:[%s1686 + $0x28] sm:$0xf]
        %v1698 = vld [vmem:[%s1686 + $0x2c] sm:$0xf]
        %v1699 = vld [vmem:[%s1686 + $0x30] sm:$0xf]
        %v1700 = vld [vmem:[%s1686 + $0x34] sm:$0xf]
        %v1701 = vld [vmem:[%s1686 + $0x38] sm:$0xf]
        %v1702 = vld [vmem:[%s1686 + $0x3c] sm:$0xf]
        %v1703 = vld [vmem:[%s1686 + $0x40] sm:$0xf]
        %v1704 = vld [vmem:[%s1686 + $0x44] sm:$0xf]
        %v1705 = vld [vmem:[%s1686 + $0x48] sm:$0xf]
        %v1706 = vld [vmem:[%s1686 + $0x4c] sm:$0xf]
        %v1707 = vld [vmem:[%s1686 + $0x50] sm:$0xf]
        %v1708 = vld [vmem:[%s1686 + $0x54] sm:$0xf]
        %v1709 = vld [vmem:[%s1686 + $0x58] sm:$0xf]
        %v1710 = vld [vmem:[%s1686 + $0x5c] sm:$0xf]
        %v1711 = vld [vmem:[%s1686 + $0x60] sm:$0xf]
        %v1712 = vld [vmem:[%s1686 + $0x64] sm:$0xf]
        %v1713 = vld [vmem:[%s1686 + $0x68] sm:$0xf]
        %v1714 = vld [vmem:[%s1686 + $0x6c] sm:$0xf]
        %v1715 = vld [vmem:[%s1686 + $0x70] sm:$0xf]
        %v1716 = vld [vmem:[%s1686 + $0x74] sm:$0xf]
        %v1717 = vld [vmem:[%s1686 + $0x78] sm:$0xf]
        %v1718 = vld [vmem:[%s1686 + $0x7c] sm:$0xf]
        %v1719 = vld [vmem:[%s1686 + $0x80] sm:$0xf]
        %v1720 = vld [vmem:[%s1686 + $0x84] sm:$0xf]
        %v1721 = vld [vmem:[%s1686 + $0x88] sm:$0xf]
        %v1722 = vld [vmem:[%s1686 + $0x8c] sm:$0xf]
        %v1723 = vld [vmem:[%s1686 + $0x90] sm:$0xf]
        %v1724 = vld [vmem:[%s1686 + $0x94] sm:$0xf]
        %v1725 = vld [vmem:[%s1686 + $0x98] sm:$0xf]
        %v1726 = vld [vmem:[%s1686 + $0x9c] sm:$0xf]
        %v1727 = vld [vmem:[%s1686 + $0xa0] sm:$0xf]
        %v1728 = vld [vmem:[%s1686 + $0xa4] sm:$0xf]
        %v1729 = vld [vmem:[%s1686 + $0xa8] sm:$0xf]
        %v1730 = vld [vmem:[%s1686 + $0xac] sm:$0xf]
        %v1731 = vld [vmem:[%s1686 + $0xb0] sm:$0xf]
        %v1732 = vld [vmem:[%s1686 + $0xb4] sm:$0xf]
        %v1733 = vld [vmem:[%s1686 + $0xb8] sm:$0xf]
        %v1734 = vld [vmem:[%s1686 + $0xbc] sm:$0xf]
        %v1783 = vunpack.c.l.b16 %v1687
        %v1784 = vunpack.c.l.b16 %v1688
        %v1785 = vunpack.c.l.b16 %v1689
        %v1786 = vunpack.c.l.b16 %v1690
        %v1787 = vunpack.c.l.b16 %v1691
        %v1788 = vunpack.c.l.b16 %v1692
        %v1789 = vunpack.c.l.b16 %v1693
        %v1790 = vunpack.c.l.b16 %v1694
        %v1791 = vunpack.c.l.b16 %v1695
        %v1792 = vunpack.c.l.b16 %v1696
        %v1793 = vunpack.c.l.b16 %v1697
        %v1794 = vunpack.c.l.b16 %v1698
        %v1795 = vunpack.c.l.b16 %v1699
        %v1796 = vunpack.c.l.b16 %v1700
        %v1797 = vunpack.c.l.b16 %v1701
        %v1798 = vunpack.c.l.b16 %v1702
        %v1799 = vunpack.c.l.b16 %v1703
        %v1800 = vunpack.c.l.b16 %v1704
        %v1801 = vunpack.c.l.b16 %v1705
        %v1802 = vunpack.c.l.b16 %v1706
        %v1803 = vunpack.c.l.b16 %v1707
        %v1804 = vunpack.c.l.b16 %v1708
        %v1805 = vunpack.c.l.b16 %v1709
        %v1806 = vunpack.c.l.b16 %v1710
        %v1807 = vunpack.c.l.b16 %v1711
        %v1808 = vunpack.c.l.b16 %v1712
        %v1809 = vunpack.c.l.b16 %v1713
        %v1810 = vunpack.c.l.b16 %v1714
        %v1811 = vunpack.c.l.b16 %v1715
        %v1812 = vunpack.c.l.b16 %v1716
        %v1813 = vunpack.c.l.b16 %v1717
        %v1814 = vunpack.c.l.b16 %v1718
        %v1815 = vunpack.c.l.b16 %v1719
        %v1816 = vunpack.c.l.b16 %v1720
        %v1817 = vunpack.c.l.b16 %v1721
        %v1818 = vunpack.c.l.b16 %v1722
        %v1819 = vunpack.c.l.b16 %v1723
        %v1820 = vunpack.c.l.b16 %v1724
        %v1821 = vunpack.c.l.b16 %v1725
        %v1822 = vunpack.c.l.b16 %v1726
        %v1823 = vunpack.c.l.b16 %v1727
        %v1824 = vunpack.c.l.b16 %v1728
        %v1825 = vunpack.c.l.b16 %v1729
        %v1826 = vunpack.c.l.b16 %v1730
        %v1827 = vunpack.c.l.b16 %v1731
        %v1828 = vunpack.c.l.b16 %v1732
        %v1829 = vunpack.c.l.b16 %v1733
        %v1830 = vunpack.c.l.b16 %v1734
        %v1831 = vpack.c.b16 %v1784, %v1783
        %v1832 = vpack.c.b16 %v1786, %v1785
        %v1833 = vpack.c.b16 %v1788, %v1787
        %v1834 = vpack.c.b16 %v1790, %v1789
        %v1835 = vpack.c.b16 %v1792, %v1791
        %v1836 = vpack.c.b16 %v1794, %v1793
        %v1837 = vpack.c.b16 %v1796, %v1795
        %v1838 = vpack.c.b16 %v1798, %v1797
        %v1839 = vpack.c.b16 %v1800, %v1799
        %v1840 = vpack.c.b16 %v1802, %v1801
        %v1841 = vpack.c.b16 %v1804, %v1803
        %v1842 = vpack.c.b16 %v1806, %v1805
        %v1843 = vpack.c.b16 %v1808, %v1807
        %v1844 = vpack.c.b16 %v1810, %v1809
        %v1845 = vpack.c.b16 %v1812, %v1811
        %v1846 = vpack.c.b16 %v1814, %v1813
        %v1847 = vpack.c.b16 %v1816, %v1815
        %v1848 = vpack.c.b16 %v1818, %v1817
        %v1849 = vpack.c.b16 %v1820, %v1819
        %v1850 = vpack.c.b16 %v1822, %v1821
        %v1851 = vpack.c.b16 %v1824, %v1823
        %v1852 = vpack.c.b16 %v1826, %v1825
        %v1853 = vpack.c.b16 %v1828, %v1827
        %v1854 = vpack.c.b16 %v1830, %v1829
        %1879 = vmatprep.subr.bf16.mxu0 0
        %1880 = vmatpush1.bf16.msra.mxu0 %v1831
        %1881 = vmatprep.subr.bf16.mxu0 0
        %1882 = vmatpush1.bf16.msra.mxu0 %v1832
        %1883 = vmatprep.subr.bf16.mxu0 0
        %1884 = vmatpush1.bf16.msra.mxu0 %v1833
        %1885 = vmatprep.subr.bf16.mxu0 0
        %1886 = vmatpush1.bf16.msra.mxu0 %v1834
        %1887 = vmatprep.subr.bf16.mxu0 0
        %1888 = vmatpush1.bf16.msra.mxu0 %v1835
        %1889 = vmatprep.subr.bf16.mxu0 0
        %1890 = vmatpush1.bf16.msra.mxu0 %v1836
        %1891 = vmatprep.subr.bf16.mxu0 0
        %1892 = vmatpush1.bf16.msra.mxu0 %v1837
        %1893 = vmatprep.subr.bf16.mxu0 0
        %1894 = vmatpush1.bf16.msra.mxu0 %v1838
        %1895 = vmatprep.subr.bf16.mxu0 0
        %1896 = vmatpush1.bf16.msra.mxu0 %v1839
        %1897 = vmatprep.subr.bf16.mxu0 0
        %1898 = vmatpush1.bf16.msra.mxu0 %v1840
        %1899 = vmatprep.subr.bf16.mxu0 0
        %1900 = vmatpush1.bf16.msra.mxu0 %v1841
        %1901 = vmatprep.subr.bf16.mxu0 0
        %1902 = vmatpush1.bf16.msra.mxu0 %v1842
        %1903 = vmatprep.subr.bf16.mxu0 0
        %1904 = vmatpush1.bf16.msra.mxu0 %v1843
        %1905 = vmatprep.subr.bf16.mxu0 0
        %1906 = vmatpush1.bf16.msra.mxu0 %v1844
        %1907 = vmatprep.subr.bf16.mxu0 0
        %1908 = vmatpush1.bf16.msra.mxu0 %v1845
        %1909 = vmatprep.subr.bf16.mxu0 0
        %1910 = vmatpush1.bf16.msra.mxu0 %v1846
        %1911 = vmatprep.mubr.bf16.mxu0 %v1537
        %1912 = vmatmul.mubr.bf16.gmra.mrb[0].mxu0 %v1486
        %v1913 = vpop.f32.mrb[0].mxu0
        %v1914 = vadd.f32 0.0, %v1913
        %v1915 = vpop.f32.mrb[0].mxu0
        %v1916 = vpop.f32.mrb[0].mxu0
        %v1917 = vadd.f32 0.0, %v1916
        %v1918 = vpop.f32.mrb[0].mxu0
        %1919 = vmatprep.mubr.bf16.mxu0 %v1549
        %1920 = vmatmul.mubr.bf16.gmra.mrb[0].mxu0 %v1487
        %v1921 = vpop.f32.mrb[0].mxu0
        %v1922 = vadd.f32 0.0, %v1921
        %v1923 = vpop.f32.mrb[0].mxu0
        %v1924 = vpop.f32.mrb[0].mxu0
        %v1925 = vadd.f32 0.0, %v1924
        %v1926 = vpop.f32.mrb[0].mxu0
        %1927 = vmatprep.mubr.bf16.mxu0 %v1561
        %1928 = vmatmul.mubr.bf16.gmra.mrb[0].mxu0 %v1488
        %v1929 = vpop.f32.mrb[0].mxu0
        %v1930 = vadd.f32 0.0, %v1929
        %v1931 = vpop.f32.mrb[0].mxu0
        %v1932 = vpop.f32.mrb[0].mxu0
        %v1933 = vadd.f32 0.0, %v1932
        %v1934 = vpop.f32.mrb[0].mxu0
        %1935 = vmatprep.mubr.bf16.mxu0 %v1573
        %1936 = vmatmul.mubr.bf16.gmra.mrb[0].mxu0 %v1489
        %v1937 = vpop.f32.mrb[0].mxu0
        %v1938 = vadd.f32 0.0, %v1937
        %v1939 = vpop.f32.mrb[0].mxu0
        %v1940 = vpop.f32.mrb[0].mxu0
        %v1941 = vadd.f32 0.0, %v1940
        %v1942 = vpop.f32.mrb[0].mxu0
        %1943 = vmatprep.mubr.bf16.mxu0 %v1585
        %1944 = vmatmul.mubr.bf16.gmra.mrb[0].mxu0 %v1490
        %v1945 = vpop.f32.mrb[0].mxu0
        %v1946 = vadd.f32 0.0, %v1945
        %v1947 = vpop.f32.mrb[0].mxu0
        %v1948 = vpop.f32.mrb[0].mxu0
        %v1949 = vadd.f32 0.0, %v1948
        %v1950 = vpop.f32.mrb[0].mxu0
        %1951 = vmatprep.mubr.bf16.mxu0 %v1597
        %1952 = vmatmul.mubr.bf16.gmra.mrb[0].mxu0 %v1491
        %v1953 = vpop.f32.mrb[0].mxu0
        %v1954 = vadd.f32 0.0, %v1953
        %v1955 = vpop.f32.mrb[0].mxu0
        %v1956 = vpop.f32.mrb[0].mxu0
        %v1957 = vadd.f32 0.0, %v1956
        %v1958 = vpop.f32.mrb[0].mxu0
        %1959 = vmatprep.mubr.bf16.mxu0 %v1609
        %1960 = vmatmul.mubr.bf16.gmra.mrb[0].mxu0 %v1492
        %v1961 = vpop.f32.mrb[0].mxu0
        %v1962 = vadd.f32 0.0, %v1961
        %v1963 = vpop.f32.mrb[0].mxu0
        %v1964 = vpop.f32.mrb[0].mxu0
        %v1965 = vadd.f32 0.0, %v1964
        %v1966 = vpop.f32.mrb[0].mxu0
        %1967 = vmatprep.mubr.bf16.mxu0 %v1621
        %1968 = vmatmul.mubr.bf16.gmra.mrb[0].mxu0 %v1493
        %v1969 = vpop.f32.mrb[0].mxu0
        %v1970 = vadd.f32 0.0, %v1969
        %v1971 = vpop.f32.mrb[0].mxu0
        %v1972 = vpop.f32.mrb[0].mxu0
        %v1973 = vadd.f32 0.0, %v1972
        %v1974 = vpop.f32.mrb[0].mxu0
        %1975 = vdwg.mxu0
        %1976 = vmatprep.subr.bf16.mxu0 0
        %1977 = vmatpush1.bf16.msra.mxu0 %v1847
        %1978 = vmatprep.subr.bf16.mxu0 0
        %1979 = vmatpush1.bf16.msra.mxu0 %v1848
        %1980 = vmatprep.subr.bf16.mxu0 0
        %1981 = vmatpush1.bf16.msra.mxu0 %v1849
        %1982 = vmatprep.subr.bf16.mxu0 0
        %1983 = vmatpush1.bf16.msra.mxu0 %v1850
        %1984 = vmatprep.subr.bf16.mxu0 0
        %1985 = vmatpush1.bf16.msra.mxu0 %v1851
        %1986 = vmatprep.subr.bf16.mxu0 0
        %1987 = vmatpush1.bf16.msra.mxu0 %v1852
        %1988 = vmatprep.subr.bf16.mxu0 0
        %1989 = vmatpush1.bf16.msra.mxu0 %v1853
        %1990 = vmatprep.subr.bf16.mxu0 0
        %1991 = vmatpush1.bf16.msra.mxu0 %v1854
        %1992 = vmatprep.subr.bf16.mxu0 0
        %1993 = vmatpush1.bf16.msra.mxu0 0
        %1994 = vmatprep.subr.bf16.mxu0 0
        %1995 = vmatpush1.bf16.msra.mxu0 0
        %1996 = vmatprep.subr.bf16.mxu0 0
        %1997 = vmatpush1.bf16.msra.mxu0 0
        %1998 = vmatprep.subr.bf16.mxu0 0
        %1999 = vmatpush1.bf16.msra.mxu0 0
        %2000 = vmatprep.subr.bf16.mxu0 0
        %2001 = vmatpush1.bf16.msra.mxu0 0
        %2002 = vmatprep.subr.bf16.mxu0 0
        %2003 = vmatpush1.bf16.msra.mxu0 0
        %2004 = vmatprep.subr.bf16.mxu0 0
        %2005 = vmatpush1.bf16.msra.mxu0 0
        %2006 = vmatprep.subr.bf16.mxu0 0
        %2007 = vmatpush1.bf16.msra.mxu0 0
        %2008 = vmatprep.mubr.bf16.mxu0 0
        %2009 = vmatmul.mubr.bf16.gmra.mrb[0].mxu0 %v1656
        %v2010 = vpop.f32.mrb[0].mxu0
        %v2011 = vadd.f32 %v1914, %v2010
        %v2012 = vpop.f32.mrb[0].mxu0
        %v2013 = vpop.f32.mrb[0].mxu0
        %v2014 = vadd.f32 %v1917, %v2013
        %v2015 = vpop.f32.mrb[0].mxu0
        %2016 = vmatprep.mubr.bf16.mxu0 0
        %2017 = vmatmul.mubr.bf16.gmra.mrb[0].mxu0 %v1659
        %v2018 = vpop.f32.mrb[0].mxu0
        %v2019 = vadd.f32 %v1922, %v2018
        %v2020 = vpop.f32.mrb[0].mxu0
        %v2021 = vpop.f32.mrb[0].mxu0
        %v2022 = vadd.f32 %v1925, %v2021
        %v2023 = vpop.f32.mrb[0].mxu0
        %2024 = vmatprep.mubr.bf16.mxu0 0
        %2025 = vmatmul.mubr.bf16.gmra.mrb[0].mxu0 %v1662
        %v2026 = vpop.f32.mrb[0].mxu0
        %v2027 = vadd.f32 %v1930, %v2026
        %v2028 = vpop.f32.mrb[0].mxu0
        %v2029 = vpop.f32.mrb[0].mxu0
        %v2030 = vadd.f32 %v1933, %v2029
        %v2031 = vpop.f32.mrb[0].mxu0
        %2032 = vmatprep.mubr.bf16.mxu0 0
        %2033 = vmatmul.mubr.bf16.gmra.mrb[0].mxu0 %v1665
        %v2034 = vpop.f32.mrb[0].mxu0
        %v2035 = vadd.f32 %v1938, %v2034
        %v2036 = vpop.f32.mrb[0].mxu0
        %v2037 = vpop.f32.mrb[0].mxu0
        %v2038 = vadd.f32 %v1941, %v2037
        %v2039 = vpop.f32.mrb[0].mxu0
        %2040 = vmatprep.mubr.bf16.mxu0 0
        %2041 = vmatmul.mubr.bf16.gmra.mrb[0].mxu0 %v1668
        %v2042 = vpop.f32.mrb[0].mxu0
        %v2043 = vadd.f32 %v1946, %v2042
        %v2044 = vpop.f32.mrb[0].mxu0
        %v2045 = vpop.f32.mrb[0].mxu0
        %v2046 = vadd.f32 %v1949, %v2045
        %v2047 = vpop.f32.mrb[0].mxu0
        %2048 = vmatprep.mubr.bf16.mxu0 0
        %2049 = vmatmul.mubr.bf16.gmra.mrb[0].mxu0 %v1671
        %v2050 = vpop.f32.mrb[0].mxu0
        %v2051 = vadd.f32 %v1954, %v2050
        %v2052 = vpop.f32.mrb[0].mxu0
        %v2053 = vpop.f32.mrb[0].mxu0
        %v2054 = vadd.f32 %v1957, %v2053
        %v2055 = vpop.f32.mrb[0].mxu0
        %2056 = vmatprep.mubr.bf16.mxu0 0
        %2057 = vmatmul.mubr.bf16.gmra.mrb[0].mxu0 %v1674
        %v2058 = vpop.f32.mrb[0].mxu0
        %v2059 = vadd.f32 %v1962, %v2058
        %v2060 = vpop.f32.mrb[0].mxu0
        %v2061 = vpop.f32.mrb[0].mxu0
        %v2062 = vadd.f32 %v1965, %v2061
        %v2063 = vpop.f32.mrb[0].mxu0
        %2064 = vmatprep.mubr.bf16.mxu0 0
        %2065 = vmatmul.mubr.bf16.gmra.mrb[0].mxu0 %v1677
        %v2066 = vpop.f32.mrb[0].mxu0
        %v2067 = vadd.f32 %v1970, %v2066
        %v2068 = vpop.f32.mrb[0].mxu0
        %v2069 = vpop.f32.mrb[0].mxu0
        %v2070 = vadd.f32 %v1973, %v2069
        %v2071 = vpop.f32.mrb[0].mxu0
        %2072 = vdwg.mxu0
        %v2121 = vunpack.c.l.b16 %v1374
        %v2122 = vunpack.c.l.b16 %v1375
        %v2123 = vunpack.c.l.b16 %v1376
        %v2124 = vunpack.c.l.b16 %v1377
        %v2125 = vunpack.c.l.b16 %v1378
        %v2126 = vunpack.c.l.b16 %v1379
        %v2127 = vunpack.c.l.b16 %v1380
        %v2128 = vunpack.c.l.b16 %v1381
        %v2129 = vunpack.c.l.b16 %v1382
        %v2130 = vunpack.c.l.b16 %v1383
        %v2131 = vunpack.c.l.b16 %v1384
        %v2132 = vunpack.c.l.b16 %v1385
        %v2133 = vunpack.c.l.b16 %v1386
        %v2134 = vunpack.c.l.b16 %v1387
        %v2135 = vunpack.c.l.b16 %v1388
        %v2136 = vunpack.c.l.b16 %v1389
        %v2137 = vunpack.c.l.b16 %v1390
        %v2138 = vunpack.c.l.b16 %v1391
        %v2139 = vunpack.c.l.b16 %v1392
        %v2140 = vunpack.c.l.b16 %v1393
        %v2141 = vunpack.c.l.b16 %v1394
        %v2142 = vunpack.c.l.b16 %v1395
        %v2143 = vunpack.c.l.b16 %v1396
        %v2144 = vunpack.c.l.b16 %v1397
        %v2145 = vunpack.c.l.b16 %v1398
        %v2146 = vunpack.c.l.b16 %v1399
        %v2147 = vunpack.c.l.b16 %v1400
        %v2148 = vunpack.c.l.b16 %v1401
        %v2149 = vunpack.c.l.b16 %v1402
        %v2150 = vunpack.c.l.b16 %v1403
        %v2151 = vunpack.c.l.b16 %v1404
        %v2152 = vunpack.c.l.b16 %v1405
        %v2153 = vunpack.c.l.b16 %v1406
        %v2154 = vunpack.c.l.b16 %v1407
        %v2155 = vunpack.c.l.b16 %v1408
        %v2156 = vunpack.c.l.b16 %v1409
        %v2157 = vunpack.c.l.b16 %v1410
        %v2158 = vunpack.c.l.b16 %v1411
        %v2159 = vunpack.c.l.b16 %v1412
        %v2160 = vunpack.c.l.b16 %v1413
        %v2161 = vunpack.c.l.b16 %v1414
        %v2162 = vunpack.c.l.b16 %v1415
        %v2163 = vunpack.c.l.b16 %v1416
        %v2164 = vunpack.c.l.b16 %v1417
        %v2165 = vunpack.c.l.b16 %v1418
        %v2166 = vunpack.c.l.b16 %v1419
        %v2167 = vunpack.c.l.b16 %v1420
        %v2168 = vunpack.c.l.b16 %v1421
        %v2169 = vpack.c.b16 %v2122, %v2121
        %v2170 = vpack.c.b16 %v2124, %v2123
        %v2171 = vpack.c.b16 %v2126, %v2125
        %v2172 = vpack.c.b16 %v2128, %v2127
        %v2173 = vpack.c.b16 %v2130, %v2129
        %v2174 = vpack.c.b16 %v2132, %v2131
        %v2175 = vpack.c.b16 %v2134, %v2133
        %v2176 = vpack.c.b16 %v2136, %v2135
        %v2177 = vpack.c.b16 %v2138, %v2137
        %v2178 = vpack.c.b16 %v2140, %v2139
        %v2179 = vpack.c.b16 %v2142, %v2141
        %v2180 = vpack.c.b16 %v2144, %v2143
        %v2181 = vpack.c.b16 %v2146, %v2145
        %v2182 = vpack.c.b16 %v2148, %v2147
        %v2183 = vpack.c.b16 %v2150, %v2149
        %v2184 = vpack.c.b16 %v2152, %v2151
        %v2185 = vpack.c.b16 %v2154, %v2153
        %v2186 = vpack.c.b16 %v2156, %v2155
        %v2187 = vpack.c.b16 %v2158, %v2157
        %v2188 = vpack.c.b16 %v2160, %v2159
        %v2189 = vpack.c.b16 %v2162, %v2161
        %v2190 = vpack.c.b16 %v2164, %v2163
        %v2191 = vpack.c.b16 %v2166, %v2165
        %v2192 = vpack.c.b16 %v2168, %v2167
        %2217 = vmatprep.subr.bf16.mxu0 0
        %2218 = vmatpush1.bf16.msra.mxu0 %v2169
        %2219 = vmatprep.subr.bf16.mxu0 0
        %2220 = vmatpush1.bf16.msra.mxu0 %v2170
        %2221 = vmatprep.subr.bf16.mxu0 0
        %2222 = vmatpush1.bf16.msra.mxu0 %v2171
        %2223 = vmatprep.subr.bf16.mxu0 0
        %2224 = vmatpush1.bf16.msra.mxu0 %v2172
        %2225 = vmatprep.subr.bf16.mxu0 0
        %2226 = vmatpush1.bf16.msra.mxu0 %v2173
        %2227 = vmatprep.subr.bf16.mxu0 0
        %2228 = vmatpush1.bf16.msra.mxu0 %v2174
        %2229 = vmatprep.subr.bf16.mxu0 0
        %2230 = vmatpush1.bf16.msra.mxu0 %v2175
        %2231 = vmatprep.subr.bf16.mxu0 0
        %2232 = vmatpush1.bf16.msra.mxu0 %v2176
        %2233 = vmatprep.subr.bf16.mxu0 0
        %2234 = vmatpush1.bf16.msra.mxu0 %v2177
        %2235 = vmatprep.subr.bf16.mxu0 0
        %2236 = vmatpush1.bf16.msra.mxu0 %v2178
        %2237 = vmatprep.subr.bf16.mxu0 0
        %2238 = vmatpush1.bf16.msra.mxu0 %v2179
        %2239 = vmatprep.subr.bf16.mxu0 0
        %2240 = vmatpush1.bf16.msra.mxu0 %v2180
        %2241 = vmatprep.subr.bf16.mxu0 0
        %2242 = vmatpush1.bf16.msra.mxu0 %v2181
        %2243 = vmatprep.subr.bf16.mxu0 0
        %2244 = vmatpush1.bf16.msra.mxu0 %v2182
        %2245 = vmatprep.subr.bf16.mxu0 0
        %2246 = vmatpush1.bf16.msra.mxu0 %v2183
        %2247 = vmatprep.subr.bf16.mxu0 0
        %2248 = vmatpush1.bf16.msra.mxu0 %v2184
        %2249 = vmatprep.mubr.bf16.mxu0 %v1224
        %2250 = vmatmul.mubr.bf16.gmra.mrb[0].mxu0 %v1172
        %v2251 = vpop.f32.mrb[0].mxu0
        %v2252 = vadd.f32 %v2011, %v2251
        %v2253 = vpop.f32.mrb[0].mxu0
        %v2254 = vpop.f32.mrb[0].mxu0
        %v2255 = vadd.f32 %v2014, %v2254
        %v2256 = vpop.f32.mrb[0].mxu0
        %2257 = vmatprep.mubr.bf16.mxu0 %v1236
        %2258 = vmatmul.mubr.bf16.gmra.mrb[0].mxu0 %v1173
        %v2259 = vpop.f32.mrb[0].mxu0
        %v2260 = vadd.f32 %v2019, %v2259
        %v2261 = vpop.f32.mrb[0].mxu0
        %v2262 = vpop.f32.mrb[0].mxu0
        %v2263 = vadd.f32 %v2022, %v2262
        %v2264 = vpop.f32.mrb[0].mxu0
        %2265 = vmatprep.mubr.bf16.mxu0 %v1248
        %2266 = vmatmul.mubr.bf16.gmra.mrb[0].mxu0 %v1174
        %v2267 = vpop.f32.mrb[0].mxu0
        %v2268 = vadd.f32 %v2027, %v2267
        %v2269 = vpop.f32.mrb[0].mxu0
        %v2270 = vpop.f32.mrb[0].mxu0
        %v2271 = vadd.f32 %v2030, %v2270
        %v2272 = vpop.f32.mrb[0].mxu0
        %2273 = vmatprep.mubr.bf16.mxu0 %v1260
        %2274 = vmatmul.mubr.bf16.gmra.mrb[0].mxu0 %v1175
        %v2275 = vpop.f32.mrb[0].mxu0
        %v2276 = vadd.f32 %v2035, %v2275
        %v2277 = vpop.f32.mrb[0].mxu0
        %v2278 = vpop.f32.mrb[0].mxu0
        %v2279 = vadd.f32 %v2038, %v2278
        %v2280 = vpop.f32.mrb[0].mxu0
        %2281 = vmatprep.mubr.bf16.mxu0 %v1272
        %2282 = vmatmul.mubr.bf16.gmra.mrb[0].mxu0 %v1176
        %v2283 = vpop.f32.mrb[0].mxu0
        %v2284 = vadd.f32 %v2043, %v2283
        %v2285 = vpop.f32.mrb[0].mxu0
        %v2286 = vpop.f32.mrb[0].mxu0
        %v2287 = vadd.f32 %v2046, %v2286
        %v2288 = vpop.f32.mrb[0].mxu0
        %2289 = vmatprep.mubr.bf16.mxu0 %v1284
        %2290 = vmatmul.mubr.bf16.gmra.mrb[0].mxu0 %v1177
        %v2291 = vpop.f32.mrb[0].mxu0
        %v2292 = vadd.f32 %v2051, %v2291
        %v2293 = vpop.f32.mrb[0].mxu0
        %v2294 = vpop.f32.mrb[0].mxu0
        %v2295 = vadd.f32 %v2054, %v2294
        %v2296 = vpop.f32.mrb[0].mxu0
        %2297 = vmatprep.mubr.bf16.mxu0 %v1296
        %2298 = vmatmul.mubr.bf16.gmra.mrb[0].mxu0 %v1178
        %v2299 = vpop.f32.mrb[0].mxu0
        %v2300 = vadd.f32 %v2059, %v2299
        %v2301 = vpop.f32.mrb[0].mxu0
        %v2302 = vpop.f32.mrb[0].mxu0
        %v2303 = vadd.f32 %v2062, %v2302
        %v2304 = vpop.f32.mrb[0].mxu0
        %2305 = vmatprep.mubr.bf16.mxu0 %v1308
        %2306 = vmatmul.mubr.bf16.gmra.mrb[0].mxu0 %v1179
        %v2307 = vpop.f32.mrb[0].mxu0
        %v2308 = vadd.f32 %v2067, %v2307
        %v2309 = vpop.f32.mrb[0].mxu0
        %v2310 = vpop.f32.mrb[0].mxu0
        %v2311 = vadd.f32 %v2070, %v2310
        %v2312 = vpop.f32.mrb[0].mxu0
        %2313 = vdwg.mxu0
        %2314 = vmatprep.subr.bf16.mxu0 0
        %2315 = vmatpush1.bf16.msra.mxu0 %v2185
        %2316 = vmatprep.subr.bf16.mxu0 0
        %2317 = vmatpush1.bf16.msra.mxu0 %v2186
        %2318 = vmatprep.subr.bf16.mxu0 0
        %2319 = vmatpush1.bf16.msra.mxu0 %v2187
        %2320 = vmatprep.subr.bf16.mxu0 0
        %2321 = vmatpush1.bf16.msra.mxu0 %v2188
        %2322 = vmatprep.subr.bf16.mxu0 0
        %2323 = vmatpush1.bf16.msra.mxu0 %v2189
        %2324 = vmatprep.subr.bf16.mxu0 0
        %2325 = vmatpush1.bf16.msra.mxu0 %v2190
        %2326 = vmatprep.subr.bf16.mxu0 0
        %2327 = vmatpush1.bf16.msra.mxu0 %v2191
        %2328 = vmatprep.subr.bf16.mxu0 0
        %2329 = vmatpush1.bf16.msra.mxu0 %v2192
        %2330 = vmatprep.subr.bf16.mxu0 0
        %2331 = vmatpush1.bf16.msra.mxu0 0
        %2332 = vmatprep.subr.bf16.mxu0 0
        %2333 = vmatpush1.bf16.msra.mxu0 0
        %2334 = vmatprep.subr.bf16.mxu0 0
        %2335 = vmatpush1.bf16.msra.mxu0 0
        %2336 = vmatprep.subr.bf16.mxu0 0
        %2337 = vmatpush1.bf16.msra.mxu0 0
        %2338 = vmatprep.subr.bf16.mxu0 0
        %2339 = vmatpush1.bf16.msra.mxu0 0
        %2340 = vmatprep.subr.bf16.mxu0 0
        %2341 = vmatpush1.bf16.msra.mxu0 0
        %2342 = vmatprep.subr.bf16.mxu0 0
        %2343 = vmatpush1.bf16.msra.mxu0 0
        %2344 = vmatprep.subr.bf16.mxu0 0
        %2345 = vmatpush1.bf16.msra.mxu0 0
        %2346 = vmatprep.mubr.bf16.mxu0 0
        %2347 = vmatmul.mubr.bf16.gmra.mrb[0].mxu0 %v1344
        %v2348 = vpop.f32.mrb[0].mxu0
        %v2349 = vadd.f32 %v2252, %v2348
        %v2350 = vpop.f32.mrb[0].mxu0
        %v2351 = vpop.f32.mrb[0].mxu0
        %v2352 = vadd.f32 %v2255, %v2351
        %v2353 = vpop.f32.mrb[0].mxu0
        %2354 = vmatprep.mubr.bf16.mxu0 0
        %2355 = vmatmul.mubr.bf16.gmra.mrb[0].mxu0 %v1347
        %v2356 = vpop.f32.mrb[0].mxu0
        %v2357 = vadd.f32 %v2260, %v2356
        %v2358 = vpop.f32.mrb[0].mxu0
        %v2359 = vpop.f32.mrb[0].mxu0
        %v2360 = vadd.f32 %v2263, %v2359
        %v2361 = vpop.f32.mrb[0].mxu0
        %2362 = vmatprep.mubr.bf16.mxu0 0
        %2363 = vmatmul.mubr.bf16.gmra.mrb[0].mxu0 %v1350
        %v2364 = vpop.f32.mrb[0].mxu0
        %v2365 = vadd.f32 %v2268, %v2364
        %v2366 = vpop.f32.mrb[0].mxu0
        %v2367 = vpop.f32.mrb[0].mxu0
        %v2368 = vadd.f32 %v2271, %v2367
        %v2369 = vpop.f32.mrb[0].mxu0
        %2370 = vmatprep.mubr.bf16.mxu0 0
        %2371 = vmatmul.mubr.bf16.gmra.mrb[0].mxu0 %v1353
        %v2372 = vpop.f32.mrb[0].mxu0
        %v2373 = vadd.f32 %v2276, %v2372
        %v2374 = vpop.f32.mrb[0].mxu0
        %v2375 = vpop.f32.mrb[0].mxu0
        %v2376 = vadd.f32 %v2279, %v2375
        %v2377 = vpop.f32.mrb[0].mxu0
        %2378 = vmatprep.mubr.bf16.mxu0 0
        %2379 = vmatmul.mubr.bf16.gmra.mrb[0].mxu0 %v1356
        %v2380 = vpop.f32.mrb[0].mxu0
        %v2381 = vadd.f32 %v2284, %v2380
        %v2382 = vpop.f32.mrb[0].mxu0
        %v2383 = vpop.f32.mrb[0].mxu0
        %v2384 = vadd.f32 %v2287, %v2383
        %v2385 = vpop.f32.mrb[0].mxu0
        %2386 = vmatprep.mubr.bf16.mxu0 0
        %2387 = vmatmul.mubr.bf16.gmra.mrb[0].mxu0 %v1359
        %v2388 = vpop.f32.mrb[0].mxu0
        %v2389 = vadd.f32 %v2292, %v2388
        %v2390 = vpop.f32.mrb[0].mxu0
        %v2391 = vpop.f32.mrb[0].mxu0
        %v2392 = vadd.f32 %v2295, %v2391
        %v2393 = vpop.f32.mrb[0].mxu0
        %2394 = vmatprep.mubr.bf16.mxu0 0
        %2395 = vmatmul.mubr.bf16.gmra.mrb[0].mxu0 %v1362
        %v2396 = vpop.f32.mrb[0].mxu0
        %v2397 = vadd.f32 %v2300, %v2396
        %v2398 = vpop.f32.mrb[0].mxu0
        %v2399 = vpop.f32.mrb[0].mxu0
        %v2400 = vadd.f32 %v2303, %v2399
        %v2401 = vpop.f32.mrb[0].mxu0
        %2402 = vmatprep.mubr.bf16.mxu0 0
        %2403 = vmatmul.mubr.bf16.gmra.mrb[0].mxu0 %v1365
        %v2404 = vpop.f32.mrb[0].mxu0
        %v2405 = vadd.f32 %v2308, %v2404
        %v2406 = vpop.f32.mrb[0].mxu0
        %v2407 = vpop.f32.mrb[0].mxu0
        %v2408 = vadd.f32 %v2311, %v2407
        %v2409 = vpop.f32.mrb[0].mxu0
        %2410 = vdwg.mxu0
        %s2411 = scalar_lea.vmem [#allocation2], 24
        %v2412 = vld [vmem:[%s2411] sm:$0xf]
        %v2413 = vld [vmem:[%s2411 + $0x4] sm:$0xf]
        %v2414 = vld [vmem:[%s2411 + $0xc] sm:$0xf]
        %v2415 = vld [vmem:[%s2411 + $0x10] sm:$0xf]
        %v2416 = vld [vmem:[%s2411 + $0x18] sm:$0xf]
        %v2417 = vld [vmem:[%s2411 + $0x1c] sm:$0xf]
        %v2418 = vld [vmem:[%s2411 + $0x24] sm:$0xf]
        %v2419 = vld [vmem:[%s2411 + $0x28] sm:$0xf]
        %v2420 = vld [vmem:[%s2411 + $0x30] sm:$0xf]
        %v2421 = vld [vmem:[%s2411 + $0x34] sm:$0xf]
        %v2422 = vld [vmem:[%s2411 + $0x3c] sm:$0xf]
        %v2423 = vld [vmem:[%s2411 + $0x40] sm:$0xf]
        %v2424 = vld [vmem:[%s2411 + $0x48] sm:$0xf]
        %v2425 = vld [vmem:[%s2411 + $0x4c] sm:$0xf]
        %v2426 = vld [vmem:[%s2411 + $0x54] sm:$0xf]
        %v2427 = vld [vmem:[%s2411 + $0x58] sm:$0xf]
        %v2428 = vld [vmem:[%s2411 + $0x8] sm:$0x1]
        %v2429 = vld [vmem:[%s2411 + $0x14] sm:$0x1]
        %v2430 = vld [vmem:[%s2411 + $0x20] sm:$0x1]
        %v2431 = vld [vmem:[%s2411 + $0x2c] sm:$0x1]
        %v2432 = vld [vmem:[%s2411 + $0x38] sm:$0x1]
        %v2433 = vld [vmem:[%s2411 + $0x44] sm:$0x1]
        %v2434 = vld [vmem:[%s2411 + $0x50] sm:$0x1]
        %v2435 = vld [vmem:[%s2411 + $0x5c] sm:$0x1]
        %v2436 = vld [vmem:[%s2411] sm:$0xe]
        %v2437 = vld [vmem:[%s2411 + $0xc] sm:$0xe]
        %v2438 = vld [vmem:[%s2411 + $0x18] sm:$0xe]
        %v2439 = vld [vmem:[%s2411 + $0x24] sm:$0xe]
        %v2440 = vld [vmem:[%s2411 + $0x30] sm:$0xe]
        %v2441 = vld [vmem:[%s2411 + $0x3c] sm:$0xe]
        %v2442 = vld [vmem:[%s2411 + $0x48] sm:$0xe]
        %v2443 = vld [vmem:[%s2411 + $0x54] sm:$0xe]
        %v2460 = vunpack.c.l.b16 %v2412
        %v2461 = vunpack.c.l.b16 %v2413
        %v2462 = vunpack.c.l.b16 %v2414
        %v2463 = vunpack.c.l.b16 %v2415
        %v2464 = vunpack.c.l.b16 %v2416
        %v2465 = vunpack.c.l.b16 %v2417
        %v2466 = vunpack.c.l.b16 %v2418
        %v2467 = vunpack.c.l.b16 %v2419
        %v2468 = vunpack.c.l.b16 %v2420
        %v2469 = vunpack.c.l.b16 %v2421
        %v2470 = vunpack.c.l.b16 %v2422
        %v2471 = vunpack.c.l.b16 %v2423
        %v2472 = vunpack.c.l.b16 %v2424
        %v2473 = vunpack.c.l.b16 %v2425
        %v2474 = vunpack.c.l.b16 %v2426
        %v2475 = vunpack.c.l.b16 %v2427
        %v2476 = vpack.c.b16 %v2461, %v2460
        %v2477 = vpack.c.b16 %v2463, %v2462
        %v2478 = vpack.c.b16 %v2465, %v2464
        %v2479 = vpack.c.b16 %v2467, %v2466
        %v2480 = vpack.c.b16 %v2469, %v2468
        %v2481 = vpack.c.b16 %v2471, %v2470
        %v2482 = vpack.c.b16 %v2473, %v2472
        %v2483 = vpack.c.b16 %v2475, %v2474
        %v2500 = vunpack.c.l.b16 %v2428
        %v2501 = vunpack.c.l.b16 %v2429
        %v2502 = vunpack.c.l.b16 %v2430
        %v2503 = vunpack.c.l.b16 %v2431
        %v2504 = vunpack.c.l.b16 %v2432
        %v2505 = vunpack.c.l.b16 %v2433
        %v2506 = vunpack.c.l.b16 %v2434
        %v2507 = vunpack.c.l.b16 %v2435
        %v2508 = vpack.c.b16 %v2500, %v2500
        %v2509 = vpack.c.b16 %v2501, %v2501
        %v2510 = vpack.c.b16 %v2502, %v2502
        %v2511 = vpack.c.b16 %v2503, %v2503
        %v2512 = vpack.c.b16 %v2504, %v2504
        %v2513 = vpack.c.b16 %v2505, %v2505
        %v2514 = vpack.c.b16 %v2506, %v2506
        %v2515 = vpack.c.b16 %v2507, %v2507
        %v2517 = vshrl.u32 %v2476, 16
        %v2519 = vshll.u32 %v2476, 16
        %v2521 = vrot.slane %v2519, 1
        %v2522 = vor.u32 %v2517, %v2521
        %v2524 = vshll.u32 %v2508, 16
        %v2526 = vrot.slane %v2524, 1
        %v2527 = vsel %vm1212, %v2522, %v2526
        %v2529 = vshrl.u32 %v2477, 16
        %v2531 = vshll.u32 %v2477, 16
        %v2533 = vrot.slane %v2531, 1
        %v2534 = vor.u32 %v2529, %v2533
        %v2536 = vshll.u32 %v2509, 16
        %v2538 = vrot.slane %v2536, 1
        %v2539 = vsel %vm1212, %v2534, %v2538
        %v2541 = vshrl.u32 %v2478, 16
        %v2543 = vshll.u32 %v2478, 16
        %v2545 = vrot.slane %v2543, 1
        %v2546 = vor.u32 %v2541, %v2545
        %v2548 = vshll.u32 %v2510, 16
        %v2550 = vrot.slane %v2548, 1
        %v2551 = vsel %vm1212, %v2546, %v2550
        %v2553 = vshrl.u32 %v2479, 16
        %v2555 = vshll.u32 %v2479, 16
        %v2557 = vrot.slane %v2555, 1
        %v2558 = vor.u32 %v2553, %v2557
        %v2560 = vshll.u32 %v2511, 16
        %v2562 = vrot.slane %v2560, 1
        %v2563 = vsel %vm1212, %v2558, %v2562
        %v2565 = vshrl.u32 %v2480, 16
        %v2567 = vshll.u32 %v2480, 16
        %v2569 = vrot.slane %v2567, 1
        %v2570 = vor.u32 %v2565, %v2569
        %v2572 = vshll.u32 %v2512, 16
        %v2574 = vrot.slane %v2572, 1
        %v2575 = vsel %vm1212, %v2570, %v2574
        %v2577 = vshrl.u32 %v2481, 16
        %v2579 = vshll.u32 %v2481, 16
        %v2581 = vrot.slane %v2579, 1
        %v2582 = vor.u32 %v2577, %v2581
        %v2584 = vshll.u32 %v2513, 16
        %v2586 = vrot.slane %v2584, 1
        %v2587 = vsel %vm1212, %v2582, %v2586
        %v2589 = vshrl.u32 %v2482, 16
        %v2591 = vshll.u32 %v2482, 16
        %v2593 = vrot.slane %v2591, 1
        %v2594 = vor.u32 %v2589, %v2593
        %v2596 = vshll.u32 %v2514, 16
        %v2598 = vrot.slane %v2596, 1
        %v2599 = vsel %vm1212, %v2594, %v2598
        %v2601 = vshrl.u32 %v2483, 16
        %v2603 = vshll.u32 %v2483, 16
        %v2605 = vrot.slane %v2603, 1
        %v2606 = vor.u32 %v2601, %v2605
        %v2608 = vshll.u32 %v2515, 16
        %v2610 = vrot.slane %v2608, 1
        %v2611 = vsel %vm1212, %v2606, %v2610
        %v2628 = vunpack.c.l.b16 %v2436
        %v2629 = vunpack.c.l.b16 %v2437
        %v2630 = vunpack.c.l.b16 %v2438
        %v2631 = vunpack.c.l.b16 %v2439
        %v2632 = vunpack.c.l.b16 %v2440
        %v2633 = vunpack.c.l.b16 %v2441
        %v2634 = vunpack.c.l.b16 %v2442
        %v2635 = vunpack.c.l.b16 %v2443
        %v2636 = vpack.c.b16 %v2461, %v2628
        %v2637 = vpack.c.b16 %v2463, %v2629
        %v2638 = vpack.c.b16 %v2465, %v2630
        %v2639 = vpack.c.b16 %v2467, %v2631
        %v2640 = vpack.c.b16 %v2469, %v2632
        %v2641 = vpack.c.b16 %v2471, %v2633
        %v2642 = vpack.c.b16 %v2473, %v2634
        %v2643 = vpack.c.b16 %v2475, %v2635
        %v2644 = vrot.slane %v2636, 1
        %v2645 = vrot.slane %v2508, 1
        %v2646 = vsel %vm1341, %v2644, %v2645
        %v2647 = vrot.slane %v2637, 1
        %v2648 = vrot.slane %v2509, 1
        %v2649 = vsel %vm1341, %v2647, %v2648
        %v2650 = vrot.slane %v2638, 1
        %v2651 = vrot.slane %v2510, 1
        %v2652 = vsel %vm1341, %v2650, %v2651
        %v2653 = vrot.slane %v2639, 1
        %v2654 = vrot.slane %v2511, 1
        %v2655 = vsel %vm1341, %v2653, %v2654
        %v2656 = vrot.slane %v2640, 1
        %v2657 = vrot.slane %v2512, 1
        %v2658 = vsel %vm1341, %v2656, %v2657
        %v2659 = vrot.slane %v2641, 1
        %v2660 = vrot.slane %v2513, 1
        %v2661 = vsel %vm1341, %v2659, %v2660
        %v2662 = vrot.slane %v2642, 1
        %v2663 = vrot.slane %v2514, 1
        %v2664 = vsel %vm1341, %v2662, %v2663
        %v2665 = vrot.slane %v2643, 1
        %v2666 = vrot.slane %v2515, 1
        %v2667 = vsel %vm1341, %v2665, %v2666
        %s2676 = scalar_lea.vmem [#allocation7], 384
        %v2677 = vld [vmem:[%s2676] sm:$0xf]
        %v2678 = vld [vmem:[%s2676 + $0x4] sm:$0xf]
        %v2679 = vld [vmem:[%s2676 + $0x8] sm:$0xf]
        %v2680 = vld [vmem:[%s2676 + $0xc] sm:$0xf]
        %v2681 = vld [vmem:[%s2676 + $0x10] sm:$0xf]
        %v2682 = vld [vmem:[%s2676 + $0x14] sm:$0xf]
        %v2683 = vld [vmem:[%s2676 + $0x18] sm:$0xf]
        %v2684 = vld [vmem:[%s2676 + $0x1c] sm:$0xf]
        %v2685 = vld [vmem:[%s2676 + $0x20] sm:$0xf]
        %v2686 = vld [vmem:[%s2676 + $0x24] sm:$0xf]
        %v2687 = vld [vmem:[%s2676 + $0x28] sm:$0xf]
        %v2688 = vld [vmem:[%s2676 + $0x2c] sm:$0xf]
        %v2689 = vld [vmem:[%s2676 + $0x30] sm:$0xf]
        %v2690 = vld [vmem:[%s2676 + $0x34] sm:$0xf]
        %v2691 = vld [vmem:[%s2676 + $0x38] sm:$0xf]
        %v2692 = vld [vmem:[%s2676 + $0x3c] sm:$0xf]
        %v2693 = vld [vmem:[%s2676 + $0x40] sm:$0xf]
        %v2694 = vld [vmem:[%s2676 + $0x44] sm:$0xf]
        %v2695 = vld [vmem:[%s2676 + $0x48] sm:$0xf]
        %v2696 = vld [vmem:[%s2676 + $0x4c] sm:$0xf]
        %v2697 = vld [vmem:[%s2676 + $0x50] sm:$0xf]
        %v2698 = vld [vmem:[%s2676 + $0x54] sm:$0xf]
        %v2699 = vld [vmem:[%s2676 + $0x58] sm:$0xf]
        %v2700 = vld [vmem:[%s2676 + $0x5c] sm:$0xf]
        %v2701 = vld [vmem:[%s2676 + $0x60] sm:$0xf]
        %v2702 = vld [vmem:[%s2676 + $0x64] sm:$0xf]
        %v2703 = vld [vmem:[%s2676 + $0x68] sm:$0xf]
        %v2704 = vld [vmem:[%s2676 + $0x6c] sm:$0xf]
        %v2705 = vld [vmem:[%s2676 + $0x70] sm:$0xf]
        %v2706 = vld [vmem:[%s2676 + $0x74] sm:$0xf]
        %v2707 = vld [vmem:[%s2676 + $0x78] sm:$0xf]
        %v2708 = vld [vmem:[%s2676 + $0x7c] sm:$0xf]
        %v2709 = vld [vmem:[%s2676 + $0x80] sm:$0xf]
        %v2710 = vld [vmem:[%s2676 + $0x84] sm:$0xf]
        %v2711 = vld [vmem:[%s2676 + $0x88] sm:$0xf]
        %v2712 = vld [vmem:[%s2676 + $0x8c] sm:$0xf]
        %v2713 = vld [vmem:[%s2676 + $0x90] sm:$0xf]
        %v2714 = vld [vmem:[%s2676 + $0x94] sm:$0xf]
        %v2715 = vld [vmem:[%s2676 + $0x98] sm:$0xf]
        %v2716 = vld [vmem:[%s2676 + $0x9c] sm:$0xf]
        %v2717 = vld [vmem:[%s2676 + $0xa0] sm:$0xf]
        %v2718 = vld [vmem:[%s2676 + $0xa4] sm:$0xf]
        %v2719 = vld [vmem:[%s2676 + $0xa8] sm:$0xf]
        %v2720 = vld [vmem:[%s2676 + $0xac] sm:$0xf]
        %v2721 = vld [vmem:[%s2676 + $0xb0] sm:$0xf]
        %v2722 = vld [vmem:[%s2676 + $0xb4] sm:$0xf]
        %v2723 = vld [vmem:[%s2676 + $0xb8] sm:$0xf]
        %v2724 = vld [vmem:[%s2676 + $0xbc] sm:$0xf]
        %v2773 = vunpack.c.l.b16 %v2677
        %v2774 = vunpack.c.l.b16 %v2678
        %v2775 = vunpack.c.l.b16 %v2679
        %v2776 = vunpack.c.l.b16 %v2680
        %v2777 = vunpack.c.l.b16 %v2681
        %v2778 = vunpack.c.l.b16 %v2682
        %v2779 = vunpack.c.l.b16 %v2683
        %v2780 = vunpack.c.l.b16 %v2684
        %v2781 = vunpack.c.l.b16 %v2685
        %v2782 = vunpack.c.l.b16 %v2686
        %v2783 = vunpack.c.l.b16 %v2687
        %v2784 = vunpack.c.l.b16 %v2688
        %v2785 = vunpack.c.l.b16 %v2689
        %v2786 = vunpack.c.l.b16 %v2690
        %v2787 = vunpack.c.l.b16 %v2691
        %v2788 = vunpack.c.l.b16 %v2692
        %v2789 = vunpack.c.l.b16 %v2693
        %v2790 = vunpack.c.l.b16 %v2694
        %v2791 = vunpack.c.l.b16 %v2695
        %v2792 = vunpack.c.l.b16 %v2696
        %v2793 = vunpack.c.l.b16 %v2697
        %v2794 = vunpack.c.l.b16 %v2698
        %v2795 = vunpack.c.l.b16 %v2699
        %v2796 = vunpack.c.l.b16 %v2700
        %v2797 = vunpack.c.l.b16 %v2701
        %v2798 = vunpack.c.l.b16 %v2702
        %v2799 = vunpack.c.l.b16 %v2703
        %v2800 = vunpack.c.l.b16 %v2704
        %v2801 = vunpack.c.l.b16 %v2705
        %v2802 = vunpack.c.l.b16 %v2706
        %v2803 = vunpack.c.l.b16 %v2707
        %v2804 = vunpack.c.l.b16 %v2708
        %v2805 = vunpack.c.l.b16 %v2709
        %v2806 = vunpack.c.l.b16 %v2710
        %v2807 = vunpack.c.l.b16 %v2711
        %v2808 = vunpack.c.l.b16 %v2712
        %v2809 = vunpack.c.l.b16 %v2713
        %v2810 = vunpack.c.l.b16 %v2714
        %v2811 = vunpack.c.l.b16 %v2715
        %v2812 = vunpack.c.l.b16 %v2716
        %v2813 = vunpack.c.l.b16 %v2717
        %v2814 = vunpack.c.l.b16 %v2718
        %v2815 = vunpack.c.l.b16 %v2719
        %v2816 = vunpack.c.l.b16 %v2720
        %v2817 = vunpack.c.l.b16 %v2721
        %v2818 = vunpack.c.l.b16 %v2722
        %v2819 = vunpack.c.l.b16 %v2723
        %v2820 = vunpack.c.l.b16 %v2724
        %v2821 = vpack.c.b16 %v2774, %v2773
        %v2822 = vpack.c.b16 %v2776, %v2775
        %v2823 = vpack.c.b16 %v2778, %v2777
        %v2824 = vpack.c.b16 %v2780, %v2779
        %v2825 = vpack.c.b16 %v2782, %v2781
        %v2826 = vpack.c.b16 %v2784, %v2783
        %v2827 = vpack.c.b16 %v2786, %v2785
        %v2828 = vpack.c.b16 %v2788, %v2787
        %v2829 = vpack.c.b16 %v2790, %v2789
        %v2830 = vpack.c.b16 %v2792, %v2791
        %v2831 = vpack.c.b16 %v2794, %v2793
        %v2832 = vpack.c.b16 %v2796, %v2795
        %v2833 = vpack.c.b16 %v2798, %v2797
        %v2834 = vpack.c.b16 %v2800, %v2799
        %v2835 = vpack.c.b16 %v2802, %v2801
        %v2836 = vpack.c.b16 %v2804, %v2803
        %v2837 = vpack.c.b16 %v2806, %v2805
        %v2838 = vpack.c.b16 %v2808, %v2807
        %v2839 = vpack.c.b16 %v2810, %v2809
        %v2840 = vpack.c.b16 %v2812, %v2811
        %v2841 = vpack.c.b16 %v2814, %v2813
        %v2842 = vpack.c.b16 %v2816, %v2815
        %v2843 = vpack.c.b16 %v2818, %v2817
        %v2844 = vpack.c.b16 %v2820, %v2819
        %2869 = vmatprep.subr.bf16.mxu0 0
        %2870 = vmatpush1.bf16.msra.mxu0 %v2821
        %2871 = vmatprep.subr.bf16.mxu0 0
        %2872 = vmatpush1.bf16.msra.mxu0 %v2822
        %2873 = vmatprep.subr.bf16.mxu0 0
        %2874 = vmatpush1.bf16.msra.mxu0 %v2823
        %2875 = vmatprep.subr.bf16.mxu0 0
        %2876 = vmatpush1.bf16.msra.mxu0 %v2824
        %2877 = vmatprep.subr.bf16.mxu0 0
        %2878 = vmatpush1.bf16.msra.mxu0 %v2825
        %2879 = vmatprep.subr.bf16.mxu0 0
        %2880 = vmatpush1.bf16.msra.mxu0 %v2826
        %2881 = vmatprep.subr.bf16.mxu0 0
        %2882 = vmatpush1.bf16.msra.mxu0 %v2827
        %2883 = vmatprep.subr.bf16.mxu0 0
        %2884 = vmatpush1.bf16.msra.mxu0 %v2828
        %2885 = vmatprep.subr.bf16.mxu0 0
        %2886 = vmatpush1.bf16.msra.mxu0 %v2829
        %2887 = vmatprep.subr.bf16.mxu0 0
        %2888 = vmatpush1.bf16.msra.mxu0 %v2830
        %2889 = vmatprep.subr.bf16.mxu0 0
        %2890 = vmatpush1.bf16.msra.mxu0 %v2831
        %2891 = vmatprep.subr.bf16.mxu0 0
        %2892 = vmatpush1.bf16.msra.mxu0 %v2832
        %2893 = vmatprep.subr.bf16.mxu0 0
        %2894 = vmatpush1.bf16.msra.mxu0 %v2833
        %2895 = vmatprep.subr.bf16.mxu0 0
        %2896 = vmatpush1.bf16.msra.mxu0 %v2834
        %2897 = vmatprep.subr.bf16.mxu0 0
        %2898 = vmatpush1.bf16.msra.mxu0 %v2835
        %2899 = vmatprep.subr.bf16.mxu0 0
        %2900 = vmatpush1.bf16.msra.mxu0 %v2836
        %2901 = vmatprep.mubr.bf16.mxu0 %v2527
        %2902 = vmatmul.mubr.bf16.gmra.mrb[0].mxu0 %v2476
        %v2903 = vpop.f32.mrb[0].mxu0
        %v2904 = vadd.f32 0.0, %v2903
        %v2905 = vpop.f32.mrb[0].mxu0
        %v2906 = vpop.f32.mrb[0].mxu0
        %v2907 = vadd.f32 0.0, %v2906
        %v2908 = vpop.f32.mrb[0].mxu0
        %2909 = vmatprep.mubr.bf16.mxu0 %v2539
        %2910 = vmatmul.mubr.bf16.gmra.mrb[0].mxu0 %v2477
        %v2911 = vpop.f32.mrb[0].mxu0
        %v2912 = vadd.f32 0.0, %v2911
        %v2913 = vpop.f32.mrb[0].mxu0
        %v2914 = vpop.f32.mrb[0].mxu0
        %v2915 = vadd.f32 0.0, %v2914
        %v2916 = vpop.f32.mrb[0].mxu0
        %2917 = vmatprep.mubr.bf16.mxu0 %v2551
        %2918 = vmatmul.mubr.bf16.gmra.mrb[0].mxu0 %v2478
        %v2919 = vpop.f32.mrb[0].mxu0
        %v2920 = vadd.f32 0.0, %v2919
        %v2921 = vpop.f32.mrb[0].mxu0
        %v2922 = vpop.f32.mrb[0].mxu0
        %v2923 = vadd.f32 0.0, %v2922
        %v2924 = vpop.f32.mrb[0].mxu0
        %2925 = vmatprep.mubr.bf16.mxu0 %v2563
        %2926 = vmatmul.mubr.bf16.gmra.mrb[0].mxu0 %v2479
        %v2927 = vpop.f32.mrb[0].mxu0
        %v2928 = vadd.f32 0.0, %v2927
        %v2929 = vpop.f32.mrb[0].mxu0
        %v2930 = vpop.f32.mrb[0].mxu0
        %v2931 = vadd.f32 0.0, %v2930
        %v2932 = vpop.f32.mrb[0].mxu0
        %2933 = vmatprep.mubr.bf16.mxu0 %v2575
        %2934 = vmatmul.mubr.bf16.gmra.mrb[0].mxu0 %v2480
        %v2935 = vpop.f32.mrb[0].mxu0
        %v2936 = vadd.f32 0.0, %v2935
        %v2937 = vpop.f32.mrb[0].mxu0
        %v2938 = vpop.f32.mrb[0].mxu0
        %v2939 = vadd.f32 0.0, %v2938
        %v2940 = vpop.f32.mrb[0].mxu0
        %2941 = vmatprep.mubr.bf16.mxu0 %v2587
        %2942 = vmatmul.mubr.bf16.gmra.mrb[0].mxu0 %v2481
        %v2943 = vpop.f32.mrb[0].mxu0
        %v2944 = vadd.f32 0.0, %v2943
        %v2945 = vpop.f32.mrb[0].mxu0
        %v2946 = vpop.f32.mrb[0].mxu0
        %v2947 = vadd.f32 0.0, %v2946
        %v2948 = vpop.f32.mrb[0].mxu0
        %2949 = vmatprep.mubr.bf16.mxu0 %v2599
        %2950 = vmatmul.mubr.bf16.gmra.mrb[0].mxu0 %v2482
        %v2951 = vpop.f32.mrb[0].mxu0
        %v2952 = vadd.f32 0.0, %v2951
        %v2953 = vpop.f32.mrb[0].mxu0
        %v2954 = vpop.f32.mrb[0].mxu0
        %v2955 = vadd.f32 0.0, %v2954
        %v2956 = vpop.f32.mrb[0].mxu0
        %2957 = vmatprep.mubr.bf16.mxu0 %v2611
        %2958 = vmatmul.mubr.bf16.gmra.mrb[0].mxu0 %v2483
        %v2959 = vpop.f32.mrb[0].mxu0
        %v2960 = vadd.f32 0.0, %v2959
        %v2961 = vpop.f32.mrb[0].mxu0
        %v2962 = vpop.f32.mrb[0].mxu0
        %v2963 = vadd.f32 0.0, %v2962
        %v2964 = vpop.f32.mrb[0].mxu0
        %2965 = vdwg.mxu0
        %2966 = vmatprep.subr.bf16.mxu0 0
        %2967 = vmatpush1.bf16.msra.mxu0 %v2837
        %2968 = vmatprep.subr.bf16.mxu0 0
        %2969 = vmatpush1.bf16.msra.mxu0 %v2838
        %2970 = vmatprep.subr.bf16.mxu0 0
        %2971 = vmatpush1.bf16.msra.mxu0 %v2839
        %2972 = vmatprep.subr.bf16.mxu0 0
        %2973 = vmatpush1.bf16.msra.mxu0 %v2840
        %2974 = vmatprep.subr.bf16.mxu0 0
        %2975 = vmatpush1.bf16.msra.mxu0 %v2841
        %2976 = vmatprep.subr.bf16.mxu0 0
        %2977 = vmatpush1.bf16.msra.mxu0 %v2842
        %2978 = vmatprep.subr.bf16.mxu0 0
        %2979 = vmatpush1.bf16.msra.mxu0 %v2843
        %2980 = vmatprep.subr.bf16.mxu0 0
        %2981 = vmatpush1.bf16.msra.mxu0 %v2844
        %2982 = vmatprep.subr.bf16.mxu0 0
        %2983 = vmatpush1.bf16.msra.mxu0 0
        %2984 = vmatprep.subr.bf16.mxu0 0
        %2985 = vmatpush1.bf16.msra.mxu0 0
        %2986 = vmatprep.subr.bf16.mxu0 0
        %2987 = vmatpush1.bf16.msra.mxu0 0
        %2988 = vmatprep.subr.bf16.mxu0 0
        %2989 = vmatpush1.bf16.msra.mxu0 0
        %2990 = vmatprep.subr.bf16.mxu0 0
        %2991 = vmatpush1.bf16.msra.mxu0 0
        %2992 = vmatprep.subr.bf16.mxu0 0
        %2993 = vmatpush1.bf16.msra.mxu0 0
        %2994 = vmatprep.subr.bf16.mxu0 0
        %2995 = vmatpush1.bf16.msra.mxu0 0
        %2996 = vmatprep.subr.bf16.mxu0 0
        %2997 = vmatpush1.bf16.msra.mxu0 0
        %2998 = vmatprep.mubr.bf16.mxu0 0
        %2999 = vmatmul.mubr.bf16.gmra.mrb[0].mxu0 %v2646
        %v3000 = vpop.f32.mrb[0].mxu0
        %v3001 = vadd.f32 %v2904, %v3000
        %v3002 = vpop.f32.mrb[0].mxu0
        %v3003 = vpop.f32.mrb[0].mxu0
        %v3004 = vadd.f32 %v2907, %v3003
        %v3005 = vpop.f32.mrb[0].mxu0
        %3006 = vmatprep.mubr.bf16.mxu0 0
        %3007 = vmatmul.mubr.bf16.gmra.mrb[0].mxu0 %v2649
        %v3008 = vpop.f32.mrb[0].mxu0
        %v3009 = vadd.f32 %v2912, %v3008
        %v3010 = vpop.f32.mrb[0].mxu0
        %v3011 = vpop.f32.mrb[0].mxu0
        %v3012 = vadd.f32 %v2915, %v3011
        %v3013 = vpop.f32.mrb[0].mxu0
        %3014 = vmatprep.mubr.bf16.mxu0 0
        %3015 = vmatmul.mubr.bf16.gmra.mrb[0].mxu0 %v2652
        %v3016 = vpop.f32.mrb[0].mxu0
        %v3017 = vadd.f32 %v2920, %v3016
        %v3018 = vpop.f32.mrb[0].mxu0
        %v3019 = vpop.f32.mrb[0].mxu0
        %v3020 = vadd.f32 %v2923, %v3019
        %v3021 = vpop.f32.mrb[0].mxu0
        %3022 = vmatprep.mubr.bf16.mxu0 0
        %3023 = vmatmul.mubr.bf16.gmra.mrb[0].mxu0 %v2655
        %v3024 = vpop.f32.mrb[0].mxu0
        %v3025 = vadd.f32 %v2928, %v3024
        %v3026 = vpop.f32.mrb[0].mxu0
        %v3027 = vpop.f32.mrb[0].mxu0
        %v3028 = vadd.f32 %v2931, %v3027
        %v3029 = vpop.f32.mrb[0].mxu0
        %3030 = vmatprep.mubr.bf16.mxu0 0
        %3031 = vmatmul.mubr.bf16.gmra.mrb[0].mxu0 %v2658
        %v3032 = vpop.f32.mrb[0].mxu0
        %v3033 = vadd.f32 %v2936, %v3032
        %v3034 = vpop.f32.mrb[0].mxu0
        %v3035 = vpop.f32.mrb[0].mxu0
        %v3036 = vadd.f32 %v2939, %v3035
        %v3037 = vpop.f32.mrb[0].mxu0
        %3038 = vmatprep.mubr.bf16.mxu0 0
        %3039 = vmatmul.mubr.bf16.gmra.mrb[0].mxu0 %v2661
        %v3040 = vpop.f32.mrb[0].mxu0
        %v3041 = vadd.f32 %v2944, %v3040
        %v3042 = vpop.f32.mrb[0].mxu0
        %v3043 = vpop.f32.mrb[0].mxu0
        %v3044 = vadd.f32 %v2947, %v3043
        %v3045 = vpop.f32.mrb[0].mxu0
        %3046 = vmatprep.mubr.bf16.mxu0 0
        %3047 = vmatmul.mubr.bf16.gmra.mrb[0].mxu0 %v2664
        %v3048 = vpop.f32.mrb[0].mxu0
        %v3049 = vadd.f32 %v2952, %v3048
        %v3050 = vpop.f32.mrb[0].mxu0
        %v3051 = vpop.f32.mrb[0].mxu0
        %v3052 = vadd.f32 %v2955, %v3051
        %v3053 = vpop.f32.mrb[0].mxu0
        %3054 = vmatprep.mubr.bf16.mxu0 0
        %3055 = vmatmul.mubr.bf16.gmra.mrb[0].mxu0 %v2667
        %v3056 = vpop.f32.mrb[0].mxu0
        %v3057 = vadd.f32 %v2960, %v3056
        %v3058 = vpop.f32.mrb[0].mxu0
        %v3059 = vpop.f32.mrb[0].mxu0
        %v3060 = vadd.f32 %v2963, %v3059
        %v3061 = vpop.f32.mrb[0].mxu0
        %3062 = vdwg.mxu0
        %v3063 = vadd.f32 %v2349, %v3001
        %v3064 = vadd.f32 %v2352, %v3004
        %v3065 = vadd.f32 %v2357, %v3009
        %v3066 = vadd.f32 %v2360, %v3012
        %v3067 = vadd.f32 %v2365, %v3017
        %v3068 = vadd.f32 %v2368, %v3020
        %v3069 = vadd.f32 %v2373, %v3025
        %v3070 = vadd.f32 %v2376, %v3028
        %v3071 = vadd.f32 %v2381, %v3033
        %v3072 = vadd.f32 %v2384, %v3036
        %v3073 = vadd.f32 %v2389, %v3041
        %v3074 = vadd.f32 %v2392, %v3044
        %v3075 = vadd.f32 %v2397, %v3049
        %v3076 = vadd.f32 %v2400, %v3052
        %v3077 = vadd.f32 %v2405, %v3057
        %v3078 = vadd.f32 %v2408, %v3060
        %v3080 = vlaneseq
        %v3081 = vshrl.u32 %v3080, 7
        %v3082 = vsub.s32 0, %v3081
        %v3083 = vrot.slane %v327, %v3082
        %v3085 = vmul.f32 %v3063, %v3083
        %v3086 = vmul.f32 %v3064, %v3083
        %v3087 = vmul.f32 %v3065, %v3083
        %v3088 = vmul.f32 %v3066, %v3083
        %v3089 = vmul.f32 %v3067, %v3083
        %v3090 = vmul.f32 %v3068, %v3083
        %v3091 = vmul.f32 %v3069, %v3083
        %v3092 = vmul.f32 %v3070, %v3083
        %v3093 = vmul.f32 %v3071, %v3083
        %v3094 = vmul.f32 %v3072, %v3083
        %v3095 = vmul.f32 %v3073, %v3083
        %v3096 = vmul.f32 %v3074, %v3083
        %v3097 = vmul.f32 %v3075, %v3083
        %v3098 = vmul.f32 %v3076, %v3083
        %v3099 = vmul.f32 %v3077, %v3083
        %v3100 = vmul.f32 %v3078, %v3083
        %v3102 = vlaneseq
        %v3103 = vshrl.u32 %v3102, 7
        %v3104 = vsub.s32 0, %v3103
        %v3105 = vrot.slane %v328, %v3104
        %v3107 = vadd.f32 %v3085, %v3105
        %v3108 = vadd.f32 %v3086, %v3105
        %v3109 = vadd.f32 %v3087, %v3105
        %v3110 = vadd.f32 %v3088, %v3105
        %v3111 = vadd.f32 %v3089, %v3105
        %v3112 = vadd.f32 %v3090, %v3105
        %v3113 = vadd.f32 %v3091, %v3105
        %v3114 = vadd.f32 %v3092, %v3105
        %v3115 = vadd.f32 %v3093, %v3105
        %v3116 = vadd.f32 %v3094, %v3105
        %v3117 = vadd.f32 %v3095, %v3105
        %v3118 = vadd.f32 %v3096, %v3105
        %v3119 = vadd.f32 %v3097, %v3105
        %v3120 = vadd.f32 %v3098, %v3105
        %v3121 = vadd.f32 %v3099, %v3105
        %v3122 = vadd.f32 %v3100, %v3105
        %v3123 = vmax.f32 %v3107, 0.0
        %v3124 = vmax.f32 %v3108, 0.0
        %v3125 = vmax.f32 %v3109, 0.0
        %v3126 = vmax.f32 %v3110, 0.0
        %v3127 = vmax.f32 %v3111, 0.0
        %v3128 = vmax.f32 %v3112, 0.0
        %v3129 = vmax.f32 %v3113, 0.0
        %v3130 = vmax.f32 %v3114, 0.0
        %v3131 = vmax.f32 %v3115, 0.0
        %v3132 = vmax.f32 %v3116, 0.0
        %v3133 = vmax.f32 %v3117, 0.0
        %v3134 = vmax.f32 %v3118, 0.0
        %v3135 = vmax.f32 %v3119, 0.0
        %v3136 = vmax.f32 %v3120, 0.0
        %v3137 = vmax.f32 %v3121, 0.0
        %v3138 = vmax.f32 %v3122, 0.0
        %v3139 = vpack.c.bf16 %v3124, %v3123
        %v3140 = vpack.c.bf16 %v3126, %v3125
        %v3141 = vpack.c.bf16 %v3128, %v3127
        %v3142 = vpack.c.bf16 %v3130, %v3129
        %v3143 = vpack.c.bf16 %v3132, %v3131
        %v3144 = vpack.c.bf16 %v3134, %v3133
        %v3145 = vpack.c.bf16 %v3136, %v3135
        %v3146 = vpack.c.bf16 %v3138, %v3137
        %v3155 = vunpack.c.l.b16 %v3139
        %v3156 = vunpack.c.h.b16 %v3139
        %v3157 = vunpack.c.l.b16 %v3140
        %v3158 = vunpack.c.h.b16 %v3140
        %v3159 = vunpack.c.l.b16 %v3141
        %v3160 = vunpack.c.h.b16 %v3141
        %v3161 = vunpack.c.l.b16 %v3142
        %v3162 = vunpack.c.h.b16 %v3142
        %v3163 = vunpack.c.l.b16 %v3143
        %v3164 = vunpack.c.h.b16 %v3143
        %v3165 = vunpack.c.l.b16 %v3144
        %v3166 = vunpack.c.h.b16 %v3144
        %v3167 = vunpack.c.l.b16 %v3145
        %v3168 = vunpack.c.h.b16 %v3145
        %v3169 = vunpack.c.l.b16 %v3146
        %v3170 = vunpack.c.h.b16 %v3146
        %v3171 = vpack.c.b16 %v3155, %v3155
        %v3172 = vpack.c.b16 %v3156, %v3156
        %v3173 = vpack.c.b16 %v3157, %v3157
        %v3174 = vpack.c.b16 %v3158, %v3158
        %v3175 = vpack.c.b16 %v3159, %v3159
        %v3176 = vpack.c.b16 %v3160, %v3160
        %v3177 = vpack.c.b16 %v3161, %v3161
        %v3178 = vpack.c.b16 %v3162, %v3162
        %v3179 = vpack.c.b16 %v3163, %v3163
        %v3180 = vpack.c.b16 %v3164, %v3164
        %v3181 = vpack.c.b16 %v3165, %v3165
        %v3182 = vpack.c.b16 %v3166, %v3166
        %v3183 = vpack.c.b16 %v3167, %v3167
        %v3184 = vpack.c.b16 %v3168, %v3168
        %v3185 = vpack.c.b16 %v3169, %v3169
        %v3186 = vpack.c.b16 %v3170, %v3170
        %v3188 = vshrl.u32 %v3171, 16
        %v3190 = vrot.slane %v3188, 7
        %v3191 = vshll.u32 %v3171, 16
        %v3193 = vor.u32 %v3190, %v3191
        %v3194 = vrot.slane %v3190, 4
        %v3196 = vshrl.u32 %v3172, 16
        %v3198 = vrot.slane %v3196, 7
        %v3199 = vshll.u32 %v3172, 16
        %v3201 = vor.u32 %v3198, %v3199
        %v3202 = vsel %vm673, %v3194, %v3201
        %v3203 = vrot.slane %v3198, 4
        %v3205 = vshrl.u32 %v3173, 16
        %v3207 = vrot.slane %v3205, 7
        %v3208 = vshll.u32 %v3173, 16
        %v3210 = vor.u32 %v3207, %v3208
        %v3211 = vrot.slane %v3207, 4
        %v3213 = vshrl.u32 %v3174, 16
        %v3215 = vrot.slane %v3213, 7
        %v3216 = vshll.u32 %v3174, 16
        %v3218 = vor.u32 %v3215, %v3216
        %v3219 = vsel %vm673, %v3211, %v3218
        %v3220 = vrot.slane %v3215, 4
        %v3222 = vshrl.u32 %v3175, 16
        %v3224 = vrot.slane %v3222, 7
        %v3225 = vshll.u32 %v3175, 16
        %v3227 = vor.u32 %v3224, %v3225
        %v3228 = vrot.slane %v3224, 4
        %v3230 = vshrl.u32 %v3176, 16
        %v3232 = vrot.slane %v3230, 7
        %v3233 = vshll.u32 %v3176, 16
        %v3235 = vor.u32 %v3232, %v3233
        %v3236 = vsel %vm673, %v3228, %v3235
        %v3237 = vrot.slane %v3232, 4
        %v3239 = vshrl.u32 %v3177, 16
        %v3241 = vrot.slane %v3239, 7
        %v3242 = vshll.u32 %v3177, 16
        %v3244 = vor.u32 %v3241, %v3242
        %v3245 = vrot.slane %v3241, 4
        %v3247 = vshrl.u32 %v3178, 16
        %v3249 = vrot.slane %v3247, 7
        %v3250 = vshll.u32 %v3178, 16
        %v3252 = vor.u32 %v3249, %v3250
        %v3253 = vsel %vm673, %v3245, %v3252
        %v3254 = vrot.slane %v3249, 4
        %v3256 = vshrl.u32 %v3179, 16
        %v3258 = vrot.slane %v3256, 7
        %v3259 = vshll.u32 %v3179, 16
        %v3261 = vor.u32 %v3258, %v3259
        %v3262 = vrot.slane %v3258, 4
        %v3264 = vshrl.u32 %v3180, 16
        %v3266 = vrot.slane %v3264, 7
        %v3267 = vshll.u32 %v3180, 16
        %v3269 = vor.u32 %v3266, %v3267
        %v3270 = vsel %vm673, %v3262, %v3269
        %v3271 = vrot.slane %v3266, 4
        %v3273 = vshrl.u32 %v3181, 16
        %v3275 = vrot.slane %v3273, 7
        %v3276 = vshll.u32 %v3181, 16
        %v3278 = vor.u32 %v3275, %v3276
        %v3279 = vrot.slane %v3275, 4
        %v3281 = vshrl.u32 %v3182, 16
        %v3283 = vrot.slane %v3281, 7
        %v3284 = vshll.u32 %v3182, 16
        %v3286 = vor.u32 %v3283, %v3284
        %v3287 = vsel %vm673, %v3279, %v3286
        %v3288 = vrot.slane %v3283, 4
        %v3290 = vshrl.u32 %v3183, 16
        %v3292 = vrot.slane %v3290, 7
        %v3293 = vshll.u32 %v3183, 16
        %v3295 = vor.u32 %v3292, %v3293
        %v3296 = vrot.slane %v3292, 4
        %v3298 = vshrl.u32 %v3184, 16
        %v3300 = vrot.slane %v3298, 7
        %v3301 = vshll.u32 %v3184, 16
        %v3303 = vor.u32 %v3300, %v3301
        %v3304 = vsel %vm673, %v3296, %v3303
        %v3305 = vrot.slane %v3300, 4
        %v3307 = vshrl.u32 %v3185, 16
        %v3309 = vrot.slane %v3307, 7
        %v3310 = vshll.u32 %v3185, 16
        %v3312 = vor.u32 %v3309, %v3310
        %v3313 = vrot.slane %v3309, 4
        %v3315 = vshrl.u32 %v3186, 16
        %v3317 = vrot.slane %v3315, 7
        %v3318 = vshll.u32 %v3186, 16
        %v3320 = vor.u32 %v3317, %v3318
        %v3321 = vsel %vm673, %v3313, %v3320
        %v3322 = vrot.slane %v3317, 4
        %v3347 = vld [vmem:[%s447] sm:$0xf]
        %v3348 = vsel %vm995, %v3193, %v3347
        %3349 = vst [vmem:[%s447] sm:$0xf] %v3348
        %3350 = vst [vmem:[%s447 + $0x4] sm:$0xf] %v3202
        %v3351 = vld [vmem:[%s447 + $0x8] sm:$0x1]
        %v3352 = vsel %vm341, %v3203, %v3351
        %3353 = vst [vmem:[%s447 + $0x8] sm:$0x1] %v3352
        %v3354 = vld [vmem:[%s447 + $0xc] sm:$0xf]
        %v3355 = vsel %vm995, %v3210, %v3354
        %3356 = vst [vmem:[%s447 + $0xc] sm:$0xf] %v3355
        %3357 = vst [vmem:[%s447 + $0x10] sm:$0xf] %v3219
        %v3358 = vld [vmem:[%s447 + $0x14] sm:$0x1]
        %v3359 = vsel %vm341, %v3220, %v3358
        %3360 = vst [vmem:[%s447 + $0x14] sm:$0x1] %v3359
        %v3361 = vld [vmem:[%s447 + $0x18] sm:$0xf]
        %v3362 = vsel %vm995, %v3227, %v3361
        %3363 = vst [vmem:[%s447 + $0x18] sm:$0xf] %v3362
        %3364 = vst [vmem:[%s447 + $0x1c] sm:$0xf] %v3236
        %v3365 = vld [vmem:[%s447 + $0x20] sm:$0x1]
        %v3366 = vsel %vm341, %v3237, %v3365
        %3367 = vst [vmem:[%s447 + $0x20] sm:$0x1] %v3366
        %v3368 = vld [vmem:[%s447 + $0x24] sm:$0xf]
        %v3369 = vsel %vm995, %v3244, %v3368
        %3370 = vst [vmem:[%s447 + $0x24] sm:$0xf] %v3369
        %3371 = vst [vmem:[%s447 + $0x28] sm:$0xf] %v3253
        %v3372 = vld [vmem:[%s447 + $0x2c] sm:$0x1]
        %v3373 = vsel %vm341, %v3254, %v3372
        %3374 = vst [vmem:[%s447 + $0x2c] sm:$0x1] %v3373
        %v3375 = vld [vmem:[%s447 + $0x30] sm:$0xf]
        %v3376 = vsel %vm995, %v3261, %v3375
        %3377 = vst [vmem:[%s447 + $0x30] sm:$0xf] %v3376
        %3378 = vst [vmem:[%s447 + $0x34] sm:$0xf] %v3270
        %v3379 = vld [vmem:[%s447 + $0x38] sm:$0x1]
        %v3380 = vsel %vm341, %v3271, %v3379
        %3381 = vst [vmem:[%s447 + $0x38] sm:$0x1] %v3380
        %v3382 = vld [vmem:[%s447 + $0x3c] sm:$0xf]
        %v3383 = vsel %vm995, %v3278, %v3382
        %3384 = vst [vmem:[%s447 + $0x3c] sm:$0xf] %v3383
        %3385 = vst [vmem:[%s447 + $0x40] sm:$0xf] %v3287
        %v3386 = vld [vmem:[%s447 + $0x44] sm:$0x1]
        %v3387 = vsel %vm341, %v3288, %v3386
        %3388 = vst [vmem:[%s447 + $0x44] sm:$0x1] %v3387
        %v3389 = vld [vmem:[%s447 + $0x48] sm:$0xf]
        %v3390 = vsel %vm995, %v3295, %v3389
        %3391 = vst [vmem:[%s447 + $0x48] sm:$0xf] %v3390
        %3392 = vst [vmem:[%s447 + $0x4c] sm:$0xf] %v3304
        %v3393 = vld [vmem:[%s447 + $0x50] sm:$0x1]
        %v3394 = vsel %vm341, %v3305, %v3393
        %3395 = vst [vmem:[%s447 + $0x50] sm:$0x1] %v3394
        %v3396 = vld [vmem:[%s447 + $0x54] sm:$0xf]
        %v3397 = vsel %vm995, %v3312, %v3396
        %3398 = vst [vmem:[%s447 + $0x54] sm:$0xf] %v3397
        %3399 = vst [vmem:[%s447 + $0x58] sm:$0xf] %v3321
        %v3400 = vld [vmem:[%s447 + $0x5c] sm:$0x1]
        %v3401 = vsel %vm341, %v3322, %v3400
        %3402 = vst [vmem:[%s447 + $0x5c] sm:$0x1] %v3401
        %s3403 = scalar_lea.vmem [#allocation2], 96
        %v3404 = vld [vmem:[%s3403] sm:$0xf]
        %v3405 = vld [vmem:[%s3403 + $0x4] sm:$0xf]
        %v3406 = vld [vmem:[%s3403 + $0xc] sm:$0xf]
        %v3407 = vld [vmem:[%s3403 + $0x10] sm:$0xf]
        %v3408 = vld [vmem:[%s3403 + $0x18] sm:$0xf]
        %v3409 = vld [vmem:[%s3403 + $0x1c] sm:$0xf]
        %v3410 = vld [vmem:[%s3403 + $0x24] sm:$0xf]
        %v3411 = vld [vmem:[%s3403 + $0x28] sm:$0xf]
        %v3412 = vld [vmem:[%s3403 + $0x30] sm:$0xf]
        %v3413 = vld [vmem:[%s3403 + $0x34] sm:$0xf]
        %v3414 = vld [vmem:[%s3403 + $0x3c] sm:$0xf]
        %v3415 = vld [vmem:[%s3403 + $0x40] sm:$0xf]
        %v3416 = vld [vmem:[%s3403 + $0x48] sm:$0xf]
        %v3417 = vld [vmem:[%s3403 + $0x4c] sm:$0xf]
        %v3418 = vld [vmem:[%s3403 + $0x54] sm:$0xf]
        %v3419 = vld [vmem:[%s3403 + $0x58] sm:$0xf]
        %v3420 = vld [vmem:[%s3403 + $0x8] sm:$0x1]
        %v3421 = vld [vmem:[%s3403 + $0x14] sm:$0x1]
        %v3422 = vld [vmem:[%s3403 + $0x20] sm:$0x1]
        %v3423 = vld [vmem:[%s3403 + $0x2c] sm:$0x1]
        %v3424 = vld [vmem:[%s3403 + $0x38] sm:$0x1]
        %v3425 = vld [vmem:[%s3403 + $0x44] sm:$0x1]
        %v3426 = vld [vmem:[%s3403 + $0x50] sm:$0x1]
        %v3427 = vld [vmem:[%s3403 + $0x5c] sm:$0x1]
        %v3428 = vld [vmem:[%s3403] sm:$0xe]
        %v3429 = vld [vmem:[%s3403 + $0xc] sm:$0xe]
        %v3430 = vld [vmem:[%s3403 + $0x18] sm:$0xe]
        %v3431 = vld [vmem:[%s3403 + $0x24] sm:$0xe]
        %v3432 = vld [vmem:[%s3403 + $0x30] sm:$0xe]
        %v3433 = vld [vmem:[%s3403 + $0x3c] sm:$0xe]
        %v3434 = vld [vmem:[%s3403 + $0x48] sm:$0xe]
        %v3435 = vld [vmem:[%s3403 + $0x54] sm:$0xe]
        %v3452 = vunpack.c.l.b16 %v3404
        %v3453 = vunpack.c.l.b16 %v3405
        %v3454 = vunpack.c.l.b16 %v3406
        %v3455 = vunpack.c.l.b16 %v3407
        %v3456 = vunpack.c.l.b16 %v3408
        %v3457 = vunpack.c.l.b16 %v3409
        %v3458 = vunpack.c.l.b16 %v3410
        %v3459 = vunpack.c.l.b16 %v3411
        %v3460 = vunpack.c.l.b16 %v3412
        %v3461 = vunpack.c.l.b16 %v3413
        %v3462 = vunpack.c.l.b16 %v3414
        %v3463 = vunpack.c.l.b16 %v3415
        %v3464 = vunpack.c.l.b16 %v3416
        %v3465 = vunpack.c.l.b16 %v3417
        %v3466 = vunpack.c.l.b16 %v3418
        %v3467 = vunpack.c.l.b16 %v3419
        %v3468 = vpack.c.b16 %v3453, %v3452
        %v3469 = vpack.c.b16 %v3455, %v3454
        %v3470 = vpack.c.b16 %v3457, %v3456
        %v3471 = vpack.c.b16 %v3459, %v3458
        %v3472 = vpack.c.b16 %v3461, %v3460
        %v3473 = vpack.c.b16 %v3463, %v3462
        %v3474 = vpack.c.b16 %v3465, %v3464
        %v3475 = vpack.c.b16 %v3467, %v3466
        %v3492 = vunpack.c.l.b16 %v3420
        %v3493 = vunpack.c.l.b16 %v3421
        %v3494 = vunpack.c.l.b16 %v3422
        %v3495 = vunpack.c.l.b16 %v3423
        %v3496 = vunpack.c.l.b16 %v3424
        %v3497 = vunpack.c.l.b16 %v3425
        %v3498 = vunpack.c.l.b16 %v3426
        %v3499 = vunpack.c.l.b16 %v3427
        %v3500 = vpack.c.b16 %v3492, %v3492
        %v3501 = vpack.c.b16 %v3493, %v3493
        %v3502 = vpack.c.b16 %v3494, %v3494
        %v3503 = vpack.c.b16 %v3495, %v3495
        %v3504 = vpack.c.b16 %v3496, %v3496
        %v3505 = vpack.c.b16 %v3497, %v3497
        %v3506 = vpack.c.b16 %v3498, %v3498
        %v3507 = vpack.c.b16 %v3499, %v3499
        %v3509 = vshrl.u32 %v3468, 16
        %v3511 = vshll.u32 %v3468, 16
        %v3513 = vrot.slane %v3511, 1
        %v3514 = vor.u32 %v3509, %v3513
        %v3516 = vshll.u32 %v3500, 16
        %v3518 = vrot.slane %v3516, 1
        %v3519 = vsel %vm1212, %v3514, %v3518
        %v3521 = vshrl.u32 %v3469, 16
        %v3523 = vshll.u32 %v3469, 16
        %v3525 = vrot.slane %v3523, 1
        %v3526 = vor.u32 %v3521, %v3525
        %v3528 = vshll.u32 %v3501, 16
        %v3530 = vrot.slane %v3528, 1
        %v3531 = vsel %vm1212, %v3526, %v3530
        %v3533 = vshrl.u32 %v3470, 16
        %v3535 = vshll.u32 %v3470, 16
        %v3537 = vrot.slane %v3535, 1
        %v3538 = vor.u32 %v3533, %v3537
        %v3540 = vshll.u32 %v3502, 16
        %v3542 = vrot.slane %v3540, 1
        %v3543 = vsel %vm1212, %v3538, %v3542
        %v3545 = vshrl.u32 %v3471, 16
        %v3547 = vshll.u32 %v3471, 16
        %v3549 = vrot.slane %v3547, 1
        %v3550 = vor.u32 %v3545, %v3549
        %v3552 = vshll.u32 %v3503, 16
        %v3554 = vrot.slane %v3552, 1
        %v3555 = vsel %vm1212, %v3550, %v3554
        %v3557 = vshrl.u32 %v3472, 16
        %v3559 = vshll.u32 %v3472, 16
        %v3561 = vrot.slane %v3559, 1
        %v3562 = vor.u32 %v3557, %v3561
        %v3564 = vshll.u32 %v3504, 16
        %v3566 = vrot.slane %v3564, 1
        %v3567 = vsel %vm1212, %v3562, %v3566
        %v3569 = vshrl.u32 %v3473, 16
        %v3571 = vshll.u32 %v3473, 16
        %v3573 = vrot.slane %v3571, 1
        %v3574 = vor.u32 %v3569, %v3573
        %v3576 = vshll.u32 %v3505, 16
        %v3578 = vrot.slane %v3576, 1
        %v3579 = vsel %vm1212, %v3574, %v3578
        %v3581 = vshrl.u32 %v3474, 16
        %v3583 = vshll.u32 %v3474, 16
        %v3585 = vrot.slane %v3583, 1
        %v3586 = vor.u32 %v3581, %v3585
        %v3588 = vshll.u32 %v3506, 16
        %v3590 = vrot.slane %v3588, 1
        %v3591 = vsel %vm1212, %v3586, %v3590
        %v3593 = vshrl.u32 %v3475, 16
        %v3595 = vshll.u32 %v3475, 16
        %v3597 = vrot.slane %v3595, 1
        %v3598 = vor.u32 %v3593, %v3597
        %v3600 = vshll.u32 %v3507, 16
        %v3602 = vrot.slane %v3600, 1
        %v3603 = vsel %vm1212, %v3598, %v3602
        %v3620 = vunpack.c.l.b16 %v3428
        %v3621 = vunpack.c.l.b16 %v3429
        %v3622 = vunpack.c.l.b16 %v3430
        %v3623 = vunpack.c.l.b16 %v3431
        %v3624 = vunpack.c.l.b16 %v3432
        %v3625 = vunpack.c.l.b16 %v3433
        %v3626 = vunpack.c.l.b16 %v3434
        %v3627 = vunpack.c.l.b16 %v3435
        %v3628 = vpack.c.b16 %v3453, %v3620
        %v3629 = vpack.c.b16 %v3455, %v3621
        %v3630 = vpack.c.b16 %v3457, %v3622
        %v3631 = vpack.c.b16 %v3459, %v3623
        %v3632 = vpack.c.b16 %v3461, %v3624
        %v3633 = vpack.c.b16 %v3463, %v3625
        %v3634 = vpack.c.b16 %v3465, %v3626
        %v3635 = vpack.c.b16 %v3467, %v3627
        %v3636 = vrot.slane %v3628, 1
        %v3637 = vrot.slane %v3500, 1
        %v3638 = vsel %vm1341, %v3636, %v3637
        %v3639 = vrot.slane %v3629, 1
        %v3640 = vrot.slane %v3501, 1
        %v3641 = vsel %vm1341, %v3639, %v3640
        %v3642 = vrot.slane %v3630, 1
        %v3643 = vrot.slane %v3502, 1
        %v3644 = vsel %vm1341, %v3642, %v3643
        %v3645 = vrot.slane %v3631, 1
        %v3646 = vrot.slane %v3503, 1
        %v3647 = vsel %vm1341, %v3645, %v3646
        %v3648 = vrot.slane %v3632, 1
        %v3649 = vrot.slane %v3504, 1
        %v3650 = vsel %vm1341, %v3648, %v3649
        %v3651 = vrot.slane %v3633, 1
        %v3652 = vrot.slane %v3505, 1
        %v3653 = vsel %vm1341, %v3651, %v3652
        %v3654 = vrot.slane %v3634, 1
        %v3655 = vrot.slane %v3506, 1
        %v3656 = vsel %vm1341, %v3654, %v3655
        %v3657 = vrot.slane %v3635, 1
        %v3658 = vrot.slane %v3507, 1
        %v3659 = vsel %vm1341, %v3657, %v3658
        %v3668 = vld [vmem:[#allocation7] sm:$0xf]
        %v3669 = vld [vmem:[#allocation7 + $0x4] sm:$0xf]
        %v3670 = vld [vmem:[#allocation7 + $0x8] sm:$0xf]
        %v3671 = vld [vmem:[#allocation7 + $0xc] sm:$0xf]
        %v3672 = vld [vmem:[#allocation7 + $0x10] sm:$0xf]
        %v3673 = vld [vmem:[#allocation7 + $0x14] sm:$0xf]
        %v3674 = vld [vmem:[#allocation7 + $0x18] sm:$0xf]
        %v3675 = vld [vmem:[#allocation7 + $0x1c] sm:$0xf]
        %v3676 = vld [vmem:[#allocation7 + $0x20] sm:$0xf]
        %v3677 = vld [vmem:[#allocation7 + $0x24] sm:$0xf]
        %v3678 = vld [vmem:[#allocation7 + $0x28] sm:$0xf]
        %v3679 = vld [vmem:[#allocation7 + $0x2c] sm:$0xf]
        %v3680 = vld [vmem:[#allocation7 + $0x30] sm:$0xf]
        %v3681 = vld [vmem:[#allocation7 + $0x34] sm:$0xf]
        %v3682 = vld [vmem:[#allocation7 + $0x38] sm:$0xf]
        %v3683 = vld [vmem:[#allocation7 + $0x3c] sm:$0xf]
        %v3684 = vld [vmem:[#allocation7 + $0x40] sm:$0xf]
        %v3685 = vld [vmem:[#allocation7 + $0x44] sm:$0xf]
        %v3686 = vld [vmem:[#allocation7 + $0x48] sm:$0xf]
        %v3687 = vld [vmem:[#allocation7 + $0x4c] sm:$0xf]
        %v3688 = vld [vmem:[#allocation7 + $0x50] sm:$0xf]
        %v3689 = vld [vmem:[#allocation7 + $0x54] sm:$0xf]
        %v3690 = vld [vmem:[#allocation7 + $0x58] sm:$0xf]
        %v3691 = vld [vmem:[#allocation7 + $0x5c] sm:$0xf]
        %v3692 = vld [vmem:[#allocation7 + $0x60] sm:$0xf]
        %v3693 = vld [vmem:[#allocation7 + $0x64] sm:$0xf]
        %v3694 = vld [vmem:[#allocation7 + $0x68] sm:$0xf]
        %v3695 = vld [vmem:[#allocation7 + $0x6c] sm:$0xf]
        %v3696 = vld [vmem:[#allocation7 + $0x70] sm:$0xf]
        %v3697 = vld [vmem:[#allocation7 + $0x74] sm:$0xf]
        %v3698 = vld [vmem:[#allocation7 + $0x78] sm:$0xf]
        %v3699 = vld [vmem:[#allocation7 + $0x7c] sm:$0xf]
        %v3700 = vld [vmem:[#allocation7 + $0x80] sm:$0xf]
        %v3701 = vld [vmem:[#allocation7 + $0x84] sm:$0xf]
        %v3702 = vld [vmem:[#allocation7 + $0x88] sm:$0xf]
        %v3703 = vld [vmem:[#allocation7 + $0x8c] sm:$0xf]
        %v3704 = vld [vmem:[#allocation7 + $0x90] sm:$0xf]
        %v3705 = vld [vmem:[#allocation7 + $0x94] sm:$0xf]
        %v3706 = vld [vmem:[#allocation7 + $0x98] sm:$0xf]
        %v3707 = vld [vmem:[#allocation7 + $0x9c] sm:$0xf]
        %v3708 = vld [vmem:[#allocation7 + $0xa0] sm:$0xf]
        %v3709 = vld [vmem:[#allocation7 + $0xa4] sm:$0xf]
        %v3710 = vld [vmem:[#allocation7 + $0xa8] sm:$0xf]
        %v3711 = vld [vmem:[#allocation7 + $0xac] sm:$0xf]
        %v3712 = vld [vmem:[#allocation7 + $0xb0] sm:$0xf]
        %v3713 = vld [vmem:[#allocation7 + $0xb4] sm:$0xf]
        %v3714 = vld [vmem:[#allocation7 + $0xb8] sm:$0xf]
        %v3715 = vld [vmem:[#allocation7 + $0xbc] sm:$0xf]
        %s3716 = scalar_lea.vmem [#allocation2], 108
        %v3717 = vld [vmem:[%s3716] sm:$0xf]
        %v3718 = vld [vmem:[%s3716 + $0x4] sm:$0xf]
        %v3719 = vld [vmem:[%s3716 + $0xc] sm:$0xf]
        %v3720 = vld [vmem:[%s3716 + $0x10] sm:$0xf]
        %v3721 = vld [vmem:[%s3716 + $0x18] sm:$0xf]
        %v3722 = vld [vmem:[%s3716 + $0x1c] sm:$0xf]
        %v3723 = vld [vmem:[%s3716 + $0x24] sm:$0xf]
        %v3724 = vld [vmem:[%s3716 + $0x28] sm:$0xf]
        %v3725 = vld [vmem:[%s3716 + $0x30] sm:$0xf]
        %v3726 = vld [vmem:[%s3716 + $0x34] sm:$0xf]
        %v3727 = vld [vmem:[%s3716 + $0x3c] sm:$0xf]
        %v3728 = vld [vmem:[%s3716 + $0x40] sm:$0xf]
        %v3729 = vld [vmem:[%s3716 + $0x48] sm:$0xf]
        %v3730 = vld [vmem:[%s3716 + $0x4c] sm:$0xf]
        %v3731 = vld [vmem:[%s3716 + $0x54] sm:$0xf]
        %v3732 = vld [vmem:[%s3716 + $0x58] sm:$0xf]
        %v3733 = vld [vmem:[%s3716 + $0x8] sm:$0x1]
        %v3734 = vld [vmem:[%s3716 + $0x14] sm:$0x1]
        %v3735 = vld [vmem:[%s3716 + $0x20] sm:$0x1]
        %v3736 = vld [vmem:[%s3716 + $0x2c] sm:$0x1]
        %v3737 = vld [vmem:[%s3716 + $0x38] sm:$0x1]
        %v3738 = vld [vmem:[%s3716 + $0x44] sm:$0x1]
        %v3739 = vld [vmem:[%s3716 + $0x50] sm:$0x1]
        %v3740 = vld [vmem:[%s3716 + $0x5c] sm:$0x1]
        %v3741 = vld [vmem:[%s3716] sm:$0xe]
        %v3742 = vld [vmem:[%s3716 + $0xc] sm:$0xe]
        %v3743 = vld [vmem:[%s3716 + $0x18] sm:$0xe]
        %v3744 = vld [vmem:[%s3716 + $0x24] sm:$0xe]
        %v3745 = vld [vmem:[%s3716 + $0x30] sm:$0xe]
        %v3746 = vld [vmem:[%s3716 + $0x3c] sm:$0xe]
        %v3747 = vld [vmem:[%s3716 + $0x48] sm:$0xe]
        %v3748 = vld [vmem:[%s3716 + $0x54] sm:$0xe]
        %v3765 = vunpack.c.l.b16 %v3717
        %v3766 = vunpack.c.l.b16 %v3718
        %v3767 = vunpack.c.l.b16 %v3719
        %v3768 = vunpack.c.l.b16 %v3720
        %v3769 = vunpack.c.l.b16 %v3721
        %v3770 = vunpack.c.l.b16 %v3722
        %v3771 = vunpack.c.l.b16 %v3723
        %v3772 = vunpack.c.l.b16 %v3724
        %v3773 = vunpack.c.l.b16 %v3725
        %v3774 = vunpack.c.l.b16 %v3726
        %v3775 = vunpack.c.l.b16 %v3727
        %v3776 = vunpack.c.l.b16 %v3728
        %v3777 = vunpack.c.l.b16 %v3729
        %v3778 = vunpack.c.l.b16 %v3730
        %v3779 = vunpack.c.l.b16 %v3731
        %v3780 = vunpack.c.l.b16 %v3732
        %v3781 = vpack.c.b16 %v3766, %v3765
        %v3782 = vpack.c.b16 %v3768, %v3767
        %v3783 = vpack.c.b16 %v3770, %v3769
        %v3784 = vpack.c.b16 %v3772, %v3771
        %v3785 = vpack.c.b16 %v3774, %v3773
        %v3786 = vpack.c.b16 %v3776, %v3775
        %v3787 = vpack.c.b16 %v3778, %v3777
        %v3788 = vpack.c.b16 %v3780, %v3779
        %v3805 = vunpack.c.l.b16 %v3733
        %v3806 = vunpack.c.l.b16 %v3734
        %v3807 = vunpack.c.l.b16 %v3735
        %v3808 = vunpack.c.l.b16 %v3736
        %v3809 = vunpack.c.l.b16 %v3737
        %v3810 = vunpack.c.l.b16 %v3738
        %v3811 = vunpack.c.l.b16 %v3739
        %v3812 = vunpack.c.l.b16 %v3740
        %v3813 = vpack.c.b16 %v3805, %v3805
        %v3814 = vpack.c.b16 %v3806, %v3806
        %v3815 = vpack.c.b16 %v3807, %v3807
        %v3816 = vpack.c.b16 %v3808, %v3808
        %v3817 = vpack.c.b16 %v3809, %v3809
        %v3818 = vpack.c.b16 %v3810, %v3810
        %v3819 = vpack.c.b16 %v3811, %v3811
        %v3820 = vpack.c.b16 %v3812, %v3812
        %v3822 = vshrl.u32 %v3781, 16
        %v3824 = vshll.u32 %v3781, 16
        %v3826 = vrot.slane %v3824, 1
        %v3827 = vor.u32 %v3822, %v3826
        %v3829 = vshll.u32 %v3813, 16
        %v3831 = vrot.slane %v3829, 1
        %v3832 = vsel %vm1212, %v3827, %v3831
        %v3834 = vshrl.u32 %v3782, 16
        %v3836 = vshll.u32 %v3782, 16
        %v3838 = vrot.slane %v3836, 1
        %v3839 = vor.u32 %v3834, %v3838
        %v3841 = vshll.u32 %v3814, 16
        %v3843 = vrot.slane %v3841, 1
        %v3844 = vsel %vm1212, %v3839, %v3843
        %v3846 = vshrl.u32 %v3783, 16
        %v3848 = vshll.u32 %v3783, 16
        %v3850 = vrot.slane %v3848, 1
        %v3851 = vor.u32 %v3846, %v3850
        %v3853 = vshll.u32 %v3815, 16
        %v3855 = vrot.slane %v3853, 1
        %v3856 = vsel %vm1212, %v3851, %v3855
        %v3858 = vshrl.u32 %v3784, 16
        %v3860 = vshll.u32 %v3784, 16
        %v3862 = vrot.slane %v3860, 1
        %v3863 = vor.u32 %v3858, %v3862
        %v3865 = vshll.u32 %v3816, 16
        %v3867 = vrot.slane %v3865, 1
        %v3868 = vsel %vm1212, %v3863, %v3867
        %v3870 = vshrl.u32 %v3785, 16
        %v3872 = vshll.u32 %v3785, 16
        %v3874 = vrot.slane %v3872, 1
        %v3875 = vor.u32 %v3870, %v3874
        %v3877 = vshll.u32 %v3817, 16
        %v3879 = vrot.slane %v3877, 1
        %v3880 = vsel %vm1212, %v3875, %v3879
        %v3882 = vshrl.u32 %v3786, 16
        %v3884 = vshll.u32 %v3786, 16
        %v3886 = vrot.slane %v3884, 1
        %v3887 = vor.u32 %v3882, %v3886
        %v3889 = vshll.u32 %v3818, 16
        %v3891 = vrot.slane %v3889, 1
        %v3892 = vsel %vm1212, %v3887, %v3891
        %v3894 = vshrl.u32 %v3787, 16
        %v3896 = vshll.u32 %v3787, 16
        %v3898 = vrot.slane %v3896, 1
        %v3899 = vor.u32 %v3894, %v3898
        %v3901 = vshll.u32 %v3819, 16
        %v3903 = vrot.slane %v3901, 1
        %v3904 = vsel %vm1212, %v3899, %v3903
        %v3906 = vshrl.u32 %v3788, 16
        %v3908 = vshll.u32 %v3788, 16
        %v3910 = vrot.slane %v3908, 1
        %v3911 = vor.u32 %v3906, %v3910
        %v3913 = vshll.u32 %v3820, 16
        %v3915 = vrot.slane %v3913, 1
        %v3916 = vsel %vm1212, %v3911, %v3915
        %v3933 = vunpack.c.l.b16 %v3741
        %v3934 = vunpack.c.l.b16 %v3742
        %v3935 = vunpack.c.l.b16 %v3743
        %v3936 = vunpack.c.l.b16 %v3744
        %v3937 = vunpack.c.l.b16 %v3745
        %v3938 = vunpack.c.l.b16 %v3746
        %v3939 = vunpack.c.l.b16 %v3747
        %v3940 = vunpack.c.l.b16 %v3748
        %v3941 = vpack.c.b16 %v3766, %v3933
        %v3942 = vpack.c.b16 %v3768, %v3934
        %v3943 = vpack.c.b16 %v3770, %v3935
        %v3944 = vpack.c.b16 %v3772, %v3936
        %v3945 = vpack.c.b16 %v3774, %v3937
        %v3946 = vpack.c.b16 %v3776, %v3938
        %v3947 = vpack.c.b16 %v3778, %v3939
        %v3948 = vpack.c.b16 %v3780, %v3940
        %v3949 = vrot.slane %v3941, 1
        %v3950 = vrot.slane %v3813, 1
        %v3951 = vsel %vm1341, %v3949, %v3950
        %v3952 = vrot.slane %v3942, 1
        %v3953 = vrot.slane %v3814, 1
        %v3954 = vsel %vm1341, %v3952, %v3953
        %v3955 = vrot.slane %v3943, 1
        %v3956 = vrot.slane %v3815, 1
        %v3957 = vsel %vm1341, %v3955, %v3956
        %v3958 = vrot.slane %v3944, 1
        %v3959 = vrot.slane %v3816, 1
        %v3960 = vsel %vm1341, %v3958, %v3959
        %v3961 = vrot.slane %v3945, 1
        %v3962 = vrot.slane %v3817, 1
        %v3963 = vsel %vm1341, %v3961, %v3962
        %v3964 = vrot.slane %v3946, 1
        %v3965 = vrot.slane %v3818, 1
        %v3966 = vsel %vm1341, %v3964, %v3965
        %v3967 = vrot.slane %v3947, 1
        %v3968 = vrot.slane %v3819, 1
        %v3969 = vsel %vm1341, %v3967, %v3968
        %v3970 = vrot.slane %v3948, 1
        %v3971 = vrot.slane %v3820, 1
        %v3972 = vsel %vm1341, %v3970, %v3971
        %v3981 = vld [vmem:[%s1686] sm:$0xf]
        %v3982 = vld [vmem:[%s1686 + $0x4] sm:$0xf]
        %v3983 = vld [vmem:[%s1686 + $0x8] sm:$0xf]
        %v3984 = vld [vmem:[%s1686 + $0xc] sm:$0xf]
        %v3985 = vld [vmem:[%s1686 + $0x10] sm:$0xf]
        %v3986 = vld [vmem:[%s1686 + $0x14] sm:$0xf]
        %v3987 = vld [vmem:[%s1686 + $0x18] sm:$0xf]
        %v3988 = vld [vmem:[%s1686 + $0x1c] sm:$0xf]
        %v3989 = vld [vmem:[%s1686 + $0x20] sm:$0xf]
        %v3990 = vld [vmem:[%s1686 + $0x24] sm:$0xf]
        %v3991 = vld [vmem:[%s1686 + $0x28] sm:$0xf]
        %v3992 = vld [vmem:[%s1686 + $0x2c] sm:$0xf]
        %v3993 = vld [vmem:[%s1686 + $0x30] sm:$0xf]
        %v3994 = vld [vmem:[%s1686 + $0x34] sm:$0xf]
        %v3995 = vld [vmem:[%s1686 + $0x38] sm:$0xf]
        %v3996 = vld [vmem:[%s1686 + $0x3c] sm:$0xf]
        %v3997 = vld [vmem:[%s1686 + $0x40] sm:$0xf]
        %v3998 = vld [vmem:[%s1686 + $0x44] sm:$0xf]
        %v3999 = vld [vmem:[%s1686 + $0x48] sm:$0xf]
        %v4000 = vld [vmem:[%s1686 + $0x4c] sm:$0xf]
        %v4001 = vld [vmem:[%s1686 + $0x50] sm:$0xf]
        %v4002 = vld [vmem:[%s1686 + $0x54] sm:$0xf]
        %v4003 = vld [vmem:[%s1686 + $0x58] sm:$0xf]
        %v4004 = vld [vmem:[%s1686 + $0x5c] sm:$0xf]
        %v4005 = vld [vmem:[%s1686 + $0x60] sm:$0xf]
        %v4006 = vld [vmem:[%s1686 + $0x64] sm:$0xf]
        %v4007 = vld [vmem:[%s1686 + $0x68] sm:$0xf]
        %v4008 = vld [vmem:[%s1686 + $0x6c] sm:$0xf]
        %v4009 = vld [vmem:[%s1686 + $0x70] sm:$0xf]
        %v4010 = vld [vmem:[%s1686 + $0x74] sm:$0xf]
        %v4011 = vld [vmem:[%s1686 + $0x78] sm:$0xf]
        %v4012 = vld [vmem:[%s1686 + $0x7c] sm:$0xf]
        %v4013 = vld [vmem:[%s1686 + $0x80] sm:$0xf]
        %v4014 = vld [vmem:[%s1686 + $0x84] sm:$0xf]
        %v4015 = vld [vmem:[%s1686 + $0x88] sm:$0xf]
        %v4016 = vld [vmem:[%s1686 + $0x8c] sm:$0xf]
        %v4017 = vld [vmem:[%s1686 + $0x90] sm:$0xf]
        %v4018 = vld [vmem:[%s1686 + $0x94] sm:$0xf]
        %v4019 = vld [vmem:[%s1686 + $0x98] sm:$0xf]
        %v4020 = vld [vmem:[%s1686 + $0x9c] sm:$0xf]
        %v4021 = vld [vmem:[%s1686 + $0xa0] sm:$0xf]
        %v4022 = vld [vmem:[%s1686 + $0xa4] sm:$0xf]
        %v4023 = vld [vmem:[%s1686 + $0xa8] sm:$0xf]
        %v4024 = vld [vmem:[%s1686 + $0xac] sm:$0xf]
        %v4025 = vld [vmem:[%s1686 + $0xb0] sm:$0xf]
        %v4026 = vld [vmem:[%s1686 + $0xb4] sm:$0xf]
        %v4027 = vld [vmem:[%s1686 + $0xb8] sm:$0xf]
        %v4028 = vld [vmem:[%s1686 + $0xbc] sm:$0xf]
        %v4077 = vunpack.c.l.b16 %v3981
        %v4078 = vunpack.c.l.b16 %v3982
        %v4079 = vunpack.c.l.b16 %v3983
        %v4080 = vunpack.c.l.b16 %v3984
        %v4081 = vunpack.c.l.b16 %v3985
        %v4082 = vunpack.c.l.b16 %v3986
        %v4083 = vunpack.c.l.b16 %v3987
        %v4084 = vunpack.c.l.b16 %v3988
        %v4085 = vunpack.c.l.b16 %v3989
        %v4086 = vunpack.c.l.b16 %v3990
        %v4087 = vunpack.c.l.b16 %v3991
        %v4088 = vunpack.c.l.b16 %v3992
        %v4089 = vunpack.c.l.b16 %v3993
        %v4090 = vunpack.c.l.b16 %v3994
        %v4091 = vunpack.c.l.b16 %v3995
        %v4092 = vunpack.c.l.b16 %v3996
        %v4093 = vunpack.c.l.b16 %v3997
        %v4094 = vunpack.c.l.b16 %v3998
        %v4095 = vunpack.c.l.b16 %v3999
        %v4096 = vunpack.c.l.b16 %v4000
        %v4097 = vunpack.c.l.b16 %v4001
        %v4098 = vunpack.c.l.b16 %v4002
        %v4099 = vunpack.c.l.b16 %v4003
        %v4100 = vunpack.c.l.b16 %v4004
        %v4101 = vunpack.c.l.b16 %v4005
        %v4102 = vunpack.c.l.b16 %v4006
        %v4103 = vunpack.c.l.b16 %v4007
        %v4104 = vunpack.c.l.b16 %v4008
        %v4105 = vunpack.c.l.b16 %v4009
        %v4106 = vunpack.c.l.b16 %v4010
        %v4107 = vunpack.c.l.b16 %v4011
        %v4108 = vunpack.c.l.b16 %v4012
        %v4109 = vunpack.c.l.b16 %v4013
        %v4110 = vunpack.c.l.b16 %v4014
        %v4111 = vunpack.c.l.b16 %v4015
        %v4112 = vunpack.c.l.b16 %v4016
        %v4113 = vunpack.c.l.b16 %v4017
        %v4114 = vunpack.c.l.b16 %v4018
        %v4115 = vunpack.c.l.b16 %v4019
        %v4116 = vunpack.c.l.b16 %v4020
        %v4117 = vunpack.c.l.b16 %v4021
        %v4118 = vunpack.c.l.b16 %v4022
        %v4119 = vunpack.c.l.b16 %v4023
        %v4120 = vunpack.c.l.b16 %v4024
        %v4121 = vunpack.c.l.b16 %v4025
        %v4122 = vunpack.c.l.b16 %v4026
        %v4123 = vunpack.c.l.b16 %v4027
        %v4124 = vunpack.c.l.b16 %v4028
        %v4125 = vpack.c.b16 %v4078, %v4077
        %v4126 = vpack.c.b16 %v4080, %v4079
        %v4127 = vpack.c.b16 %v4082, %v4081
        %v4128 = vpack.c.b16 %v4084, %v4083
        %v4129 = vpack.c.b16 %v4086, %v4085
        %v4130 = vpack.c.b16 %v4088, %v4087
        %v4131 = vpack.c.b16 %v4090, %v4089
        %v4132 = vpack.c.b16 %v4092, %v4091
        %v4133 = vpack.c.b16 %v4094, %v4093
        %v4134 = vpack.c.b16 %v4096, %v4095
        %v4135 = vpack.c.b16 %v4098, %v4097
        %v4136 = vpack.c.b16 %v4100, %v4099
        %v4137 = vpack.c.b16 %v4102, %v4101
        %v4138 = vpack.c.b16 %v4104, %v4103
        %v4139 = vpack.c.b16 %v4106, %v4105
        %v4140 = vpack.c.b16 %v4108, %v4107
        %v4141 = vpack.c.b16 %v4110, %v4109
        %v4142 = vpack.c.b16 %v4112, %v4111
        %v4143 = vpack.c.b16 %v4114, %v4113
        %v4144 = vpack.c.b16 %v4116, %v4115
        %v4145 = vpack.c.b16 %v4118, %v4117
        %v4146 = vpack.c.b16 %v4120, %v4119
        %v4147 = vpack.c.b16 %v4122, %v4121
        %v4148 = vpack.c.b16 %v4124, %v4123
        %4173 = vmatprep.subr.bf16.mxu0 0
        %4174 = vmatpush1.bf16.msra.mxu0 %v4125
        %4175 = vmatprep.subr.bf16.mxu0 0
        %4176 = vmatpush1.bf16.msra.mxu0 %v4126
        %4177 = vmatprep.subr.bf16.mxu0 0
        %4178 = vmatpush1.bf16.msra.mxu0 %v4127
        %4179 = vmatprep.subr.bf16.mxu0 0
        %4180 = vmatpush1.bf16.msra.mxu0 %v4128
        %4181 = vmatprep.subr.bf16.mxu0 0
        %4182 = vmatpush1.bf16.msra.mxu0 %v4129
        %4183 = vmatprep.subr.bf16.mxu0 0
        %4184 = vmatpush1.bf16.msra.mxu0 %v4130
        %4185 = vmatprep.subr.bf16.mxu0 0
        %4186 = vmatpush1.bf16.msra.mxu0 %v4131
        %4187 = vmatprep.subr.bf16.mxu0 0
        %4188 = vmatpush1.bf16.msra.mxu0 %v4132
        %4189 = vmatprep.subr.bf16.mxu0 0
        %4190 = vmatpush1.bf16.msra.mxu0 %v4133
        %4191 = vmatprep.subr.bf16.mxu0 0
        %4192 = vmatpush1.bf16.msra.mxu0 %v4134
        %4193 = vmatprep.subr.bf16.mxu0 0
        %4194 = vmatpush1.bf16.msra.mxu0 %v4135
        %4195 = vmatprep.subr.bf16.mxu0 0
        %4196 = vmatpush1.bf16.msra.mxu0 %v4136
        %4197 = vmatprep.subr.bf16.mxu0 0
        %4198 = vmatpush1.bf16.msra.mxu0 %v4137
        %4199 = vmatprep.subr.bf16.mxu0 0
        %4200 = vmatpush1.bf16.msra.mxu0 %v4138
        %4201 = vmatprep.subr.bf16.mxu0 0
        %4202 = vmatpush1.bf16.msra.mxu0 %v4139
        %4203 = vmatprep.subr.bf16.mxu0 0
        %4204 = vmatpush1.bf16.msra.mxu0 %v4140
        %4205 = vmatprep.mubr.bf16.mxu0 %v3832
        %4206 = vmatmul.mubr.bf16.gmra.mrb[0].mxu0 %v3781
        %v4207 = vpop.f32.mrb[0].mxu0
        %v4208 = vadd.f32 0.0, %v4207
        %v4209 = vpop.f32.mrb[0].mxu0
        %v4210 = vpop.f32.mrb[0].mxu0
        %v4211 = vadd.f32 0.0, %v4210
        %v4212 = vpop.f32.mrb[0].mxu0
        %4213 = vmatprep.mubr.bf16.mxu0 %v3844
        %4214 = vmatmul.mubr.bf16.gmra.mrb[0].mxu0 %v3782
        %v4215 = vpop.f32.mrb[0].mxu0
        %v4216 = vadd.f32 0.0, %v4215
        %v4217 = vpop.f32.mrb[0].mxu0
        %v4218 = vpop.f32.mrb[0].mxu0
        %v4219 = vadd.f32 0.0, %v4218
        %v4220 = vpop.f32.mrb[0].mxu0
        %4221 = vmatprep.mubr.bf16.mxu0 %v3856
        %4222 = vmatmul.mubr.bf16.gmra.mrb[0].mxu0 %v3783
        %v4223 = vpop.f32.mrb[0].mxu0
        %v4224 = vadd.f32 0.0, %v4223
        %v4225 = vpop.f32.mrb[0].mxu0
        %v4226 = vpop.f32.mrb[0].mxu0
        %v4227 = vadd.f32 0.0, %v4226
        %v4228 = vpop.f32.mrb[0].mxu0
        %4229 = vmatprep.mubr.bf16.mxu0 %v3868
        %4230 = vmatmul.mubr.bf16.gmra.mrb[0].mxu0 %v3784
        %v4231 = vpop.f32.mrb[0].mxu0
        %v4232 = vadd.f32 0.0, %v4231
        %v4233 = vpop.f32.mrb[0].mxu0
        %v4234 = vpop.f32.mrb[0].mxu0
        %v4235 = vadd.f32 0.0, %v4234
        %v4236 = vpop.f32.mrb[0].mxu0
        %4237 = vmatprep.mubr.bf16.mxu0 %v3880
        %4238 = vmatmul.mubr.bf16.gmra.mrb[0].mxu0 %v3785
        %v4239 = vpop.f32.mrb[0].mxu0
        %v4240 = vadd.f32 0.0, %v4239
        %v4241 = vpop.f32.mrb[0].mxu0
        %v4242 = vpop.f32.mrb[0].mxu0
        %v4243 = vadd.f32 0.0, %v4242
        %v4244 = vpop.f32.mrb[0].mxu0
        %4245 = vmatprep.mubr.bf16.mxu0 %v3892
        %4246 = vmatmul.mubr.bf16.gmra.mrb[0].mxu0 %v3786
        %v4247 = vpop.f32.mrb[0].mxu0
        %v4248 = vadd.f32 0.0, %v4247
        %v4249 = vpop.f32.mrb[0].mxu0
        %v4250 = vpop.f32.mrb[0].mxu0
        %v4251 = vadd.f32 0.0, %v4250
        %v4252 = vpop.f32.mrb[0].mxu0
        %4253 = vmatprep.mubr.bf16.mxu0 %v3904
        %4254 = vmatmul.mubr.bf16.gmra.mrb[0].mxu0 %v3787
        %v4255 = vpop.f32.mrb[0].mxu0
        %v4256 = vadd.f32 0.0, %v4255
        %v4257 = vpop.f32.mrb[0].mxu0
        %v4258 = vpop.f32.mrb[0].mxu0
        %v4259 = vadd.f32 0.0, %v4258
        %v4260 = vpop.f32.mrb[0].mxu0
        %4261 = vmatprep.mubr.bf16.mxu0 %v3916
        %4262 = vmatmul.mubr.bf16.gmra.mrb[0].mxu0 %v3788
        %v4263 = vpop.f32.mrb[0].mxu0
        %v4264 = vadd.f32 0.0, %v4263
        %v4265 = vpop.f32.mrb[0].mxu0
        %v4266 = vpop.f32.mrb[0].mxu0
        %v4267 = vadd.f32 0.0, %v4266
        %v4268 = vpop.f32.mrb[0].mxu0
        %4269 = vdwg.mxu0
        %4270 = vmatprep.subr.bf16.mxu0 0
        %4271 = vmatpush1.bf16.msra.mxu0 %v4141
        %4272 = vmatprep.subr.bf16.mxu0 0
        %4273 = vmatpush1.bf16.msra.mxu0 %v4142
        %4274 = vmatprep.subr.bf16.mxu0 0
        %4275 = vmatpush1.bf16.msra.mxu0 %v4143
        %4276 = vmatprep.subr.bf16.mxu0 0
        %4277 = vmatpush1.bf16.msra.mxu0 %v4144
        %4278 = vmatprep.subr.bf16.mxu0 0
        %4279 = vmatpush1.bf16.msra.mxu0 %v4145
        %4280 = vmatprep.subr.bf16.mxu0 0
        %4281 = vmatpush1.bf16.msra.mxu0 %v4146
        %4282 = vmatprep.subr.bf16.mxu0 0
        %4283 = vmatpush1.bf16.msra.mxu0 %v4147
        %4284 = vmatprep.subr.bf16.mxu0 0
        %4285 = vmatpush1.bf16.msra.mxu0 %v4148
        %4286 = vmatprep.subr.bf16.mxu0 0
        %4287 = vmatpush1.bf16.msra.mxu0 0
        %4288 = vmatprep.subr.bf16.mxu0 0
        %4289 = vmatpush1.bf16.msra.mxu0 0
        %4290 = vmatprep.subr.bf16.mxu0 0
        %4291 = vmatpush1.bf16.msra.mxu0 0
        %4292 = vmatprep.subr.bf16.mxu0 0
        %4293 = vmatpush1.bf16.msra.mxu0 0
        %4294 = vmatprep.subr.bf16.mxu0 0
        %4295 = vmatpush1.bf16.msra.mxu0 0
        %4296 = vmatprep.subr.bf16.mxu0 0
        %4297 = vmatpush1.bf16.msra.mxu0 0
        %4298 = vmatprep.subr.bf16.mxu0 0
        %4299 = vmatpush1.bf16.msra.mxu0 0
        %4300 = vmatprep.subr.bf16.mxu0 0
        %4301 = vmatpush1.bf16.msra.mxu0 0
        %4302 = vmatprep.mubr.bf16.mxu0 0
        %4303 = vmatmul.mubr.bf16.gmra.mrb[0].mxu0 %v3951
        %v4304 = vpop.f32.mrb[0].mxu0
        %v4305 = vadd.f32 %v4208, %v4304
        %v4306 = vpop.f32.mrb[0].mxu0
        %v4307 = vpop.f32.mrb[0].mxu0
        %v4308 = vadd.f32 %v4211, %v4307
        %v4309 = vpop.f32.mrb[0].mxu0
        %4310 = vmatprep.mubr.bf16.mxu0 0
        %4311 = vmatmul.mubr.bf16.gmra.mrb[0].mxu0 %v3954
        %v4312 = vpop.f32.mrb[0].mxu0
        %v4313 = vadd.f32 %v4216, %v4312
        %v4314 = vpop.f32.mrb[0].mxu0
        %v4315 = vpop.f32.mrb[0].mxu0
        %v4316 = vadd.f32 %v4219, %v4315
        %v4317 = vpop.f32.mrb[0].mxu0
        %4318 = vmatprep.mubr.bf16.mxu0 0
        %4319 = vmatmul.mubr.bf16.gmra.mrb[0].mxu0 %v3957
        %v4320 = vpop.f32.mrb[0].mxu0
        %v4321 = vadd.f32 %v4224, %v4320
        %v4322 = vpop.f32.mrb[0].mxu0
        %v4323 = vpop.f32.mrb[0].mxu0
        %v4324 = vadd.f32 %v4227, %v4323
        %v4325 = vpop.f32.mrb[0].mxu0
        %4326 = vmatprep.mubr.bf16.mxu0 0
        %4327 = vmatmul.mubr.bf16.gmra.mrb[0].mxu0 %v3960
        %v4328 = vpop.f32.mrb[0].mxu0
        %v4329 = vadd.f32 %v4232, %v4328
        %v4330 = vpop.f32.mrb[0].mxu0
        %v4331 = vpop.f32.mrb[0].mxu0
        %v4332 = vadd.f32 %v4235, %v4331
        %v4333 = vpop.f32.mrb[0].mxu0
        %4334 = vmatprep.mubr.bf16.mxu0 0
        %4335 = vmatmul.mubr.bf16.gmra.mrb[0].mxu0 %v3963
        %v4336 = vpop.f32.mrb[0].mxu0
        %v4337 = vadd.f32 %v4240, %v4336
        %v4338 = vpop.f32.mrb[0].mxu0
        %v4339 = vpop.f32.mrb[0].mxu0
        %v4340 = vadd.f32 %v4243, %v4339
        %v4341 = vpop.f32.mrb[0].mxu0
        %4342 = vmatprep.mubr.bf16.mxu0 0
        %4343 = vmatmul.mubr.bf16.gmra.mrb[0].mxu0 %v3966
        %v4344 = vpop.f32.mrb[0].mxu0
        %v4345 = vadd.f32 %v4248, %v4344
        %v4346 = vpop.f32.mrb[0].mxu0
        %v4347 = vpop.f32.mrb[0].mxu0
        %v4348 = vadd.f32 %v4251, %v4347
        %v4349 = vpop.f32.mrb[0].mxu0
        %4350 = vmatprep.mubr.bf16.mxu0 0
        %4351 = vmatmul.mubr.bf16.gmra.mrb[0].mxu0 %v3969
        %v4352 = vpop.f32.mrb[0].mxu0
        %v4353 = vadd.f32 %v4256, %v4352
        %v4354 = vpop.f32.mrb[0].mxu0
        %v4355 = vpop.f32.mrb[0].mxu0
        %v4356 = vadd.f32 %v4259, %v4355
        %v4357 = vpop.f32.mrb[0].mxu0
        %4358 = vmatprep.mubr.bf16.mxu0 0
        %4359 = vmatmul.mubr.bf16.gmra.mrb[0].mxu0 %v3972
        %v4360 = vpop.f32.mrb[0].mxu0
        %v4361 = vadd.f32 %v4264, %v4360
        %v4362 = vpop.f32.mrb[0].mxu0
        %v4363 = vpop.f32.mrb[0].mxu0
        %v4364 = vadd.f32 %v4267, %v4363
        %v4365 = vpop.f32.mrb[0].mxu0
        %4366 = vdwg.mxu0
        %v4415 = vunpack.c.l.b16 %v3668
        %v4416 = vunpack.c.l.b16 %v3669
        %v4417 = vunpack.c.l.b16 %v3670
        %v4418 = vunpack.c.l.b16 %v3671
        %v4419 = vunpack.c.l.b16 %v3672
        %v4420 = vunpack.c.l.b16 %v3673
        %v4421 = vunpack.c.l.b16 %v3674
        %v4422 = vunpack.c.l.b16 %v3675
        %v4423 = vunpack.c.l.b16 %v3676
        %v4424 = vunpack.c.l.b16 %v3677
        %v4425 = vunpack.c.l.b16 %v3678
        %v4426 = vunpack.c.l.b16 %v3679
        %v4427 = vunpack.c.l.b16 %v3680
        %v4428 = vunpack.c.l.b16 %v3681
        %v4429 = vunpack.c.l.b16 %v3682
        %v4430 = vunpack.c.l.b16 %v3683
        %v4431 = vunpack.c.l.b16 %v3684
        %v4432 = vunpack.c.l.b16 %v3685
        %v4433 = vunpack.c.l.b16 %v3686
        %v4434 = vunpack.c.l.b16 %v3687
        %v4435 = vunpack.c.l.b16 %v3688
        %v4436 = vunpack.c.l.b16 %v3689
        %v4437 = vunpack.c.l.b16 %v3690
        %v4438 = vunpack.c.l.b16 %v3691
        %v4439 = vunpack.c.l.b16 %v3692
        %v4440 = vunpack.c.l.b16 %v3693
        %v4441 = vunpack.c.l.b16 %v3694
        %v4442 = vunpack.c.l.b16 %v3695
        %v4443 = vunpack.c.l.b16 %v3696
        %v4444 = vunpack.c.l.b16 %v3697
        %v4445 = vunpack.c.l.b16 %v3698
        %v4446 = vunpack.c.l.b16 %v3699
        %v4447 = vunpack.c.l.b16 %v3700
        %v4448 = vunpack.c.l.b16 %v3701
        %v4449 = vunpack.c.l.b16 %v3702
        %v4450 = vunpack.c.l.b16 %v3703
        %v4451 = vunpack.c.l.b16 %v3704
        %v4452 = vunpack.c.l.b16 %v3705
        %v4453 = vunpack.c.l.b16 %v3706
        %v4454 = vunpack.c.l.b16 %v3707
        %v4455 = vunpack.c.l.b16 %v3708
        %v4456 = vunpack.c.l.b16 %v3709
        %v4457 = vunpack.c.l.b16 %v3710
        %v4458 = vunpack.c.l.b16 %v3711
        %v4459 = vunpack.c.l.b16 %v3712
        %v4460 = vunpack.c.l.b16 %v3713
        %v4461 = vunpack.c.l.b16 %v3714
        %v4462 = vunpack.c.l.b16 %v3715
        %v4463 = vpack.c.b16 %v4416, %v4415
        %v4464 = vpack.c.b16 %v4418, %v4417
        %v4465 = vpack.c.b16 %v4420, %v4419
        %v4466 = vpack.c.b16 %v4422, %v4421
        %v4467 = vpack.c.b16 %v4424, %v4423
        %v4468 = vpack.c.b16 %v4426, %v4425
        %v4469 = vpack.c.b16 %v4428, %v4427
        %v4470 = vpack.c.b16 %v4430, %v4429
        %v4471 = vpack.c.b16 %v4432, %v4431
        %v4472 = vpack.c.b16 %v4434, %v4433
        %v4473 = vpack.c.b16 %v4436, %v4435
        %v4474 = vpack.c.b16 %v4438, %v4437
        %v4475 = vpack.c.b16 %v4440, %v4439
        %v4476 = vpack.c.b16 %v4442, %v4441
        %v4477 = vpack.c.b16 %v4444, %v4443
        %v4478 = vpack.c.b16 %v4446, %v4445
        %v4479 = vpack.c.b16 %v4448, %v4447
        %v4480 = vpack.c.b16 %v4450, %v4449
        %v4481 = vpack.c.b16 %v4452, %v4451
        %v4482 = vpack.c.b16 %v4454, %v4453
        %v4483 = vpack.c.b16 %v4456, %v4455
        %v4484 = vpack.c.b16 %v4458, %v4457
        %v4485 = vpack.c.b16 %v4460, %v4459
        %v4486 = vpack.c.b16 %v4462, %v4461
        %4511 = vmatprep.subr.bf16.mxu0 0
        %4512 = vmatpush1.bf16.msra.mxu0 %v4463
        %4513 = vmatprep.subr.bf16.mxu0 0
        %4514 = vmatpush1.bf16.msra.mxu0 %v4464
        %4515 = vmatprep.subr.bf16.mxu0 0
        %4516 = vmatpush1.bf16.msra.mxu0 %v4465
        %4517 = vmatprep.subr.bf16.mxu0 0
        %4518 = vmatpush1.bf16.msra.mxu0 %v4466
        %4519 = vmatprep.subr.bf16.mxu0 0
        %4520 = vmatpush1.bf16.msra.mxu0 %v4467
        %4521 = vmatprep.subr.bf16.mxu0 0
        %4522 = vmatpush1.bf16.msra.mxu0 %v4468
        %4523 = vmatprep.subr.bf16.mxu0 0
        %4524 = vmatpush1.bf16.msra.mxu0 %v4469
        %4525 = vmatprep.subr.bf16.mxu0 0
        %4526 = vmatpush1.bf16.msra.mxu0 %v4470
        %4527 = vmatprep.subr.bf16.mxu0 0
        %4528 = vmatpush1.bf16.msra.mxu0 %v4471
        %4529 = vmatprep.subr.bf16.mxu0 0
        %4530 = vmatpush1.bf16.msra.mxu0 %v4472
        %4531 = vmatprep.subr.bf16.mxu0 0
        %4532 = vmatpush1.bf16.msra.mxu0 %v4473
        %4533 = vmatprep.subr.bf16.mxu0 0
        %4534 = vmatpush1.bf16.msra.mxu0 %v4474
        %4535 = vmatprep.subr.bf16.mxu0 0
        %4536 = vmatpush1.bf16.msra.mxu0 %v4475
        %4537 = vmatprep.subr.bf16.mxu0 0
        %4538 = vmatpush1.bf16.msra.mxu0 %v4476
        %4539 = vmatprep.subr.bf16.mxu0 0
        %4540 = vmatpush1.bf16.msra.mxu0 %v4477
        %4541 = vmatprep.subr.bf16.mxu0 0
        %4542 = vmatpush1.bf16.msra.mxu0 %v4478
        %4543 = vmatprep.mubr.bf16.mxu0 %v3519
        %4544 = vmatmul.mubr.bf16.gmra.mrb[0].mxu0 %v3468
        %v4545 = vpop.f32.mrb[0].mxu0
        %v4546 = vadd.f32 %v4305, %v4545
        %v4547 = vpop.f32.mrb[0].mxu0
        %v4548 = vpop.f32.mrb[0].mxu0
        %v4549 = vadd.f32 %v4308, %v4548
        %v4550 = vpop.f32.mrb[0].mxu0
        %4551 = vmatprep.mubr.bf16.mxu0 %v3531
        %4552 = vmatmul.mubr.bf16.gmra.mrb[0].mxu0 %v3469
        %v4553 = vpop.f32.mrb[0].mxu0
        %v4554 = vadd.f32 %v4313, %v4553
        %v4555 = vpop.f32.mrb[0].mxu0
        %v4556 = vpop.f32.mrb[0].mxu0
        %v4557 = vadd.f32 %v4316, %v4556
        %v4558 = vpop.f32.mrb[0].mxu0
        %4559 = vmatprep.mubr.bf16.mxu0 %v3543
        %4560 = vmatmul.mubr.bf16.gmra.mrb[0].mxu0 %v3470
        %v4561 = vpop.f32.mrb[0].mxu0
        %v4562 = vadd.f32 %v4321, %v4561
        %v4563 = vpop.f32.mrb[0].mxu0
        %v4564 = vpop.f32.mrb[0].mxu0
        %v4565 = vadd.f32 %v4324, %v4564
        %v4566 = vpop.f32.mrb[0].mxu0
        %4567 = vmatprep.mubr.bf16.mxu0 %v3555
        %4568 = vmatmul.mubr.bf16.gmra.mrb[0].mxu0 %v3471
        %v4569 = vpop.f32.mrb[0].mxu0
        %v4570 = vadd.f32 %v4329, %v4569
        %v4571 = vpop.f32.mrb[0].mxu0
        %v4572 = vpop.f32.mrb[0].mxu0
        %v4573 = vadd.f32 %v4332, %v4572
        %v4574 = vpop.f32.mrb[0].mxu0
        %4575 = vmatprep.mubr.bf16.mxu0 %v3567
        %4576 = vmatmul.mubr.bf16.gmra.mrb[0].mxu0 %v3472
        %v4577 = vpop.f32.mrb[0].mxu0
        %v4578 = vadd.f32 %v4337, %v4577
        %v4579 = vpop.f32.mrb[0].mxu0
        %v4580 = vpop.f32.mrb[0].mxu0
        %v4581 = vadd.f32 %v4340, %v4580
        %v4582 = vpop.f32.mrb[0].mxu0
        %4583 = vmatprep.mubr.bf16.mxu0 %v3579
        %4584 = vmatmul.mubr.bf16.gmra.mrb[0].mxu0 %v3473
        %v4585 = vpop.f32.mrb[0].mxu0
        %v4586 = vadd.f32 %v4345, %v4585
        %v4587 = vpop.f32.mrb[0].mxu0
        %v4588 = vpop.f32.mrb[0].mxu0
        %v4589 = vadd.f32 %v4348, %v4588
        %v4590 = vpop.f32.mrb[0].mxu0
        %4591 = vmatprep.mubr.bf16.mxu0 %v3591
        %4592 = vmatmul.mubr.bf16.gmra.mrb[0].mxu0 %v3474
        %v4593 = vpop.f32.mrb[0].mxu0
        %v4594 = vadd.f32 %v4353, %v4593
        %v4595 = vpop.f32.mrb[0].mxu0
        %v4596 = vpop.f32.mrb[0].mxu0
        %v4597 = vadd.f32 %v4356, %v4596
        %v4598 = vpop.f32.mrb[0].mxu0
        %4599 = vmatprep.mubr.bf16.mxu0 %v3603
        %4600 = vmatmul.mubr.bf16.gmra.mrb[0].mxu0 %v3475
        %v4601 = vpop.f32.mrb[0].mxu0
        %v4602 = vadd.f32 %v4361, %v4601
        %v4603 = vpop.f32.mrb[0].mxu0
        %v4604 = vpop.f32.mrb[0].mxu0
        %v4605 = vadd.f32 %v4364, %v4604
        %v4606 = vpop.f32.mrb[0].mxu0
        %4607 = vdwg.mxu0
        %4608 = vmatprep.subr.bf16.mxu0 0
        %4609 = vmatpush1.bf16.msra.mxu0 %v4479
        %4610 = vmatprep.subr.bf16.mxu0 0
        %4611 = vmatpush1.bf16.msra.mxu0 %v4480
        %4612 = vmatprep.subr.bf16.mxu0 0
        %4613 = vmatpush1.bf16.msra.mxu0 %v4481
        %4614 = vmatprep.subr.bf16.mxu0 0
        %4615 = vmatpush1.bf16.msra.mxu0 %v4482
        %4616 = vmatprep.subr.bf16.mxu0 0
        %4617 = vmatpush1.bf16.msra.mxu0 %v4483
        %4618 = vmatprep.subr.bf16.mxu0 0
        %4619 = vmatpush1.bf16.msra.mxu0 %v4484
        %4620 = vmatprep.subr.bf16.mxu0 0
        %4621 = vmatpush1.bf16.msra.mxu0 %v4485
        %4622 = vmatprep.subr.bf16.mxu0 0
        %4623 = vmatpush1.bf16.msra.mxu0 %v4486
        %4624 = vmatprep.subr.bf16.mxu0 0
        %4625 = vmatpush1.bf16.msra.mxu0 0
        %4626 = vmatprep.subr.bf16.mxu0 0
        %4627 = vmatpush1.bf16.msra.mxu0 0
        %4628 = vmatprep.subr.bf16.mxu0 0
        %4629 = vmatpush1.bf16.msra.mxu0 0
        %4630 = vmatprep.subr.bf16.mxu0 0
        %4631 = vmatpush1.bf16.msra.mxu0 0
        %4632 = vmatprep.subr.bf16.mxu0 0
        %4633 = vmatpush1.bf16.msra.mxu0 0
        %4634 = vmatprep.subr.bf16.mxu0 0
        %4635 = vmatpush1.bf16.msra.mxu0 0
        %4636 = vmatprep.subr.bf16.mxu0 0
        %4637 = vmatpush1.bf16.msra.mxu0 0
        %4638 = vmatprep.subr.bf16.mxu0 0
        %4639 = vmatpush1.bf16.msra.mxu0 0
        %4640 = vmatprep.mubr.bf16.mxu0 0
        %4641 = vmatmul.mubr.bf16.gmra.mrb[0].mxu0 %v3638
        %v4642 = vpop.f32.mrb[0].mxu0
        %v4643 = vadd.f32 %v4546, %v4642
        %v4644 = vpop.f32.mrb[0].mxu0
        %v4645 = vpop.f32.mrb[0].mxu0
        %v4646 = vadd.f32 %v4549, %v4645
        %v4647 = vpop.f32.mrb[0].mxu0
        %4648 = vmatprep.mubr.bf16.mxu0 0
        %4649 = vmatmul.mubr.bf16.gmra.mrb[0].mxu0 %v3641
        %v4650 = vpop.f32.mrb[0].mxu0
        %v4651 = vadd.f32 %v4554, %v4650
        %v4652 = vpop.f32.mrb[0].mxu0
        %v4653 = vpop.f32.mrb[0].mxu0
        %v4654 = vadd.f32 %v4557, %v4653
        %v4655 = vpop.f32.mrb[0].mxu0
        %4656 = vmatprep.mubr.bf16.mxu0 0
        %4657 = vmatmul.mubr.bf16.gmra.mrb[0].mxu0 %v3644
        %v4658 = vpop.f32.mrb[0].mxu0
        %v4659 = vadd.f32 %v4562, %v4658
        %v4660 = vpop.f32.mrb[0].mxu0
        %v4661 = vpop.f32.mrb[0].mxu0
        %v4662 = vadd.f32 %v4565, %v4661
        %v4663 = vpop.f32.mrb[0].mxu0
        %4664 = vmatprep.mubr.bf16.mxu0 0
        %4665 = vmatmul.mubr.bf16.gmra.mrb[0].mxu0 %v3647
        %v4666 = vpop.f32.mrb[0].mxu0
        %v4667 = vadd.f32 %v4570, %v4666
        %v4668 = vpop.f32.mrb[0].mxu0
        %v4669 = vpop.f32.mrb[0].mxu0
        %v4670 = vadd.f32 %v4573, %v4669
        %v4671 = vpop.f32.mrb[0].mxu0
        %4672 = vmatprep.mubr.bf16.mxu0 0
        %4673 = vmatmul.mubr.bf16.gmra.mrb[0].mxu0 %v3650
        %v4674 = vpop.f32.mrb[0].mxu0
        %v4675 = vadd.f32 %v4578, %v4674
        %v4676 = vpop.f32.mrb[0].mxu0
        %v4677 = vpop.f32.mrb[0].mxu0
        %v4678 = vadd.f32 %v4581, %v4677
        %v4679 = vpop.f32.mrb[0].mxu0
        %4680 = vmatprep.mubr.bf16.mxu0 0
        %4681 = vmatmul.mubr.bf16.gmra.mrb[0].mxu0 %v3653
        %v4682 = vpop.f32.mrb[0].mxu0
        %v4683 = vadd.f32 %v4586, %v4682
        %v4684 = vpop.f32.mrb[0].mxu0
        %v4685 = vpop.f32.mrb[0].mxu0
        %v4686 = vadd.f32 %v4589, %v4685
        %v4687 = vpop.f32.mrb[0].mxu0
        %4688 = vmatprep.mubr.bf16.mxu0 0
        %4689 = vmatmul.mubr.bf16.gmra.mrb[0].mxu0 %v3656
        %v4690 = vpop.f32.mrb[0].mxu0
        %v4691 = vadd.f32 %v4594, %v4690
        %v4692 = vpop.f32.mrb[0].mxu0
        %v4693 = vpop.f32.mrb[0].mxu0
        %v4694 = vadd.f32 %v4597, %v4693
        %v4695 = vpop.f32.mrb[0].mxu0
        %4696 = vmatprep.mubr.bf16.mxu0 0
        %4697 = vmatmul.mubr.bf16.gmra.mrb[0].mxu0 %v3659
        %v4698 = vpop.f32.mrb[0].mxu0
        %v4699 = vadd.f32 %v4602, %v4698
        %v4700 = vpop.f32.mrb[0].mxu0
        %v4701 = vpop.f32.mrb[0].mxu0
        %v4702 = vadd.f32 %v4605, %v4701
        %v4703 = vpop.f32.mrb[0].mxu0
        %4704 = vdwg.mxu0
        %s4705 = scalar_lea.vmem [#allocation2], 120
        %v4706 = vld [vmem:[%s4705] sm:$0xf]
        %v4707 = vld [vmem:[%s4705 + $0x4] sm:$0xf]
        %v4708 = vld [vmem:[%s4705 + $0xc] sm:$0xf]
        %v4709 = vld [vmem:[%s4705 + $0x10] sm:$0xf]
        %v4710 = vld [vmem:[%s4705 + $0x18] sm:$0xf]
        %v4711 = vld [vmem:[%s4705 + $0x1c] sm:$0xf]
        %v4712 = vld [vmem:[%s4705 + $0x24] sm:$0xf]
        %v4713 = vld [vmem:[%s4705 + $0x28] sm:$0xf]
        %v4714 = vld [vmem:[%s4705 + $0x30] sm:$0xf]
        %v4715 = vld [vmem:[%s4705 + $0x34] sm:$0xf]
        %v4716 = vld [vmem:[%s4705 + $0x3c] sm:$0xf]
        %v4717 = vld [vmem:[%s4705 + $0x40] sm:$0xf]
        %v4718 = vld [vmem:[%s4705 + $0x48] sm:$0xf]
        %v4719 = vld [vmem:[%s4705 + $0x4c] sm:$0xf]
        %v4720 = vld [vmem:[%s4705 + $0x54] sm:$0xf]
        %v4721 = vld [vmem:[%s4705 + $0x58] sm:$0xf]
        %v4722 = vld [vmem:[%s4705 + $0x8] sm:$0x1]
        %v4723 = vld [vmem:[%s4705 + $0x14] sm:$0x1]
        %v4724 = vld [vmem:[%s4705 + $0x20] sm:$0x1]
        %v4725 = vld [vmem:[%s4705 + $0x2c] sm:$0x1]
        %v4726 = vld [vmem:[%s4705 + $0x38] sm:$0x1]
        %v4727 = vld [vmem:[%s4705 + $0x44] sm:$0x1]
        %v4728 = vld [vmem:[%s4705 + $0x50] sm:$0x1]
        %v4729 = vld [vmem:[%s4705 + $0x5c] sm:$0x1]
        %v4730 = vld [vmem:[%s4705] sm:$0xe]
        %v4731 = vld [vmem:[%s4705 + $0xc] sm:$0xe]
        %v4732 = vld [vmem:[%s4705 + $0x18] sm:$0xe]
        %v4733 = vld [vmem:[%s4705 + $0x24] sm:$0xe]
        %v4734 = vld [vmem:[%s4705 + $0x30] sm:$0xe]
        %v4735 = vld [vmem:[%s4705 + $0x3c] sm:$0xe]
        %v4736 = vld [vmem:[%s4705 + $0x48] sm:$0xe]
        %v4737 = vld [vmem:[%s4705 + $0x54] sm:$0xe]
        %v4754 = vunpack.c.l.b16 %v4706
        %v4755 = vunpack.c.l.b16 %v4707
        %v4756 = vunpack.c.l.b16 %v4708
        %v4757 = vunpack.c.l.b16 %v4709
        %v4758 = vunpack.c.l.b16 %v4710
        %v4759 = vunpack.c.l.b16 %v4711
        %v4760 = vunpack.c.l.b16 %v4712
        %v4761 = vunpack.c.l.b16 %v4713
        %v4762 = vunpack.c.l.b16 %v4714
        %v4763 = vunpack.c.l.b16 %v4715
        %v4764 = vunpack.c.l.b16 %v4716
        %v4765 = vunpack.c.l.b16 %v4717
        %v4766 = vunpack.c.l.b16 %v4718
        %v4767 = vunpack.c.l.b16 %v4719
        %v4768 = vunpack.c.l.b16 %v4720
        %v4769 = vunpack.c.l.b16 %v4721
        %v4770 = vpack.c.b16 %v4755, %v4754
        %v4771 = vpack.c.b16 %v4757, %v4756
        %v4772 = vpack.c.b16 %v4759, %v4758
        %v4773 = vpack.c.b16 %v4761, %v4760
        %v4774 = vpack.c.b16 %v4763, %v4762
        %v4775 = vpack.c.b16 %v4765, %v4764
        %v4776 = vpack.c.b16 %v4767, %v4766
        %v4777 = vpack.c.b16 %v4769, %v4768
        %v4794 = vunpack.c.l.b16 %v4722
        %v4795 = vunpack.c.l.b16 %v4723
        %v4796 = vunpack.c.l.b16 %v4724
        %v4797 = vunpack.c.l.b16 %v4725
        %v4798 = vunpack.c.l.b16 %v4726
        %v4799 = vunpack.c.l.b16 %v4727
        %v4800 = vunpack.c.l.b16 %v4728
        %v4801 = vunpack.c.l.b16 %v4729
        %v4802 = vpack.c.b16 %v4794, %v4794
        %v4803 = vpack.c.b16 %v4795, %v4795
        %v4804 = vpack.c.b16 %v4796, %v4796
        %v4805 = vpack.c.b16 %v4797, %v4797
        %v4806 = vpack.c.b16 %v4798, %v4798
        %v4807 = vpack.c.b16 %v4799, %v4799
        %v4808 = vpack.c.b16 %v4800, %v4800
        %v4809 = vpack.c.b16 %v4801, %v4801
        %v4811 = vshrl.u32 %v4770, 16
        %v4813 = vshll.u32 %v4770, 16
        %v4815 = vrot.slane %v4813, 1
        %v4816 = vor.u32 %v4811, %v4815
        %v4818 = vshll.u32 %v4802, 16
        %v4820 = vrot.slane %v4818, 1
        %v4821 = vsel %vm1212, %v4816, %v4820
        %v4823 = vshrl.u32 %v4771, 16
        %v4825 = vshll.u32 %v4771, 16
        %v4827 = vrot.slane %v4825, 1
        %v4828 = vor.u32 %v4823, %v4827
        %v4830 = vshll.u32 %v4803, 16
        %v4832 = vrot.slane %v4830, 1
        %v4833 = vsel %vm1212, %v4828, %v4832
        %v4835 = vshrl.u32 %v4772, 16
        %v4837 = vshll.u32 %v4772, 16
        %v4839 = vrot.slane %v4837, 1
        %v4840 = vor.u32 %v4835, %v4839
        %v4842 = vshll.u32 %v4804, 16
        %v4844 = vrot.slane %v4842, 1
        %v4845 = vsel %vm1212, %v4840, %v4844
        %v4847 = vshrl.u32 %v4773, 16
        %v4849 = vshll.u32 %v4773, 16
        %v4851 = vrot.slane %v4849, 1
        %v4852 = vor.u32 %v4847, %v4851
        %v4854 = vshll.u32 %v4805, 16
        %v4856 = vrot.slane %v4854, 1
        %v4857 = vsel %vm1212, %v4852, %v4856
        %v4859 = vshrl.u32 %v4774, 16
        %v4861 = vshll.u32 %v4774, 16
        %v4863 = vrot.slane %v4861, 1
        %v4864 = vor.u32 %v4859, %v4863
        %v4866 = vshll.u32 %v4806, 16
        %v4868 = vrot.slane %v4866, 1
        %v4869 = vsel %vm1212, %v4864, %v4868
        %v4871 = vshrl.u32 %v4775, 16
        %v4873 = vshll.u32 %v4775, 16
        %v4875 = vrot.slane %v4873, 1
        %v4876 = vor.u32 %v4871, %v4875
        %v4878 = vshll.u32 %v4807, 16
        %v4880 = vrot.slane %v4878, 1
        %v4881 = vsel %vm1212, %v4876, %v4880
        %v4883 = vshrl.u32 %v4776, 16
        %v4885 = vshll.u32 %v4776, 16
        %v4887 = vrot.slane %v4885, 1
        %v4888 = vor.u32 %v4883, %v4887
        %v4890 = vshll.u32 %v4808, 16
        %v4892 = vrot.slane %v4890, 1
        %v4893 = vsel %vm1212, %v4888, %v4892
        %v4895 = vshrl.u32 %v4777, 16
        %v4897 = vshll.u32 %v4777, 16
        %v4899 = vrot.slane %v4897, 1
        %v4900 = vor.u32 %v4895, %v4899
        %v4902 = vshll.u32 %v4809, 16
        %v4904 = vrot.slane %v4902, 1
        %v4905 = vsel %vm1212, %v4900, %v4904
        %v4922 = vunpack.c.l.b16 %v4730
        %v4923 = vunpack.c.l.b16 %v4731
        %v4924 = vunpack.c.l.b16 %v4732
        %v4925 = vunpack.c.l.b16 %v4733
        %v4926 = vunpack.c.l.b16 %v4734
        %v4927 = vunpack.c.l.b16 %v4735
        %v4928 = vunpack.c.l.b16 %v4736
        %v4929 = vunpack.c.l.b16 %v4737
        %v4930 = vpack.c.b16 %v4755, %v4922
        %v4931 = vpack.c.b16 %v4757, %v4923
        %v4932 = vpack.c.b16 %v4759, %v4924
        %v4933 = vpack.c.b16 %v4761, %v4925
        %v4934 = vpack.c.b16 %v4763, %v4926
        %v4935 = vpack.c.b16 %v4765, %v4927
        %v4936 = vpack.c.b16 %v4767, %v4928
        %v4937 = vpack.c.b16 %v4769, %v4929
        %v4938 = vrot.slane %v4930, 1
        %v4939 = vrot.slane %v4802, 1
        %v4940 = vsel %vm1341, %v4938, %v4939
        %v4941 = vrot.slane %v4931, 1
        %v4942 = vrot.slane %v4803, 1
        %v4943 = vsel %vm1341, %v4941, %v4942
        %v4944 = vrot.slane %v4932, 1
        %v4945 = vrot.slane %v4804, 1
        %v4946 = vsel %vm1341, %v4944, %v4945
        %v4947 = vrot.slane %v4933, 1
        %v4948 = vrot.slane %v4805, 1
        %v4949 = vsel %vm1341, %v4947, %v4948
        %v4950 = vrot.slane %v4934, 1
        %v4951 = vrot.slane %v4806, 1
        %v4952 = vsel %vm1341, %v4950, %v4951
        %v4953 = vrot.slane %v4935, 1
        %v4954 = vrot.slane %v4807, 1
        %v4955 = vsel %vm1341, %v4953, %v4954
        %v4956 = vrot.slane %v4936, 1
        %v4957 = vrot.slane %v4808, 1
        %v4958 = vsel %vm1341, %v4956, %v4957
        %v4959 = vrot.slane %v4937, 1
        %v4960 = vrot.slane %v4809, 1
        %v4961 = vsel %vm1341, %v4959, %v4960
        %v4970 = vld [vmem:[%s2676] sm:$0xf]
        %v4971 = vld [vmem:[%s2676 + $0x4] sm:$0xf]
        %v4972 = vld [vmem:[%s2676 + $0x8] sm:$0xf]
        %v4973 = vld [vmem:[%s2676 + $0xc] sm:$0xf]
        %v4974 = vld [vmem:[%s2676 + $0x10] sm:$0xf]
        %v4975 = vld [vmem:[%s2676 + $0x14] sm:$0xf]
        %v4976 = vld [vmem:[%s2676 + $0x18] sm:$0xf]
        %v4977 = vld [vmem:[%s2676 + $0x1c] sm:$0xf]
        %v4978 = vld [vmem:[%s2676 + $0x20] sm:$0xf]
        %v4979 = vld [vmem:[%s2676 + $0x24] sm:$0xf]
        %v4980 = vld [vmem:[%s2676 + $0x28] sm:$0xf]
        %v4981 = vld [vmem:[%s2676 + $0x2c] sm:$0xf]
        %v4982 = vld [vmem:[%s2676 + $0x30] sm:$0xf]
        %v4983 = vld [vmem:[%s2676 + $0x34] sm:$0xf]
        %v4984 = vld [vmem:[%s2676 + $0x38] sm:$0xf]
        %v4985 = vld [vmem:[%s2676 + $0x3c] sm:$0xf]
        %v4986 = vld [vmem:[%s2676 + $0x40] sm:$0xf]
        %v4987 = vld [vmem:[%s2676 + $0x44] sm:$0xf]
        %v4988 = vld [vmem:[%s2676 + $0x48] sm:$0xf]
        %v4989 = vld [vmem:[%s2676 + $0x4c] sm:$0xf]
        %v4990 = vld [vmem:[%s2676 + $0x50] sm:$0xf]
        %v4991 = vld [vmem:[%s2676 + $0x54] sm:$0xf]
        %v4992 = vld [vmem:[%s2676 + $0x58] sm:$0xf]
        %v4993 = vld [vmem:[%s2676 + $0x5c] sm:$0xf]
        %v4994 = vld [vmem:[%s2676 + $0x60] sm:$0xf]
        %v4995 = vld [vmem:[%s2676 + $0x64] sm:$0xf]
        %v4996 = vld [vmem:[%s2676 + $0x68] sm:$0xf]
        %v4997 = vld [vmem:[%s2676 + $0x6c] sm:$0xf]
        %v4998 = vld [vmem:[%s2676 + $0x70] sm:$0xf]
        %v4999 = vld [vmem:[%s2676 + $0x74] sm:$0xf]
        %v5000 = vld [vmem:[%s2676 + $0x78] sm:$0xf]
        %v5001 = vld [vmem:[%s2676 + $0x7c] sm:$0xf]
        %v5002 = vld [vmem:[%s2676 + $0x80] sm:$0xf]
        %v5003 = vld [vmem:[%s2676 + $0x84] sm:$0xf]
        %v5004 = vld [vmem:[%s2676 + $0x88] sm:$0xf]
        %v5005 = vld [vmem:[%s2676 + $0x8c] sm:$0xf]
        %v5006 = vld [vmem:[%s2676 + $0x90] sm:$0xf]
        %v5007 = vld [vmem:[%s2676 + $0x94] sm:$0xf]
        %v5008 = vld [vmem:[%s2676 + $0x98] sm:$0xf]
        %v5009 = vld [vmem:[%s2676 + $0x9c] sm:$0xf]
        %v5010 = vld [vmem:[%s2676 + $0xa0] sm:$0xf]
        %v5011 = vld [vmem:[%s2676 + $0xa4] sm:$0xf]
        %v5012 = vld [vmem:[%s2676 + $0xa8] sm:$0xf]
        %v5013 = vld [vmem:[%s2676 + $0xac] sm:$0xf]
        %v5014 = vld [vmem:[%s2676 + $0xb0] sm:$0xf]
        %v5015 = vld [vmem:[%s2676 + $0xb4] sm:$0xf]
        %v5016 = vld [vmem:[%s2676 + $0xb8] sm:$0xf]
        %v5017 = vld [vmem:[%s2676 + $0xbc] sm:$0xf]
        %v5066 = vunpack.c.l.b16 %v4970
        %v5067 = vunpack.c.l.b16 %v4971
        %v5068 = vunpack.c.l.b16 %v4972
        %v5069 = vunpack.c.l.b16 %v4973
        %v5070 = vunpack.c.l.b16 %v4974
        %v5071 = vunpack.c.l.b16 %v4975
        %v5072 = vunpack.c.l.b16 %v4976
        %v5073 = vunpack.c.l.b16 %v4977
        %v5074 = vunpack.c.l.b16 %v4978
        %v5075 = vunpack.c.l.b16 %v4979
        %v5076 = vunpack.c.l.b16 %v4980
        %v5077 = vunpack.c.l.b16 %v4981
        %v5078 = vunpack.c.l.b16 %v4982
        %v5079 = vunpack.c.l.b16 %v4983
        %v5080 = vunpack.c.l.b16 %v4984
        %v5081 = vunpack.c.l.b16 %v4985
        %v5082 = vunpack.c.l.b16 %v4986
        %v5083 = vunpack.c.l.b16 %v4987
        %v5084 = vunpack.c.l.b16 %v4988
        %v5085 = vunpack.c.l.b16 %v4989
        %v5086 = vunpack.c.l.b16 %v4990
        %v5087 = vunpack.c.l.b16 %v4991
        %v5088 = vunpack.c.l.b16 %v4992
        %v5089 = vunpack.c.l.b16 %v4993
        %v5090 = vunpack.c.l.b16 %v4994
        %v5091 = vunpack.c.l.b16 %v4995
        %v5092 = vunpack.c.l.b16 %v4996
        %v5093 = vunpack.c.l.b16 %v4997
        %v5094 = vunpack.c.l.b16 %v4998
        %v5095 = vunpack.c.l.b16 %v4999
        %v5096 = vunpack.c.l.b16 %v5000
        %v5097 = vunpack.c.l.b16 %v5001
        %v5098 = vunpack.c.l.b16 %v5002
        %v5099 = vunpack.c.l.b16 %v5003
        %v5100 = vunpack.c.l.b16 %v5004
        %v5101 = vunpack.c.l.b16 %v5005
        %v5102 = vunpack.c.l.b16 %v5006
        %v5103 = vunpack.c.l.b16 %v5007
        %v5104 = vunpack.c.l.b16 %v5008
        %v5105 = vunpack.c.l.b16 %v5009
        %v5106 = vunpack.c.l.b16 %v5010
        %v5107 = vunpack.c.l.b16 %v5011
        %v5108 = vunpack.c.l.b16 %v5012
        %v5109 = vunpack.c.l.b16 %v5013
        %v5110 = vunpack.c.l.b16 %v5014
        %v5111 = vunpack.c.l.b16 %v5015
        %v5112 = vunpack.c.l.b16 %v5016
        %v5113 = vunpack.c.l.b16 %v5017
        %v5114 = vpack.c.b16 %v5067, %v5066
        %v5115 = vpack.c.b16 %v5069, %v5068
        %v5116 = vpack.c.b16 %v5071, %v5070
        %v5117 = vpack.c.b16 %v5073, %v5072
        %v5118 = vpack.c.b16 %v5075, %v5074
        %v5119 = vpack.c.b16 %v5077, %v5076
        %v5120 = vpack.c.b16 %v5079, %v5078
        %v5121 = vpack.c.b16 %v5081, %v5080
        %v5122 = vpack.c.b16 %v5083, %v5082
        %v5123 = vpack.c.b16 %v5085, %v5084
        %v5124 = vpack.c.b16 %v5087, %v5086
        %v5125 = vpack.c.b16 %v5089, %v5088
        %v5126 = vpack.c.b16 %v5091, %v5090
        %v5127 = vpack.c.b16 %v5093, %v5092
        %v5128 = vpack.c.b16 %v5095, %v5094
        %v5129 = vpack.c.b16 %v5097, %v5096
        %v5130 = vpack.c.b16 %v5099, %v5098
        %v5131 = vpack.c.b16 %v5101, %v5100
        %v5132 = vpack.c.b16 %v5103, %v5102
        %v5133 = vpack.c.b16 %v5105, %v5104
        %v5134 = vpack.c.b16 %v5107, %v5106
        %v5135 = vpack.c.b16 %v5109, %v5108
        %v5136 = vpack.c.b16 %v5111, %v5110
        %v5137 = vpack.c.b16 %v5113, %v5112
        %5162 = vmatprep.subr.bf16.mxu0 0
        %5163 = vmatpush1.bf16.msra.mxu0 %v5114
        %5164 = vmatprep.subr.bf16.mxu0 0
        %5165 = vmatpush1.bf16.msra.mxu0 %v5115
        %5166 = vmatprep.subr.bf16.mxu0 0
        %5167 = vmatpush1.bf16.msra.mxu0 %v5116
        %5168 = vmatprep.subr.bf16.mxu0 0
        %5169 = vmatpush1.bf16.msra.mxu0 %v5117
        %5170 = vmatprep.subr.bf16.mxu0 0
        %5171 = vmatpush1.bf16.msra.mxu0 %v5118
        %5172 = vmatprep.subr.bf16.mxu0 0
        %5173 = vmatpush1.bf16.msra.mxu0 %v5119
        %5174 = vmatprep.subr.bf16.mxu0 0
        %5175 = vmatpush1.bf16.msra.mxu0 %v5120
        %5176 = vmatprep.subr.bf16.mxu0 0
        %5177 = vmatpush1.bf16.msra.mxu0 %v5121
        %5178 = vmatprep.subr.bf16.mxu0 0
        %5179 = vmatpush1.bf16.msra.mxu0 %v5122
        %5180 = vmatprep.subr.bf16.mxu0 0
        %5181 = vmatpush1.bf16.msra.mxu0 %v5123
        %5182 = vmatprep.subr.bf16.mxu0 0
        %5183 = vmatpush1.bf16.msra.mxu0 %v5124
        %5184 = vmatprep.subr.bf16.mxu0 0
        %5185 = vmatpush1.bf16.msra.mxu0 %v5125
        %5186 = vmatprep.subr.bf16.mxu0 0
        %5187 = vmatpush1.bf16.msra.mxu0 %v5126
        %5188 = vmatprep.subr.bf16.mxu0 0
        %5189 = vmatpush1.bf16.msra.mxu0 %v5127
        %5190 = vmatprep.subr.bf16.mxu0 0
        %5191 = vmatpush1.bf16.msra.mxu0 %v5128
        %5192 = vmatprep.subr.bf16.mxu0 0
        %5193 = vmatpush1.bf16.msra.mxu0 %v5129
        %5194 = vmatprep.mubr.bf16.mxu0 %v4821
        %5195 = vmatmul.mubr.bf16.gmra.mrb[0].mxu0 %v4770
        %v5196 = vpop.f32.mrb[0].mxu0
        %v5197 = vadd.f32 0.0, %v5196
        %v5198 = vpop.f32.mrb[0].mxu0
        %v5199 = vpop.f32.mrb[0].mxu0
        %v5200 = vadd.f32 0.0, %v5199
        %v5201 = vpop.f32.mrb[0].mxu0
        %5202 = vmatprep.mubr.bf16.mxu0 %v4833
        %5203 = vmatmul.mubr.bf16.gmra.mrb[0].mxu0 %v4771
        %v5204 = vpop.f32.mrb[0].mxu0
        %v5205 = vadd.f32 0.0, %v5204
        %v5206 = vpop.f32.mrb[0].mxu0
        %v5207 = vpop.f32.mrb[0].mxu0
        %v5208 = vadd.f32 0.0, %v5207
        %v5209 = vpop.f32.mrb[0].mxu0
        %5210 = vmatprep.mubr.bf16.mxu0 %v4845
        %5211 = vmatmul.mubr.bf16.gmra.mrb[0].mxu0 %v4772
        %v5212 = vpop.f32.mrb[0].mxu0
        %v5213 = vadd.f32 0.0, %v5212
        %v5214 = vpop.f32.mrb[0].mxu0
        %v5215 = vpop.f32.mrb[0].mxu0
        %v5216 = vadd.f32 0.0, %v5215
        %v5217 = vpop.f32.mrb[0].mxu0
        %5218 = vmatprep.mubr.bf16.mxu0 %v4857
        %5219 = vmatmul.mubr.bf16.gmra.mrb[0].mxu0 %v4773
        %v5220 = vpop.f32.mrb[0].mxu0
        %v5221 = vadd.f32 0.0, %v5220
        %v5222 = vpop.f32.mrb[0].mxu0
        %v5223 = vpop.f32.mrb[0].mxu0
        %v5224 = vadd.f32 0.0, %v5223
        %v5225 = vpop.f32.mrb[0].mxu0
        %5226 = vmatprep.mubr.bf16.mxu0 %v4869
        %5227 = vmatmul.mubr.bf16.gmra.mrb[0].mxu0 %v4774
        %v5228 = vpop.f32.mrb[0].mxu0
        %v5229 = vadd.f32 0.0, %v5228
        %v5230 = vpop.f32.mrb[0].mxu0
        %v5231 = vpop.f32.mrb[0].mxu0
        %v5232 = vadd.f32 0.0, %v5231
        %v5233 = vpop.f32.mrb[0].mxu0
        %5234 = vmatprep.mubr.bf16.mxu0 %v4881
        %5235 = vmatmul.mubr.bf16.gmra.mrb[0].mxu0 %v4775
        %v5236 = vpop.f32.mrb[0].mxu0
        %v5237 = vadd.f32 0.0, %v5236
        %v5238 = vpop.f32.mrb[0].mxu0
        %v5239 = vpop.f32.mrb[0].mxu0
        %v5240 = vadd.f32 0.0, %v5239
        %v5241 = vpop.f32.mrb[0].mxu0
        %5242 = vmatprep.mubr.bf16.mxu0 %v4893
        %5243 = vmatmul.mubr.bf16.gmra.mrb[0].mxu0 %v4776
        %v5244 = vpop.f32.mrb[0].mxu0
        %v5245 = vadd.f32 0.0, %v5244
        %v5246 = vpop.f32.mrb[0].mxu0
        %v5247 = vpop.f32.mrb[0].mxu0
        %v5248 = vadd.f32 0.0, %v5247
        %v5249 = vpop.f32.mrb[0].mxu0
        %5250 = vmatprep.mubr.bf16.mxu0 %v4905
        %5251 = vmatmul.mubr.bf16.gmra.mrb[0].mxu0 %v4777
        %v5252 = vpop.f32.mrb[0].mxu0
        %v5253 = vadd.f32 0.0, %v5252
        %v5254 = vpop.f32.mrb[0].mxu0
        %v5255 = vpop.f32.mrb[0].mxu0
        %v5256 = vadd.f32 0.0, %v5255
        %v5257 = vpop.f32.mrb[0].mxu0
        %5258 = vdwg.mxu0
        %5259 = vmatprep.subr.bf16.mxu0 0
        %5260 = vmatpush1.bf16.msra.mxu0 %v5130
        %5261 = vmatprep.subr.bf16.mxu0 0
        %5262 = vmatpush1.bf16.msra.mxu0 %v5131
        %5263 = vmatprep.subr.bf16.mxu0 0
        %5264 = vmatpush1.bf16.msra.mxu0 %v5132
        %5265 = vmatprep.subr.bf16.mxu0 0
        %5266 = vmatpush1.bf16.msra.mxu0 %v5133
        %5267 = vmatprep.subr.bf16.mxu0 0
        %5268 = vmatpush1.bf16.msra.mxu0 %v5134
        %5269 = vmatprep.subr.bf16.mxu0 0
        %5270 = vmatpush1.bf16.msra.mxu0 %v5135
        %5271 = vmatprep.subr.bf16.mxu0 0
        %5272 = vmatpush1.bf16.msra.mxu0 %v5136
        %5273 = vmatprep.subr.bf16.mxu0 0
        %5274 = vmatpush1.bf16.msra.mxu0 %v5137
        %5275 = vmatprep.subr.bf16.mxu0 0
        %5276 = vmatpush1.bf16.msra.mxu0 0
        %5277 = vmatprep.subr.bf16.mxu0 0
        %5278 = vmatpush1.bf16.msra.mxu0 0
        %5279 = vmatprep.subr.bf16.mxu0 0
        %5280 = vmatpush1.bf16.msra.mxu0 0
        %5281 = vmatprep.subr.bf16.mxu0 0
        %5282 = vmatpush1.bf16.msra.mxu0 0
        %5283 = vmatprep.subr.bf16.mxu0 0
        %5284 = vmatpush1.bf16.msra.mxu0 0
        %5285 = vmatprep.subr.bf16.mxu0 0
        %5286 = vmatpush1.bf16.msra.mxu0 0
        %5287 = vmatprep.subr.bf16.mxu0 0
        %5288 = vmatpush1.bf16.msra.mxu0 0
        %5289 = vmatprep.subr.bf16.mxu0 0
        %5290 = vmatpush1.bf16.msra.mxu0 0
        %5291 = vmatprep.mubr.bf16.mxu0 0
        %5292 = vmatmul.mubr.bf16.gmra.mrb[0].mxu0 %v4940
        %v5293 = vpop.f32.mrb[0].mxu0
        %v5294 = vadd.f32 %v5197, %v5293
        %v5295 = vpop.f32.mrb[0].mxu0
        %v5296 = vpop.f32.mrb[0].mxu0
        %v5297 = vadd.f32 %v5200, %v5296
        %v5298 = vpop.f32.mrb[0].mxu0
        %5299 = vmatprep.mubr.bf16.mxu0 0
        %5300 = vmatmul.mubr.bf16.gmra.mrb[0].mxu0 %v4943
        %v5301 = vpop.f32.mrb[0].mxu0
        %v5302 = vadd.f32 %v5205, %v5301
        %v5303 = vpop.f32.mrb[0].mxu0
        %v5304 = vpop.f32.mrb[0].mxu0
        %v5305 = vadd.f32 %v5208, %v5304
        %v5306 = vpop.f32.mrb[0].mxu0
        %5307 = vmatprep.mubr.bf16.mxu0 0
        %5308 = vmatmul.mubr.bf16.gmra.mrb[0].mxu0 %v4946
        %v5309 = vpop.f32.mrb[0].mxu0
        %v5310 = vadd.f32 %v5213, %v5309
        %v5311 = vpop.f32.mrb[0].mxu0
        %v5312 = vpop.f32.mrb[0].mxu0
        %v5313 = vadd.f32 %v5216, %v5312
        %v5314 = vpop.f32.mrb[0].mxu0
        %5315 = vmatprep.mubr.bf16.mxu0 0
        %5316 = vmatmul.mubr.bf16.gmra.mrb[0].mxu0 %v4949
        %v5317 = vpop.f32.mrb[0].mxu0
        %v5318 = vadd.f32 %v5221, %v5317
        %v5319 = vpop.f32.mrb[0].mxu0
        %v5320 = vpop.f32.mrb[0].mxu0
        %v5321 = vadd.f32 %v5224, %v5320
        %v5322 = vpop.f32.mrb[0].mxu0
        %5323 = vmatprep.mubr.bf16.mxu0 0
        %5324 = vmatmul.mubr.bf16.gmra.mrb[0].mxu0 %v4952
        %v5325 = vpop.f32.mrb[0].mxu0
        %v5326 = vadd.f32 %v5229, %v5325
        %v5327 = vpop.f32.mrb[0].mxu0
        %v5328 = vpop.f32.mrb[0].mxu0
        %v5329 = vadd.f32 %v5232, %v5328
        %v5330 = vpop.f32.mrb[0].mxu0
        %5331 = vmatprep.mubr.bf16.mxu0 0
        %5332 = vmatmul.mubr.bf16.gmra.mrb[0].mxu0 %v4955
        %v5333 = vpop.f32.mrb[0].mxu0
        %v5334 = vadd.f32 %v5237, %v5333
        %v5335 = vpop.f32.mrb[0].mxu0
        %v5336 = vpop.f32.mrb[0].mxu0
        %v5337 = vadd.f32 %v5240, %v5336
        %v5338 = vpop.f32.mrb[0].mxu0
        %5339 = vmatprep.mubr.bf16.mxu0 0
        %5340 = vmatmul.mubr.bf16.gmra.mrb[0].mxu0 %v4958
        %v5341 = vpop.f32.mrb[0].mxu0
        %v5342 = vadd.f32 %v5245, %v5341
        %v5343 = vpop.f32.mrb[0].mxu0
        %v5344 = vpop.f32.mrb[0].mxu0
        %v5345 = vadd.f32 %v5248, %v5344
        %v5346 = vpop.f32.mrb[0].mxu0
        %5347 = vmatprep.mubr.bf16.mxu0 0
        %5348 = vmatmul.mubr.bf16.gmra.mrb[0].mxu0 %v4961
        %v5349 = vpop.f32.mrb[0].mxu0
        %v5350 = vadd.f32 %v5253, %v5349
        %v5351 = vpop.f32.mrb[0].mxu0
        %v5352 = vpop.f32.mrb[0].mxu0
        %v5353 = vadd.f32 %v5256, %v5352
        %v5354 = vpop.f32.mrb[0].mxu0
        %5355 = vdwg.mxu0
        %v5356 = vadd.f32 %v4643, %v5294
        %v5357 = vadd.f32 %v4646, %v5297
        %v5358 = vadd.f32 %v4651, %v5302
        %v5359 = vadd.f32 %v4654, %v5305
        %v5360 = vadd.f32 %v4659, %v5310
        %v5361 = vadd.f32 %v4662, %v5313
        %v5362 = vadd.f32 %v4667, %v5318
        %v5363 = vadd.f32 %v4670, %v5321
        %v5364 = vadd.f32 %v4675, %v5326
        %v5365 = vadd.f32 %v4678, %v5329
        %v5366 = vadd.f32 %v4683, %v5334
        %v5367 = vadd.f32 %v4686, %v5337
        %v5368 = vadd.f32 %v4691, %v5342
        %v5369 = vadd.f32 %v4694, %v5345
        %v5370 = vadd.f32 %v4699, %v5350
        %v5371 = vadd.f32 %v4702, %v5353
        %v5372 = vmul.f32 %v5356, %v3083
        %v5373 = vmul.f32 %v5357, %v3083
        %v5374 = vmul.f32 %v5358, %v3083
        %v5375 = vmul.f32 %v5359, %v3083
        %v5376 = vmul.f32 %v5360, %v3083
        %v5377 = vmul.f32 %v5361, %v3083
        %v5378 = vmul.f32 %v5362, %v3083
        %v5379 = vmul.f32 %v5363, %v3083
        %v5380 = vmul.f32 %v5364, %v3083
        %v5381 = vmul.f32 %v5365, %v3083
        %v5382 = vmul.f32 %v5366, %v3083
        %v5383 = vmul.f32 %v5367, %v3083
        %v5384 = vmul.f32 %v5368, %v3083
        %v5385 = vmul.f32 %v5369, %v3083
        %v5386 = vmul.f32 %v5370, %v3083
        %v5387 = vmul.f32 %v5371, %v3083
        %v5388 = vadd.f32 %v5372, %v3105
        %v5389 = vadd.f32 %v5373, %v3105
        %v5390 = vadd.f32 %v5374, %v3105
        %v5391 = vadd.f32 %v5375, %v3105
        %v5392 = vadd.f32 %v5376, %v3105
        %v5393 = vadd.f32 %v5377, %v3105
        %v5394 = vadd.f32 %v5378, %v3105
        %v5395 = vadd.f32 %v5379, %v3105
        %v5396 = vadd.f32 %v5380, %v3105
        %v5397 = vadd.f32 %v5381, %v3105
        %v5398 = vadd.f32 %v5382, %v3105
        %v5399 = vadd.f32 %v5383, %v3105
        %v5400 = vadd.f32 %v5384, %v3105
        %v5401 = vadd.f32 %v5385, %v3105
        %v5402 = vadd.f32 %v5386, %v3105
        %v5403 = vadd.f32 %v5387, %v3105
        %v5404 = vmax.f32 %v5388, 0.0
        %v5405 = vmax.f32 %v5389, 0.0
        %v5406 = vmax.f32 %v5390, 0.0
        %v5407 = vmax.f32 %v5391, 0.0
        %v5408 = vmax.f32 %v5392, 0.0
        %v5409 = vmax.f32 %v5393, 0.0
        %v5410 = vmax.f32 %v5394, 0.0
        %v5411 = vmax.f32 %v5395, 0.0
        %v5412 = vmax.f32 %v5396, 0.0
        %v5413 = vmax.f32 %v5397, 0.0
        %v5414 = vmax.f32 %v5398, 0.0
        %v5415 = vmax.f32 %v5399, 0.0
        %v5416 = vmax.f32 %v5400, 0.0
        %v5417 = vmax.f32 %v5401, 0.0
        %v5418 = vmax.f32 %v5402, 0.0
        %v5419 = vmax.f32 %v5403, 0.0
        %v5420 = vpack.c.bf16 %v5405, %v5404
        %v5421 = vpack.c.bf16 %v5407, %v5406
        %v5422 = vpack.c.bf16 %v5409, %v5408
        %v5423 = vpack.c.bf16 %v5411, %v5410
        %v5424 = vpack.c.bf16 %v5413, %v5412
        %v5425 = vpack.c.bf16 %v5415, %v5414
        %v5426 = vpack.c.bf16 %v5417, %v5416
        %v5427 = vpack.c.bf16 %v5419, %v5418
        %v5436 = vunpack.c.l.b16 %v5420
        %v5437 = vunpack.c.h.b16 %v5420
        %v5438 = vunpack.c.l.b16 %v5421
        %v5439 = vunpack.c.h.b16 %v5421
        %v5440 = vunpack.c.l.b16 %v5422
        %v5441 = vunpack.c.h.b16 %v5422
        %v5442 = vunpack.c.l.b16 %v5423
        %v5443 = vunpack.c.h.b16 %v5423
        %v5444 = vunpack.c.l.b16 %v5424
        %v5445 = vunpack.c.h.b16 %v5424
        %v5446 = vunpack.c.l.b16 %v5425
        %v5447 = vunpack.c.h.b16 %v5425
        %v5448 = vunpack.c.l.b16 %v5426
        %v5449 = vunpack.c.h.b16 %v5426
        %v5450 = vunpack.c.l.b16 %v5427
        %v5451 = vunpack.c.h.b16 %v5427
        %v5452 = vpack.c.b16 %v5436, %v5436
        %v5453 = vpack.c.b16 %v5437, %v5437
        %v5454 = vpack.c.b16 %v5438, %v5438
        %v5455 = vpack.c.b16 %v5439, %v5439
        %v5456 = vpack.c.b16 %v5440, %v5440
        %v5457 = vpack.c.b16 %v5441, %v5441
        %v5458 = vpack.c.b16 %v5442, %v5442
        %v5459 = vpack.c.b16 %v5443, %v5443
        %v5460 = vpack.c.b16 %v5444, %v5444
        %v5461 = vpack.c.b16 %v5445, %v5445
        %v5462 = vpack.c.b16 %v5446, %v5446
        %v5463 = vpack.c.b16 %v5447, %v5447
        %v5464 = vpack.c.b16 %v5448, %v5448
        %v5465 = vpack.c.b16 %v5449, %v5449
        %v5466 = vpack.c.b16 %v5450, %v5450
        %v5467 = vpack.c.b16 %v5451, %v5451
        %v5469 = vshrl.u32 %v5452, 16
        %v5471 = vrot.slane %v5469, 7
        %v5472 = vshll.u32 %v5452, 16
        %v5474 = vor.u32 %v5471, %v5472
        %v5475 = vrot.slane %v5471, 4
        %v5477 = vshrl.u32 %v5453, 16
        %v5479 = vrot.slane %v5477, 7
        %v5480 = vshll.u32 %v5453, 16
        %v5482 = vor.u32 %v5479, %v5480
        %v5483 = vsel %vm673, %v5475, %v5482
        %v5484 = vrot.slane %v5479, 4
        %v5486 = vshrl.u32 %v5454, 16
        %v5488 = vrot.slane %v5486, 7
        %v5489 = vshll.u32 %v5454, 16
        %v5491 = vor.u32 %v5488, %v5489
        %v5492 = vrot.slane %v5488, 4
        %v5494 = vshrl.u32 %v5455, 16
        %v5496 = vrot.slane %v5494, 7
        %v5497 = vshll.u32 %v5455, 16
        %v5499 = vor.u32 %v5496, %v5497
        %v5500 = vsel %vm673, %v5492, %v5499
        %v5501 = vrot.slane %v5496, 4
        %v5503 = vshrl.u32 %v5456, 16
        %v5505 = vrot.slane %v5503, 7
        %v5506 = vshll.u32 %v5456, 16
        %v5508 = vor.u32 %v5505, %v5506
        %v5509 = vrot.slane %v5505, 4
        %v5511 = vshrl.u32 %v5457, 16
        %v5513 = vrot.slane %v5511, 7
        %v5514 = vshll.u32 %v5457, 16
        %v5516 = vor.u32 %v5513, %v5514
        %v5517 = vsel %vm673, %v5509, %v5516
        %v5518 = vrot.slane %v5513, 4
        %v5520 = vshrl.u32 %v5458, 16
        %v5522 = vrot.slane %v5520, 7
        %v5523 = vshll.u32 %v5458, 16
        %v5525 = vor.u32 %v5522, %v5523
        %v5526 = vrot.slane %v5522, 4
        %v5528 = vshrl.u32 %v5459, 16
        %v5530 = vrot.slane %v5528, 7
        %v5531 = vshll.u32 %v5459, 16
        %v5533 = vor.u32 %v5530, %v5531
        %v5534 = vsel %vm673, %v5526, %v5533
        %v5535 = vrot.slane %v5530, 4
        %v5537 = vshrl.u32 %v5460, 16
        %v5539 = vrot.slane %v5537, 7
        %v5540 = vshll.u32 %v5460, 16
        %v5542 = vor.u32 %v5539, %v5540
        %v5543 = vrot.slane %v5539, 4
        %v5545 = vshrl.u32 %v5461, 16
        %v5547 = vrot.slane %v5545, 7
        %v5548 = vshll.u32 %v5461, 16
        %v5550 = vor.u32 %v5547, %v5548
        %v5551 = vsel %vm673, %v5543, %v5550
        %v5552 = vrot.slane %v5547, 4
        %v5554 = vshrl.u32 %v5462, 16
        %v5556 = vrot.slane %v5554, 7
        %v5557 = vshll.u32 %v5462, 16
        %v5559 = vor.u32 %v5556, %v5557
        %v5560 = vrot.slane %v5556, 4
        %v5562 = vshrl.u32 %v5463, 16
        %v5564 = vrot.slane %v5562, 7
        %v5565 = vshll.u32 %v5463, 16
        %v5567 = vor.u32 %v5564, %v5565
        %v5568 = vsel %vm673, %v5560, %v5567
        %v5569 = vrot.slane %v5564, 4
        %v5571 = vshrl.u32 %v5464, 16
        %v5573 = vrot.slane %v5571, 7
        %v5574 = vshll.u32 %v5464, 16
        %v5576 = vor.u32 %v5573, %v5574
        %v5577 = vrot.slane %v5573, 4
        %v5579 = vshrl.u32 %v5465, 16
        %v5581 = vrot.slane %v5579, 7
        %v5582 = vshll.u32 %v5465, 16
        %v5584 = vor.u32 %v5581, %v5582
        %v5585 = vsel %vm673, %v5577, %v5584
        %v5586 = vrot.slane %v5581, 4
        %v5588 = vshrl.u32 %v5466, 16
        %v5590 = vrot.slane %v5588, 7
        %v5591 = vshll.u32 %v5466, 16
        %v5593 = vor.u32 %v5590, %v5591
        %v5594 = vrot.slane %v5590, 4
        %v5596 = vshrl.u32 %v5467, 16
        %v5598 = vrot.slane %v5596, 7
        %v5599 = vshll.u32 %v5467, 16
        %v5601 = vor.u32 %v5598, %v5599
        %v5602 = vsel %vm673, %v5594, %v5601
        %v5603 = vrot.slane %v5598, 4
        %s5628 = scalar_lea.vmem [#allocation3], 108
        %v5629 = vld [vmem:[%s5628] sm:$0xf]
        %v5630 = vsel %vm995, %v5474, %v5629
        %5631 = vst [vmem:[%s5628] sm:$0xf] %v5630
        %5632 = vst [vmem:[%s5628 + $0x4] sm:$0xf] %v5483
        %v5633 = vld [vmem:[%s5628 + $0x8] sm:$0x1]
        %v5634 = vsel %vm341, %v5484, %v5633
        %5635 = vst [vmem:[%s5628 + $0x8] sm:$0x1] %v5634
        %v5636 = vld [vmem:[%s5628 + $0xc] sm:$0xf]
        %v5637 = vsel %vm995, %v5491, %v5636
        %5638 = vst [vmem:[%s5628 + $0xc] sm:$0xf] %v5637
        %5639 = vst [vmem:[%s5628 + $0x10] sm:$0xf] %v5500
        %v5640 = vld [vmem:[%s5628 + $0x14] sm:$0x1]
        %v5641 = vsel %vm341, %v5501, %v5640
        %5642 = vst [vmem:[%s5628 + $0x14] sm:$0x1] %v5641
        %v5643 = vld [vmem:[%s5628 + $0x18] sm:$0xf]
        %v5644 = vsel %vm995, %v5508, %v5643
        %5645 = vst [vmem:[%s5628 + $0x18] sm:$0xf] %v5644
        %5646 = vst [vmem:[%s5628 + $0x1c] sm:$0xf] %v5517
        %v5647 = vld [vmem:[%s5628 + $0x20] sm:$0x1]
        %v5648 = vsel %vm341, %v5518, %v5647
        %5649 = vst [vmem:[%s5628 + $0x20] sm:$0x1] %v5648
        %v5650 = vld [vmem:[%s5628 + $0x24] sm:$0xf]
        %v5651 = vsel %vm995, %v5525, %v5650
        %5652 = vst [vmem:[%s5628 + $0x24] sm:$0xf] %v5651
        %5653 = vst [vmem:[%s5628 + $0x28] sm:$0xf] %v5534
        %v5654 = vld [vmem:[%s5628 + $0x2c] sm:$0x1]
        %v5655 = vsel %vm341, %v5535, %v5654
        %5656 = vst [vmem:[%s5628 + $0x2c] sm:$0x1] %v5655
        %v5657 = vld [vmem:[%s5628 + $0x30] sm:$0xf]
        %v5658 = vsel %vm995, %v5542, %v5657
        %5659 = vst [vmem:[%s5628 + $0x30] sm:$0xf] %v5658
        %5660 = vst [vmem:[%s5628 + $0x34] sm:$0xf] %v5551
        %v5661 = vld [vmem:[%s5628 + $0x38] sm:$0x1]
        %v5662 = vsel %vm341, %v5552, %v5661
        %5663 = vst [vmem:[%s5628 + $0x38] sm:$0x1] %v5662
        %v5664 = vld [vmem:[%s5628 + $0x3c] sm:$0xf]
        %v5665 = vsel %vm995, %v5559, %v5664
        %5666 = vst [vmem:[%s5628 + $0x3c] sm:$0xf] %v5665
        %5667 = vst [vmem:[%s5628 + $0x40] sm:$0xf] %v5568
        %v5668 = vld [vmem:[%s5628 + $0x44] sm:$0x1]
        %v5669 = vsel %vm341, %v5569, %v5668
        %5670 = vst [vmem:[%s5628 + $0x44] sm:$0x1] %v5669
        %v5671 = vld [vmem:[%s5628 + $0x48] sm:$0xf]
        %v5672 = vsel %vm995, %v5576, %v5671
        %5673 = vst [vmem:[%s5628 + $0x48] sm:$0xf] %v5672
        %5674 = vst [vmem:[%s5628 + $0x4c] sm:$0xf] %v5585
        %v5675 = vld [vmem:[%s5628 + $0x50] sm:$0x1]
        %v5676 = vsel %vm341, %v5586, %v5675
        %5677 = vst [vmem:[%s5628 + $0x50] sm:$0x1] %v5676
        %v5678 = vld [vmem:[%s5628 + $0x54] sm:$0xf]
        %v5679 = vsel %vm995, %v5593, %v5678
        %5680 = vst [vmem:[%s5628 + $0x54] sm:$0xf] %v5679
        %5681 = vst [vmem:[%s5628 + $0x58] sm:$0xf] %v5602
        %v5682 = vld [vmem:[%s5628 + $0x5c] sm:$0x1]
        %v5683 = vsel %vm341, %v5603, %v5682
        %5684 = vst [vmem:[%s5628 + $0x5c] sm:$0x1] %v5683
        %v5685 = vld [vmem:[#allocation3] sm:$0xf]
        %v5686 = vld [vmem:[#allocation3 + $0x4] sm:$0xf]
        %v5687 = vld [vmem:[#allocation3 + $0xc] sm:$0xf]
        %v5688 = vld [vmem:[#allocation3 + $0x10] sm:$0xf]
        %v5689 = vld [vmem:[#allocation3 + $0x18] sm:$0xf]
        %v5690 = vld [vmem:[#allocation3 + $0x1c] sm:$0xf]
        %v5691 = vld [vmem:[#allocation3 + $0x24] sm:$0xf]
        %v5692 = vld [vmem:[#allocation3 + $0x28] sm:$0xf]
        %v5693 = vld [vmem:[#allocation3 + $0x30] sm:$0xf]
        %v5694 = vld [vmem:[#allocation3 + $0x34] sm:$0xf]
        %v5695 = vld [vmem:[#allocation3 + $0x3c] sm:$0xf]
        %v5696 = vld [vmem:[#allocation3 + $0x40] sm:$0xf]
        %v5697 = vld [vmem:[#allocation3 + $0x48] sm:$0xf]
        %v5698 = vld [vmem:[#allocation3 + $0x4c] sm:$0xf]
        %v5699 = vld [vmem:[#allocation3 + $0x54] sm:$0xf]
        %v5700 = vld [vmem:[#allocation3 + $0x58] sm:$0xf]
        %v5701 = vld [vmem:[#allocation3 + $0x8] sm:$0x1]
        %v5702 = vld [vmem:[#allocation3 + $0x14] sm:$0x1]
        %v5703 = vld [vmem:[#allocation3 + $0x20] sm:$0x1]
        %v5704 = vld [vmem:[#allocation3 + $0x2c] sm:$0x1]
        %v5705 = vld [vmem:[#allocation3 + $0x38] sm:$0x1]
        %v5706 = vld [vmem:[#allocation3 + $0x44] sm:$0x1]
        %v5707 = vld [vmem:[#allocation3 + $0x50] sm:$0x1]
        %v5708 = vld [vmem:[#allocation3 + $0x5c] sm:$0x1]
        %v5709 = vld [vmem:[#allocation3] sm:$0xe]
        %v5710 = vld [vmem:[#allocation3 + $0xc] sm:$0xe]
        %v5711 = vld [vmem:[#allocation3 + $0x18] sm:$0xe]
        %v5712 = vld [vmem:[#allocation3 + $0x24] sm:$0xe]
        %v5713 = vld [vmem:[#allocation3 + $0x30] sm:$0xe]
        %v5714 = vld [vmem:[#allocation3 + $0x3c] sm:$0xe]
        %v5715 = vld [vmem:[#allocation3 + $0x48] sm:$0xe]
        %v5716 = vld [vmem:[#allocation3 + $0x54] sm:$0xe]
        %v5733 = vunpack.c.l.b16 %v5685
        %v5734 = vunpack.c.l.b16 %v5686
        %v5735 = vunpack.c.l.b16 %v5687
        %v5736 = vunpack.c.l.b16 %v5688
        %v5737 = vunpack.c.l.b16 %v5689
        %v5738 = vunpack.c.l.b16 %v5690
        %v5739 = vunpack.c.l.b16 %v5691
        %v5740 = vunpack.c.l.b16 %v5692
        %v5741 = vunpack.c.l.b16 %v5693
        %v5742 = vunpack.c.l.b16 %v5694
        %v5743 = vunpack.c.l.b16 %v5695
        %v5744 = vunpack.c.l.b16 %v5696
        %v5745 = vunpack.c.l.b16 %v5697
        %v5746 = vunpack.c.l.b16 %v5698
        %v5747 = vunpack.c.l.b16 %v5699
        %v5748 = vunpack.c.l.b16 %v5700
        %v5749 = vpack.c.b16 %v5734, %v5733
        %v5750 = vpack.c.b16 %v5736, %v5735
        %v5751 = vpack.c.b16 %v5738, %v5737
        %v5752 = vpack.c.b16 %v5740, %v5739
        %v5753 = vpack.c.b16 %v5742, %v5741
        %v5754 = vpack.c.b16 %v5744, %v5743
        %v5755 = vpack.c.b16 %v5746, %v5745
        %v5756 = vpack.c.b16 %v5748, %v5747
        %v5773 = vunpack.c.l.b16 %v5701
        %v5774 = vunpack.c.l.b16 %v5702
        %v5775 = vunpack.c.l.b16 %v5703
        %v5776 = vunpack.c.l.b16 %v5704
        %v5777 = vunpack.c.l.b16 %v5705
        %v5778 = vunpack.c.l.b16 %v5706
        %v5779 = vunpack.c.l.b16 %v5707
        %v5780 = vunpack.c.l.b16 %v5708
        %v5781 = vpack.c.b16 %v5773, %v5773
        %v5782 = vpack.c.b16 %v5774, %v5774
        %v5783 = vpack.c.b16 %v5775, %v5775
        %v5784 = vpack.c.b16 %v5776, %v5776
        %v5785 = vpack.c.b16 %v5777, %v5777
        %v5786 = vpack.c.b16 %v5778, %v5778
        %v5787 = vpack.c.b16 %v5779, %v5779
        %v5788 = vpack.c.b16 %v5780, %v5780
        %v5790 = vshrl.u32 %v5749, 16
        %v5792 = vshll.u32 %v5749, 16
        %v5794 = vrot.slane %v5792, 1
        %v5795 = vor.u32 %v5790, %v5794
        %v5797 = vshll.u32 %v5781, 16
        %v5799 = vrot.slane %v5797, 1
        %v5800 = vsel %vm1212, %v5795, %v5799
        %v5802 = vshrl.u32 %v5750, 16
        %v5804 = vshll.u32 %v5750, 16
        %v5806 = vrot.slane %v5804, 1
        %v5807 = vor.u32 %v5802, %v5806
        %v5809 = vshll.u32 %v5782, 16
        %v5811 = vrot.slane %v5809, 1
        %v5812 = vsel %vm1212, %v5807, %v5811
        %v5814 = vshrl.u32 %v5751, 16
        %v5816 = vshll.u32 %v5751, 16
        %v5818 = vrot.slane %v5816, 1
        %v5819 = vor.u32 %v5814, %v5818
        %v5821 = vshll.u32 %v5783, 16
        %v5823 = vrot.slane %v5821, 1
        %v5824 = vsel %vm1212, %v5819, %v5823
        %v5826 = vshrl.u32 %v5752, 16
        %v5828 = vshll.u32 %v5752, 16
        %v5830 = vrot.slane %v5828, 1
        %v5831 = vor.u32 %v5826, %v5830
        %v5833 = vshll.u32 %v5784, 16
        %v5835 = vrot.slane %v5833, 1
        %v5836 = vsel %vm1212, %v5831, %v5835
        %v5838 = vshrl.u32 %v5753, 16
        %v5840 = vshll.u32 %v5753, 16
        %v5842 = vrot.slane %v5840, 1
        %v5843 = vor.u32 %v5838, %v5842
        %v5845 = vshll.u32 %v5785, 16
        %v5847 = vrot.slane %v5845, 1
        %v5848 = vsel %vm1212, %v5843, %v5847
        %v5850 = vshrl.u32 %v5754, 16
        %v5852 = vshll.u32 %v5754, 16
        %v5854 = vrot.slane %v5852, 1
        %v5855 = vor.u32 %v5850, %v5854
        %v5857 = vshll.u32 %v5786, 16
        %v5859 = vrot.slane %v5857, 1
        %v5860 = vsel %vm1212, %v5855, %v5859
        %v5862 = vshrl.u32 %v5755, 16
        %v5864 = vshll.u32 %v5755, 16
        %v5866 = vrot.slane %v5864, 1
        %v5867 = vor.u32 %v5862, %v5866
        %v5869 = vshll.u32 %v5787, 16
        %v5871 = vrot.slane %v5869, 1
        %v5872 = vsel %vm1212, %v5867, %v5871
        %v5874 = vshrl.u32 %v5756, 16
        %v5876 = vshll.u32 %v5756, 16
        %v5878 = vrot.slane %v5876, 1
        %v5879 = vor.u32 %v5874, %v5878
        %v5881 = vshll.u32 %v5788, 16
        %v5883 = vrot.slane %v5881, 1
        %v5884 = vsel %vm1212, %v5879, %v5883
        %v5901 = vunpack.c.l.b16 %v5709
        %v5902 = vunpack.c.l.b16 %v5710
        %v5903 = vunpack.c.l.b16 %v5711
        %v5904 = vunpack.c.l.b16 %v5712
        %v5905 = vunpack.c.l.b16 %v5713
        %v5906 = vunpack.c.l.b16 %v5714
        %v5907 = vunpack.c.l.b16 %v5715
        %v5908 = vunpack.c.l.b16 %v5716
        %v5909 = vpack.c.b16 %v5734, %v5901
        %v5910 = vpack.c.b16 %v5736, %v5902
        %v5911 = vpack.c.b16 %v5738, %v5903
        %v5912 = vpack.c.b16 %v5740, %v5904
        %v5913 = vpack.c.b16 %v5742, %v5905
        %v5914 = vpack.c.b16 %v5744, %v5906
        %v5915 = vpack.c.b16 %v5746, %v5907
        %v5916 = vpack.c.b16 %v5748, %v5908
        %v5917 = vrot.slane %v5909, 1
        %v5918 = vrot.slane %v5781, 1
        %v5919 = vsel %vm1341, %v5917, %v5918
        %v5920 = vrot.slane %v5910, 1
        %v5921 = vrot.slane %v5782, 1
        %v5922 = vsel %vm1341, %v5920, %v5921
        %v5923 = vrot.slane %v5911, 1
        %v5924 = vrot.slane %v5783, 1
        %v5925 = vsel %vm1341, %v5923, %v5924
        %v5926 = vrot.slane %v5912, 1
        %v5927 = vrot.slane %v5784, 1
        %v5928 = vsel %vm1341, %v5926, %v5927
        %v5929 = vrot.slane %v5913, 1
        %v5930 = vrot.slane %v5785, 1
        %v5931 = vsel %vm1341, %v5929, %v5930
        %v5932 = vrot.slane %v5914, 1
        %v5933 = vrot.slane %v5786, 1
        %v5934 = vsel %vm1341, %v5932, %v5933
        %v5935 = vrot.slane %v5915, 1
        %v5936 = vrot.slane %v5787, 1
        %v5937 = vsel %vm1341, %v5935, %v5936
        %v5938 = vrot.slane %v5916, 1
        %v5939 = vrot.slane %v5788, 1
        %v5940 = vsel %vm1341, %v5938, %v5939
        %v5949 = vld [vmem:[#allocation9] sm:$0xf]
        %v5950 = vld [vmem:[#allocation9 + $0x4] sm:$0xf]
        %v5951 = vld [vmem:[#allocation9 + $0x8] sm:$0xf]
        %v5952 = vld [vmem:[#allocation9 + $0xc] sm:$0xf]
        %v5953 = vld [vmem:[#allocation9 + $0x10] sm:$0xf]
        %v5954 = vld [vmem:[#allocation9 + $0x14] sm:$0xf]
        %v5955 = vld [vmem:[#allocation9 + $0x18] sm:$0xf]
        %v5956 = vld [vmem:[#allocation9 + $0x1c] sm:$0xf]
        %v5957 = vld [vmem:[#allocation9 + $0x20] sm:$0xf]
        %v5958 = vld [vmem:[#allocation9 + $0x24] sm:$0xf]
        %v5959 = vld [vmem:[#allocation9 + $0x28] sm:$0xf]
        %v5960 = vld [vmem:[#allocation9 + $0x2c] sm:$0xf]
        %v5961 = vld [vmem:[#allocation9 + $0x30] sm:$0xf]
        %v5962 = vld [vmem:[#allocation9 + $0x34] sm:$0xf]
        %v5963 = vld [vmem:[#allocation9 + $0x38] sm:$0xf]
        %v5964 = vld [vmem:[#allocation9 + $0x3c] sm:$0xf]
        %v5965 = vld [vmem:[#allocation9 + $0x40] sm:$0xf]
        %v5966 = vld [vmem:[#allocation9 + $0x44] sm:$0xf]
        %v5967 = vld [vmem:[#allocation9 + $0x48] sm:$0xf]
        %v5968 = vld [vmem:[#allocation9 + $0x4c] sm:$0xf]
        %v5969 = vld [vmem:[#allocation9 + $0x50] sm:$0xf]
        %v5970 = vld [vmem:[#allocation9 + $0x54] sm:$0xf]
        %v5971 = vld [vmem:[#allocation9 + $0x58] sm:$0xf]
        %v5972 = vld [vmem:[#allocation9 + $0x5c] sm:$0xf]
        %v5973 = vld [vmem:[#allocation9 + $0x60] sm:$0xf]
        %v5974 = vld [vmem:[#allocation9 + $0x64] sm:$0xf]
        %v5975 = vld [vmem:[#allocation9 + $0x68] sm:$0xf]
        %v5976 = vld [vmem:[#allocation9 + $0x6c] sm:$0xf]
        %v5977 = vld [vmem:[#allocation9 + $0x70] sm:$0xf]
        %v5978 = vld [vmem:[#allocation9 + $0x74] sm:$0xf]
        %v5979 = vld [vmem:[#allocation9 + $0x78] sm:$0xf]
        %v5980 = vld [vmem:[#allocation9 + $0x7c] sm:$0xf]
        %v5981 = vld [vmem:[#allocation9 + $0x80] sm:$0xf]
        %v5982 = vld [vmem:[#allocation9 + $0x84] sm:$0xf]
        %v5983 = vld [vmem:[#allocation9 + $0x88] sm:$0xf]
        %v5984 = vld [vmem:[#allocation9 + $0x8c] sm:$0xf]
        %v5985 = vld [vmem:[#allocation9 + $0x90] sm:$0xf]
        %v5986 = vld [vmem:[#allocation9 + $0x94] sm:$0xf]
        %v5987 = vld [vmem:[#allocation9 + $0x98] sm:$0xf]
        %v5988 = vld [vmem:[#allocation9 + $0x9c] sm:$0xf]
        %v5989 = vld [vmem:[#allocation9 + $0xa0] sm:$0xf]
        %v5990 = vld [vmem:[#allocation9 + $0xa4] sm:$0xf]
        %v5991 = vld [vmem:[#allocation9 + $0xa8] sm:$0xf]
        %v5992 = vld [vmem:[#allocation9 + $0xac] sm:$0xf]
        %v5993 = vld [vmem:[#allocation9 + $0xb0] sm:$0xf]
        %v5994 = vld [vmem:[#allocation9 + $0xb4] sm:$0xf]
        %v5995 = vld [vmem:[#allocation9 + $0xb8] sm:$0xf]
        %v5996 = vld [vmem:[#allocation9 + $0xbc] sm:$0xf]
        %v5997 = vld [vmem:[%s447] sm:$0xf]
        %v5998 = vld [vmem:[%s447 + $0x4] sm:$0xf]
        %v5999 = vld [vmem:[%s447 + $0xc] sm:$0xf]
        %v6000 = vld [vmem:[%s447 + $0x10] sm:$0xf]
        %v6001 = vld [vmem:[%s447 + $0x18] sm:$0xf]
        %v6002 = vld [vmem:[%s447 + $0x1c] sm:$0xf]
        %v6003 = vld [vmem:[%s447 + $0x24] sm:$0xf]
        %v6004 = vld [vmem:[%s447 + $0x28] sm:$0xf]
        %v6005 = vld [vmem:[%s447 + $0x30] sm:$0xf]
        %v6006 = vld [vmem:[%s447 + $0x34] sm:$0xf]
        %v6007 = vld [vmem:[%s447 + $0x3c] sm:$0xf]
        %v6008 = vld [vmem:[%s447 + $0x40] sm:$0xf]
        %v6009 = vld [vmem:[%s447 + $0x48] sm:$0xf]
        %v6010 = vld [vmem:[%s447 + $0x4c] sm:$0xf]
        %v6011 = vld [vmem:[%s447 + $0x54] sm:$0xf]
        %v6012 = vld [vmem:[%s447 + $0x58] sm:$0xf]
        %v6013 = vld [vmem:[%s447 + $0x8] sm:$0x1]
        %v6014 = vld [vmem:[%s447 + $0x14] sm:$0x1]
        %v6015 = vld [vmem:[%s447 + $0x20] sm:$0x1]
        %v6016 = vld [vmem:[%s447 + $0x2c] sm:$0x1]
        %v6017 = vld [vmem:[%s447 + $0x38] sm:$0x1]
        %v6018 = vld [vmem:[%s447 + $0x44] sm:$0x1]
        %v6019 = vld [vmem:[%s447 + $0x50] sm:$0x1]
        %v6020 = vld [vmem:[%s447 + $0x5c] sm:$0x1]
        %v6021 = vld [vmem:[%s447] sm:$0xe]
        %v6022 = vld [vmem:[%s447 + $0xc] sm:$0xe]
        %v6023 = vld [vmem:[%s447 + $0x18] sm:$0xe]
        %v6024 = vld [vmem:[%s447 + $0x24] sm:$0xe]
        %v6025 = vld [vmem:[%s447 + $0x30] sm:$0xe]
        %v6026 = vld [vmem:[%s447 + $0x3c] sm:$0xe]
        %v6027 = vld [vmem:[%s447 + $0x48] sm:$0xe]
        %v6028 = vld [vmem:[%s447 + $0x54] sm:$0xe]
        %v6045 = vunpack.c.l.b16 %v5997
        %v6046 = vunpack.c.l.b16 %v5998
        %v6047 = vunpack.c.l.b16 %v5999
        %v6048 = vunpack.c.l.b16 %v6000
        %v6049 = vunpack.c.l.b16 %v6001
        %v6050 = vunpack.c.l.b16 %v6002
        %v6051 = vunpack.c.l.b16 %v6003
        %v6052 = vunpack.c.l.b16 %v6004
        %v6053 = vunpack.c.l.b16 %v6005
        %v6054 = vunpack.c.l.b16 %v6006
        %v6055 = vunpack.c.l.b16 %v6007
        %v6056 = vunpack.c.l.b16 %v6008
        %v6057 = vunpack.c.l.b16 %v6009
        %v6058 = vunpack.c.l.b16 %v6010
        %v6059 = vunpack.c.l.b16 %v6011
        %v6060 = vunpack.c.l.b16 %v6012
        %v6061 = vpack.c.b16 %v6046, %v6045
        %v6062 = vpack.c.b16 %v6048, %v6047
        %v6063 = vpack.c.b16 %v6050, %v6049
        %v6064 = vpack.c.b16 %v6052, %v6051
        %v6065 = vpack.c.b16 %v6054, %v6053
        %v6066 = vpack.c.b16 %v6056, %v6055
        %v6067 = vpack.c.b16 %v6058, %v6057
        %v6068 = vpack.c.b16 %v6060, %v6059
        %v6085 = vunpack.c.l.b16 %v6013
        %v6086 = vunpack.c.l.b16 %v6014
        %v6087 = vunpack.c.l.b16 %v6015
        %v6088 = vunpack.c.l.b16 %v6016
        %v6089 = vunpack.c.l.b16 %v6017
        %v6090 = vunpack.c.l.b16 %v6018
        %v6091 = vunpack.c.l.b16 %v6019
        %v6092 = vunpack.c.l.b16 %v6020
        %v6093 = vpack.c.b16 %v6085, %v6085
        %v6094 = vpack.c.b16 %v6086, %v6086
        %v6095 = vpack.c.b16 %v6087, %v6087
        %v6096 = vpack.c.b16 %v6088, %v6088
        %v6097 = vpack.c.b16 %v6089, %v6089
        %v6098 = vpack.c.b16 %v6090, %v6090
        %v6099 = vpack.c.b16 %v6091, %v6091
        %v6100 = vpack.c.b16 %v6092, %v6092
        %v6102 = vshrl.u32 %v6061, 16
        %v6104 = vshll.u32 %v6061, 16
        %v6106 = vrot.slane %v6104, 1
        %v6107 = vor.u32 %v6102, %v6106
        %v6109 = vshll.u32 %v6093, 16
        %v6111 = vrot.slane %v6109, 1
        %v6112 = vsel %vm1212, %v6107, %v6111
        %v6114 = vshrl.u32 %v6062, 16
        %v6116 = vshll.u32 %v6062, 16
        %v6118 = vrot.slane %v6116, 1
        %v6119 = vor.u32 %v6114, %v6118
        %v6121 = vshll.u32 %v6094, 16
        %v6123 = vrot.slane %v6121, 1
        %v6124 = vsel %vm1212, %v6119, %v6123
        %v6126 = vshrl.u32 %v6063, 16
        %v6128 = vshll.u32 %v6063, 16
        %v6130 = vrot.slane %v6128, 1
        %v6131 = vor.u32 %v6126, %v6130
        %v6133 = vshll.u32 %v6095, 16
        %v6135 = vrot.slane %v6133, 1
        %v6136 = vsel %vm1212, %v6131, %v6135
        %v6138 = vshrl.u32 %v6064, 16
        %v6140 = vshll.u32 %v6064, 16
        %v6142 = vrot.slane %v6140, 1
        %v6143 = vor.u32 %v6138, %v6142
        %v6145 = vshll.u32 %v6096, 16
        %v6147 = vrot.slane %v6145, 1
        %v6148 = vsel %vm1212, %v6143, %v6147
        %v6150 = vshrl.u32 %v6065, 16
        %v6152 = vshll.u32 %v6065, 16
        %v6154 = vrot.slane %v6152, 1
        %v6155 = vor.u32 %v6150, %v6154
        %v6157 = vshll.u32 %v6097, 16
        %v6159 = vrot.slane %v6157, 1
        %v6160 = vsel %vm1212, %v6155, %v6159
        %v6162 = vshrl.u32 %v6066, 16
        %v6164 = vshll.u32 %v6066, 16
        %v6166 = vrot.slane %v6164, 1
        %v6167 = vor.u32 %v6162, %v6166
        %v6169 = vshll.u32 %v6098, 16
        %v6171 = vrot.slane %v6169, 1
        %v6172 = vsel %vm1212, %v6167, %v6171
        %v6174 = vshrl.u32 %v6067, 16
        %v6176 = vshll.u32 %v6067, 16
        %v6178 = vrot.slane %v6176, 1
        %v6179 = vor.u32 %v6174, %v6178
        %v6181 = vshll.u32 %v6099, 16
        %v6183 = vrot.slane %v6181, 1
        %v6184 = vsel %vm1212, %v6179, %v6183
        %v6186 = vshrl.u32 %v6068, 16
        %v6188 = vshll.u32 %v6068, 16
        %v6190 = vrot.slane %v6188, 1
        %v6191 = vor.u32 %v6186, %v6190
        %v6193 = vshll.u32 %v6100, 16
        %v6195 = vrot.slane %v6193, 1
        %v6196 = vsel %vm1212, %v6191, %v6195
        %v6213 = vunpack.c.l.b16 %v6021
        %v6214 = vunpack.c.l.b16 %v6022
        %v6215 = vunpack.c.l.b16 %v6023
        %v6216 = vunpack.c.l.b16 %v6024
        %v6217 = vunpack.c.l.b16 %v6025
        %v6218 = vunpack.c.l.b16 %v6026
        %v6219 = vunpack.c.l.b16 %v6027
        %v6220 = vunpack.c.l.b16 %v6028
        %v6221 = vpack.c.b16 %v6046, %v6213
        %v6222 = vpack.c.b16 %v6048, %v6214
        %v6223 = vpack.c.b16 %v6050, %v6215
        %v6224 = vpack.c.b16 %v6052, %v6216
        %v6225 = vpack.c.b16 %v6054, %v6217
        %v6226 = vpack.c.b16 %v6056, %v6218
        %v6227 = vpack.c.b16 %v6058, %v6219
        %v6228 = vpack.c.b16 %v6060, %v6220
        %v6229 = vrot.slane %v6221, 1
        %v6230 = vrot.slane %v6093, 1
        %v6231 = vsel %vm1341, %v6229, %v6230
        %v6232 = vrot.slane %v6222, 1
        %v6233 = vrot.slane %v6094, 1
        %v6234 = vsel %vm1341, %v6232, %v6233
        %v6235 = vrot.slane %v6223, 1
        %v6236 = vrot.slane %v6095, 1
        %v6237 = vsel %vm1341, %v6235, %v6236
        %v6238 = vrot.slane %v6224, 1
        %v6239 = vrot.slane %v6096, 1
        %v6240 = vsel %vm1341, %v6238, %v6239
        %v6241 = vrot.slane %v6225, 1
        %v6242 = vrot.slane %v6097, 1
        %v6243 = vsel %vm1341, %v6241, %v6242
        %v6244 = vrot.slane %v6226, 1
        %v6245 = vrot.slane %v6098, 1
        %v6246 = vsel %vm1341, %v6244, %v6245
        %v6247 = vrot.slane %v6227, 1
        %v6248 = vrot.slane %v6099, 1
        %v6249 = vsel %vm1341, %v6247, %v6248
        %v6250 = vrot.slane %v6228, 1
        %v6251 = vrot.slane %v6100, 1
        %v6252 = vsel %vm1341, %v6250, %v6251
        %s6261 = scalar_lea.vmem [#allocation9], 192
        %v6262 = vld [vmem:[%s6261] sm:$0xf]
        %v6263 = vld [vmem:[%s6261 + $0x4] sm:$0xf]
        %v6264 = vld [vmem:[%s6261 + $0x8] sm:$0xf]
        %v6265 = vld [vmem:[%s6261 + $0xc] sm:$0xf]
        %v6266 = vld [vmem:[%s6261 + $0x10] sm:$0xf]
        %v6267 = vld [vmem:[%s6261 + $0x14] sm:$0xf]
        %v6268 = vld [vmem:[%s6261 + $0x18] sm:$0xf]
        %v6269 = vld [vmem:[%s6261 + $0x1c] sm:$0xf]
        %v6270 = vld [vmem:[%s6261 + $0x20] sm:$0xf]
        %v6271 = vld [vmem:[%s6261 + $0x24] sm:$0xf]
        %v6272 = vld [vmem:[%s6261 + $0x28] sm:$0xf]
        %v6273 = vld [vmem:[%s6261 + $0x2c] sm:$0xf]
        %v6274 = vld [vmem:[%s6261 + $0x30] sm:$0xf]
        %v6275 = vld [vmem:[%s6261 + $0x34] sm:$0xf]
        %v6276 = vld [vmem:[%s6261 + $0x38] sm:$0xf]
        %v6277 = vld [vmem:[%s6261 + $0x3c] sm:$0xf]
        %v6278 = vld [vmem:[%s6261 + $0x40] sm:$0xf]
        %v6279 = vld [vmem:[%s6261 + $0x44] sm:$0xf]
        %v6280 = vld [vmem:[%s6261 + $0x48] sm:$0xf]
        %v6281 = vld [vmem:[%s6261 + $0x4c] sm:$0xf]
        %v6282 = vld [vmem:[%s6261 + $0x50] sm:$0xf]
        %v6283 = vld [vmem:[%s6261 + $0x54] sm:$0xf]
        %v6284 = vld [vmem:[%s6261 + $0x58] sm:$0xf]
        %v6285 = vld [vmem:[%s6261 + $0x5c] sm:$0xf]
        %v6286 = vld [vmem:[%s6261 + $0x60] sm:$0xf]
        %v6287 = vld [vmem:[%s6261 + $0x64] sm:$0xf]
        %v6288 = vld [vmem:[%s6261 + $0x68] sm:$0xf]
        %v6289 = vld [vmem:[%s6261 + $0x6c] sm:$0xf]
        %v6290 = vld [vmem:[%s6261 + $0x70] sm:$0xf]
        %v6291 = vld [vmem:[%s6261 + $0x74] sm:$0xf]
        %v6292 = vld [vmem:[%s6261 + $0x78] sm:$0xf]
        %v6293 = vld [vmem:[%s6261 + $0x7c] sm:$0xf]
        %v6294 = vld [vmem:[%s6261 + $0x80] sm:$0xf]
        %v6295 = vld [vmem:[%s6261 + $0x84] sm:$0xf]
        %v6296 = vld [vmem:[%s6261 + $0x88] sm:$0xf]
        %v6297 = vld [vmem:[%s6261 + $0x8c] sm:$0xf]
        %v6298 = vld [vmem:[%s6261 + $0x90] sm:$0xf]
        %v6299 = vld [vmem:[%s6261 + $0x94] sm:$0xf]
        %v6300 = vld [vmem:[%s6261 + $0x98] sm:$0xf]
        %v6301 = vld [vmem:[%s6261 + $0x9c] sm:$0xf]
        %v6302 = vld [vmem:[%s6261 + $0xa0] sm:$0xf]
        %v6303 = vld [vmem:[%s6261 + $0xa4] sm:$0xf]
        %v6304 = vld [vmem:[%s6261 + $0xa8] sm:$0xf]
        %v6305 = vld [vmem:[%s6261 + $0xac] sm:$0xf]
        %v6306 = vld [vmem:[%s6261 + $0xb0] sm:$0xf]
        %v6307 = vld [vmem:[%s6261 + $0xb4] sm:$0xf]
        %v6308 = vld [vmem:[%s6261 + $0xb8] sm:$0xf]
        %v6309 = vld [vmem:[%s6261 + $0xbc] sm:$0xf]
        %v6358 = vunpack.c.l.b16 %v6262
        %v6359 = vunpack.c.l.b16 %v6263
        %v6360 = vunpack.c.l.b16 %v6264
        %v6361 = vunpack.c.l.b16 %v6265
        %v6362 = vunpack.c.l.b16 %v6266
        %v6363 = vunpack.c.l.b16 %v6267
        %v6364 = vunpack.c.l.b16 %v6268
        %v6365 = vunpack.c.l.b16 %v6269
        %v6366 = vunpack.c.l.b16 %v6270
        %v6367 = vunpack.c.l.b16 %v6271
        %v6368 = vunpack.c.l.b16 %v6272
        %v6369 = vunpack.c.l.b16 %v6273
        %v6370 = vunpack.c.l.b16 %v6274
        %v6371 = vunpack.c.l.b16 %v6275
        %v6372 = vunpack.c.l.b16 %v6276
        %v6373 = vunpack.c.l.b16 %v6277
        %v6374 = vunpack.c.l.b16 %v6278
        %v6375 = vunpack.c.l.b16 %v6279
        %v6376 = vunpack.c.l.b16 %v6280
        %v6377 = vunpack.c.l.b16 %v6281
        %v6378 = vunpack.c.l.b16 %v6282
        %v6379 = vunpack.c.l.b16 %v6283
        %v6380 = vunpack.c.l.b16 %v6284
        %v6381 = vunpack.c.l.b16 %v6285
        %v6382 = vunpack.c.l.b16 %v6286
        %v6383 = vunpack.c.l.b16 %v6287
        %v6384 = vunpack.c.l.b16 %v6288
        %v6385 = vunpack.c.l.b16 %v6289
        %v6386 = vunpack.c.l.b16 %v6290
        %v6387 = vunpack.c.l.b16 %v6291
        %v6388 = vunpack.c.l.b16 %v6292
        %v6389 = vunpack.c.l.b16 %v6293
        %v6390 = vunpack.c.l.b16 %v6294
        %v6391 = vunpack.c.l.b16 %v6295
        %v6392 = vunpack.c.l.b16 %v6296
        %v6393 = vunpack.c.l.b16 %v6297
        %v6394 = vunpack.c.l.b16 %v6298
        %v6395 = vunpack.c.l.b16 %v6299
        %v6396 = vunpack.c.l.b16 %v6300
        %v6397 = vunpack.c.l.b16 %v6301
        %v6398 = vunpack.c.l.b16 %v6302
        %v6399 = vunpack.c.l.b16 %v6303
        %v6400 = vunpack.c.l.b16 %v6304
        %v6401 = vunpack.c.l.b16 %v6305
        %v6402 = vunpack.c.l.b16 %v6306
        %v6403 = vunpack.c.l.b16 %v6307
        %v6404 = vunpack.c.l.b16 %v6308
        %v6405 = vunpack.c.l.b16 %v6309
        %v6406 = vpack.c.b16 %v6359, %v6358
        %v6407 = vpack.c.b16 %v6361, %v6360
        %v6408 = vpack.c.b16 %v6363, %v6362
        %v6409 = vpack.c.b16 %v6365, %v6364
        %v6410 = vpack.c.b16 %v6367, %v6366
        %v6411 = vpack.c.b16 %v6369, %v6368
        %v6412 = vpack.c.b16 %v6371, %v6370
        %v6413 = vpack.c.b16 %v6373, %v6372
        %v6414 = vpack.c.b16 %v6375, %v6374
        %v6415 = vpack.c.b16 %v6377, %v6376
        %v6416 = vpack.c.b16 %v6379, %v6378
        %v6417 = vpack.c.b16 %v6381, %v6380
        %v6418 = vpack.c.b16 %v6383, %v6382
        %v6419 = vpack.c.b16 %v6385, %v6384
        %v6420 = vpack.c.b16 %v6387, %v6386
        %v6421 = vpack.c.b16 %v6389, %v6388
        %v6422 = vpack.c.b16 %v6391, %v6390
        %v6423 = vpack.c.b16 %v6393, %v6392
        %v6424 = vpack.c.b16 %v6395, %v6394
        %v6425 = vpack.c.b16 %v6397, %v6396
        %v6426 = vpack.c.b16 %v6399, %v6398
        %v6427 = vpack.c.b16 %v6401, %v6400
        %v6428 = vpack.c.b16 %v6403, %v6402
        %v6429 = vpack.c.b16 %v6405, %v6404
        %6454 = vmatprep.subr.bf16.mxu0 0
        %6455 = vmatpush1.bf16.msra.mxu0 %v6406
        %6456 = vmatprep.subr.bf16.mxu0 0
        %6457 = vmatpush1.bf16.msra.mxu0 %v6407
        %6458 = vmatprep.subr.bf16.mxu0 0
        %6459 = vmatpush1.bf16.msra.mxu0 %v6408
        %6460 = vmatprep.subr.bf16.mxu0 0
        %6461 = vmatpush1.bf16.msra.mxu0 %v6409
        %6462 = vmatprep.subr.bf16.mxu0 0
        %6463 = vmatpush1.bf16.msra.mxu0 %v6410
        %6464 = vmatprep.subr.bf16.mxu0 0
        %6465 = vmatpush1.bf16.msra.mxu0 %v6411
        %6466 = vmatprep.subr.bf16.mxu0 0
        %6467 = vmatpush1.bf16.msra.mxu0 %v6412
        %6468 = vmatprep.subr.bf16.mxu0 0
        %6469 = vmatpush1.bf16.msra.mxu0 %v6413
        %6470 = vmatprep.subr.bf16.mxu0 0
        %6471 = vmatpush1.bf16.msra.mxu0 %v6414
        %6472 = vmatprep.subr.bf16.mxu0 0
        %6473 = vmatpush1.bf16.msra.mxu0 %v6415
        %6474 = vmatprep.subr.bf16.mxu0 0
        %6475 = vmatpush1.bf16.msra.mxu0 %v6416
        %6476 = vmatprep.subr.bf16.mxu0 0
        %6477 = vmatpush1.bf16.msra.mxu0 %v6417
        %6478 = vmatprep.subr.bf16.mxu0 0
        %6479 = vmatpush1.bf16.msra.mxu0 %v6418
        %6480 = vmatprep.subr.bf16.mxu0 0
        %6481 = vmatpush1.bf16.msra.mxu0 %v6419
        %6482 = vmatprep.subr.bf16.mxu0 0
        %6483 = vmatpush1.bf16.msra.mxu0 %v6420
        %6484 = vmatprep.subr.bf16.mxu0 0
        %6485 = vmatpush1.bf16.msra.mxu0 %v6421
        %6486 = vmatprep.mubr.bf16.mxu0 %v6112
        %6487 = vmatmul.mubr.bf16.gmra.mrb[0].mxu0 %v6061
        %v6488 = vpop.f32.mrb[0].mxu0
        %v6489 = vadd.f32 0.0, %v6488
        %v6490 = vpop.f32.mrb[0].mxu0
        %v6491 = vpop.f32.mrb[0].mxu0
        %v6492 = vadd.f32 0.0, %v6491
        %v6493 = vpop.f32.mrb[0].mxu0
        %6494 = vmatprep.mubr.bf16.mxu0 %v6124
        %6495 = vmatmul.mubr.bf16.gmra.mrb[0].mxu0 %v6062
        %v6496 = vpop.f32.mrb[0].mxu0
        %v6497 = vadd.f32 0.0, %v6496
        %v6498 = vpop.f32.mrb[0].mxu0
        %v6499 = vpop.f32.mrb[0].mxu0
        %v6500 = vadd.f32 0.0, %v6499
        %v6501 = vpop.f32.mrb[0].mxu0
        %6502 = vmatprep.mubr.bf16.mxu0 %v6136
        %6503 = vmatmul.mubr.bf16.gmra.mrb[0].mxu0 %v6063
        %v6504 = vpop.f32.mrb[0].mxu0
        %v6505 = vadd.f32 0.0, %v6504
        %v6506 = vpop.f32.mrb[0].mxu0
        %v6507 = vpop.f32.mrb[0].mxu0
        %v6508 = vadd.f32 0.0, %v6507
        %v6509 = vpop.f32.mrb[0].mxu0
        %6510 = vmatprep.mubr.bf16.mxu0 %v6148
        %6511 = vmatmul.mubr.bf16.gmra.mrb[0].mxu0 %v6064
        %v6512 = vpop.f32.mrb[0].mxu0
        %v6513 = vadd.f32 0.0, %v6512
        %v6514 = vpop.f32.mrb[0].mxu0
        %v6515 = vpop.f32.mrb[0].mxu0
        %v6516 = vadd.f32 0.0, %v6515
        %v6517 = vpop.f32.mrb[0].mxu0
        %6518 = vmatprep.mubr.bf16.mxu0 %v6160
        %6519 = vmatmul.mubr.bf16.gmra.mrb[0].mxu0 %v6065
        %v6520 = vpop.f32.mrb[0].mxu0
        %v6521 = vadd.f32 0.0, %v6520
        %v6522 = vpop.f32.mrb[0].mxu0
        %v6523 = vpop.f32.mrb[0].mxu0
        %v6524 = vadd.f32 0.0, %v6523
        %v6525 = vpop.f32.mrb[0].mxu0
        %6526 = vmatprep.mubr.bf16.mxu0 %v6172
        %6527 = vmatmul.mubr.bf16.gmra.mrb[0].mxu0 %v6066
        %v6528 = vpop.f32.mrb[0].mxu0
        %v6529 = vadd.f32 0.0, %v6528
        %v6530 = vpop.f32.mrb[0].mxu0
        %v6531 = vpop.f32.mrb[0].mxu0
        %v6532 = vadd.f32 0.0, %v6531
        %v6533 = vpop.f32.mrb[0].mxu0
        %6534 = vmatprep.mubr.bf16.mxu0 %v6184
        %6535 = vmatmul.mubr.bf16.gmra.mrb[0].mxu0 %v6067
        %v6536 = vpop.f32.mrb[0].mxu0
        %v6537 = vadd.f32 0.0, %v6536
        %v6538 = vpop.f32.mrb[0].mxu0
        %v6539 = vpop.f32.mrb[0].mxu0
        %v6540 = vadd.f32 0.0, %v6539
        %v6541 = vpop.f32.mrb[0].mxu0
        %6542 = vmatprep.mubr.bf16.mxu0 %v6196
        %6543 = vmatmul.mubr.bf16.gmra.mrb[0].mxu0 %v6068
        %v6544 = vpop.f32.mrb[0].mxu0
        %v6545 = vadd.f32 0.0, %v6544
        %v6546 = vpop.f32.mrb[0].mxu0
        %v6547 = vpop.f32.mrb[0].mxu0
        %v6548 = vadd.f32 0.0, %v6547
        %v6549 = vpop.f32.mrb[0].mxu0
        %6550 = vdwg.mxu0
        %6551 = vmatprep.subr.bf16.mxu0 0
        %6552 = vmatpush1.bf16.msra.mxu0 %v6422
        %6553 = vmatprep.subr.bf16.mxu0 0
        %6554 = vmatpush1.bf16.msra.mxu0 %v6423
        %6555 = vmatprep.subr.bf16.mxu0 0
        %6556 = vmatpush1.bf16.msra.mxu0 %v6424
        %6557 = vmatprep.subr.bf16.mxu0 0
        %6558 = vmatpush1.bf16.msra.mxu0 %v6425
        %6559 = vmatprep.subr.bf16.mxu0 0
        %6560 = vmatpush1.bf16.msra.mxu0 %v6426
        %6561 = vmatprep.subr.bf16.mxu0 0
        %6562 = vmatpush1.bf16.msra.mxu0 %v6427
        %6563 = vmatprep.subr.bf16.mxu0 0
        %6564 = vmatpush1.bf16.msra.mxu0 %v6428
        %6565 = vmatprep.subr.bf16.mxu0 0
        %6566 = vmatpush1.bf16.msra.mxu0 %v6429
        %6567 = vmatprep.subr.bf16.mxu0 0
        %6568 = vmatpush1.bf16.msra.mxu0 0
        %6569 = vmatprep.subr.bf16.mxu0 0
        %6570 = vmatpush1.bf16.msra.mxu0 0
        %6571 = vmatprep.subr.bf16.mxu0 0
        %6572 = vmatpush1.bf16.msra.mxu0 0
        %6573 = vmatprep.subr.bf16.mxu0 0
        %6574 = vmatpush1.bf16.msra.mxu0 0
        %6575 = vmatprep.subr.bf16.mxu0 0
        %6576 = vmatpush1.bf16.msra.mxu0 0
        %6577 = vmatprep.subr.bf16.mxu0 0
        %6578 = vmatpush1.bf16.msra.mxu0 0
        %6579 = vmatprep.subr.bf16.mxu0 0
        %6580 = vmatpush1.bf16.msra.mxu0 0
        %6581 = vmatprep.subr.bf16.mxu0 0
        %6582 = vmatpush1.bf16.msra.mxu0 0
        %6583 = vmatprep.mubr.bf16.mxu0 0
        %6584 = vmatmul.mubr.bf16.gmra.mrb[0].mxu0 %v6231
        %v6585 = vpop.f32.mrb[0].mxu0
        %v6586 = vadd.f32 %v6489, %v6585
        %v6587 = vpop.f32.mrb[0].mxu0
        %v6588 = vpop.f32.mrb[0].mxu0
        %v6589 = vadd.f32 %v6492, %v6588
        %v6590 = vpop.f32.mrb[0].mxu0
        %6591 = vmatprep.mubr.bf16.mxu0 0
        %6592 = vmatmul.mubr.bf16.gmra.mrb[0].mxu0 %v6234
        %v6593 = vpop.f32.mrb[0].mxu0
        %v6594 = vadd.f32 %v6497, %v6593
        %v6595 = vpop.f32.mrb[0].mxu0
        %v6596 = vpop.f32.mrb[0].mxu0
        %v6597 = vadd.f32 %v6500, %v6596
        %v6598 = vpop.f32.mrb[0].mxu0
        %6599 = vmatprep.mubr.bf16.mxu0 0
        %6600 = vmatmul.mubr.bf16.gmra.mrb[0].mxu0 %v6237
        %v6601 = vpop.f32.mrb[0].mxu0
        %v6602 = vadd.f32 %v6505, %v6601
        %v6603 = vpop.f32.mrb[0].mxu0
        %v6604 = vpop.f32.mrb[0].mxu0
        %v6605 = vadd.f32 %v6508, %v6604
        %v6606 = vpop.f32.mrb[0].mxu0
        %6607 = vmatprep.mubr.bf16.mxu0 0
        %6608 = vmatmul.mubr.bf16.gmra.mrb[0].mxu0 %v6240
        %v6609 = vpop.f32.mrb[0].mxu0
        %v6610 = vadd.f32 %v6513, %v6609
        %v6611 = vpop.f32.mrb[0].mxu0
        %v6612 = vpop.f32.mrb[0].mxu0
        %v6613 = vadd.f32 %v6516, %v6612
        %v6614 = vpop.f32.mrb[0].mxu0
        %6615 = vmatprep.mubr.bf16.mxu0 0
        %6616 = vmatmul.mubr.bf16.gmra.mrb[0].mxu0 %v6243
        %v6617 = vpop.f32.mrb[0].mxu0
        %v6618 = vadd.f32 %v6521, %v6617
        %v6619 = vpop.f32.mrb[0].mxu0
        %v6620 = vpop.f32.mrb[0].mxu0
        %v6621 = vadd.f32 %v6524, %v6620
        %v6622 = vpop.f32.mrb[0].mxu0
        %6623 = vmatprep.mubr.bf16.mxu0 0
        %6624 = vmatmul.mubr.bf16.gmra.mrb[0].mxu0 %v6246
        %v6625 = vpop.f32.mrb[0].mxu0
        %v6626 = vadd.f32 %v6529, %v6625
        %v6627 = vpop.f32.mrb[0].mxu0
        %v6628 = vpop.f32.mrb[0].mxu0
        %v6629 = vadd.f32 %v6532, %v6628
        %v6630 = vpop.f32.mrb[0].mxu0
        %6631 = vmatprep.mubr.bf16.mxu0 0
        %6632 = vmatmul.mubr.bf16.gmra.mrb[0].mxu0 %v6249
        %v6633 = vpop.f32.mrb[0].mxu0
        %v6634 = vadd.f32 %v6537, %v6633
        %v6635 = vpop.f32.mrb[0].mxu0
        %v6636 = vpop.f32.mrb[0].mxu0
        %v6637 = vadd.f32 %v6540, %v6636
        %v6638 = vpop.f32.mrb[0].mxu0
        %6639 = vmatprep.mubr.bf16.mxu0 0
        %6640 = vmatmul.mubr.bf16.gmra.mrb[0].mxu0 %v6252
        %v6641 = vpop.f32.mrb[0].mxu0
        %v6642 = vadd.f32 %v6545, %v6641
        %v6643 = vpop.f32.mrb[0].mxu0
        %v6644 = vpop.f32.mrb[0].mxu0
        %v6645 = vadd.f32 %v6548, %v6644
        %v6646 = vpop.f32.mrb[0].mxu0
        %6647 = vdwg.mxu0
        %v6696 = vunpack.c.l.b16 %v5949
        %v6697 = vunpack.c.l.b16 %v5950
        %v6698 = vunpack.c.l.b16 %v5951
        %v6699 = vunpack.c.l.b16 %v5952
        %v6700 = vunpack.c.l.b16 %v5953
        %v6701 = vunpack.c.l.b16 %v5954
        %v6702 = vunpack.c.l.b16 %v5955
        %v6703 = vunpack.c.l.b16 %v5956
        %v6704 = vunpack.c.l.b16 %v5957
        %v6705 = vunpack.c.l.b16 %v5958
        %v6706 = vunpack.c.l.b16 %v5959
        %v6707 = vunpack.c.l.b16 %v5960
        %v6708 = vunpack.c.l.b16 %v5961
        %v6709 = vunpack.c.l.b16 %v5962
        %v6710 = vunpack.c.l.b16 %v5963
        %v6711 = vunpack.c.l.b16 %v5964
        %v6712 = vunpack.c.l.b16 %v5965
        %v6713 = vunpack.c.l.b16 %v5966
        %v6714 = vunpack.c.l.b16 %v5967
        %v6715 = vunpack.c.l.b16 %v5968
        %v6716 = vunpack.c.l.b16 %v5969
        %v6717 = vunpack.c.l.b16 %v5970
        %v6718 = vunpack.c.l.b16 %v5971
        %v6719 = vunpack.c.l.b16 %v5972
        %v6720 = vunpack.c.l.b16 %v5973
        %v6721 = vunpack.c.l.b16 %v5974
        %v6722 = vunpack.c.l.b16 %v5975
        %v6723 = vunpack.c.l.b16 %v5976
        %v6724 = vunpack.c.l.b16 %v5977
        %v6725 = vunpack.c.l.b16 %v5978
        %v6726 = vunpack.c.l.b16 %v5979
        %v6727 = vunpack.c.l.b16 %v5980
        %v6728 = vunpack.c.l.b16 %v5981
        %v6729 = vunpack.c.l.b16 %v5982
        %v6730 = vunpack.c.l.b16 %v5983
        %v6731 = vunpack.c.l.b16 %v5984
        %v6732 = vunpack.c.l.b16 %v5985
        %v6733 = vunpack.c.l.b16 %v5986
        %v6734 = vunpack.c.l.b16 %v5987
        %v6735 = vunpack.c.l.b16 %v5988
        %v6736 = vunpack.c.l.b16 %v5989
        %v6737 = vunpack.c.l.b16 %v5990
        %v6738 = vunpack.c.l.b16 %v5991
        %v6739 = vunpack.c.l.b16 %v5992
        %v6740 = vunpack.c.l.b16 %v5993
        %v6741 = vunpack.c.l.b16 %v5994
        %v6742 = vunpack.c.l.b16 %v5995
        %v6743 = vunpack.c.l.b16 %v5996
        %v6744 = vpack.c.b16 %v6697, %v6696
        %v6745 = vpack.c.b16 %v6699, %v6698
        %v6746 = vpack.c.b16 %v6701, %v6700
        %v6747 = vpack.c.b16 %v6703, %v6702
        %v6748 = vpack.c.b16 %v6705, %v6704
        %v6749 = vpack.c.b16 %v6707, %v6706
        %v6750 = vpack.c.b16 %v6709, %v6708
        %v6751 = vpack.c.b16 %v6711, %v6710
        %v6752 = vpack.c.b16 %v6713, %v6712
        %v6753 = vpack.c.b16 %v6715, %v6714
        %v6754 = vpack.c.b16 %v6717, %v6716
        %v6755 = vpack.c.b16 %v6719, %v6718
        %v6756 = vpack.c.b16 %v6721, %v6720
        %v6757 = vpack.c.b16 %v6723, %v6722
        %v6758 = vpack.c.b16 %v6725, %v6724
        %v6759 = vpack.c.b16 %v6727, %v6726
        %v6760 = vpack.c.b16 %v6729, %v6728
        %v6761 = vpack.c.b16 %v6731, %v6730
        %v6762 = vpack.c.b16 %v6733, %v6732
        %v6763 = vpack.c.b16 %v6735, %v6734
        %v6764 = vpack.c.b16 %v6737, %v6736
        %v6765 = vpack.c.b16 %v6739, %v6738
        %v6766 = vpack.c.b16 %v6741, %v6740
        %v6767 = vpack.c.b16 %v6743, %v6742
        %6792 = vmatprep.subr.bf16.mxu0 0
        %6793 = vmatpush1.bf16.msra.mxu0 %v6744
        %6794 = vmatprep.subr.bf16.mxu0 0
        %6795 = vmatpush1.bf16.msra.mxu0 %v6745
        %6796 = vmatprep.subr.bf16.mxu0 0
        %6797 = vmatpush1.bf16.msra.mxu0 %v6746
        %6798 = vmatprep.subr.bf16.mxu0 0
        %6799 = vmatpush1.bf16.msra.mxu0 %v6747
        %6800 = vmatprep.subr.bf16.mxu0 0
        %6801 = vmatpush1.bf16.msra.mxu0 %v6748
        %6802 = vmatprep.subr.bf16.mxu0 0
        %6803 = vmatpush1.bf16.msra.mxu0 %v6749
        %6804 = vmatprep.subr.bf16.mxu0 0
        %6805 = vmatpush1.bf16.msra.mxu0 %v6750
        %6806 = vmatprep.subr.bf16.mxu0 0
        %6807 = vmatpush1.bf16.msra.mxu0 %v6751
        %6808 = vmatprep.subr.bf16.mxu0 0
        %6809 = vmatpush1.bf16.msra.mxu0 %v6752
        %6810 = vmatprep.subr.bf16.mxu0 0
        %6811 = vmatpush1.bf16.msra.mxu0 %v6753
        %6812 = vmatprep.subr.bf16.mxu0 0
        %6813 = vmatpush1.bf16.msra.mxu0 %v6754
        %6814 = vmatprep.subr.bf16.mxu0 0
        %6815 = vmatpush1.bf16.msra.mxu0 %v6755
        %6816 = vmatprep.subr.bf16.mxu0 0
        %6817 = vmatpush1.bf16.msra.mxu0 %v6756
        %6818 = vmatprep.subr.bf16.mxu0 0
        %6819 = vmatpush1.bf16.msra.mxu0 %v6757
        %6820 = vmatprep.subr.bf16.mxu0 0
        %6821 = vmatpush1.bf16.msra.mxu0 %v6758
        %6822 = vmatprep.subr.bf16.mxu0 0
        %6823 = vmatpush1.bf16.msra.mxu0 %v6759
        %6824 = vmatprep.mubr.bf16.mxu0 %v5800
        %6825 = vmatmul.mubr.bf16.gmra.mrb[0].mxu0 %v5749
        %v6826 = vpop.f32.mrb[0].mxu0
        %v6827 = vadd.f32 %v6586, %v6826
        %v6828 = vpop.f32.mrb[0].mxu0
        %v6829 = vpop.f32.mrb[0].mxu0
        %v6830 = vadd.f32 %v6589, %v6829
        %v6831 = vpop.f32.mrb[0].mxu0
        %6832 = vmatprep.mubr.bf16.mxu0 %v5812
        %6833 = vmatmul.mubr.bf16.gmra.mrb[0].mxu0 %v5750
        %v6834 = vpop.f32.mrb[0].mxu0
        %v6835 = vadd.f32 %v6594, %v6834
        %v6836 = vpop.f32.mrb[0].mxu0
        %v6837 = vpop.f32.mrb[0].mxu0
        %v6838 = vadd.f32 %v6597, %v6837
        %v6839 = vpop.f32.mrb[0].mxu0
        %6840 = vmatprep.mubr.bf16.mxu0 %v5824
        %6841 = vmatmul.mubr.bf16.gmra.mrb[0].mxu0 %v5751
        %v6842 = vpop.f32.mrb[0].mxu0
        %v6843 = vadd.f32 %v6602, %v6842
        %v6844 = vpop.f32.mrb[0].mxu0
        %v6845 = vpop.f32.mrb[0].mxu0
        %v6846 = vadd.f32 %v6605, %v6845
        %v6847 = vpop.f32.mrb[0].mxu0
        %6848 = vmatprep.mubr.bf16.mxu0 %v5836
        %6849 = vmatmul.mubr.bf16.gmra.mrb[0].mxu0 %v5752
        %v6850 = vpop.f32.mrb[0].mxu0
        %v6851 = vadd.f32 %v6610, %v6850
        %v6852 = vpop.f32.mrb[0].mxu0
        %v6853 = vpop.f32.mrb[0].mxu0
        %v6854 = vadd.f32 %v6613, %v6853
        %v6855 = vpop.f32.mrb[0].mxu0
        %6856 = vmatprep.mubr.bf16.mxu0 %v5848
        %6857 = vmatmul.mubr.bf16.gmra.mrb[0].mxu0 %v5753
        %v6858 = vpop.f32.mrb[0].mxu0
        %v6859 = vadd.f32 %v6618, %v6858
        %v6860 = vpop.f32.mrb[0].mxu0
        %v6861 = vpop.f32.mrb[0].mxu0
        %v6862 = vadd.f32 %v6621, %v6861
        %v6863 = vpop.f32.mrb[0].mxu0
        %6864 = vmatprep.mubr.bf16.mxu0 %v5860
        %6865 = vmatmul.mubr.bf16.gmra.mrb[0].mxu0 %v5754
        %v6866 = vpop.f32.mrb[0].mxu0
        %v6867 = vadd.f32 %v6626, %v6866
        %v6868 = vpop.f32.mrb[0].mxu0
        %v6869 = vpop.f32.mrb[0].mxu0
        %v6870 = vadd.f32 %v6629, %v6869
        %v6871 = vpop.f32.mrb[0].mxu0
        %6872 = vmatprep.mubr.bf16.mxu0 %v5872
        %6873 = vmatmul.mubr.bf16.gmra.mrb[0].mxu0 %v5755
        %v6874 = vpop.f32.mrb[0].mxu0
        %v6875 = vadd.f32 %v6634, %v6874
        %v6876 = vpop.f32.mrb[0].mxu0
        %v6877 = vpop.f32.mrb[0].mxu0
        %v6878 = vadd.f32 %v6637, %v6877
        %v6879 = vpop.f32.mrb[0].mxu0
        %6880 = vmatprep.mubr.bf16.mxu0 %v5884
        %6881 = vmatmul.mubr.bf16.gmra.mrb[0].mxu0 %v5756
        %v6882 = vpop.f32.mrb[0].mxu0
        %v6883 = vadd.f32 %v6642, %v6882
        %v6884 = vpop.f32.mrb[0].mxu0
        %v6885 = vpop.f32.mrb[0].mxu0
        %v6886 = vadd.f32 %v6645, %v6885
        %v6887 = vpop.f32.mrb[0].mxu0
        %6888 = vdwg.mxu0
        %6889 = vmatprep.subr.bf16.mxu0 0
        %6890 = vmatpush1.bf16.msra.mxu0 %v6760
        %6891 = vmatprep.subr.bf16.mxu0 0
        %6892 = vmatpush1.bf16.msra.mxu0 %v6761
        %6893 = vmatprep.subr.bf16.mxu0 0
        %6894 = vmatpush1.bf16.msra.mxu0 %v6762
        %6895 = vmatprep.subr.bf16.mxu0 0
        %6896 = vmatpush1.bf16.msra.mxu0 %v6763
        %6897 = vmatprep.subr.bf16.mxu0 0
        %6898 = vmatpush1.bf16.msra.mxu0 %v6764
        %6899 = vmatprep.subr.bf16.mxu0 0
        %6900 = vmatpush1.bf16.msra.mxu0 %v6765
        %6901 = vmatprep.subr.bf16.mxu0 0
        %6902 = vmatpush1.bf16.msra.mxu0 %v6766
        %6903 = vmatprep.subr.bf16.mxu0 0
        %6904 = vmatpush1.bf16.msra.mxu0 %v6767
        %6905 = vmatprep.subr.bf16.mxu0 0
        %6906 = vmatpush1.bf16.msra.mxu0 0
        %6907 = vmatprep.subr.bf16.mxu0 0
        %6908 = vmatpush1.bf16.msra.mxu0 0
        %6909 = vmatprep.subr.bf16.mxu0 0
        %6910 = vmatpush1.bf16.msra.mxu0 0
        %6911 = vmatprep.subr.bf16.mxu0 0
        %6912 = vmatpush1.bf16.msra.mxu0 0
        %6913 = vmatprep.subr.bf16.mxu0 0
        %6914 = vmatpush1.bf16.msra.mxu0 0
        %6915 = vmatprep.subr.bf16.mxu0 0
        %6916 = vmatpush1.bf16.msra.mxu0 0
        %6917 = vmatprep.subr.bf16.mxu0 0
        %6918 = vmatpush1.bf16.msra.mxu0 0
        %6919 = vmatprep.subr.bf16.mxu0 0
        %6920 = vmatpush1.bf16.msra.mxu0 0
        %6921 = vmatprep.mubr.bf16.mxu0 0
        %6922 = vmatmul.mubr.bf16.gmra.mrb[0].mxu0 %v5919
        %v6923 = vpop.f32.mrb[0].mxu0
        %v6924 = vadd.f32 %v6827, %v6923
        %v6925 = vpop.f32.mrb[0].mxu0
        %v6926 = vpop.f32.mrb[0].mxu0
        %v6927 = vadd.f32 %v6830, %v6926
        %v6928 = vpop.f32.mrb[0].mxu0
        %6929 = vmatprep.mubr.bf16.mxu0 0
        %6930 = vmatmul.mubr.bf16.gmra.mrb[0].mxu0 %v5922
        %v6931 = vpop.f32.mrb[0].mxu0
        %v6932 = vadd.f32 %v6835, %v6931
        %v6933 = vpop.f32.mrb[0].mxu0
        %v6934 = vpop.f32.mrb[0].mxu0
        %v6935 = vadd.f32 %v6838, %v6934
        %v6936 = vpop.f32.mrb[0].mxu0
        %6937 = vmatprep.mubr.bf16.mxu0 0
        %6938 = vmatmul.mubr.bf16.gmra.mrb[0].mxu0 %v5925
        %v6939 = vpop.f32.mrb[0].mxu0
        %v6940 = vadd.f32 %v6843, %v6939
        %v6941 = vpop.f32.mrb[0].mxu0
        %v6942 = vpop.f32.mrb[0].mxu0
        %v6943 = vadd.f32 %v6846, %v6942
        %v6944 = vpop.f32.mrb[0].mxu0
        %6945 = vmatprep.mubr.bf16.mxu0 0
        %6946 = vmatmul.mubr.bf16.gmra.mrb[0].mxu0 %v5928
        %v6947 = vpop.f32.mrb[0].mxu0
        %v6948 = vadd.f32 %v6851, %v6947
        %v6949 = vpop.f32.mrb[0].mxu0
        %v6950 = vpop.f32.mrb[0].mxu0
        %v6951 = vadd.f32 %v6854, %v6950
        %v6952 = vpop.f32.mrb[0].mxu0
        %6953 = vmatprep.mubr.bf16.mxu0 0
        %6954 = vmatmul.mubr.bf16.gmra.mrb[0].mxu0 %v5931
        %v6955 = vpop.f32.mrb[0].mxu0
        %v6956 = vadd.f32 %v6859, %v6955
        %v6957 = vpop.f32.mrb[0].mxu0
        %v6958 = vpop.f32.mrb[0].mxu0
        %v6959 = vadd.f32 %v6862, %v6958
        %v6960 = vpop.f32.mrb[0].mxu0
        %6961 = vmatprep.mubr.bf16.mxu0 0
        %6962 = vmatmul.mubr.bf16.gmra.mrb[0].mxu0 %v5934
        %v6963 = vpop.f32.mrb[0].mxu0
        %v6964 = vadd.f32 %v6867, %v6963
        %v6965 = vpop.f32.mrb[0].mxu0
        %v6966 = vpop.f32.mrb[0].mxu0
        %v6967 = vadd.f32 %v6870, %v6966
        %v6968 = vpop.f32.mrb[0].mxu0
        %6969 = vmatprep.mubr.bf16.mxu0 0
        %6970 = vmatmul.mubr.bf16.gmra.mrb[0].mxu0 %v5937
        %v6971 = vpop.f32.mrb[0].mxu0
        %v6972 = vadd.f32 %v6875, %v6971
        %v6973 = vpop.f32.mrb[0].mxu0
        %v6974 = vpop.f32.mrb[0].mxu0
        %v6975 = vadd.f32 %v6878, %v6974
        %v6976 = vpop.f32.mrb[0].mxu0
        %6977 = vmatprep.mubr.bf16.mxu0 0
        %6978 = vmatmul.mubr.bf16.gmra.mrb[0].mxu0 %v5940
        %v6979 = vpop.f32.mrb[0].mxu0
        %v6980 = vadd.f32 %v6883, %v6979
        %v6981 = vpop.f32.mrb[0].mxu0
        %v6982 = vpop.f32.mrb[0].mxu0
        %v6983 = vadd.f32 %v6886, %v6982
        %v6984 = vpop.f32.mrb[0].mxu0
        %6985 = vdwg.mxu0
        %s6986 = scalar_lea.vmem [#allocation3], 24
        %v6987 = vld [vmem:[%s6986] sm:$0xf]
        %v6988 = vld [vmem:[%s6986 + $0x4] sm:$0xf]
        %v6989 = vld [vmem:[%s6986 + $0xc] sm:$0xf]
        %v6990 = vld [vmem:[%s6986 + $0x10] sm:$0xf]
        %v6991 = vld [vmem:[%s6986 + $0x18] sm:$0xf]
        %v6992 = vld [vmem:[%s6986 + $0x1c] sm:$0xf]
        %v6993 = vld [vmem:[%s6986 + $0x24] sm:$0xf]
        %v6994 = vld [vmem:[%s6986 + $0x28] sm:$0xf]
        %v6995 = vld [vmem:[%s6986 + $0x30] sm:$0xf]
        %v6996 = vld [vmem:[%s6986 + $0x34] sm:$0xf]
        %v6997 = vld [vmem:[%s6986 + $0x3c] sm:$0xf]
        %v6998 = vld [vmem:[%s6986 + $0x40] sm:$0xf]
        %v6999 = vld [vmem:[%s6986 + $0x48] sm:$0xf]
        %v7000 = vld [vmem:[%s6986 + $0x4c] sm:$0xf]
        %v7001 = vld [vmem:[%s6986 + $0x54] sm:$0xf]
        %v7002 = vld [vmem:[%s6986 + $0x58] sm:$0xf]
        %v7003 = vld [vmem:[%s6986 + $0x8] sm:$0x1]
        %v7004 = vld [vmem:[%s6986 + $0x14] sm:$0x1]
        %v7005 = vld [vmem:[%s6986 + $0x20] sm:$0x1]
        %v7006 = vld [vmem:[%s6986 + $0x2c] sm:$0x1]
        %v7007 = vld [vmem:[%s6986 + $0x38] sm:$0x1]
        %v7008 = vld [vmem:[%s6986 + $0x44] sm:$0x1]
        %v7009 = vld [vmem:[%s6986 + $0x50] sm:$0x1]
        %v7010 = vld [vmem:[%s6986 + $0x5c] sm:$0x1]
        %v7011 = vld [vmem:[%s6986] sm:$0xe]
        %v7012 = vld [vmem:[%s6986 + $0xc] sm:$0xe]
        %v7013 = vld [vmem:[%s6986 + $0x18] sm:$0xe]
        %v7014 = vld [vmem:[%s6986 + $0x24] sm:$0xe]
        %v7015 = vld [vmem:[%s6986 + $0x30] sm:$0xe]
        %v7016 = vld [vmem:[%s6986 + $0x3c] sm:$0xe]
        %v7017 = vld [vmem:[%s6986 + $0x48] sm:$0xe]
        %v7018 = vld [vmem:[%s6986 + $0x54] sm:$0xe]
        %v7035 = vunpack.c.l.b16 %v6987
        %v7036 = vunpack.c.l.b16 %v6988
        %v7037 = vunpack.c.l.b16 %v6989
        %v7038 = vunpack.c.l.b16 %v6990
        %v7039 = vunpack.c.l.b16 %v6991
        %v7040 = vunpack.c.l.b16 %v6992
        %v7041 = vunpack.c.l.b16 %v6993
        %v7042 = vunpack.c.l.b16 %v6994
        %v7043 = vunpack.c.l.b16 %v6995
        %v7044 = vunpack.c.l.b16 %v6996
        %v7045 = vunpack.c.l.b16 %v6997
        %v7046 = vunpack.c.l.b16 %v6998
        %v7047 = vunpack.c.l.b16 %v6999
        %v7048 = vunpack.c.l.b16 %v7000
        %v7049 = vunpack.c.l.b16 %v7001
        %v7050 = vunpack.c.l.b16 %v7002
        %v7051 = vpack.c.b16 %v7036, %v7035
        %v7052 = vpack.c.b16 %v7038, %v7037
        %v7053 = vpack.c.b16 %v7040, %v7039
        %v7054 = vpack.c.b16 %v7042, %v7041
        %v7055 = vpack.c.b16 %v7044, %v7043
        %v7056 = vpack.c.b16 %v7046, %v7045
        %v7057 = vpack.c.b16 %v7048, %v7047
        %v7058 = vpack.c.b16 %v7050, %v7049
        %v7075 = vunpack.c.l.b16 %v7003
        %v7076 = vunpack.c.l.b16 %v7004
        %v7077 = vunpack.c.l.b16 %v7005
        %v7078 = vunpack.c.l.b16 %v7006
        %v7079 = vunpack.c.l.b16 %v7007
        %v7080 = vunpack.c.l.b16 %v7008
        %v7081 = vunpack.c.l.b16 %v7009
        %v7082 = vunpack.c.l.b16 %v7010
        %v7083 = vpack.c.b16 %v7075, %v7075
        %v7084 = vpack.c.b16 %v7076, %v7076
        %v7085 = vpack.c.b16 %v7077, %v7077
        %v7086 = vpack.c.b16 %v7078, %v7078
        %v7087 = vpack.c.b16 %v7079, %v7079
        %v7088 = vpack.c.b16 %v7080, %v7080
        %v7089 = vpack.c.b16 %v7081, %v7081
        %v7090 = vpack.c.b16 %v7082, %v7082
        %v7092 = vshrl.u32 %v7051, 16
        %v7094 = vshll.u32 %v7051, 16
        %v7096 = vrot.slane %v7094, 1
        %v7097 = vor.u32 %v7092, %v7096
        %v7099 = vshll.u32 %v7083, 16
        %v7101 = vrot.slane %v7099, 1
        %v7102 = vsel %vm1212, %v7097, %v7101
        %v7104 = vshrl.u32 %v7052, 16
        %v7106 = vshll.u32 %v7052, 16
        %v7108 = vrot.slane %v7106, 1
        %v7109 = vor.u32 %v7104, %v7108
        %v7111 = vshll.u32 %v7084, 16
        %v7113 = vrot.slane %v7111, 1
        %v7114 = vsel %vm1212, %v7109, %v7113
        %v7116 = vshrl.u32 %v7053, 16
        %v7118 = vshll.u32 %v7053, 16
        %v7120 = vrot.slane %v7118, 1
        %v7121 = vor.u32 %v7116, %v7120
        %v7123 = vshll.u32 %v7085, 16
        %v7125 = vrot.slane %v7123, 1
        %v7126 = vsel %vm1212, %v7121, %v7125
        %v7128 = vshrl.u32 %v7054, 16
        %v7130 = vshll.u32 %v7054, 16
        %v7132 = vrot.slane %v7130, 1
        %v7133 = vor.u32 %v7128, %v7132
        %v7135 = vshll.u32 %v7086, 16
        %v7137 = vrot.slane %v7135, 1
        %v7138 = vsel %vm1212, %v7133, %v7137
        %v7140 = vshrl.u32 %v7055, 16
        %v7142 = vshll.u32 %v7055, 16
        %v7144 = vrot.slane %v7142, 1
        %v7145 = vor.u32 %v7140, %v7144
        %v7147 = vshll.u32 %v7087, 16
        %v7149 = vrot.slane %v7147, 1
        %v7150 = vsel %vm1212, %v7145, %v7149
        %v7152 = vshrl.u32 %v7056, 16
        %v7154 = vshll.u32 %v7056, 16
        %v7156 = vrot.slane %v7154, 1
        %v7157 = vor.u32 %v7152, %v7156
        %v7159 = vshll.u32 %v7088, 16
        %v7161 = vrot.slane %v7159, 1
        %v7162 = vsel %vm1212, %v7157, %v7161
        %v7164 = vshrl.u32 %v7057, 16
        %v7166 = vshll.u32 %v7057, 16
        %v7168 = vrot.slane %v7166, 1
        %v7169 = vor.u32 %v7164, %v7168
        %v7171 = vshll.u32 %v7089, 16
        %v7173 = vrot.slane %v7171, 1
        %v7174 = vsel %vm1212, %v7169, %v7173
        %v7176 = vshrl.u32 %v7058, 16
        %v7178 = vshll.u32 %v7058, 16
        %v7180 = vrot.slane %v7178, 1
        %v7181 = vor.u32 %v7176, %v7180
        %v7183 = vshll.u32 %v7090, 16
        %v7185 = vrot.slane %v7183, 1
        %v7186 = vsel %vm1212, %v7181, %v7185
        %v7203 = vunpack.c.l.b16 %v7011
        %v7204 = vunpack.c.l.b16 %v7012
        %v7205 = vunpack.c.l.b16 %v7013
        %v7206 = vunpack.c.l.b16 %v7014
        %v7207 = vunpack.c.l.b16 %v7015
        %v7208 = vunpack.c.l.b16 %v7016
        %v7209 = vunpack.c.l.b16 %v7017
        %v7210 = vunpack.c.l.b16 %v7018
        %v7211 = vpack.c.b16 %v7036, %v7203
        %v7212 = vpack.c.b16 %v7038, %v7204
        %v7213 = vpack.c.b16 %v7040, %v7205
        %v7214 = vpack.c.b16 %v7042, %v7206
        %v7215 = vpack.c.b16 %v7044, %v7207
        %v7216 = vpack.c.b16 %v7046, %v7208
        %v7217 = vpack.c.b16 %v7048, %v7209
        %v7218 = vpack.c.b16 %v7050, %v7210
        %v7219 = vrot.slane %v7211, 1
        %v7220 = vrot.slane %v7083, 1
        %v7221 = vsel %vm1341, %v7219, %v7220
        %v7222 = vrot.slane %v7212, 1
        %v7223 = vrot.slane %v7084, 1
        %v7224 = vsel %vm1341, %v7222, %v7223
        %v7225 = vrot.slane %v7213, 1
        %v7226 = vrot.slane %v7085, 1
        %v7227 = vsel %vm1341, %v7225, %v7226
        %v7228 = vrot.slane %v7214, 1
        %v7229 = vrot.slane %v7086, 1
        %v7230 = vsel %vm1341, %v7228, %v7229
        %v7231 = vrot.slane %v7215, 1
        %v7232 = vrot.slane %v7087, 1
        %v7233 = vsel %vm1341, %v7231, %v7232
        %v7234 = vrot.slane %v7216, 1
        %v7235 = vrot.slane %v7088, 1
        %v7236 = vsel %vm1341, %v7234, %v7235
        %v7237 = vrot.slane %v7217, 1
        %v7238 = vrot.slane %v7089, 1
        %v7239 = vsel %vm1341, %v7237, %v7238
        %v7240 = vrot.slane %v7218, 1
        %v7241 = vrot.slane %v7090, 1
        %v7242 = vsel %vm1341, %v7240, %v7241
        %s7251 = scalar_lea.vmem [#allocation9], 384
        %v7252 = vld [vmem:[%s7251] sm:$0xf]
        %v7253 = vld [vmem:[%s7251 + $0x4] sm:$0xf]
        %v7254 = vld [vmem:[%s7251 + $0x8] sm:$0xf]
        %v7255 = vld [vmem:[%s7251 + $0xc] sm:$0xf]
        %v7256 = vld [vmem:[%s7251 + $0x10] sm:$0xf]
        %v7257 = vld [vmem:[%s7251 + $0x14] sm:$0xf]
        %v7258 = vld [vmem:[%s7251 + $0x18] sm:$0xf]
        %v7259 = vld [vmem:[%s7251 + $0x1c] sm:$0xf]
        %v7260 = vld [vmem:[%s7251 + $0x20] sm:$0xf]
        %v7261 = vld [vmem:[%s7251 + $0x24] sm:$0xf]
        %v7262 = vld [vmem:[%s7251 + $0x28] sm:$0xf]
        %v7263 = vld [vmem:[%s7251 + $0x2c] sm:$0xf]
        %v7264 = vld [vmem:[%s7251 + $0x30] sm:$0xf]
        %v7265 = vld [vmem:[%s7251 + $0x34] sm:$0xf]
        %v7266 = vld [vmem:[%s7251 + $0x38] sm:$0xf]
        %v7267 = vld [vmem:[%s7251 + $0x3c] sm:$0xf]
        %v7268 = vld [vmem:[%s7251 + $0x40] sm:$0xf]
        %v7269 = vld [vmem:[%s7251 + $0x44] sm:$0xf]
        %v7270 = vld [vmem:[%s7251 + $0x48] sm:$0xf]
        %v7271 = vld [vmem:[%s7251 + $0x4c] sm:$0xf]
        %v7272 = vld [vmem:[%s7251 + $0x50] sm:$0xf]
        %v7273 = vld [vmem:[%s7251 + $0x54] sm:$0xf]
        %v7274 = vld [vmem:[%s7251 + $0x58] sm:$0xf]
        %v7275 = vld [vmem:[%s7251 + $0x5c] sm:$0xf]
        %v7276 = vld [vmem:[%s7251 + $0x60] sm:$0xf]
        %v7277 = vld [vmem:[%s7251 + $0x64] sm:$0xf]
        %v7278 = vld [vmem:[%s7251 + $0x68] sm:$0xf]
        %v7279 = vld [vmem:[%s7251 + $0x6c] sm:$0xf]
        %v7280 = vld [vmem:[%s7251 + $0x70] sm:$0xf]
        %v7281 = vld [vmem:[%s7251 + $0x74] sm:$0xf]
        %v7282 = vld [vmem:[%s7251 + $0x78] sm:$0xf]
        %v7283 = vld [vmem:[%s7251 + $0x7c] sm:$0xf]
        %v7284 = vld [vmem:[%s7251 + $0x80] sm:$0xf]
        %v7285 = vld [vmem:[%s7251 + $0x84] sm:$0xf]
        %v7286 = vld [vmem:[%s7251 + $0x88] sm:$0xf]
        %v7287 = vld [vmem:[%s7251 + $0x8c] sm:$0xf]
        %v7288 = vld [vmem:[%s7251 + $0x90] sm:$0xf]
        %v7289 = vld [vmem:[%s7251 + $0x94] sm:$0xf]
        %v7290 = vld [vmem:[%s7251 + $0x98] sm:$0xf]
        %v7291 = vld [vmem:[%s7251 + $0x9c] sm:$0xf]
        %v7292 = vld [vmem:[%s7251 + $0xa0] sm:$0xf]
        %v7293 = vld [vmem:[%s7251 + $0xa4] sm:$0xf]
        %v7294 = vld [vmem:[%s7251 + $0xa8] sm:$0xf]
        %v7295 = vld [vmem:[%s7251 + $0xac] sm:$0xf]
        %v7296 = vld [vmem:[%s7251 + $0xb0] sm:$0xf]
        %v7297 = vld [vmem:[%s7251 + $0xb4] sm:$0xf]
        %v7298 = vld [vmem:[%s7251 + $0xb8] sm:$0xf]
        %v7299 = vld [vmem:[%s7251 + $0xbc] sm:$0xf]
        %v7348 = vunpack.c.l.b16 %v7252
        %v7349 = vunpack.c.l.b16 %v7253
        %v7350 = vunpack.c.l.b16 %v7254
        %v7351 = vunpack.c.l.b16 %v7255
        %v7352 = vunpack.c.l.b16 %v7256
        %v7353 = vunpack.c.l.b16 %v7257
        %v7354 = vunpack.c.l.b16 %v7258
        %v7355 = vunpack.c.l.b16 %v7259
        %v7356 = vunpack.c.l.b16 %v7260
        %v7357 = vunpack.c.l.b16 %v7261
        %v7358 = vunpack.c.l.b16 %v7262
        %v7359 = vunpack.c.l.b16 %v7263
        %v7360 = vunpack.c.l.b16 %v7264
        %v7361 = vunpack.c.l.b16 %v7265
        %v7362 = vunpack.c.l.b16 %v7266
        %v7363 = vunpack.c.l.b16 %v7267
        %v7364 = vunpack.c.l.b16 %v7268
        %v7365 = vunpack.c.l.b16 %v7269
        %v7366 = vunpack.c.l.b16 %v7270
        %v7367 = vunpack.c.l.b16 %v7271
        %v7368 = vunpack.c.l.b16 %v7272
        %v7369 = vunpack.c.l.b16 %v7273
        %v7370 = vunpack.c.l.b16 %v7274
        %v7371 = vunpack.c.l.b16 %v7275
        %v7372 = vunpack.c.l.b16 %v7276
        %v7373 = vunpack.c.l.b16 %v7277
        %v7374 = vunpack.c.l.b16 %v7278
        %v7375 = vunpack.c.l.b16 %v7279
        %v7376 = vunpack.c.l.b16 %v7280
        %v7377 = vunpack.c.l.b16 %v7281
        %v7378 = vunpack.c.l.b16 %v7282
        %v7379 = vunpack.c.l.b16 %v7283
        %v7380 = vunpack.c.l.b16 %v7284
        %v7381 = vunpack.c.l.b16 %v7285
        %v7382 = vunpack.c.l.b16 %v7286
        %v7383 = vunpack.c.l.b16 %v7287
        %v7384 = vunpack.c.l.b16 %v7288
        %v7385 = vunpack.c.l.b16 %v7289
        %v7386 = vunpack.c.l.b16 %v7290
        %v7387 = vunpack.c.l.b16 %v7291
        %v7388 = vunpack.c.l.b16 %v7292
        %v7389 = vunpack.c.l.b16 %v7293
        %v7390 = vunpack.c.l.b16 %v7294
        %v7391 = vunpack.c.l.b16 %v7295
        %v7392 = vunpack.c.l.b16 %v7296
        %v7393 = vunpack.c.l.b16 %v7297
        %v7394 = vunpack.c.l.b16 %v7298
        %v7395 = vunpack.c.l.b16 %v7299
        %v7396 = vpack.c.b16 %v7349, %v7348
        %v7397 = vpack.c.b16 %v7351, %v7350
        %v7398 = vpack.c.b16 %v7353, %v7352
        %v7399 = vpack.c.b16 %v7355, %v7354
        %v7400 = vpack.c.b16 %v7357, %v7356
        %v7401 = vpack.c.b16 %v7359, %v7358
        %v7402 = vpack.c.b16 %v7361, %v7360
        %v7403 = vpack.c.b16 %v7363, %v7362
        %v7404 = vpack.c.b16 %v7365, %v7364
        %v7405 = vpack.c.b16 %v7367, %v7366
        %v7406 = vpack.c.b16 %v7369, %v7368
        %v7407 = vpack.c.b16 %v7371, %v7370
        %v7408 = vpack.c.b16 %v7373, %v7372
        %v7409 = vpack.c.b16 %v7375, %v7374
        %v7410 = vpack.c.b16 %v7377, %v7376
        %v7411 = vpack.c.b16 %v7379, %v7378
        %v7412 = vpack.c.b16 %v7381, %v7380
        %v7413 = vpack.c.b16 %v7383, %v7382
        %v7414 = vpack.c.b16 %v7385, %v7384
        %v7415 = vpack.c.b16 %v7387, %v7386
        %v7416 = vpack.c.b16 %v7389, %v7388
        %v7417 = vpack.c.b16 %v7391, %v7390
        %v7418 = vpack.c.b16 %v7393, %v7392
        %v7419 = vpack.c.b16 %v7395, %v7394
        %7444 = vmatprep.subr.bf16.mxu0 0
        %7445 = vmatpush1.bf16.msra.mxu0 %v7396
        %7446 = vmatprep.subr.bf16.mxu0 0
        %7447 = vmatpush1.bf16.msra.mxu0 %v7397
        %7448 = vmatprep.subr.bf16.mxu0 0
        %7449 = vmatpush1.bf16.msra.mxu0 %v7398
        %7450 = vmatprep.subr.bf16.mxu0 0
        %7451 = vmatpush1.bf16.msra.mxu0 %v7399
        %7452 = vmatprep.subr.bf16.mxu0 0
        %7453 = vmatpush1.bf16.msra.mxu0 %v7400
        %7454 = vmatprep.subr.bf16.mxu0 0
        %7455 = vmatpush1.bf16.msra.mxu0 %v7401
        %7456 = vmatprep.subr.bf16.mxu0 0
        %7457 = vmatpush1.bf16.msra.mxu0 %v7402
        %7458 = vmatprep.subr.bf16.mxu0 0
        %7459 = vmatpush1.bf16.msra.mxu0 %v7403
        %7460 = vmatprep.subr.bf16.mxu0 0
        %7461 = vmatpush1.bf16.msra.mxu0 %v7404
        %7462 = vmatprep.subr.bf16.mxu0 0
        %7463 = vmatpush1.bf16.msra.mxu0 %v7405
        %7464 = vmatprep.subr.bf16.mxu0 0
        %7465 = vmatpush1.bf16.msra.mxu0 %v7406
        %7466 = vmatprep.subr.bf16.mxu0 0
        %7467 = vmatpush1.bf16.msra.mxu0 %v7407
        %7468 = vmatprep.subr.bf16.mxu0 0
        %7469 = vmatpush1.bf16.msra.mxu0 %v7408
        %7470 = vmatprep.subr.bf16.mxu0 0
        %7471 = vmatpush1.bf16.msra.mxu0 %v7409
        %7472 = vmatprep.subr.bf16.mxu0 0
        %7473 = vmatpush1.bf16.msra.mxu0 %v7410
        %7474 = vmatprep.subr.bf16.mxu0 0
        %7475 = vmatpush1.bf16.msra.mxu0 %v7411
        %7476 = vmatprep.mubr.bf16.mxu0 %v7102
        %7477 = vmatmul.mubr.bf16.gmra.mrb[0].mxu0 %v7051
        %v7478 = vpop.f32.mrb[0].mxu0
        %v7479 = vadd.f32 0.0, %v7478
        %v7480 = vpop.f32.mrb[0].mxu0
        %v7481 = vpop.f32.mrb[0].mxu0
        %v7482 = vadd.f32 0.0, %v7481
        %v7483 = vpop.f32.mrb[0].mxu0
        %7484 = vmatprep.mubr.bf16.mxu0 %v7114
        %7485 = vmatmul.mubr.bf16.gmra.mrb[0].mxu0 %v7052
        %v7486 = vpop.f32.mrb[0].mxu0
        %v7487 = vadd.f32 0.0, %v7486
        %v7488 = vpop.f32.mrb[0].mxu0
        %v7489 = vpop.f32.mrb[0].mxu0
        %v7490 = vadd.f32 0.0, %v7489
        %v7491 = vpop.f32.mrb[0].mxu0
        %7492 = vmatprep.mubr.bf16.mxu0 %v7126
        %7493 = vmatmul.mubr.bf16.gmra.mrb[0].mxu0 %v7053
        %v7494 = vpop.f32.mrb[0].mxu0
        %v7495 = vadd.f32 0.0, %v7494
        %v7496 = vpop.f32.mrb[0].mxu0
        %v7497 = vpop.f32.mrb[0].mxu0
        %v7498 = vadd.f32 0.0, %v7497
        %v7499 = vpop.f32.mrb[0].mxu0
        %7500 = vmatprep.mubr.bf16.mxu0 %v7138
        %7501 = vmatmul.mubr.bf16.gmra.mrb[0].mxu0 %v7054
        %v7502 = vpop.f32.mrb[0].mxu0
        %v7503 = vadd.f32 0.0, %v7502
        %v7504 = vpop.f32.mrb[0].mxu0
        %v7505 = vpop.f32.mrb[0].mxu0
        %v7506 = vadd.f32 0.0, %v7505
        %v7507 = vpop.f32.mrb[0].mxu0
        %7508 = vmatprep.mubr.bf16.mxu0 %v7150
        %7509 = vmatmul.mubr.bf16.gmra.mrb[0].mxu0 %v7055
        %v7510 = vpop.f32.mrb[0].mxu0
        %v7511 = vadd.f32 0.0, %v7510
        %v7512 = vpop.f32.mrb[0].mxu0
        %v7513 = vpop.f32.mrb[0].mxu0
        %v7514 = vadd.f32 0.0, %v7513
        %v7515 = vpop.f32.mrb[0].mxu0
        %7516 = vmatprep.mubr.bf16.mxu0 %v7162
        %7517 = vmatmul.mubr.bf16.gmra.mrb[0].mxu0 %v7056
        %v7518 = vpop.f32.mrb[0].mxu0
        %v7519 = vadd.f32 0.0, %v7518
        %v7520 = vpop.f32.mrb[0].mxu0
        %v7521 = vpop.f32.mrb[0].mxu0
        %v7522 = vadd.f32 0.0, %v7521
        %v7523 = vpop.f32.mrb[0].mxu0
        %7524 = vmatprep.mubr.bf16.mxu0 %v7174
        %7525 = vmatmul.mubr.bf16.gmra.mrb[0].mxu0 %v7057
        %v7526 = vpop.f32.mrb[0].mxu0
        %v7527 = vadd.f32 0.0, %v7526
        %v7528 = vpop.f32.mrb[0].mxu0
        %v7529 = vpop.f32.mrb[0].mxu0
        %v7530 = vadd.f32 0.0, %v7529
        %v7531 = vpop.f32.mrb[0].mxu0
        %7532 = vmatprep.mubr.bf16.mxu0 %v7186
        %7533 = vmatmul.mubr.bf16.gmra.mrb[0].mxu0 %v7058
        %v7534 = vpop.f32.mrb[0].mxu0
        %v7535 = vadd.f32 0.0, %v7534
        %v7536 = vpop.f32.mrb[0].mxu0
        %v7537 = vpop.f32.mrb[0].mxu0
        %v7538 = vadd.f32 0.0, %v7537
        %v7539 = vpop.f32.mrb[0].mxu0
        %7540 = vdwg.mxu0
        %7541 = vmatprep.subr.bf16.mxu0 0
        %7542 = vmatpush1.bf16.msra.mxu0 %v7412
        %7543 = vmatprep.subr.bf16.mxu0 0
        %7544 = vmatpush1.bf16.msra.mxu0 %v7413
        %7545 = vmatprep.subr.bf16.mxu0 0
        %7546 = vmatpush1.bf16.msra.mxu0 %v7414
        %7547 = vmatprep.subr.bf16.mxu0 0
        %7548 = vmatpush1.bf16.msra.mxu0 %v7415
        %7549 = vmatprep.subr.bf16.mxu0 0
        %7550 = vmatpush1.bf16.msra.mxu0 %v7416
        %7551 = vmatprep.subr.bf16.mxu0 0
        %7552 = vmatpush1.bf16.msra.mxu0 %v7417
        %7553 = vmatprep.subr.bf16.mxu0 0
        %7554 = vmatpush1.bf16.msra.mxu0 %v7418
        %7555 = vmatprep.subr.bf16.mxu0 0
        %7556 = vmatpush1.bf16.msra.mxu0 %v7419
        %7557 = vmatprep.subr.bf16.mxu0 0
        %7558 = vmatpush1.bf16.msra.mxu0 0
        %7559 = vmatprep.subr.bf16.mxu0 0
        %7560 = vmatpush1.bf16.msra.mxu0 0
        %7561 = vmatprep.subr.bf16.mxu0 0
        %7562 = vmatpush1.bf16.msra.mxu0 0
        %7563 = vmatprep.subr.bf16.mxu0 0
        %7564 = vmatpush1.bf16.msra.mxu0 0
        %7565 = vmatprep.subr.bf16.mxu0 0
        %7566 = vmatpush1.bf16.msra.mxu0 0
        %7567 = vmatprep.subr.bf16.mxu0 0
        %7568 = vmatpush1.bf16.msra.mxu0 0
        %7569 = vmatprep.subr.bf16.mxu0 0
        %7570 = vmatpush1.bf16.msra.mxu0 0
        %7571 = vmatprep.subr.bf16.mxu0 0
        %7572 = vmatpush1.bf16.msra.mxu0 0
        %7573 = vmatprep.mubr.bf16.mxu0 0
        %7574 = vmatmul.mubr.bf16.gmra.mrb[0].mxu0 %v7221
        %v7575 = vpop.f32.mrb[0].mxu0
        %v7576 = vadd.f32 %v7479, %v7575
        %v7577 = vpop.f32.mrb[0].mxu0
        %v7578 = vpop.f32.mrb[0].mxu0
        %v7579 = vadd.f32 %v7482, %v7578
        %v7580 = vpop.f32.mrb[0].mxu0
        %7581 = vmatprep.mubr.bf16.mxu0 0
        %7582 = vmatmul.mubr.bf16.gmra.mrb[0].mxu0 %v7224
        %v7583 = vpop.f32.mrb[0].mxu0
        %v7584 = vadd.f32 %v7487, %v7583
        %v7585 = vpop.f32.mrb[0].mxu0
        %v7586 = vpop.f32.mrb[0].mxu0
        %v7587 = vadd.f32 %v7490, %v7586
        %v7588 = vpop.f32.mrb[0].mxu0
        %7589 = vmatprep.mubr.bf16.mxu0 0
        %7590 = vmatmul.mubr.bf16.gmra.mrb[0].mxu0 %v7227
        %v7591 = vpop.f32.mrb[0].mxu0
        %v7592 = vadd.f32 %v7495, %v7591
        %v7593 = vpop.f32.mrb[0].mxu0
        %v7594 = vpop.f32.mrb[0].mxu0
        %v7595 = vadd.f32 %v7498, %v7594
        %v7596 = vpop.f32.mrb[0].mxu0
        %7597 = vmatprep.mubr.bf16.mxu0 0
        %7598 = vmatmul.mubr.bf16.gmra.mrb[0].mxu0 %v7230
        %v7599 = vpop.f32.mrb[0].mxu0
        %v7600 = vadd.f32 %v7503, %v7599
        %v7601 = vpop.f32.mrb[0].mxu0
        %v7602 = vpop.f32.mrb[0].mxu0
        %v7603 = vadd.f32 %v7506, %v7602
        %v7604 = vpop.f32.mrb[0].mxu0
        %7605 = vmatprep.mubr.bf16.mxu0 0
        %7606 = vmatmul.mubr.bf16.gmra.mrb[0].mxu0 %v7233
        %v7607 = vpop.f32.mrb[0].mxu0
        %v7608 = vadd.f32 %v7511, %v7607
        %v7609 = vpop.f32.mrb[0].mxu0
        %v7610 = vpop.f32.mrb[0].mxu0
        %v7611 = vadd.f32 %v7514, %v7610
        %v7612 = vpop.f32.mrb[0].mxu0
        %7613 = vmatprep.mubr.bf16.mxu0 0
        %7614 = vmatmul.mubr.bf16.gmra.mrb[0].mxu0 %v7236
        %v7615 = vpop.f32.mrb[0].mxu0
        %v7616 = vadd.f32 %v7519, %v7615
        %v7617 = vpop.f32.mrb[0].mxu0
        %v7618 = vpop.f32.mrb[0].mxu0
        %v7619 = vadd.f32 %v7522, %v7618
        %v7620 = vpop.f32.mrb[0].mxu0
        %7621 = vmatprep.mubr.bf16.mxu0 0
        %7622 = vmatmul.mubr.bf16.gmra.mrb[0].mxu0 %v7239
        %v7623 = vpop.f32.mrb[0].mxu0
        %v7624 = vadd.f32 %v7527, %v7623
        %v7625 = vpop.f32.mrb[0].mxu0
        %v7626 = vpop.f32.mrb[0].mxu0
        %v7627 = vadd.f32 %v7530, %v7626
        %v7628 = vpop.f32.mrb[0].mxu0
        %7629 = vmatprep.mubr.bf16.mxu0 0
        %7630 = vmatmul.mubr.bf16.gmra.mrb[0].mxu0 %v7242
        %v7631 = vpop.f32.mrb[0].mxu0
        %v7632 = vadd.f32 %v7535, %v7631
        %v7633 = vpop.f32.mrb[0].mxu0
        %v7634 = vpop.f32.mrb[0].mxu0
        %v7635 = vadd.f32 %v7538, %v7634
        %v7636 = vpop.f32.mrb[0].mxu0
        %7637 = vdwg.mxu0
        %v7638 = vadd.f32 %v6924, %v7576
        %v7639 = vadd.f32 %v6927, %v7579
        %v7640 = vadd.f32 %v6932, %v7584
        %v7641 = vadd.f32 %v6935, %v7587
        %v7642 = vadd.f32 %v6940, %v7592
        %v7643 = vadd.f32 %v6943, %v7595
        %v7644 = vadd.f32 %v6948, %v7600
        %v7645 = vadd.f32 %v6951, %v7603
        %v7646 = vadd.f32 %v6956, %v7608
        %v7647 = vadd.f32 %v6959, %v7611
        %v7648 = vadd.f32 %v6964, %v7616
        %v7649 = vadd.f32 %v6967, %v7619
        %v7650 = vadd.f32 %v6972, %v7624
        %v7651 = vadd.f32 %v6975, %v7627
        %v7652 = vadd.f32 %v6980, %v7632
        %v7653 = vadd.f32 %v6983, %v7635
        %v7654 = vld [vmem:[%s287] sm:$0xff]
        %v7655 = vld [vmem:[%s287 + $0x8] sm:$0xff]
        %v7656 = vld [vmem:[%s287 + $0x10] sm:$0xff]
        %v7657 = vld [vmem:[%s287 + $0x18] sm:$0xff]
        %v7658 = vld [vmem:[%s287 + $0x20] sm:$0xff]
        %v7659 = vld [vmem:[%s287 + $0x28] sm:$0xff]
        %v7660 = vld [vmem:[%s287 + $0x30] sm:$0xff]
        %v7661 = vld [vmem:[%s287 + $0x38] sm:$0xff]
        %v7662 = vld [vmem:[%s287 + $0x40] sm:$0xff]
        %v7663 = vld [vmem:[%s287 + $0x48] sm:$0xff]
        %v7664 = vld [vmem:[%s287 + $0x50] sm:$0xff]
        %v7665 = vld [vmem:[%s287 + $0x58] sm:$0xff]
        %v7666 = vld [vmem:[%s287 + $0x60] sm:$0xff]
        %v7667 = vld [vmem:[%s287 + $0x68] sm:$0xff]
        %v7668 = vld [vmem:[%s287 + $0x70] sm:$0xff]
        %v7669 = vld [vmem:[%s287 + $0x78] sm:$0xff]
        %v7671 = vlaneseq
        %v7672 = vshrl.u32 %v7671, 7
        %v7673 = vsub.s32 0, %v7672
        %v7674 = vrot.slane %v329, %v7673
        %v7676 = vmul.f32 %v7638, %v7674
        %v7677 = vmul.f32 %v7639, %v7674
        %v7678 = vmul.f32 %v7640, %v7674
        %v7679 = vmul.f32 %v7641, %v7674
        %v7680 = vmul.f32 %v7642, %v7674
        %v7681 = vmul.f32 %v7643, %v7674
        %v7682 = vmul.f32 %v7644, %v7674
        %v7683 = vmul.f32 %v7645, %v7674
        %v7684 = vmul.f32 %v7646, %v7674
        %v7685 = vmul.f32 %v7647, %v7674
        %v7686 = vmul.f32 %v7648, %v7674
        %v7687 = vmul.f32 %v7649, %v7674
        %v7688 = vmul.f32 %v7650, %v7674
        %v7689 = vmul.f32 %v7651, %v7674
        %v7690 = vmul.f32 %v7652, %v7674
        %v7691 = vmul.f32 %v7653, %v7674
        %v7693 = vlaneseq
        %v7694 = vshrl.u32 %v7693, 7
        %v7695 = vsub.s32 0, %v7694
        %v7696 = vrot.slane %v330, %v7695
        %v7698 = vadd.f32 %v7676, %v7696
        %v7699 = vadd.f32 %v7677, %v7696
        %v7700 = vadd.f32 %v7678, %v7696
        %v7701 = vadd.f32 %v7679, %v7696
        %v7702 = vadd.f32 %v7680, %v7696
        %v7703 = vadd.f32 %v7681, %v7696
        %v7704 = vadd.f32 %v7682, %v7696
        %v7705 = vadd.f32 %v7683, %v7696
        %v7706 = vadd.f32 %v7684, %v7696
        %v7707 = vadd.f32 %v7685, %v7696
        %v7708 = vadd.f32 %v7686, %v7696
        %v7709 = vadd.f32 %v7687, %v7696
        %v7710 = vadd.f32 %v7688, %v7696
        %v7711 = vadd.f32 %v7689, %v7696
        %v7712 = vadd.f32 %v7690, %v7696
        %v7713 = vadd.f32 %v7691, %v7696
        %v7714 = vadd.f32 %v7698, %v7654
        %v7715 = vadd.f32 %v7699, %v7655
        %v7716 = vadd.f32 %v7700, %v7656
        %v7717 = vadd.f32 %v7701, %v7657
        %v7718 = vadd.f32 %v7702, %v7658
        %v7719 = vadd.f32 %v7703, %v7659
        %v7720 = vadd.f32 %v7704, %v7660
        %v7721 = vadd.f32 %v7705, %v7661
        %v7722 = vadd.f32 %v7706, %v7662
        %v7723 = vadd.f32 %v7707, %v7663
        %v7724 = vadd.f32 %v7708, %v7664
        %v7725 = vadd.f32 %v7709, %v7665
        %v7726 = vadd.f32 %v7710, %v7666
        %v7727 = vadd.f32 %v7711, %v7667
        %v7728 = vadd.f32 %v7712, %v7668
        %v7729 = vadd.f32 %v7713, %v7669
        %v7730 = vmax.f32 %v7714, 0.0
        %v7731 = vmax.f32 %v7715, 0.0
        %v7732 = vmax.f32 %v7716, 0.0
        %v7733 = vmax.f32 %v7717, 0.0
        %v7734 = vmax.f32 %v7718, 0.0
        %v7735 = vmax.f32 %v7719, 0.0
        %v7736 = vmax.f32 %v7720, 0.0
        %v7737 = vmax.f32 %v7721, 0.0
        %v7738 = vmax.f32 %v7722, 0.0
        %v7739 = vmax.f32 %v7723, 0.0
        %v7740 = vmax.f32 %v7724, 0.0
        %v7741 = vmax.f32 %v7725, 0.0
        %v7742 = vmax.f32 %v7726, 0.0
        %v7743 = vmax.f32 %v7727, 0.0
        %v7744 = vmax.f32 %v7728, 0.0
        %v7745 = vmax.f32 %v7729, 0.0
        %7746 = vst [vmem:[%s325] sm:$0xff] %v7730
        %7747 = vst [vmem:[%s325 + $0x8] sm:$0xff] %v7731
        %7748 = vst [vmem:[%s325 + $0x10] sm:$0xff] %v7732
        %7749 = vst [vmem:[%s325 + $0x18] sm:$0xff] %v7733
        %7750 = vst [vmem:[%s325 + $0x20] sm:$0xff] %v7734
        %7751 = vst [vmem:[%s325 + $0x28] sm:$0xff] %v7735
        %7752 = vst [vmem:[%s325 + $0x30] sm:$0xff] %v7736
        %7753 = vst [vmem:[%s325 + $0x38] sm:$0xff] %v7737
        %7754 = vst [vmem:[%s325 + $0x40] sm:$0xff] %v7738
        %7755 = vst [vmem:[%s325 + $0x48] sm:$0xff] %v7739
        %7756 = vst [vmem:[%s325 + $0x50] sm:$0xff] %v7740
        %7757 = vst [vmem:[%s325 + $0x58] sm:$0xff] %v7741
        %7758 = vst [vmem:[%s325 + $0x60] sm:$0xff] %v7742
        %7759 = vst [vmem:[%s325 + $0x68] sm:$0xff] %v7743
        %7760 = vst [vmem:[%s325 + $0x70] sm:$0xff] %v7744
        %7761 = vst [vmem:[%s325 + $0x78] sm:$0xff] %v7745
        %s7762 = scalar_lea.vmem [#allocation3], 96
        %v7763 = vld [vmem:[%s7762] sm:$0xf]
        %v7764 = vld [vmem:[%s7762 + $0x4] sm:$0xf]
        %v7765 = vld [vmem:[%s7762 + $0xc] sm:$0xf]
        %v7766 = vld [vmem:[%s7762 + $0x10] sm:$0xf]
        %v7767 = vld [vmem:[%s7762 + $0x18] sm:$0xf]
        %v7768 = vld [vmem:[%s7762 + $0x1c] sm:$0xf]
        %v7769 = vld [vmem:[%s7762 + $0x24] sm:$0xf]
        %v7770 = vld [vmem:[%s7762 + $0x28] sm:$0xf]
        %v7771 = vld [vmem:[%s7762 + $0x30] sm:$0xf]
        %v7772 = vld [vmem:[%s7762 + $0x34] sm:$0xf]
        %v7773 = vld [vmem:[%s7762 + $0x3c] sm:$0xf]
        %v7774 = vld [vmem:[%s7762 + $0x40] sm:$0xf]
        %v7775 = vld [vmem:[%s7762 + $0x48] sm:$0xf]
        %v7776 = vld [vmem:[%s7762 + $0x4c] sm:$0xf]
        %v7777 = vld [vmem:[%s7762 + $0x54] sm:$0xf]
        %v7778 = vld [vmem:[%s7762 + $0x58] sm:$0xf]
        %v7779 = vld [vmem:[%s7762 + $0x8] sm:$0x1]
        %v7780 = vld [vmem:[%s7762 + $0x14] sm:$0x1]
        %v7781 = vld [vmem:[%s7762 + $0x20] sm:$0x1]
        %v7782 = vld [vmem:[%s7762 + $0x2c] sm:$0x1]
        %v7783 = vld [vmem:[%s7762 + $0x38] sm:$0x1]
        %v7784 = vld [vmem:[%s7762 + $0x44] sm:$0x1]
        %v7785 = vld [vmem:[%s7762 + $0x50] sm:$0x1]
        %v7786 = vld [vmem:[%s7762 + $0x5c] sm:$0x1]
        %v7787 = vld [vmem:[%s7762] sm:$0xe]
        %v7788 = vld [vmem:[%s7762 + $0xc] sm:$0xe]
        %v7789 = vld [vmem:[%s7762 + $0x18] sm:$0xe]
        %v7790 = vld [vmem:[%s7762 + $0x24] sm:$0xe]
        %v7791 = vld [vmem:[%s7762 + $0x30] sm:$0xe]
        %v7792 = vld [vmem:[%s7762 + $0x3c] sm:$0xe]
        %v7793 = vld [vmem:[%s7762 + $0x48] sm:$0xe]
        %v7794 = vld [vmem:[%s7762 + $0x54] sm:$0xe]
        %v7811 = vunpack.c.l.b16 %v7763
        %v7812 = vunpack.c.l.b16 %v7764
        %v7813 = vunpack.c.l.b16 %v7765
        %v7814 = vunpack.c.l.b16 %v7766
        %v7815 = vunpack.c.l.b16 %v7767
        %v7816 = vunpack.c.l.b16 %v7768
        %v7817 = vunpack.c.l.b16 %v7769
        %v7818 = vunpack.c.l.b16 %v7770
        %v7819 = vunpack.c.l.b16 %v7771
        %v7820 = vunpack.c.l.b16 %v7772
        %v7821 = vunpack.c.l.b16 %v7773
        %v7822 = vunpack.c.l.b16 %v7774
        %v7823 = vunpack.c.l.b16 %v7775
        %v7824 = vunpack.c.l.b16 %v7776
        %v7825 = vunpack.c.l.b16 %v7777
        %v7826 = vunpack.c.l.b16 %v7778
        %v7827 = vpack.c.b16 %v7812, %v7811
        %v7828 = vpack.c.b16 %v7814, %v7813
        %v7829 = vpack.c.b16 %v7816, %v7815
        %v7830 = vpack.c.b16 %v7818, %v7817
        %v7831 = vpack.c.b16 %v7820, %v7819
        %v7832 = vpack.c.b16 %v7822, %v7821
        %v7833 = vpack.c.b16 %v7824, %v7823
        %v7834 = vpack.c.b16 %v7826, %v7825
        %v7851 = vunpack.c.l.b16 %v7779
        %v7852 = vunpack.c.l.b16 %v7780
        %v7853 = vunpack.c.l.b16 %v7781
        %v7854 = vunpack.c.l.b16 %v7782
        %v7855 = vunpack.c.l.b16 %v7783
        %v7856 = vunpack.c.l.b16 %v7784
        %v7857 = vunpack.c.l.b16 %v7785
        %v7858 = vunpack.c.l.b16 %v7786
        %v7859 = vpack.c.b16 %v7851, %v7851
        %v7860 = vpack.c.b16 %v7852, %v7852
        %v7861 = vpack.c.b16 %v7853, %v7853
        %v7862 = vpack.c.b16 %v7854, %v7854
        %v7863 = vpack.c.b16 %v7855, %v7855
        %v7864 = vpack.c.b16 %v7856, %v7856
        %v7865 = vpack.c.b16 %v7857, %v7857
        %v7866 = vpack.c.b16 %v7858, %v7858
        %v7868 = vshrl.u32 %v7827, 16
        %v7870 = vshll.u32 %v7827, 16
        %v7872 = vrot.slane %v7870, 1
        %v7873 = vor.u32 %v7868, %v7872
        %v7875 = vshll.u32 %v7859, 16
        %v7877 = vrot.slane %v7875, 1
        %v7878 = vsel %vm1212, %v7873, %v7877
        %v7880 = vshrl.u32 %v7828, 16
        %v7882 = vshll.u32 %v7828, 16
        %v7884 = vrot.slane %v7882, 1
        %v7885 = vor.u32 %v7880, %v7884
        %v7887 = vshll.u32 %v7860, 16
        %v7889 = vrot.slane %v7887, 1
        %v7890 = vsel %vm1212, %v7885, %v7889
        %v7892 = vshrl.u32 %v7829, 16
        %v7894 = vshll.u32 %v7829, 16
        %v7896 = vrot.slane %v7894, 1
        %v7897 = vor.u32 %v7892, %v7896
        %v7899 = vshll.u32 %v7861, 16
        %v7901 = vrot.slane %v7899, 1
        %v7902 = vsel %vm1212, %v7897, %v7901
        %v7904 = vshrl.u32 %v7830, 16
        %v7906 = vshll.u32 %v7830, 16
        %v7908 = vrot.slane %v7906, 1
        %v7909 = vor.u32 %v7904, %v7908
        %v7911 = vshll.u32 %v7862, 16
        %v7913 = vrot.slane %v7911, 1
        %v7914 = vsel %vm1212, %v7909, %v7913
        %v7916 = vshrl.u32 %v7831, 16
        %v7918 = vshll.u32 %v7831, 16
        %v7920 = vrot.slane %v7918, 1
        %v7921 = vor.u32 %v7916, %v7920
        %v7923 = vshll.u32 %v7863, 16
        %v7925 = vrot.slane %v7923, 1
        %v7926 = vsel %vm1212, %v7921, %v7925
        %v7928 = vshrl.u32 %v7832, 16
        %v7930 = vshll.u32 %v7832, 16
        %v7932 = vrot.slane %v7930, 1
        %v7933 = vor.u32 %v7928, %v7932
        %v7935 = vshll.u32 %v7864, 16
        %v7937 = vrot.slane %v7935, 1
        %v7938 = vsel %vm1212, %v7933, %v7937
        %v7940 = vshrl.u32 %v7833, 16
        %v7942 = vshll.u32 %v7833, 16
        %v7944 = vrot.slane %v7942, 1
        %v7945 = vor.u32 %v7940, %v7944
        %v7947 = vshll.u32 %v7865, 16
        %v7949 = vrot.slane %v7947, 1
        %v7950 = vsel %vm1212, %v7945, %v7949
        %v7952 = vshrl.u32 %v7834, 16
        %v7954 = vshll.u32 %v7834, 16
        %v7956 = vrot.slane %v7954, 1
        %v7957 = vor.u32 %v7952, %v7956
        %v7959 = vshll.u32 %v7866, 16
        %v7961 = vrot.slane %v7959, 1
        %v7962 = vsel %vm1212, %v7957, %v7961
        %v7979 = vunpack.c.l.b16 %v7787
        %v7980 = vunpack.c.l.b16 %v7788
        %v7981 = vunpack.c.l.b16 %v7789
        %v7982 = vunpack.c.l.b16 %v7790
        %v7983 = vunpack.c.l.b16 %v7791
        %v7984 = vunpack.c.l.b16 %v7792
        %v7985 = vunpack.c.l.b16 %v7793
        %v7986 = vunpack.c.l.b16 %v7794
        %v7987 = vpack.c.b16 %v7812, %v7979
        %v7988 = vpack.c.b16 %v7814, %v7980
        %v7989 = vpack.c.b16 %v7816, %v7981
        %v7990 = vpack.c.b16 %v7818, %v7982
        %v7991 = vpack.c.b16 %v7820, %v7983
        %v7992 = vpack.c.b16 %v7822, %v7984
        %v7993 = vpack.c.b16 %v7824, %v7985
        %v7994 = vpack.c.b16 %v7826, %v7986
        %v7995 = vrot.slane %v7987, 1
        %v7996 = vrot.slane %v7859, 1
        %v7997 = vsel %vm1341, %v7995, %v7996
        %v7998 = vrot.slane %v7988, 1
        %v7999 = vrot.slane %v7860, 1
        %v8000 = vsel %vm1341, %v7998, %v7999
        %v8001 = vrot.slane %v7989, 1
        %v8002 = vrot.slane %v7861, 1
        %v8003 = vsel %vm1341, %v8001, %v8002
        %v8004 = vrot.slane %v7990, 1
        %v8005 = vrot.slane %v7862, 1
        %v8006 = vsel %vm1341, %v8004, %v8005
        %v8007 = vrot.slane %v7991, 1
        %v8008 = vrot.slane %v7863, 1
        %v8009 = vsel %vm1341, %v8007, %v8008
        %v8010 = vrot.slane %v7992, 1
        %v8011 = vrot.slane %v7864, 1
        %v8012 = vsel %vm1341, %v8010, %v8011
        %v8013 = vrot.slane %v7993, 1
        %v8014 = vrot.slane %v7865, 1
        %v8015 = vsel %vm1341, %v8013, %v8014
        %v8016 = vrot.slane %v7994, 1
        %v8017 = vrot.slane %v7866, 1
        %v8018 = vsel %vm1341, %v8016, %v8017
        %v8027 = vld [vmem:[#allocation9] sm:$0xf]
        %v8028 = vld [vmem:[#allocation9 + $0x4] sm:$0xf]
        %v8029 = vld [vmem:[#allocation9 + $0x8] sm:$0xf]
        %v8030 = vld [vmem:[#allocation9 + $0xc] sm:$0xf]
        %v8031 = vld [vmem:[#allocation9 + $0x10] sm:$0xf]
        %v8032 = vld [vmem:[#allocation9 + $0x14] sm:$0xf]
        %v8033 = vld [vmem:[#allocation9 + $0x18] sm:$0xf]
        %v8034 = vld [vmem:[#allocation9 + $0x1c] sm:$0xf]
        %v8035 = vld [vmem:[#allocation9 + $0x20] sm:$0xf]
        %v8036 = vld [vmem:[#allocation9 + $0x24] sm:$0xf]
        %v8037 = vld [vmem:[#allocation9 + $0x28] sm:$0xf]
        %v8038 = vld [vmem:[#allocation9 + $0x2c] sm:$0xf]
        %v8039 = vld [vmem:[#allocation9 + $0x30] sm:$0xf]
        %v8040 = vld [vmem:[#allocation9 + $0x34] sm:$0xf]
        %v8041 = vld [vmem:[#allocation9 + $0x38] sm:$0xf]
        %v8042 = vld [vmem:[#allocation9 + $0x3c] sm:$0xf]
        %v8043 = vld [vmem:[#allocation9 + $0x40] sm:$0xf]
        %v8044 = vld [vmem:[#allocation9 + $0x44] sm:$0xf]
        %v8045 = vld [vmem:[#allocation9 + $0x48] sm:$0xf]
        %v8046 = vld [vmem:[#allocation9 + $0x4c] sm:$0xf]
        %v8047 = vld [vmem:[#allocation9 + $0x50] sm:$0xf]
        %v8048 = vld [vmem:[#allocation9 + $0x54] sm:$0xf]
        %v8049 = vld [vmem:[#allocation9 + $0x58] sm:$0xf]
        %v8050 = vld [vmem:[#allocation9 + $0x5c] sm:$0xf]
        %v8051 = vld [vmem:[#allocation9 + $0x60] sm:$0xf]
        %v8052 = vld [vmem:[#allocation9 + $0x64] sm:$0xf]
        %v8053 = vld [vmem:[#allocation9 + $0x68] sm:$0xf]
        %v8054 = vld [vmem:[#allocation9 + $0x6c] sm:$0xf]
        %v8055 = vld [vmem:[#allocation9 + $0x70] sm:$0xf]
        %v8056 = vld [vmem:[#allocation9 + $0x74] sm:$0xf]
        %v8057 = vld [vmem:[#allocation9 + $0x78] sm:$0xf]
        %v8058 = vld [vmem:[#allocation9 + $0x7c] sm:$0xf]
        %v8059 = vld [vmem:[#allocation9 + $0x80] sm:$0xf]
        %v8060 = vld [vmem:[#allocation9 + $0x84] sm:$0xf]
        %v8061 = vld [vmem:[#allocation9 + $0x88] sm:$0xf]
        %v8062 = vld [vmem:[#allocation9 + $0x8c] sm:$0xf]
        %v8063 = vld [vmem:[#allocation9 + $0x90] sm:$0xf]
        %v8064 = vld [vmem:[#allocation9 + $0x94] sm:$0xf]
        %v8065 = vld [vmem:[#allocation9 + $0x98] sm:$0xf]
        %v8066 = vld [vmem:[#allocation9 + $0x9c] sm:$0xf]
        %v8067 = vld [vmem:[#allocation9 + $0xa0] sm:$0xf]
        %v8068 = vld [vmem:[#allocation9 + $0xa4] sm:$0xf]
        %v8069 = vld [vmem:[#allocation9 + $0xa8] sm:$0xf]
        %v8070 = vld [vmem:[#allocation9 + $0xac] sm:$0xf]
        %v8071 = vld [vmem:[#allocation9 + $0xb0] sm:$0xf]
        %v8072 = vld [vmem:[#allocation9 + $0xb4] sm:$0xf]
        %v8073 = vld [vmem:[#allocation9 + $0xb8] sm:$0xf]
        %v8074 = vld [vmem:[#allocation9 + $0xbc] sm:$0xf]
        %v8075 = vld [vmem:[%s5628] sm:$0xf]
        %v8076 = vld [vmem:[%s5628 + $0x4] sm:$0xf]
        %v8077 = vld [vmem:[%s5628 + $0xc] sm:$0xf]
        %v8078 = vld [vmem:[%s5628 + $0x10] sm:$0xf]
        %v8079 = vld [vmem:[%s5628 + $0x18] sm:$0xf]
        %v8080 = vld [vmem:[%s5628 + $0x1c] sm:$0xf]
        %v8081 = vld [vmem:[%s5628 + $0x24] sm:$0xf]
        %v8082 = vld [vmem:[%s5628 + $0x28] sm:$0xf]
        %v8083 = vld [vmem:[%s5628 + $0x30] sm:$0xf]
        %v8084 = vld [vmem:[%s5628 + $0x34] sm:$0xf]
        %v8085 = vld [vmem:[%s5628 + $0x3c] sm:$0xf]
        %v8086 = vld [vmem:[%s5628 + $0x40] sm:$0xf]
        %v8087 = vld [vmem:[%s5628 + $0x48] sm:$0xf]
        %v8088 = vld [vmem:[%s5628 + $0x4c] sm:$0xf]
        %v8089 = vld [vmem:[%s5628 + $0x54] sm:$0xf]
        %v8090 = vld [vmem:[%s5628 + $0x58] sm:$0xf]
        %v8091 = vld [vmem:[%s5628 + $0x8] sm:$0x1]
        %v8092 = vld [vmem:[%s5628 + $0x14] sm:$0x1]
        %v8093 = vld [vmem:[%s5628 + $0x20] sm:$0x1]
        %v8094 = vld [vmem:[%s5628 + $0x2c] sm:$0x1]
        %v8095 = vld [vmem:[%s5628 + $0x38] sm:$0x1]
        %v8096 = vld [vmem:[%s5628 + $0x44] sm:$0x1]
        %v8097 = vld [vmem:[%s5628 + $0x50] sm:$0x1]
        %v8098 = vld [vmem:[%s5628 + $0x5c] sm:$0x1]
        %v8099 = vld [vmem:[%s5628] sm:$0xe]
        %v8100 = vld [vmem:[%s5628 + $0xc] sm:$0xe]
        %v8101 = vld [vmem:[%s5628 + $0x18] sm:$0xe]
        %v8102 = vld [vmem:[%s5628 + $0x24] sm:$0xe]
        %v8103 = vld [vmem:[%s5628 + $0x30] sm:$0xe]
        %v8104 = vld [vmem:[%s5628 + $0x3c] sm:$0xe]
        %v8105 = vld [vmem:[%s5628 + $0x48] sm:$0xe]
        %v8106 = vld [vmem:[%s5628 + $0x54] sm:$0xe]
        %v8123 = vunpack.c.l.b16 %v8075
        %v8124 = vunpack.c.l.b16 %v8076
        %v8125 = vunpack.c.l.b16 %v8077
        %v8126 = vunpack.c.l.b16 %v8078
        %v8127 = vunpack.c.l.b16 %v8079
        %v8128 = vunpack.c.l.b16 %v8080
        %v8129 = vunpack.c.l.b16 %v8081
        %v8130 = vunpack.c.l.b16 %v8082
        %v8131 = vunpack.c.l.b16 %v8083
        %v8132 = vunpack.c.l.b16 %v8084
        %v8133 = vunpack.c.l.b16 %v8085
        %v8134 = vunpack.c.l.b16 %v8086
        %v8135 = vunpack.c.l.b16 %v8087
        %v8136 = vunpack.c.l.b16 %v8088
        %v8137 = vunpack.c.l.b16 %v8089
        %v8138 = vunpack.c.l.b16 %v8090
        %v8139 = vpack.c.b16 %v8124, %v8123
        %v8140 = vpack.c.b16 %v8126, %v8125
        %v8141 = vpack.c.b16 %v8128, %v8127
        %v8142 = vpack.c.b16 %v8130, %v8129
        %v8143 = vpack.c.b16 %v8132, %v8131
        %v8144 = vpack.c.b16 %v8134, %v8133
        %v8145 = vpack.c.b16 %v8136, %v8135
        %v8146 = vpack.c.b16 %v8138, %v8137
        %v8163 = vunpack.c.l.b16 %v8091
        %v8164 = vunpack.c.l.b16 %v8092
        %v8165 = vunpack.c.l.b16 %v8093
        %v8166 = vunpack.c.l.b16 %v8094
        %v8167 = vunpack.c.l.b16 %v8095
        %v8168 = vunpack.c.l.b16 %v8096
        %v8169 = vunpack.c.l.b16 %v8097
        %v8170 = vunpack.c.l.b16 %v8098
        %v8171 = vpack.c.b16 %v8163, %v8163
        %v8172 = vpack.c.b16 %v8164, %v8164
        %v8173 = vpack.c.b16 %v8165, %v8165
        %v8174 = vpack.c.b16 %v8166, %v8166
        %v8175 = vpack.c.b16 %v8167, %v8167
        %v8176 = vpack.c.b16 %v8168, %v8168
        %v8177 = vpack.c.b16 %v8169, %v8169
        %v8178 = vpack.c.b16 %v8170, %v8170
        %v8180 = vshrl.u32 %v8139, 16
        %v8182 = vshll.u32 %v8139, 16
        %v8184 = vrot.slane %v8182, 1
        %v8185 = vor.u32 %v8180, %v8184
        %v8187 = vshll.u32 %v8171, 16
        %v8189 = vrot.slane %v8187, 1
        %v8190 = vsel %vm1212, %v8185, %v8189
        %v8192 = vshrl.u32 %v8140, 16
        %v8194 = vshll.u32 %v8140, 16
        %v8196 = vrot.slane %v8194, 1
        %v8197 = vor.u32 %v8192, %v8196
        %v8199 = vshll.u32 %v8172, 16
        %v8201 = vrot.slane %v8199, 1
        %v8202 = vsel %vm1212, %v8197, %v8201
        %v8204 = vshrl.u32 %v8141, 16
        %v8206 = vshll.u32 %v8141, 16
        %v8208 = vrot.slane %v8206, 1
        %v8209 = vor.u32 %v8204, %v8208
        %v8211 = vshll.u32 %v8173, 16
        %v8213 = vrot.slane %v8211, 1
        %v8214 = vsel %vm1212, %v8209, %v8213
        %v8216 = vshrl.u32 %v8142, 16
        %v8218 = vshll.u32 %v8142, 16
        %v8220 = vrot.slane %v8218, 1
        %v8221 = vor.u32 %v8216, %v8220
        %v8223 = vshll.u32 %v8174, 16
        %v8225 = vrot.slane %v8223, 1
        %v8226 = vsel %vm1212, %v8221, %v8225
        %v8228 = vshrl.u32 %v8143, 16
        %v8230 = vshll.u32 %v8143, 16
        %v8232 = vrot.slane %v8230, 1
        %v8233 = vor.u32 %v8228, %v8232
        %v8235 = vshll.u32 %v8175, 16
        %v8237 = vrot.slane %v8235, 1
        %v8238 = vsel %vm1212, %v8233, %v8237
        %v8240 = vshrl.u32 %v8144, 16
        %v8242 = vshll.u32 %v8144, 16
        %v8244 = vrot.slane %v8242, 1
        %v8245 = vor.u32 %v8240, %v8244
        %v8247 = vshll.u32 %v8176, 16
        %v8249 = vrot.slane %v8247, 1
        %v8250 = vsel %vm1212, %v8245, %v8249
        %v8252 = vshrl.u32 %v8145, 16
        %v8254 = vshll.u32 %v8145, 16
        %v8256 = vrot.slane %v8254, 1
        %v8257 = vor.u32 %v8252, %v8256
        %v8259 = vshll.u32 %v8177, 16
        %v8261 = vrot.slane %v8259, 1
        %v8262 = vsel %vm1212, %v8257, %v8261
        %v8264 = vshrl.u32 %v8146, 16
        %v8266 = vshll.u32 %v8146, 16
        %v8268 = vrot.slane %v8266, 1
        %v8269 = vor.u32 %v8264, %v8268
        %v8271 = vshll.u32 %v8178, 16
        %v8273 = vrot.slane %v8271, 1
        %v8274 = vsel %vm1212, %v8269, %v8273
        %v8291 = vunpack.c.l.b16 %v8099
        %v8292 = vunpack.c.l.b16 %v8100
        %v8293 = vunpack.c.l.b16 %v8101
        %v8294 = vunpack.c.l.b16 %v8102
        %v8295 = vunpack.c.l.b16 %v8103
        %v8296 = vunpack.c.l.b16 %v8104
        %v8297 = vunpack.c.l.b16 %v8105
        %v8298 = vunpack.c.l.b16 %v8106
        %v8299 = vpack.c.b16 %v8124, %v8291
        %v8300 = vpack.c.b16 %v8126, %v8292
        %v8301 = vpack.c.b16 %v8128, %v8293
        %v8302 = vpack.c.b16 %v8130, %v8294
        %v8303 = vpack.c.b16 %v8132, %v8295
        %v8304 = vpack.c.b16 %v8134, %v8296
        %v8305 = vpack.c.b16 %v8136, %v8297
        %v8306 = vpack.c.b16 %v8138, %v8298
        %v8307 = vrot.slane %v8299, 1
        %v8308 = vrot.slane %v8171, 1
        %v8309 = vsel %vm1341, %v8307, %v8308
        %v8310 = vrot.slane %v8300, 1
        %v8311 = vrot.slane %v8172, 1
        %v8312 = vsel %vm1341, %v8310, %v8311
        %v8313 = vrot.slane %v8301, 1
        %v8314 = vrot.slane %v8173, 1
        %v8315 = vsel %vm1341, %v8313, %v8314
        %v8316 = vrot.slane %v8302, 1
        %v8317 = vrot.slane %v8174, 1
        %v8318 = vsel %vm1341, %v8316, %v8317
        %v8319 = vrot.slane %v8303, 1
        %v8320 = vrot.slane %v8175, 1
        %v8321 = vsel %vm1341, %v8319, %v8320
        %v8322 = vrot.slane %v8304, 1
        %v8323 = vrot.slane %v8176, 1
        %v8324 = vsel %vm1341, %v8322, %v8323
        %v8325 = vrot.slane %v8305, 1
        %v8326 = vrot.slane %v8177, 1
        %v8327 = vsel %vm1341, %v8325, %v8326
        %v8328 = vrot.slane %v8306, 1
        %v8329 = vrot.slane %v8178, 1
        %v8330 = vsel %vm1341, %v8328, %v8329
        %v8339 = vld [vmem:[%s6261] sm:$0xf]
        %v8340 = vld [vmem:[%s6261 + $0x4] sm:$0xf]
        %v8341 = vld [vmem:[%s6261 + $0x8] sm:$0xf]
        %v8342 = vld [vmem:[%s6261 + $0xc] sm:$0xf]
        %v8343 = vld [vmem:[%s6261 + $0x10] sm:$0xf]
        %v8344 = vld [vmem:[%s6261 + $0x14] sm:$0xf]
        %v8345 = vld [vmem:[%s6261 + $0x18] sm:$0xf]
        %v8346 = vld [vmem:[%s6261 + $0x1c] sm:$0xf]
        %v8347 = vld [vmem:[%s6261 + $0x20] sm:$0xf]
        %v8348 = vld [vmem:[%s6261 + $0x24] sm:$0xf]
        %v8349 = vld [vmem:[%s6261 + $0x28] sm:$0xf]
        %v8350 = vld [vmem:[%s6261 + $0x2c] sm:$0xf]
        %v8351 = vld [vmem:[%s6261 + $0x30] sm:$0xf]
        %v8352 = vld [vmem:[%s6261 + $0x34] sm:$0xf]
        %v8353 = vld [vmem:[%s6261 + $0x38] sm:$0xf]
        %v8354 = vld [vmem:[%s6261 + $0x3c] sm:$0xf]
        %v8355 = vld [vmem:[%s6261 + $0x40] sm:$0xf]
        %v8356 = vld [vmem:[%s6261 + $0x44] sm:$0xf]
        %v8357 = vld [vmem:[%s6261 + $0x48] sm:$0xf]
        %v8358 = vld [vmem:[%s6261 + $0x4c] sm:$0xf]
        %v8359 = vld [vmem:[%s6261 + $0x50] sm:$0xf]
        %v8360 = vld [vmem:[%s6261 + $0x54] sm:$0xf]
        %v8361 = vld [vmem:[%s6261 + $0x58] sm:$0xf]
        %v8362 = vld [vmem:[%s6261 + $0x5c] sm:$0xf]
        %v8363 = vld [vmem:[%s6261 + $0x60] sm:$0xf]
        %v8364 = vld [vmem:[%s6261 + $0x64] sm:$0xf]
        %v8365 = vld [vmem:[%s6261 + $0x68] sm:$0xf]
        %v8366 = vld [vmem:[%s6261 + $0x6c] sm:$0xf]
        %v8367 = vld [vmem:[%s6261 + $0x70] sm:$0xf]
        %v8368 = vld [vmem:[%s6261 + $0x74] sm:$0xf]
        %v8369 = vld [vmem:[%s6261 + $0x78] sm:$0xf]
        %v8370 = vld [vmem:[%s6261 + $0x7c] sm:$0xf]
        %v8371 = vld [vmem:[%s6261 + $0x80] sm:$0xf]
        %v8372 = vld [vmem:[%s6261 + $0x84] sm:$0xf]
        %v8373 = vld [vmem:[%s6261 + $0x88] sm:$0xf]
        %v8374 = vld [vmem:[%s6261 + $0x8c] sm:$0xf]
        %v8375 = vld [vmem:[%s6261 + $0x90] sm:$0xf]
        %v8376 = vld [vmem:[%s6261 + $0x94] sm:$0xf]
        %v8377 = vld [vmem:[%s6261 + $0x98] sm:$0xf]
        %v8378 = vld [vmem:[%s6261 + $0x9c] sm:$0xf]
        %v8379 = vld [vmem:[%s6261 + $0xa0] sm:$0xf]
        %v8380 = vld [vmem:[%s6261 + $0xa4] sm:$0xf]
        %v8381 = vld [vmem:[%s6261 + $0xa8] sm:$0xf]
        %v8382 = vld [vmem:[%s6261 + $0xac] sm:$0xf]
        %v8383 = vld [vmem:[%s6261 + $0xb0] sm:$0xf]
        %v8384 = vld [vmem:[%s6261 + $0xb4] sm:$0xf]
        %v8385 = vld [vmem:[%s6261 + $0xb8] sm:$0xf]
        %v8386 = vld [vmem:[%s6261 + $0xbc] sm:$0xf]
        %v8435 = vunpack.c.l.b16 %v8339
        %v8436 = vunpack.c.l.b16 %v8340
        %v8437 = vunpack.c.l.b16 %v8341
        %v8438 = vunpack.c.l.b16 %v8342
        %v8439 = vunpack.c.l.b16 %v8343
        %v8440 = vunpack.c.l.b16 %v8344
        %v8441 = vunpack.c.l.b16 %v8345
        %v8442 = vunpack.c.l.b16 %v8346
        %v8443 = vunpack.c.l.b16 %v8347
        %v8444 = vunpack.c.l.b16 %v8348
        %v8445 = vunpack.c.l.b16 %v8349
        %v8446 = vunpack.c.l.b16 %v8350
        %v8447 = vunpack.c.l.b16 %v8351
        %v8448 = vunpack.c.l.b16 %v8352
        %v8449 = vunpack.c.l.b16 %v8353
        %v8450 = vunpack.c.l.b16 %v8354
        %v8451 = vunpack.c.l.b16 %v8355
        %v8452 = vunpack.c.l.b16 %v8356
        %v8453 = vunpack.c.l.b16 %v8357
        %v8454 = vunpack.c.l.b16 %v8358
        %v8455 = vunpack.c.l.b16 %v8359
        %v8456 = vunpack.c.l.b16 %v8360
        %v8457 = vunpack.c.l.b16 %v8361
        %v8458 = vunpack.c.l.b16 %v8362
        %v8459 = vunpack.c.l.b16 %v8363
        %v8460 = vunpack.c.l.b16 %v8364
        %v8461 = vunpack.c.l.b16 %v8365
        %v8462 = vunpack.c.l.b16 %v8366
        %v8463 = vunpack.c.l.b16 %v8367
        %v8464 = vunpack.c.l.b16 %v8368
        %v8465 = vunpack.c.l.b16 %v8369
        %v8466 = vunpack.c.l.b16 %v8370
        %v8467 = vunpack.c.l.b16 %v8371
        %v8468 = vunpack.c.l.b16 %v8372
        %v8469 = vunpack.c.l.b16 %v8373
        %v8470 = vunpack.c.l.b16 %v8374
        %v8471 = vunpack.c.l.b16 %v8375
        %v8472 = vunpack.c.l.b16 %v8376
        %v8473 = vunpack.c.l.b16 %v8377
        %v8474 = vunpack.c.l.b16 %v8378
        %v8475 = vunpack.c.l.b16 %v8379
        %v8476 = vunpack.c.l.b16 %v8380
        %v8477 = vunpack.c.l.b16 %v8381
        %v8478 = vunpack.c.l.b16 %v8382
        %v8479 = vunpack.c.l.b16 %v8383
        %v8480 = vunpack.c.l.b16 %v8384
        %v8481 = vunpack.c.l.b16 %v8385
        %v8482 = vunpack.c.l.b16 %v8386
        %v8483 = vpack.c.b16 %v8436, %v8435
        %v8484 = vpack.c.b16 %v8438, %v8437
        %v8485 = vpack.c.b16 %v8440, %v8439
        %v8486 = vpack.c.b16 %v8442, %v8441
        %v8487 = vpack.c.b16 %v8444, %v8443
        %v8488 = vpack.c.b16 %v8446, %v8445
        %v8489 = vpack.c.b16 %v8448, %v8447
        %v8490 = vpack.c.b16 %v8450, %v8449
        %v8491 = vpack.c.b16 %v8452, %v8451
        %v8492 = vpack.c.b16 %v8454, %v8453
        %v8493 = vpack.c.b16 %v8456, %v8455
        %v8494 = vpack.c.b16 %v8458, %v8457
        %v8495 = vpack.c.b16 %v8460, %v8459
        %v8496 = vpack.c.b16 %v8462, %v8461
        %v8497 = vpack.c.b16 %v8464, %v8463
        %v8498 = vpack.c.b16 %v8466, %v8465
        %v8499 = vpack.c.b16 %v8468, %v8467
        %v8500 = vpack.c.b16 %v8470, %v8469
        %v8501 = vpack.c.b16 %v8472, %v8471
        %v8502 = vpack.c.b16 %v8474, %v8473
        %v8503 = vpack.c.b16 %v8476, %v8475
        %v8504 = vpack.c.b16 %v8478, %v8477
        %v8505 = vpack.c.b16 %v8480, %v8479
        %v8506 = vpack.c.b16 %v8482, %v8481
        %8531 = vmatprep.subr.bf16.mxu0 0
        %8532 = vmatpush1.bf16.msra.mxu0 %v8483
        %8533 = vmatprep.subr.bf16.mxu0 0
        %8534 = vmatpush1.bf16.msra.mxu0 %v8484
        %8535 = vmatprep.subr.bf16.mxu0 0
        %8536 = vmatpush1.bf16.msra.mxu0 %v8485
        %8537 = vmatprep.subr.bf16.mxu0 0
        %8538 = vmatpush1.bf16.msra.mxu0 %v8486
        %8539 = vmatprep.subr.bf16.mxu0 0
        %8540 = vmatpush1.bf16.msra.mxu0 %v8487
        %8541 = vmatprep.subr.bf16.mxu0 0
        %8542 = vmatpush1.bf16.msra.mxu0 %v8488
        %8543 = vmatprep.subr.bf16.mxu0 0
        %8544 = vmatpush1.bf16.msra.mxu0 %v8489
        %8545 = vmatprep.subr.bf16.mxu0 0
        %8546 = vmatpush1.bf16.msra.mxu0 %v8490
        %8547 = vmatprep.subr.bf16.mxu0 0
        %8548 = vmatpush1.bf16.msra.mxu0 %v8491
        %8549 = vmatprep.subr.bf16.mxu0 0
        %8550 = vmatpush1.bf16.msra.mxu0 %v8492
        %8551 = vmatprep.subr.bf16.mxu0 0
        %8552 = vmatpush1.bf16.msra.mxu0 %v8493
        %8553 = vmatprep.subr.bf16.mxu0 0
        %8554 = vmatpush1.bf16.msra.mxu0 %v8494
        %8555 = vmatprep.subr.bf16.mxu0 0
        %8556 = vmatpush1.bf16.msra.mxu0 %v8495
        %8557 = vmatprep.subr.bf16.mxu0 0
        %8558 = vmatpush1.bf16.msra.mxu0 %v8496
        %8559 = vmatprep.subr.bf16.mxu0 0
        %8560 = vmatpush1.bf16.msra.mxu0 %v8497
        %8561 = vmatprep.subr.bf16.mxu0 0
        %8562 = vmatpush1.bf16.msra.mxu0 %v8498
        %8563 = vmatprep.mubr.bf16.mxu0 %v8190
        %8564 = vmatmul.mubr.bf16.gmra.mrb[0].mxu0 %v8139
        %v8565 = vpop.f32.mrb[0].mxu0
        %v8566 = vadd.f32 0.0, %v8565
        %v8567 = vpop.f32.mrb[0].mxu0
        %v8568 = vpop.f32.mrb[0].mxu0
        %v8569 = vadd.f32 0.0, %v8568
        %v8570 = vpop.f32.mrb[0].mxu0
        %8571 = vmatprep.mubr.bf16.mxu0 %v8202
        %8572 = vmatmul.mubr.bf16.gmra.mrb[0].mxu0 %v8140
        %v8573 = vpop.f32.mrb[0].mxu0
        %v8574 = vadd.f32 0.0, %v8573
        %v8575 = vpop.f32.mrb[0].mxu0
        %v8576 = vpop.f32.mrb[0].mxu0
        %v8577 = vadd.f32 0.0, %v8576
        %v8578 = vpop.f32.mrb[0].mxu0
        %8579 = vmatprep.mubr.bf16.mxu0 %v8214
        %8580 = vmatmul.mubr.bf16.gmra.mrb[0].mxu0 %v8141
        %v8581 = vpop.f32.mrb[0].mxu0
        %v8582 = vadd.f32 0.0, %v8581
        %v8583 = vpop.f32.mrb[0].mxu0
        %v8584 = vpop.f32.mrb[0].mxu0
        %v8585 = vadd.f32 0.0, %v8584
        %v8586 = vpop.f32.mrb[0].mxu0
        %8587 = vmatprep.mubr.bf16.mxu0 %v8226
        %8588 = vmatmul.mubr.bf16.gmra.mrb[0].mxu0 %v8142
        %v8589 = vpop.f32.mrb[0].mxu0
        %v8590 = vadd.f32 0.0, %v8589
        %v8591 = vpop.f32.mrb[0].mxu0
        %v8592 = vpop.f32.mrb[0].mxu0
        %v8593 = vadd.f32 0.0, %v8592
        %v8594 = vpop.f32.mrb[0].mxu0
        %8595 = vmatprep.mubr.bf16.mxu0 %v8238
        %8596 = vmatmul.mubr.bf16.gmra.mrb[0].mxu0 %v8143
        %v8597 = vpop.f32.mrb[0].mxu0
        %v8598 = vadd.f32 0.0, %v8597
        %v8599 = vpop.f32.mrb[0].mxu0
        %v8600 = vpop.f32.mrb[0].mxu0
        %v8601 = vadd.f32 0.0, %v8600
        %v8602 = vpop.f32.mrb[0].mxu0
        %8603 = vmatprep.mubr.bf16.mxu0 %v8250
        %8604 = vmatmul.mubr.bf16.gmra.mrb[0].mxu0 %v8144
        %v8605 = vpop.f32.mrb[0].mxu0
        %v8606 = vadd.f32 0.0, %v8605
        %v8607 = vpop.f32.mrb[0].mxu0
        %v8608 = vpop.f32.mrb[0].mxu0
        %v8609 = vadd.f32 0.0, %v8608
        %v8610 = vpop.f32.mrb[0].mxu0
        %8611 = vmatprep.mubr.bf16.mxu0 %v8262
        %8612 = vmatmul.mubr.bf16.gmra.mrb[0].mxu0 %v8145
        %v8613 = vpop.f32.mrb[0].mxu0
        %v8614 = vadd.f32 0.0, %v8613
        %v8615 = vpop.f32.mrb[0].mxu0
        %v8616 = vpop.f32.mrb[0].mxu0
        %v8617 = vadd.f32 0.0, %v8616
        %v8618 = vpop.f32.mrb[0].mxu0
        %8619 = vmatprep.mubr.bf16.mxu0 %v8274
        %8620 = vmatmul.mubr.bf16.gmra.mrb[0].mxu0 %v8146
        %v8621 = vpop.f32.mrb[0].mxu0
        %v8622 = vadd.f32 0.0, %v8621
        %v8623 = vpop.f32.mrb[0].mxu0
        %v8624 = vpop.f32.mrb[0].mxu0
        %v8625 = vadd.f32 0.0, %v8624
        %v8626 = vpop.f32.mrb[0].mxu0
        %8627 = vdwg.mxu0
        %8628 = vmatprep.subr.bf16.mxu0 0
        %8629 = vmatpush1.bf16.msra.mxu0 %v8499
        %8630 = vmatprep.subr.bf16.mxu0 0
        %8631 = vmatpush1.bf16.msra.mxu0 %v8500
        %8632 = vmatprep.subr.bf16.mxu0 0
        %8633 = vmatpush1.bf16.msra.mxu0 %v8501
        %8634 = vmatprep.subr.bf16.mxu0 0
        %8635 = vmatpush1.bf16.msra.mxu0 %v8502
        %8636 = vmatprep.subr.bf16.mxu0 0
        %8637 = vmatpush1.bf16.msra.mxu0 %v8503
        %8638 = vmatprep.subr.bf16.mxu0 0
        %8639 = vmatpush1.bf16.msra.mxu0 %v8504
        %8640 = vmatprep.subr.bf16.mxu0 0
        %8641 = vmatpush1.bf16.msra.mxu0 %v8505
        %8642 = vmatprep.subr.bf16.mxu0 0
        %8643 = vmatpush1.bf16.msra.mxu0 %v8506
        %8644 = vmatprep.subr.bf16.mxu0 0
        %8645 = vmatpush1.bf16.msra.mxu0 0
        %8646 = vmatprep.subr.bf16.mxu0 0
        %8647 = vmatpush1.bf16.msra.mxu0 0
        %8648 = vmatprep.subr.bf16.mxu0 0
        %8649 = vmatpush1.bf16.msra.mxu0 0
        %8650 = vmatprep.subr.bf16.mxu0 0
        %8651 = vmatpush1.bf16.msra.mxu0 0
        %8652 = vmatprep.subr.bf16.mxu0 0
        %8653 = vmatpush1.bf16.msra.mxu0 0
        %8654 = vmatprep.subr.bf16.mxu0 0
        %8655 = vmatpush1.bf16.msra.mxu0 0
        %8656 = vmatprep.subr.bf16.mxu0 0
        %8657 = vmatpush1.bf16.msra.mxu0 0
        %8658 = vmatprep.subr.bf16.mxu0 0
        %8659 = vmatpush1.bf16.msra.mxu0 0
        %8660 = vmatprep.mubr.bf16.mxu0 0
        %8661 = vmatmul.mubr.bf16.gmra.mrb[0].mxu0 %v8309
        %v8662 = vpop.f32.mrb[0].mxu0
        %v8663 = vadd.f32 %v8566, %v8662
        %v8664 = vpop.f32.mrb[0].mxu0
        %v8665 = vpop.f32.mrb[0].mxu0
        %v8666 = vadd.f32 %v8569, %v8665
        %v8667 = vpop.f32.mrb[0].mxu0
        %8668 = vmatprep.mubr.bf16.mxu0 0
        %8669 = vmatmul.mubr.bf16.gmra.mrb[0].mxu0 %v8312
        %v8670 = vpop.f32.mrb[0].mxu0
        %v8671 = vadd.f32 %v8574, %v8670
        %v8672 = vpop.f32.mrb[0].mxu0
        %v8673 = vpop.f32.mrb[0].mxu0
        %v8674 = vadd.f32 %v8577, %v8673
        %v8675 = vpop.f32.mrb[0].mxu0
        %8676 = vmatprep.mubr.bf16.mxu0 0
        %8677 = vmatmul.mubr.bf16.gmra.mrb[0].mxu0 %v8315
        %v8678 = vpop.f32.mrb[0].mxu0
        %v8679 = vadd.f32 %v8582, %v8678
        %v8680 = vpop.f32.mrb[0].mxu0
        %v8681 = vpop.f32.mrb[0].mxu0
        %v8682 = vadd.f32 %v8585, %v8681
        %v8683 = vpop.f32.mrb[0].mxu0
        %8684 = vmatprep.mubr.bf16.mxu0 0
        %8685 = vmatmul.mubr.bf16.gmra.mrb[0].mxu0 %v8318
        %v8686 = vpop.f32.mrb[0].mxu0
        %v8687 = vadd.f32 %v8590, %v8686
        %v8688 = vpop.f32.mrb[0].mxu0
        %v8689 = vpop.f32.mrb[0].mxu0
        %v8690 = vadd.f32 %v8593, %v8689
        %v8691 = vpop.f32.mrb[0].mxu0
        %8692 = vmatprep.mubr.bf16.mxu0 0
        %8693 = vmatmul.mubr.bf16.gmra.mrb[0].mxu0 %v8321
        %v8694 = vpop.f32.mrb[0].mxu0
        %v8695 = vadd.f32 %v8598, %v8694
        %v8696 = vpop.f32.mrb[0].mxu0
        %v8697 = vpop.f32.mrb[0].mxu0
        %v8698 = vadd.f32 %v8601, %v8697
        %v8699 = vpop.f32.mrb[0].mxu0
        %8700 = vmatprep.mubr.bf16.mxu0 0
        %8701 = vmatmul.mubr.bf16.gmra.mrb[0].mxu0 %v8324
        %v8702 = vpop.f32.mrb[0].mxu0
        %v8703 = vadd.f32 %v8606, %v8702
        %v8704 = vpop.f32.mrb[0].mxu0
        %v8705 = vpop.f32.mrb[0].mxu0
        %v8706 = vadd.f32 %v8609, %v8705
        %v8707 = vpop.f32.mrb[0].mxu0
        %8708 = vmatprep.mubr.bf16.mxu0 0
        %8709 = vmatmul.mubr.bf16.gmra.mrb[0].mxu0 %v8327
        %v8710 = vpop.f32.mrb[0].mxu0
        %v8711 = vadd.f32 %v8614, %v8710
        %v8712 = vpop.f32.mrb[0].mxu0
        %v8713 = vpop.f32.mrb[0].mxu0
        %v8714 = vadd.f32 %v8617, %v8713
        %v8715 = vpop.f32.mrb[0].mxu0
        %8716 = vmatprep.mubr.bf16.mxu0 0
        %8717 = vmatmul.mubr.bf16.gmra.mrb[0].mxu0 %v8330
        %v8718 = vpop.f32.mrb[0].mxu0
        %v8719 = vadd.f32 %v8622, %v8718
        %v8720 = vpop.f32.mrb[0].mxu0
        %v8721 = vpop.f32.mrb[0].mxu0
        %v8722 = vadd.f32 %v8625, %v8721
        %v8723 = vpop.f32.mrb[0].mxu0
        %8724 = vdwg.mxu0
        %v8773 = vunpack.c.l.b16 %v8027
        %v8774 = vunpack.c.l.b16 %v8028
        %v8775 = vunpack.c.l.b16 %v8029
        %v8776 = vunpack.c.l.b16 %v8030
        %v8777 = vunpack.c.l.b16 %v8031
        %v8778 = vunpack.c.l.b16 %v8032
        %v8779 = vunpack.c.l.b16 %v8033
        %v8780 = vunpack.c.l.b16 %v8034
        %v8781 = vunpack.c.l.b16 %v8035
        %v8782 = vunpack.c.l.b16 %v8036
        %v8783 = vunpack.c.l.b16 %v8037
        %v8784 = vunpack.c.l.b16 %v8038
        %v8785 = vunpack.c.l.b16 %v8039
        %v8786 = vunpack.c.l.b16 %v8040
        %v8787 = vunpack.c.l.b16 %v8041
        %v8788 = vunpack.c.l.b16 %v8042
        %v8789 = vunpack.c.l.b16 %v8043
        %v8790 = vunpack.c.l.b16 %v8044
        %v8791 = vunpack.c.l.b16 %v8045
        %v8792 = vunpack.c.l.b16 %v8046
        %v8793 = vunpack.c.l.b16 %v8047
        %v8794 = vunpack.c.l.b16 %v8048
        %v8795 = vunpack.c.l.b16 %v8049
        %v8796 = vunpack.c.l.b16 %v8050
        %v8797 = vunpack.c.l.b16 %v8051
        %v8798 = vunpack.c.l.b16 %v8052
        %v8799 = vunpack.c.l.b16 %v8053
        %v8800 = vunpack.c.l.b16 %v8054
        %v8801 = vunpack.c.l.b16 %v8055
        %v8802 = vunpack.c.l.b16 %v8056
        %v8803 = vunpack.c.l.b16 %v8057
        %v8804 = vunpack.c.l.b16 %v8058
        %v8805 = vunpack.c.l.b16 %v8059
        %v8806 = vunpack.c.l.b16 %v8060
        %v8807 = vunpack.c.l.b16 %v8061
        %v8808 = vunpack.c.l.b16 %v8062
        %v8809 = vunpack.c.l.b16 %v8063
        %v8810 = vunpack.c.l.b16 %v8064
        %v8811 = vunpack.c.l.b16 %v8065
        %v8812 = vunpack.c.l.b16 %v8066
        %v8813 = vunpack.c.l.b16 %v8067
        %v8814 = vunpack.c.l.b16 %v8068
        %v8815 = vunpack.c.l.b16 %v8069
        %v8816 = vunpack.c.l.b16 %v8070
        %v8817 = vunpack.c.l.b16 %v8071
        %v8818 = vunpack.c.l.b16 %v8072
        %v8819 = vunpack.c.l.b16 %v8073
        %v8820 = vunpack.c.l.b16 %v8074
        %v8821 = vpack.c.b16 %v8774, %v8773
        %v8822 = vpack.c.b16 %v8776, %v8775
        %v8823 = vpack.c.b16 %v8778, %v8777
        %v8824 = vpack.c.b16 %v8780, %v8779
        %v8825 = vpack.c.b16 %v8782, %v8781
        %v8826 = vpack.c.b16 %v8784, %v8783
        %v8827 = vpack.c.b16 %v8786, %v8785
        %v8828 = vpack.c.b16 %v8788, %v8787
        %v8829 = vpack.c.b16 %v8790, %v8789
        %v8830 = vpack.c.b16 %v8792, %v8791
        %v8831 = vpack.c.b16 %v8794, %v8793
        %v8832 = vpack.c.b16 %v8796, %v8795
        %v8833 = vpack.c.b16 %v8798, %v8797
        %v8834 = vpack.c.b16 %v8800, %v8799
        %v8835 = vpack.c.b16 %v8802, %v8801
        %v8836 = vpack.c.b16 %v8804, %v8803
        %v8837 = vpack.c.b16 %v8806, %v8805
        %v8838 = vpack.c.b16 %v8808, %v8807
        %v8839 = vpack.c.b16 %v8810, %v8809
        %v8840 = vpack.c.b16 %v8812, %v8811
        %v8841 = vpack.c.b16 %v8814, %v8813
        %v8842 = vpack.c.b16 %v8816, %v8815
        %v8843 = vpack.c.b16 %v8818, %v8817
        %v8844 = vpack.c.b16 %v8820, %v8819
        %8869 = vmatprep.subr.bf16.mxu0 0
        %8870 = vmatpush1.bf16.msra.mxu0 %v8821
        %8871 = vmatprep.subr.bf16.mxu0 0
        %8872 = vmatpush1.bf16.msra.mxu0 %v8822
        %8873 = vmatprep.subr.bf16.mxu0 0
        %8874 = vmatpush1.bf16.msra.mxu0 %v8823
        %8875 = vmatprep.subr.bf16.mxu0 0
        %8876 = vmatpush1.bf16.msra.mxu0 %v8824
        %8877 = vmatprep.subr.bf16.mxu0 0
        %8878 = vmatpush1.bf16.msra.mxu0 %v8825
        %8879 = vmatprep.subr.bf16.mxu0 0
        %8880 = vmatpush1.bf16.msra.mxu0 %v8826
        %8881 = vmatprep.subr.bf16.mxu0 0
        %8882 = vmatpush1.bf16.msra.mxu0 %v8827
        %8883 = vmatprep.subr.bf16.mxu0 0
        %8884 = vmatpush1.bf16.msra.mxu0 %v8828
        %8885 = vmatprep.subr.bf16.mxu0 0
        %8886 = vmatpush1.bf16.msra.mxu0 %v8829
        %8887 = vmatprep.subr.bf16.mxu0 0
        %8888 = vmatpush1.bf16.msra.mxu0 %v8830
        %8889 = vmatprep.subr.bf16.mxu0 0
        %8890 = vmatpush1.bf16.msra.mxu0 %v8831
        %8891 = vmatprep.subr.bf16.mxu0 0
        %8892 = vmatpush1.bf16.msra.mxu0 %v8832
        %8893 = vmatprep.subr.bf16.mxu0 0
        %8894 = vmatpush1.bf16.msra.mxu0 %v8833
        %8895 = vmatprep.subr.bf16.mxu0 0
        %8896 = vmatpush1.bf16.msra.mxu0 %v8834
        %8897 = vmatprep.subr.bf16.mxu0 0
        %8898 = vmatpush1.bf16.msra.mxu0 %v8835
        %8899 = vmatprep.subr.bf16.mxu0 0
        %8900 = vmatpush1.bf16.msra.mxu0 %v8836
        %8901 = vmatprep.mubr.bf16.mxu0 %v7878
        %8902 = vmatmul.mubr.bf16.gmra.mrb[0].mxu0 %v7827
        %v8903 = vpop.f32.mrb[0].mxu0
        %v8904 = vadd.f32 %v8663, %v8903
        %v8905 = vpop.f32.mrb[0].mxu0
        %v8906 = vpop.f32.mrb[0].mxu0
        %v8907 = vadd.f32 %v8666, %v8906
        %v8908 = vpop.f32.mrb[0].mxu0
        %8909 = vmatprep.mubr.bf16.mxu0 %v7890
        %8910 = vmatmul.mubr.bf16.gmra.mrb[0].mxu0 %v7828
        %v8911 = vpop.f32.mrb[0].mxu0
        %v8912 = vadd.f32 %v8671, %v8911
        %v8913 = vpop.f32.mrb[0].mxu0
        %v8914 = vpop.f32.mrb[0].mxu0
        %v8915 = vadd.f32 %v8674, %v8914
        %v8916 = vpop.f32.mrb[0].mxu0
        %8917 = vmatprep.mubr.bf16.mxu0 %v7902
        %8918 = vmatmul.mubr.bf16.gmra.mrb[0].mxu0 %v7829
        %v8919 = vpop.f32.mrb[0].mxu0
        %v8920 = vadd.f32 %v8679, %v8919
        %v8921 = vpop.f32.mrb[0].mxu0
        %v8922 = vpop.f32.mrb[0].mxu0
        %v8923 = vadd.f32 %v8682, %v8922
        %v8924 = vpop.f32.mrb[0].mxu0
        %8925 = vmatprep.mubr.bf16.mxu0 %v7914
        %8926 = vmatmul.mubr.bf16.gmra.mrb[0].mxu0 %v7830
        %v8927 = vpop.f32.mrb[0].mxu0
        %v8928 = vadd.f32 %v8687, %v8927
        %v8929 = vpop.f32.mrb[0].mxu0
        %v8930 = vpop.f32.mrb[0].mxu0
        %v8931 = vadd.f32 %v8690, %v8930
        %v8932 = vpop.f32.mrb[0].mxu0
        %8933 = vmatprep.mubr.bf16.mxu0 %v7926
        %8934 = vmatmul.mubr.bf16.gmra.mrb[0].mxu0 %v7831
        %v8935 = vpop.f32.mrb[0].mxu0
        %v8936 = vadd.f32 %v8695, %v8935
        %v8937 = vpop.f32.mrb[0].mxu0
        %v8938 = vpop.f32.mrb[0].mxu0
        %v8939 = vadd.f32 %v8698, %v8938
        %v8940 = vpop.f32.mrb[0].mxu0
        %8941 = vmatprep.mubr.bf16.mxu0 %v7938
        %8942 = vmatmul.mubr.bf16.gmra.mrb[0].mxu0 %v7832
        %v8943 = vpop.f32.mrb[0].mxu0
        %v8944 = vadd.f32 %v8703, %v8943
        %v8945 = vpop.f32.mrb[0].mxu0
        %v8946 = vpop.f32.mrb[0].mxu0
        %v8947 = vadd.f32 %v8706, %v8946
        %v8948 = vpop.f32.mrb[0].mxu0
        %8949 = vmatprep.mubr.bf16.mxu0 %v7950
        %8950 = vmatmul.mubr.bf16.gmra.mrb[0].mxu0 %v7833
        %v8951 = vpop.f32.mrb[0].mxu0
        %v8952 = vadd.f32 %v8711, %v8951
        %v8953 = vpop.f32.mrb[0].mxu0
        %v8954 = vpop.f32.mrb[0].mxu0
        %v8955 = vadd.f32 %v8714, %v8954
        %v8956 = vpop.f32.mrb[0].mxu0
        %8957 = vmatprep.mubr.bf16.mxu0 %v7962
        %8958 = vmatmul.mubr.bf16.gmra.mrb[0].mxu0 %v7834
        %v8959 = vpop.f32.mrb[0].mxu0
        %v8960 = vadd.f32 %v8719, %v8959
        %v8961 = vpop.f32.mrb[0].mxu0
        %v8962 = vpop.f32.mrb[0].mxu0
        %v8963 = vadd.f32 %v8722, %v8962
        %v8964 = vpop.f32.mrb[0].mxu0
        %8965 = vdwg.mxu0
        %8966 = vmatprep.subr.bf16.mxu0 0
        %8967 = vmatpush1.bf16.msra.mxu0 %v8837
        %8968 = vmatprep.subr.bf16.mxu0 0
        %8969 = vmatpush1.bf16.msra.mxu0 %v8838
        %8970 = vmatprep.subr.bf16.mxu0 0
        %8971 = vmatpush1.bf16.msra.mxu0 %v8839
        %8972 = vmatprep.subr.bf16.mxu0 0
        %8973 = vmatpush1.bf16.msra.mxu0 %v8840
        %8974 = vmatprep.subr.bf16.mxu0 0
        %8975 = vmatpush1.bf16.msra.mxu0 %v8841
        %8976 = vmatprep.subr.bf16.mxu0 0
        %8977 = vmatpush1.bf16.msra.mxu0 %v8842
        %8978 = vmatprep.subr.bf16.mxu0 0
        %8979 = vmatpush1.bf16.msra.mxu0 %v8843
        %8980 = vmatprep.subr.bf16.mxu0 0
        %8981 = vmatpush1.bf16.msra.mxu0 %v8844
        %8982 = vmatprep.subr.bf16.mxu0 0
        %8983 = vmatpush1.bf16.msra.mxu0 0
        %8984 = vmatprep.subr.bf16.mxu0 0
        %8985 = vmatpush1.bf16.msra.mxu0 0
        %8986 = vmatprep.subr.bf16.mxu0 0
        %8987 = vmatpush1.bf16.msra.mxu0 0
        %8988 = vmatprep.subr.bf16.mxu0 0
        %8989 = vmatpush1.bf16.msra.mxu0 0
        %8990 = vmatprep.subr.bf16.mxu0 0
        %8991 = vmatpush1.bf16.msra.mxu0 0
        %8992 = vmatprep.subr.bf16.mxu0 0
        %8993 = vmatpush1.bf16.msra.mxu0 0
        %8994 = vmatprep.subr.bf16.mxu0 0
        %8995 = vmatpush1.bf16.msra.mxu0 0
        %8996 = vmatprep.subr.bf16.mxu0 0
        %8997 = vmatpush1.bf16.msra.mxu0 0
        %8998 = vmatprep.mubr.bf16.mxu0 0
        %8999 = vmatmul.mubr.bf16.gmra.mrb[0].mxu0 %v7997
        %v9000 = vpop.f32.mrb[0].mxu0
        %v9001 = vadd.f32 %v8904, %v9000
        %v9002 = vpop.f32.mrb[0].mxu0
        %v9003 = vpop.f32.mrb[0].mxu0
        %v9004 = vadd.f32 %v8907, %v9003
        %v9005 = vpop.f32.mrb[0].mxu0
        %9006 = vmatprep.mubr.bf16.mxu0 0
        %9007 = vmatmul.mubr.bf16.gmra.mrb[0].mxu0 %v8000
        %v9008 = vpop.f32.mrb[0].mxu0
        %v9009 = vadd.f32 %v8912, %v9008
        %v9010 = vpop.f32.mrb[0].mxu0
        %v9011 = vpop.f32.mrb[0].mxu0
        %v9012 = vadd.f32 %v8915, %v9011
        %v9013 = vpop.f32.mrb[0].mxu0
        %9014 = vmatprep.mubr.bf16.mxu0 0
        %9015 = vmatmul.mubr.bf16.gmra.mrb[0].mxu0 %v8003
        %v9016 = vpop.f32.mrb[0].mxu0
        %v9017 = vadd.f32 %v8920, %v9016
        %v9018 = vpop.f32.mrb[0].mxu0
        %v9019 = vpop.f32.mrb[0].mxu0
        %v9020 = vadd.f32 %v8923, %v9019
        %v9021 = vpop.f32.mrb[0].mxu0
        %9022 = vmatprep.mubr.bf16.mxu0 0
        %9023 = vmatmul.mubr.bf16.gmra.mrb[0].mxu0 %v8006
        %v9024 = vpop.f32.mrb[0].mxu0
        %v9025 = vadd.f32 %v8928, %v9024
        %v9026 = vpop.f32.mrb[0].mxu0
        %v9027 = vpop.f32.mrb[0].mxu0
        %v9028 = vadd.f32 %v8931, %v9027
        %v9029 = vpop.f32.mrb[0].mxu0
        %9030 = vmatprep.mubr.bf16.mxu0 0
        %9031 = vmatmul.mubr.bf16.gmra.mrb[0].mxu0 %v8009
        %v9032 = vpop.f32.mrb[0].mxu0
        %v9033 = vadd.f32 %v8936, %v9032
        %v9034 = vpop.f32.mrb[0].mxu0
        %v9035 = vpop.f32.mrb[0].mxu0
        %v9036 = vadd.f32 %v8939, %v9035
        %v9037 = vpop.f32.mrb[0].mxu0
        %9038 = vmatprep.mubr.bf16.mxu0 0
        %9039 = vmatmul.mubr.bf16.gmra.mrb[0].mxu0 %v8012
        %v9040 = vpop.f32.mrb[0].mxu0
        %v9041 = vadd.f32 %v8944, %v9040
        %v9042 = vpop.f32.mrb[0].mxu0
        %v9043 = vpop.f32.mrb[0].mxu0
        %v9044 = vadd.f32 %v8947, %v9043
        %v9045 = vpop.f32.mrb[0].mxu0
        %9046 = vmatprep.mubr.bf16.mxu0 0
        %9047 = vmatmul.mubr.bf16.gmra.mrb[0].mxu0 %v8015
        %v9048 = vpop.f32.mrb[0].mxu0
        %v9049 = vadd.f32 %v8952, %v9048
        %v9050 = vpop.f32.mrb[0].mxu0
        %v9051 = vpop.f32.mrb[0].mxu0
        %v9052 = vadd.f32 %v8955, %v9051
        %v9053 = vpop.f32.mrb[0].mxu0
        %9054 = vmatprep.mubr.bf16.mxu0 0
        %9055 = vmatmul.mubr.bf16.gmra.mrb[0].mxu0 %v8018
        %v9056 = vpop.f32.mrb[0].mxu0
        %v9057 = vadd.f32 %v8960, %v9056
        %v9058 = vpop.f32.mrb[0].mxu0
        %v9059 = vpop.f32.mrb[0].mxu0
        %v9060 = vadd.f32 %v8963, %v9059
        %v9061 = vpop.f32.mrb[0].mxu0
        %9062 = vdwg.mxu0
        %s9063 = scalar_lea.vmem [#allocation3], 120
        %v9064 = vld [vmem:[%s9063] sm:$0xf]
        %v9065 = vld [vmem:[%s9063 + $0x4] sm:$0xf]
        %v9066 = vld [vmem:[%s9063 + $0xc] sm:$0xf]
        %v9067 = vld [vmem:[%s9063 + $0x10] sm:$0xf]
        %v9068 = vld [vmem:[%s9063 + $0x18] sm:$0xf]
        %v9069 = vld [vmem:[%s9063 + $0x1c] sm:$0xf]
        %v9070 = vld [vmem:[%s9063 + $0x24] sm:$0xf]
        %v9071 = vld [vmem:[%s9063 + $0x28] sm:$0xf]
        %v9072 = vld [vmem:[%s9063 + $0x30] sm:$0xf]
        %v9073 = vld [vmem:[%s9063 + $0x34] sm:$0xf]
        %v9074 = vld [vmem:[%s9063 + $0x3c] sm:$0xf]
        %v9075 = vld [vmem:[%s9063 + $0x40] sm:$0xf]
        %v9076 = vld [vmem:[%s9063 + $0x48] sm:$0xf]
        %v9077 = vld [vmem:[%s9063 + $0x4c] sm:$0xf]
        %v9078 = vld [vmem:[%s9063 + $0x54] sm:$0xf]
        %v9079 = vld [vmem:[%s9063 + $0x58] sm:$0xf]
        %v9080 = vld [vmem:[%s9063 + $0x8] sm:$0x1]
        %v9081 = vld [vmem:[%s9063 + $0x14] sm:$0x1]
        %v9082 = vld [vmem:[%s9063 + $0x20] sm:$0x1]
        %v9083 = vld [vmem:[%s9063 + $0x2c] sm:$0x1]
        %v9084 = vld [vmem:[%s9063 + $0x38] sm:$0x1]
        %v9085 = vld [vmem:[%s9063 + $0x44] sm:$0x1]
        %v9086 = vld [vmem:[%s9063 + $0x50] sm:$0x1]
        %v9087 = vld [vmem:[%s9063 + $0x5c] sm:$0x1]
        %v9088 = vld [vmem:[%s9063] sm:$0xe]
        %v9089 = vld [vmem:[%s9063 + $0xc] sm:$0xe]
        %v9090 = vld [vmem:[%s9063 + $0x18] sm:$0xe]
        %v9091 = vld [vmem:[%s9063 + $0x24] sm:$0xe]
        %v9092 = vld [vmem:[%s9063 + $0x30] sm:$0xe]
        %v9093 = vld [vmem:[%s9063 + $0x3c] sm:$0xe]
        %v9094 = vld [vmem:[%s9063 + $0x48] sm:$0xe]
        %v9095 = vld [vmem:[%s9063 + $0x54] sm:$0xe]
        %v9112 = vunpack.c.l.b16 %v9064
        %v9113 = vunpack.c.l.b16 %v9065
        %v9114 = vunpack.c.l.b16 %v9066
        %v9115 = vunpack.c.l.b16 %v9067
        %v9116 = vunpack.c.l.b16 %v9068
        %v9117 = vunpack.c.l.b16 %v9069
        %v9118 = vunpack.c.l.b16 %v9070
        %v9119 = vunpack.c.l.b16 %v9071
        %v9120 = vunpack.c.l.b16 %v9072
        %v9121 = vunpack.c.l.b16 %v9073
        %v9122 = vunpack.c.l.b16 %v9074
        %v9123 = vunpack.c.l.b16 %v9075
        %v9124 = vunpack.c.l.b16 %v9076
        %v9125 = vunpack.c.l.b16 %v9077
        %v9126 = vunpack.c.l.b16 %v9078
        %v9127 = vunpack.c.l.b16 %v9079
        %v9128 = vpack.c.b16 %v9113, %v9112
        %v9129 = vpack.c.b16 %v9115, %v9114
        %v9130 = vpack.c.b16 %v9117, %v9116
        %v9131 = vpack.c.b16 %v9119, %v9118
        %v9132 = vpack.c.b16 %v9121, %v9120
        %v9133 = vpack.c.b16 %v9123, %v9122
        %v9134 = vpack.c.b16 %v9125, %v9124
        %v9135 = vpack.c.b16 %v9127, %v9126
        %v9152 = vunpack.c.l.b16 %v9080
        %v9153 = vunpack.c.l.b16 %v9081
        %v9154 = vunpack.c.l.b16 %v9082
        %v9155 = vunpack.c.l.b16 %v9083
        %v9156 = vunpack.c.l.b16 %v9084
        %v9157 = vunpack.c.l.b16 %v9085
        %v9158 = vunpack.c.l.b16 %v9086
        %v9159 = vunpack.c.l.b16 %v9087
        %v9160 = vpack.c.b16 %v9152, %v9152
        %v9161 = vpack.c.b16 %v9153, %v9153
        %v9162 = vpack.c.b16 %v9154, %v9154
        %v9163 = vpack.c.b16 %v9155, %v9155
        %v9164 = vpack.c.b16 %v9156, %v9156
        %v9165 = vpack.c.b16 %v9157, %v9157
        %v9166 = vpack.c.b16 %v9158, %v9158
        %v9167 = vpack.c.b16 %v9159, %v9159
        %v9169 = vshrl.u32 %v9128, 16
        %v9171 = vshll.u32 %v9128, 16
        %v9173 = vrot.slane %v9171, 1
        %v9174 = vor.u32 %v9169, %v9173
        %v9176 = vshll.u32 %v9160, 16
        %v9178 = vrot.slane %v9176, 1
        %v9179 = vsel %vm1212, %v9174, %v9178
        %v9181 = vshrl.u32 %v9129, 16
        %v9183 = vshll.u32 %v9129, 16
        %v9185 = vrot.slane %v9183, 1
        %v9186 = vor.u32 %v9181, %v9185
        %v9188 = vshll.u32 %v9161, 16
        %v9190 = vrot.slane %v9188, 1
        %v9191 = vsel %vm1212, %v9186, %v9190
        %v9193 = vshrl.u32 %v9130, 16
        %v9195 = vshll.u32 %v9130, 16
        %v9197 = vrot.slane %v9195, 1
        %v9198 = vor.u32 %v9193, %v9197
        %v9200 = vshll.u32 %v9162, 16
        %v9202 = vrot.slane %v9200, 1
        %v9203 = vsel %vm1212, %v9198, %v9202
        %v9205 = vshrl.u32 %v9131, 16
        %v9207 = vshll.u32 %v9131, 16
        %v9209 = vrot.slane %v9207, 1
        %v9210 = vor.u32 %v9205, %v9209
        %v9212 = vshll.u32 %v9163, 16
        %v9214 = vrot.slane %v9212, 1
        %v9215 = vsel %vm1212, %v9210, %v9214
        %v9217 = vshrl.u32 %v9132, 16
        %v9219 = vshll.u32 %v9132, 16
        %v9221 = vrot.slane %v9219, 1
        %v9222 = vor.u32 %v9217, %v9221
        %v9224 = vshll.u32 %v9164, 16
        %v9226 = vrot.slane %v9224, 1
        %v9227 = vsel %vm1212, %v9222, %v9226
        %v9229 = vshrl.u32 %v9133, 16
        %v9231 = vshll.u32 %v9133, 16
        %v9233 = vrot.slane %v9231, 1
        %v9234 = vor.u32 %v9229, %v9233
        %v9236 = vshll.u32 %v9165, 16
        %v9238 = vrot.slane %v9236, 1
        %v9239 = vsel %vm1212, %v9234, %v9238
        %v9241 = vshrl.u32 %v9134, 16
        %v9243 = vshll.u32 %v9134, 16
        %v9245 = vrot.slane %v9243, 1
        %v9246 = vor.u32 %v9241, %v9245
        %v9248 = vshll.u32 %v9166, 16
        %v9250 = vrot.slane %v9248, 1
        %v9251 = vsel %vm1212, %v9246, %v9250
        %v9253 = vshrl.u32 %v9135, 16
        %v9255 = vshll.u32 %v9135, 16
        %v9257 = vrot.slane %v9255, 1
        %v9258 = vor.u32 %v9253, %v9257
        %v9260 = vshll.u32 %v9167, 16
        %v9262 = vrot.slane %v9260, 1
        %v9263 = vsel %vm1212, %v9258, %v9262
        %v9280 = vunpack.c.l.b16 %v9088
        %v9281 = vunpack.c.l.b16 %v9089
        %v9282 = vunpack.c.l.b16 %v9090
        %v9283 = vunpack.c.l.b16 %v9091
        %v9284 = vunpack.c.l.b16 %v9092
        %v9285 = vunpack.c.l.b16 %v9093
        %v9286 = vunpack.c.l.b16 %v9094
        %v9287 = vunpack.c.l.b16 %v9095
        %v9288 = vpack.c.b16 %v9113, %v9280
        %v9289 = vpack.c.b16 %v9115, %v9281
        %v9290 = vpack.c.b16 %v9117, %v9282
        %v9291 = vpack.c.b16 %v9119, %v9283
        %v9292 = vpack.c.b16 %v9121, %v9284
        %v9293 = vpack.c.b16 %v9123, %v9285
        %v9294 = vpack.c.b16 %v9125, %v9286
        %v9295 = vpack.c.b16 %v9127, %v9287
        %v9296 = vrot.slane %v9288, 1
        %v9297 = vrot.slane %v9160, 1
        %v9298 = vsel %vm1341, %v9296, %v9297
        %v9299 = vrot.slane %v9289, 1
        %v9300 = vrot.slane %v9161, 1
        %v9301 = vsel %vm1341, %v9299, %v9300
        %v9302 = vrot.slane %v9290, 1
        %v9303 = vrot.slane %v9162, 1
        %v9304 = vsel %vm1341, %v9302, %v9303
        %v9305 = vrot.slane %v9291, 1
        %v9306 = vrot.slane %v9163, 1
        %v9307 = vsel %vm1341, %v9305, %v9306
        %v9308 = vrot.slane %v9292, 1
        %v9309 = vrot.slane %v9164, 1
        %v9310 = vsel %vm1341, %v9308, %v9309
        %v9311 = vrot.slane %v9293, 1
        %v9312 = vrot.slane %v9165, 1
        %v9313 = vsel %vm1341, %v9311, %v9312
        %v9314 = vrot.slane %v9294, 1
        %v9315 = vrot.slane %v9166, 1
        %v9316 = vsel %vm1341, %v9314, %v9315
        %v9317 = vrot.slane %v9295, 1
        %v9318 = vrot.slane %v9167, 1
        %v9319 = vsel %vm1341, %v9317, %v9318
        %v9328 = vld [vmem:[%s7251] sm:$0xf]
        %v9329 = vld [vmem:[%s7251 + $0x4] sm:$0xf]
        %v9330 = vld [vmem:[%s7251 + $0x8] sm:$0xf]
        %v9331 = vld [vmem:[%s7251 + $0xc] sm:$0xf]
        %v9332 = vld [vmem:[%s7251 + $0x10] sm:$0xf]
        %v9333 = vld [vmem:[%s7251 + $0x14] sm:$0xf]
        %v9334 = vld [vmem:[%s7251 + $0x18] sm:$0xf]
        %v9335 = vld [vmem:[%s7251 + $0x1c] sm:$0xf]
        %v9336 = vld [vmem:[%s7251 + $0x20] sm:$0xf]
        %v9337 = vld [vmem:[%s7251 + $0x24] sm:$0xf]
        %v9338 = vld [vmem:[%s7251 + $0x28] sm:$0xf]
        %v9339 = vld [vmem:[%s7251 + $0x2c] sm:$0xf]
        %v9340 = vld [vmem:[%s7251 + $0x30] sm:$0xf]
        %v9341 = vld [vmem:[%s7251 + $0x34] sm:$0xf]
        %v9342 = vld [vmem:[%s7251 + $0x38] sm:$0xf]
        %v9343 = vld [vmem:[%s7251 + $0x3c] sm:$0xf]
        %v9344 = vld [vmem:[%s7251 + $0x40] sm:$0xf]
        %v9345 = vld [vmem:[%s7251 + $0x44] sm:$0xf]
        %v9346 = vld [vmem:[%s7251 + $0x48] sm:$0xf]
        %v9347 = vld [vmem:[%s7251 + $0x4c] sm:$0xf]
        %v9348 = vld [vmem:[%s7251 + $0x50] sm:$0xf]
        %v9349 = vld [vmem:[%s7251 + $0x54] sm:$0xf]
        %v9350 = vld [vmem:[%s7251 + $0x58] sm:$0xf]
        %v9351 = vld [vmem:[%s7251 + $0x5c] sm:$0xf]
        %v9352 = vld [vmem:[%s7251 + $0x60] sm:$0xf]
        %v9353 = vld [vmem:[%s7251 + $0x64] sm:$0xf]
        %v9354 = vld [vmem:[%s7251 + $0x68] sm:$0xf]
        %v9355 = vld [vmem:[%s7251 + $0x6c] sm:$0xf]
        %v9356 = vld [vmem:[%s7251 + $0x70] sm:$0xf]
        %v9357 = vld [vmem:[%s7251 + $0x74] sm:$0xf]
        %v9358 = vld [vmem:[%s7251 + $0x78] sm:$0xf]
        %v9359 = vld [vmem:[%s7251 + $0x7c] sm:$0xf]
        %v9360 = vld [vmem:[%s7251 + $0x80] sm:$0xf]
        %v9361 = vld [vmem:[%s7251 + $0x84] sm:$0xf]
        %v9362 = vld [vmem:[%s7251 + $0x88] sm:$0xf]
        %v9363 = vld [vmem:[%s7251 + $0x8c] sm:$0xf]
        %v9364 = vld [vmem:[%s7251 + $0x90] sm:$0xf]
        %v9365 = vld [vmem:[%s7251 + $0x94] sm:$0xf]
        %v9366 = vld [vmem:[%s7251 + $0x98] sm:$0xf]
        %v9367 = vld [vmem:[%s7251 + $0x9c] sm:$0xf]
        %v9368 = vld [vmem:[%s7251 + $0xa0] sm:$0xf]
        %v9369 = vld [vmem:[%s7251 + $0xa4] sm:$0xf]
        %v9370 = vld [vmem:[%s7251 + $0xa8] sm:$0xf]
        %v9371 = vld [vmem:[%s7251 + $0xac] sm:$0xf]
        %v9372 = vld [vmem:[%s7251 + $0xb0] sm:$0xf]
        %v9373 = vld [vmem:[%s7251 + $0xb4] sm:$0xf]
        %v9374 = vld [vmem:[%s7251 + $0xb8] sm:$0xf]
        %v9375 = vld [vmem:[%s7251 + $0xbc] sm:$0xf]
        %v9424 = vunpack.c.l.b16 %v9328
        %v9425 = vunpack.c.l.b16 %v9329
        %v9426 = vunpack.c.l.b16 %v9330
        %v9427 = vunpack.c.l.b16 %v9331
        %v9428 = vunpack.c.l.b16 %v9332
        %v9429 = vunpack.c.l.b16 %v9333
        %v9430 = vunpack.c.l.b16 %v9334
        %v9431 = vunpack.c.l.b16 %v9335
        %v9432 = vunpack.c.l.b16 %v9336
        %v9433 = vunpack.c.l.b16 %v9337
        %v9434 = vunpack.c.l.b16 %v9338
        %v9435 = vunpack.c.l.b16 %v9339
        %v9436 = vunpack.c.l.b16 %v9340
        %v9437 = vunpack.c.l.b16 %v9341
        %v9438 = vunpack.c.l.b16 %v9342
        %v9439 = vunpack.c.l.b16 %v9343
        %v9440 = vunpack.c.l.b16 %v9344
        %v9441 = vunpack.c.l.b16 %v9345
        %v9442 = vunpack.c.l.b16 %v9346
        %v9443 = vunpack.c.l.b16 %v9347
        %v9444 = vunpack.c.l.b16 %v9348
        %v9445 = vunpack.c.l.b16 %v9349
        %v9446 = vunpack.c.l.b16 %v9350
        %v9447 = vunpack.c.l.b16 %v9351
        %v9448 = vunpack.c.l.b16 %v9352
        %v9449 = vunpack.c.l.b16 %v9353
        %v9450 = vunpack.c.l.b16 %v9354
        %v9451 = vunpack.c.l.b16 %v9355
        %v9452 = vunpack.c.l.b16 %v9356
        %v9453 = vunpack.c.l.b16 %v9357
        %v9454 = vunpack.c.l.b16 %v9358
        %v9455 = vunpack.c.l.b16 %v9359
        %v9456 = vunpack.c.l.b16 %v9360
        %v9457 = vunpack.c.l.b16 %v9361
        %v9458 = vunpack.c.l.b16 %v9362
        %v9459 = vunpack.c.l.b16 %v9363
        %v9460 = vunpack.c.l.b16 %v9364
        %v9461 = vunpack.c.l.b16 %v9365
        %v9462 = vunpack.c.l.b16 %v9366
        %v9463 = vunpack.c.l.b16 %v9367
        %v9464 = vunpack.c.l.b16 %v9368
        %v9465 = vunpack.c.l.b16 %v9369
        %v9466 = vunpack.c.l.b16 %v9370
        %v9467 = vunpack.c.l.b16 %v9371
        %v9468 = vunpack.c.l.b16 %v9372
        %v9469 = vunpack.c.l.b16 %v9373
        %v9470 = vunpack.c.l.b16 %v9374
        %v9471 = vunpack.c.l.b16 %v9375
        %v9472 = vpack.c.b16 %v9425, %v9424
        %v9473 = vpack.c.b16 %v9427, %v9426
        %v9474 = vpack.c.b16 %v9429, %v9428
        %v9475 = vpack.c.b16 %v9431, %v9430
        %v9476 = vpack.c.b16 %v9433, %v9432
        %v9477 = vpack.c.b16 %v9435, %v9434
        %v9478 = vpack.c.b16 %v9437, %v9436
        %v9479 = vpack.c.b16 %v9439, %v9438
        %v9480 = vpack.c.b16 %v9441, %v9440
        %v9481 = vpack.c.b16 %v9443, %v9442
        %v9482 = vpack.c.b16 %v9445, %v9444
        %v9483 = vpack.c.b16 %v9447, %v9446
        %v9484 = vpack.c.b16 %v9449, %v9448
        %v9485 = vpack.c.b16 %v9451, %v9450
        %v9486 = vpack.c.b16 %v9453, %v9452
        %v9487 = vpack.c.b16 %v9455, %v9454
        %v9488 = vpack.c.b16 %v9457, %v9456
        %v9489 = vpack.c.b16 %v9459, %v9458
        %v9490 = vpack.c.b16 %v9461, %v9460
        %v9491 = vpack.c.b16 %v9463, %v9462
        %v9492 = vpack.c.b16 %v9465, %v9464
        %v9493 = vpack.c.b16 %v9467, %v9466
        %v9494 = vpack.c.b16 %v9469, %v9468
        %v9495 = vpack.c.b16 %v9471, %v9470
        %9520 = vmatprep.subr.bf16.mxu0 0
        %9521 = vmatpush1.bf16.msra.mxu0 %v9472
        %9522 = vmatprep.subr.bf16.mxu0 0
        %9523 = vmatpush1.bf16.msra.mxu0 %v9473
        %9524 = vmatprep.subr.bf16.mxu0 0
        %9525 = vmatpush1.bf16.msra.mxu0 %v9474
        %9526 = vmatprep.subr.bf16.mxu0 0
        %9527 = vmatpush1.bf16.msra.mxu0 %v9475
        %9528 = vmatprep.subr.bf16.mxu0 0
        %9529 = vmatpush1.bf16.msra.mxu0 %v9476
        %9530 = vmatprep.subr.bf16.mxu0 0
        %9531 = vmatpush1.bf16.msra.mxu0 %v9477
        %9532 = vmatprep.subr.bf16.mxu0 0
        %9533 = vmatpush1.bf16.msra.mxu0 %v9478
        %9534 = vmatprep.subr.bf16.mxu0 0
        %9535 = vmatpush1.bf16.msra.mxu0 %v9479
        %9536 = vmatprep.subr.bf16.mxu0 0
        %9537 = vmatpush1.bf16.msra.mxu0 %v9480
        %9538 = vmatprep.subr.bf16.mxu0 0
        %9539 = vmatpush1.bf16.msra.mxu0 %v9481
        %9540 = vmatprep.subr.bf16.mxu0 0
        %9541 = vmatpush1.bf16.msra.mxu0 %v9482
        %9542 = vmatprep.subr.bf16.mxu0 0
        %9543 = vmatpush1.bf16.msra.mxu0 %v9483
        %9544 = vmatprep.subr.bf16.mxu0 0
        %9545 = vmatpush1.bf16.msra.mxu0 %v9484
        %9546 = vmatprep.subr.bf16.mxu0 0
        %9547 = vmatpush1.bf16.msra.mxu0 %v9485
        %9548 = vmatprep.subr.bf16.mxu0 0
        %9549 = vmatpush1.bf16.msra.mxu0 %v9486
        %9550 = vmatprep.subr.bf16.mxu0 0
        %9551 = vmatpush1.bf16.msra.mxu0 %v9487
        %9552 = vmatprep.mubr.bf16.mxu0 %v9179
        %9553 = vmatmul.mubr.bf16.gmra.mrb[0].mxu0 %v9128
        %v9554 = vpop.f32.mrb[0].mxu0
        %v9555 = vadd.f32 0.0, %v9554
        %v9556 = vpop.f32.mrb[0].mxu0
        %v9557 = vpop.f32.mrb[0].mxu0
        %v9558 = vadd.f32 0.0, %v9557
        %v9559 = vpop.f32.mrb[0].mxu0
        %9560 = vmatprep.mubr.bf16.mxu0 %v9191
        %9561 = vmatmul.mubr.bf16.gmra.mrb[0].mxu0 %v9129
        %v9562 = vpop.f32.mrb[0].mxu0
        %v9563 = vadd.f32 0.0, %v9562
        %v9564 = vpop.f32.mrb[0].mxu0
        %v9565 = vpop.f32.mrb[0].mxu0
        %v9566 = vadd.f32 0.0, %v9565
        %v9567 = vpop.f32.mrb[0].mxu0
        %9568 = vmatprep.mubr.bf16.mxu0 %v9203
        %9569 = vmatmul.mubr.bf16.gmra.mrb[0].mxu0 %v9130
        %v9570 = vpop.f32.mrb[0].mxu0
        %v9571 = vadd.f32 0.0, %v9570
        %v9572 = vpop.f32.mrb[0].mxu0
        %v9573 = vpop.f32.mrb[0].mxu0
        %v9574 = vadd.f32 0.0, %v9573
        %v9575 = vpop.f32.mrb[0].mxu0
        %9576 = vmatprep.mubr.bf16.mxu0 %v9215
        %9577 = vmatmul.mubr.bf16.gmra.mrb[0].mxu0 %v9131
        %v9578 = vpop.f32.mrb[0].mxu0
        %v9579 = vadd.f32 0.0, %v9578
        %v9580 = vpop.f32.mrb[0].mxu0
        %v9581 = vpop.f32.mrb[0].mxu0
        %v9582 = vadd.f32 0.0, %v9581
        %v9583 = vpop.f32.mrb[0].mxu0
        %9584 = vmatprep.mubr.bf16.mxu0 %v9227
        %9585 = vmatmul.mubr.bf16.gmra.mrb[0].mxu0 %v9132
        %v9586 = vpop.f32.mrb[0].mxu0
        %v9587 = vadd.f32 0.0, %v9586
        %v9588 = vpop.f32.mrb[0].mxu0
        %v9589 = vpop.f32.mrb[0].mxu0
        %v9590 = vadd.f32 0.0, %v9589
        %v9591 = vpop.f32.mrb[0].mxu0
        %9592 = vmatprep.mubr.bf16.mxu0 %v9239
        %9593 = vmatmul.mubr.bf16.gmra.mrb[0].mxu0 %v9133
        %v9594 = vpop.f32.mrb[0].mxu0
        %v9595 = vadd.f32 0.0, %v9594
        %v9596 = vpop.f32.mrb[0].mxu0
        %v9597 = vpop.f32.mrb[0].mxu0
        %v9598 = vadd.f32 0.0, %v9597
        %v9599 = vpop.f32.mrb[0].mxu0
        %9600 = vmatprep.mubr.bf16.mxu0 %v9251
        %9601 = vmatmul.mubr.bf16.gmra.mrb[0].mxu0 %v9134
        %v9602 = vpop.f32.mrb[0].mxu0
        %v9603 = vadd.f32 0.0, %v9602
        %v9604 = vpop.f32.mrb[0].mxu0
        %v9605 = vpop.f32.mrb[0].mxu0
        %v9606 = vadd.f32 0.0, %v9605
        %v9607 = vpop.f32.mrb[0].mxu0
        %9608 = vmatprep.mubr.bf16.mxu0 %v9263
        %9609 = vmatmul.mubr.bf16.gmra.mrb[0].mxu0 %v9135
        %v9610 = vpop.f32.mrb[0].mxu0
        %v9611 = vadd.f32 0.0, %v9610
        %v9612 = vpop.f32.mrb[0].mxu0
        %v9613 = vpop.f32.mrb[0].mxu0
        %v9614 = vadd.f32 0.0, %v9613
        %v9615 = vpop.f32.mrb[0].mxu0
        %9616 = vdwg.mxu0
        %9617 = vmatprep.subr.bf16.mxu0 0
        %9618 = vmatpush1.bf16.msra.mxu0 %v9488
        %9619 = vmatprep.subr.bf16.mxu0 0
        %9620 = vmatpush1.bf16.msra.mxu0 %v9489
        %9621 = vmatprep.subr.bf16.mxu0 0
        %9622 = vmatpush1.bf16.msra.mxu0 %v9490
        %9623 = vmatprep.subr.bf16.mxu0 0
        %9624 = vmatpush1.bf16.msra.mxu0 %v9491
        %9625 = vmatprep.subr.bf16.mxu0 0
        %9626 = vmatpush1.bf16.msra.mxu0 %v9492
        %9627 = vmatprep.subr.bf16.mxu0 0
        %9628 = vmatpush1.bf16.msra.mxu0 %v9493
        %9629 = vmatprep.subr.bf16.mxu0 0
        %9630 = vmatpush1.bf16.msra.mxu0 %v9494
        %9631 = vmatprep.subr.bf16.mxu0 0
        %9632 = vmatpush1.bf16.msra.mxu0 %v9495
        %9633 = vmatprep.subr.bf16.mxu0 0
        %9634 = vmatpush1.bf16.msra.mxu0 0
        %9635 = vmatprep.subr.bf16.mxu0 0
        %9636 = vmatpush1.bf16.msra.mxu0 0
        %9637 = vmatprep.subr.bf16.mxu0 0
        %9638 = vmatpush1.bf16.msra.mxu0 0
        %9639 = vmatprep.subr.bf16.mxu0 0
        %9640 = vmatpush1.bf16.msra.mxu0 0
        %9641 = vmatprep.subr.bf16.mxu0 0
        %9642 = vmatpush1.bf16.msra.mxu0 0
        %9643 = vmatprep.subr.bf16.mxu0 0
        %9644 = vmatpush1.bf16.msra.mxu0 0
        %9645 = vmatprep.subr.bf16.mxu0 0
        %9646 = vmatpush1.bf16.msra.mxu0 0
        %9647 = vmatprep.subr.bf16.mxu0 0
        %9648 = vmatpush1.bf16.msra.mxu0 0
        %9649 = vmatprep.mubr.bf16.mxu0 0
        %9650 = vmatmul.mubr.bf16.gmra.mrb[0].mxu0 %v9298
        %v9651 = vpop.f32.mrb[0].mxu0
        %v9652 = vadd.f32 %v9555, %v9651
        %v9653 = vpop.f32.mrb[0].mxu0
        %v9654 = vpop.f32.mrb[0].mxu0
        %v9655 = vadd.f32 %v9558, %v9654
        %v9656 = vpop.f32.mrb[0].mxu0
        %9657 = vmatprep.mubr.bf16.mxu0 0
        %9658 = vmatmul.mubr.bf16.gmra.mrb[0].mxu0 %v9301
        %v9659 = vpop.f32.mrb[0].mxu0
        %v9660 = vadd.f32 %v9563, %v9659
        %v9661 = vpop.f32.mrb[0].mxu0
        %v9662 = vpop.f32.mrb[0].mxu0
        %v9663 = vadd.f32 %v9566, %v9662
        %v9664 = vpop.f32.mrb[0].mxu0
        %9665 = vmatprep.mubr.bf16.mxu0 0
        %9666 = vmatmul.mubr.bf16.gmra.mrb[0].mxu0 %v9304
        %v9667 = vpop.f32.mrb[0].mxu0
        %v9668 = vadd.f32 %v9571, %v9667
        %v9669 = vpop.f32.mrb[0].mxu0
        %v9670 = vpop.f32.mrb[0].mxu0
        %v9671 = vadd.f32 %v9574, %v9670
        %v9672 = vpop.f32.mrb[0].mxu0
        %9673 = vmatprep.mubr.bf16.mxu0 0
        %9674 = vmatmul.mubr.bf16.gmra.mrb[0].mxu0 %v9307
        %v9675 = vpop.f32.mrb[0].mxu0
        %v9676 = vadd.f32 %v9579, %v9675
        %v9677 = vpop.f32.mrb[0].mxu0
        %v9678 = vpop.f32.mrb[0].mxu0
        %v9679 = vadd.f32 %v9582, %v9678
        %v9680 = vpop.f32.mrb[0].mxu0
        %9681 = vmatprep.mubr.bf16.mxu0 0
        %9682 = vmatmul.mubr.bf16.gmra.mrb[0].mxu0 %v9310
        %v9683 = vpop.f32.mrb[0].mxu0
        %v9684 = vadd.f32 %v9587, %v9683
        %v9685 = vpop.f32.mrb[0].mxu0
        %v9686 = vpop.f32.mrb[0].mxu0
        %v9687 = vadd.f32 %v9590, %v9686
        %v9688 = vpop.f32.mrb[0].mxu0
        %9689 = vmatprep.mubr.bf16.mxu0 0
        %9690 = vmatmul.mubr.bf16.gmra.mrb[0].mxu0 %v9313
        %v9691 = vpop.f32.mrb[0].mxu0
        %v9692 = vadd.f32 %v9595, %v9691
        %v9693 = vpop.f32.mrb[0].mxu0
        %v9694 = vpop.f32.mrb[0].mxu0
        %v9695 = vadd.f32 %v9598, %v9694
        %v9696 = vpop.f32.mrb[0].mxu0
        %9697 = vmatprep.mubr.bf16.mxu0 0
        %9698 = vmatmul.mubr.bf16.gmra.mrb[0].mxu0 %v9316
        %v9699 = vpop.f32.mrb[0].mxu0
        %v9700 = vadd.f32 %v9603, %v9699
        %v9701 = vpop.f32.mrb[0].mxu0
        %v9702 = vpop.f32.mrb[0].mxu0
        %v9703 = vadd.f32 %v9606, %v9702
        %v9704 = vpop.f32.mrb[0].mxu0
        %9705 = vmatprep.mubr.bf16.mxu0 0
        %9706 = vmatmul.mubr.bf16.gmra.mrb[0].mxu0 %v9319
        %v9707 = vpop.f32.mrb[0].mxu0
        %v9708 = vadd.f32 %v9611, %v9707
        %v9709 = vpop.f32.mrb[0].mxu0
        %v9710 = vpop.f32.mrb[0].mxu0
        %v9711 = vadd.f32 %v9614, %v9710
        %v9712 = vpop.f32.mrb[0].mxu0
        %9713 = vdwg.mxu0
        %v9714 = vadd.f32 %v9001, %v9652
        %v9715 = vadd.f32 %v9004, %v9655
        %v9716 = vadd.f32 %v9009, %v9660
        %v9717 = vadd.f32 %v9012, %v9663
        %v9718 = vadd.f32 %v9017, %v9668
        %v9719 = vadd.f32 %v9020, %v9671
        %v9720 = vadd.f32 %v9025, %v9676
        %v9721 = vadd.f32 %v9028, %v9679
        %v9722 = vadd.f32 %v9033, %v9684
        %v9723 = vadd.f32 %v9036, %v9687
        %v9724 = vadd.f32 %v9041, %v9692
        %v9725 = vadd.f32 %v9044, %v9695
        %v9726 = vadd.f32 %v9049, %v9700
        %v9727 = vadd.f32 %v9052, %v9703
        %v9728 = vadd.f32 %v9057, %v9708
        %v9729 = vadd.f32 %v9060, %v9711
        %s9730 = scalar_lea.vmem %s287, 128 [#allocation4]
        %v9731 = vld [vmem:[%s9730] sm:$0xff]
        %v9732 = vld [vmem:[%s9730 + $0x8] sm:$0xff]
        %v9733 = vld [vmem:[%s9730 + $0x10] sm:$0xff]
        %v9734 = vld [vmem:[%s9730 + $0x18] sm:$0xff]
        %v9735 = vld [vmem:[%s9730 + $0x20] sm:$0xff]
        %v9736 = vld [vmem:[%s9730 + $0x28] sm:$0xff]
        %v9737 = vld [vmem:[%s9730 + $0x30] sm:$0xff]
        %v9738 = vld [vmem:[%s9730 + $0x38] sm:$0xff]
        %v9739 = vld [vmem:[%s9730 + $0x40] sm:$0xff]
        %v9740 = vld [vmem:[%s9730 + $0x48] sm:$0xff]
        %v9741 = vld [vmem:[%s9730 + $0x50] sm:$0xff]
        %v9742 = vld [vmem:[%s9730 + $0x58] sm:$0xff]
        %v9743 = vld [vmem:[%s9730 + $0x60] sm:$0xff]
        %v9744 = vld [vmem:[%s9730 + $0x68] sm:$0xff]
        %v9745 = vld [vmem:[%s9730 + $0x70] sm:$0xff]
        %v9746 = vld [vmem:[%s9730 + $0x78] sm:$0xff]
        %v9747 = vmul.f32 %v9714, %v7674
        %v9748 = vmul.f32 %v9715, %v7674
        %v9749 = vmul.f32 %v9716, %v7674
        %v9750 = vmul.f32 %v9717, %v7674
        %v9751 = vmul.f32 %v9718, %v7674
        %v9752 = vmul.f32 %v9719, %v7674
        %v9753 = vmul.f32 %v9720, %v7674
        %v9754 = vmul.f32 %v9721, %v7674
        %v9755 = vmul.f32 %v9722, %v7674
        %v9756 = vmul.f32 %v9723, %v7674
        %v9757 = vmul.f32 %v9724, %v7674
        %v9758 = vmul.f32 %v9725, %v7674
        %v9759 = vmul.f32 %v9726, %v7674
        %v9760 = vmul.f32 %v9727, %v7674
        %v9761 = vmul.f32 %v9728, %v7674
        %v9762 = vmul.f32 %v9729, %v7674
        %v9763 = vadd.f32 %v9747, %v7696
        %v9764 = vadd.f32 %v9748, %v7696
        %v9765 = vadd.f32 %v9749, %v7696
        %v9766 = vadd.f32 %v9750, %v7696
        %v9767 = vadd.f32 %v9751, %v7696
        %v9768 = vadd.f32 %v9752, %v7696
        %v9769 = vadd.f32 %v9753, %v7696
        %v9770 = vadd.f32 %v9754, %v7696
        %v9771 = vadd.f32 %v9755, %v7696
        %v9772 = vadd.f32 %v9756, %v7696
        %v9773 = vadd.f32 %v9757, %v7696
        %v9774 = vadd.f32 %v9758, %v7696
        %v9775 = vadd.f32 %v9759, %v7696
        %v9776 = vadd.f32 %v9760, %v7696
        %v9777 = vadd.f32 %v9761, %v7696
        %v9778 = vadd.f32 %v9762, %v7696
        %v9779 = vadd.f32 %v9763, %v9731
        %v9780 = vadd.f32 %v9764, %v9732
        %v9781 = vadd.f32 %v9765, %v9733
        %v9782 = vadd.f32 %v9766, %v9734
        %v9783 = vadd.f32 %v9767, %v9735
        %v9784 = vadd.f32 %v9768, %v9736
        %v9785 = vadd.f32 %v9769, %v9737
        %v9786 = vadd.f32 %v9770, %v9738
        %v9787 = vadd.f32 %v9771, %v9739
        %v9788 = vadd.f32 %v9772, %v9740
        %v9789 = vadd.f32 %v9773, %v9741
        %v9790 = vadd.f32 %v9774, %v9742
        %v9791 = vadd.f32 %v9775, %v9743
        %v9792 = vadd.f32 %v9776, %v9744
        %v9793 = vadd.f32 %v9777, %v9745
        %v9794 = vadd.f32 %v9778, %v9746
        %v9795 = vmax.f32 %v9779, 0.0
        %v9796 = vmax.f32 %v9780, 0.0
        %v9797 = vmax.f32 %v9781, 0.0
        %v9798 = vmax.f32 %v9782, 0.0
        %v9799 = vmax.f32 %v9783, 0.0
        %v9800 = vmax.f32 %v9784, 0.0
        %v9801 = vmax.f32 %v9785, 0.0
        %v9802 = vmax.f32 %v9786, 0.0
        %v9803 = vmax.f32 %v9787, 0.0
        %v9804 = vmax.f32 %v9788, 0.0
        %v9805 = vmax.f32 %v9789, 0.0
        %v9806 = vmax.f32 %v9790, 0.0
        %v9807 = vmax.f32 %v9791, 0.0
        %v9808 = vmax.f32 %v9792, 0.0
        %v9809 = vmax.f32 %v9793, 0.0
        %v9810 = vmax.f32 %v9794, 0.0
        %s9811 = scalar_lea.vmem %s325, 128 [#allocation10]
        %9812 = vst [vmem:[%s9811] sm:$0xff] %v9795
        %9813 = vst [vmem:[%s9811 + $0x8] sm:$0xff] %v9796
        %9814 = vst [vmem:[%s9811 + $0x10] sm:$0xff] %v9797
        %9815 = vst [vmem:[%s9811 + $0x18] sm:$0xff] %v9798
        %9816 = vst [vmem:[%s9811 + $0x20] sm:$0xff] %v9799
        %9817 = vst [vmem:[%s9811 + $0x28] sm:$0xff] %v9800
        %9818 = vst [vmem:[%s9811 + $0x30] sm:$0xff] %v9801
        %9819 = vst [vmem:[%s9811 + $0x38] sm:$0xff] %v9802
        %9820 = vst [vmem:[%s9811 + $0x40] sm:$0xff] %v9803
        %9821 = vst [vmem:[%s9811 + $0x48] sm:$0xff] %v9804
        %9822 = vst [vmem:[%s9811 + $0x50] sm:$0xff] %v9805
        %9823 = vst [vmem:[%s9811 + $0x58] sm:$0xff] %v9806
        %9824 = vst [vmem:[%s9811 + $0x60] sm:$0xff] %v9807
        %9825 = vst [vmem:[%s9811 + $0x68] sm:$0xff] %v9808
        %9826 = vst [vmem:[%s9811 + $0x70] sm:$0xff] %v9809
        %9827 = vst [vmem:[%s9811 + $0x78] sm:$0xff] %v9810
        %s9828 = sand.u32 %s185, 1
        %s9829 = scalar_lea.sflag [#allocation6], %s9828
        %s9830 = sand.u32 %s185, 1
        %s9831 = smul.addr %s9830, 256
        %s9832 = scalar_lea.vmem [#allocation10], %s9831
        // Predicated region
        $region61: #{tpu_custom_call.1} parent=47 // pred_check
          %p9833 = pneg %p195
        $region62: #{tpu_custom_call.1} parent=47 // pred_check_branch
          %9835 = sbr.rel (%p9833) target = $region64
        $region63: #{tpu_custom_call.1} parent=47 // pred_region
          %s9837 = ssub.s32 4096, 4096
          %9838 = vsyncadd %s9829, %s9837
          %s9839 = smul.addr %s25, 32
          %s9840 = smul.addr %s9839, 128
          %s9841 = scalar_lea.hbm %s7, %s9840
          %s9842 = sshll.u32 %s9832, 4
          %s9843 = int_to_ptr.vmem [resolvable:$true] %s9842
          %9848 = dma.vmem_to_hbm [thread:$0]  %s9843, 4096, %s9841, %s9829, 128, 128, 8
        $region64: #{tpu_custom_call.1} parent=47 // pred_fallthru
          _
      $region48: #{tpu_custom_call.1} parent=5 // pred_fallthru
        _
      %p9849 = scmp.le.s32.totalorder 2, %s20
      // Predicated region
      $region65: #{tpu_custom_call.1} parent=5 // pred_check
        %p9850 = pneg %p9849
      $region66: #{tpu_custom_call.1} parent=5 // pred_check_branch
        %9852 = sbr.rel (%p9850) target = $region68
      $region67: #{tpu_custom_call.1} parent=5 // pred_region
        %s9853 = ssub.s32 %s20, 2
        // Predicated region
        $region69: #{tpu_custom_call.1} parent=67 // pred_check
          %p9854 = pneg %p201
        $region70: #{tpu_custom_call.1} parent=67 // pred_check_branch
          %9856 = sbr.rel (%p9854) target = $region72
        $region71: #{tpu_custom_call.1} parent=67 // pred_region
          %s9857 = sand.u32 %s186, 1
          %s9858 = scalar_lea.sflag [#allocation6], %s9857
          %s9859 = sand.u32 %s186, 1
          %s9860 = smul.addr %s9859, 256
          %s9861 = scalar_lea.vmem [#allocation10], %s9860
          %9862 = dma.done %s9858, 4096
        $region72: #{tpu_custom_call.1} parent=67 // pred_fallthru
          _
      $region68: #{tpu_custom_call.1} parent=5 // pred_fallthru
        _
    $region6: #{tpu_custom_call.1} parent=1 // loop_footer
      %s24 = sadd.s32 1, %s20
    $region7: #{tpu_custom_call.1} parent=1 // loop_footer_branch
      %19 = sbr.rel target = $region3
    $region8: #{tpu_custom_call.1} parent=1 // loop_exit
      _
    %9863 = vsyncpa [#allocation5], 1
    %s9864 = scalar_lea.sflag [#allocation5], 1
    %9865 = vsyncpa %s9864, 1
    %9866 = vsyncpa [#allocation8], 1
    %9867 = vsyncpa [#allocation6], 1
    %s9868 = scalar_lea.sflag [#allocation6], 1
    %9869 = vsyncpa %s9868, 1

</llo_original>
